<compile_context>
chip_gen: v7x
topology: tpu7x:2x2x1
jax: 0.10.0
libtpu: 0.0.40
codegen_flags: <defaults>
</compile_context>

<pallas_src>
import functools

import jax
import jax.numpy as jnp
from jax import lax
from jax.experimental import pallas as pl
from jax.experimental.pallas import tpu as pltpu


def _round_up(x, m):
    return (x + m - 1) // m * m


def _vmem_capacity_bytes():
    try:
        return int(pltpu.get_tpu_info().vmem_capacity_bytes)
    except Exception:
        return 64 << 20          # conservative default (v7x per-core VMEM)


def _tensorcores_per_chip():
    try:
        kind = jax.devices()[0].device_kind.lower()
    except Exception:
        return 1
    if "lite" in kind or "v5e" in kind or "v6e" in kind:
        return 1                 # single TensorCore per chip (v5e / v6e)
    if any(tag in kind for tag in ("v7", "v5p", "v4")):
        return 2                 # megacore / dual-TC chips
    return 1


def _lstm_chunk_kernel(x_ref, wih_ref, whh_ref, b_ref,      # inputs
                       out_ref, cN_ref,                      # outputs
                       h_sc, c_sc, gx_sc, hst_sc,            # scratch
                       *, seq_len, pad_tail):
    """One grid step == one chunk of tc LSTM time steps for one batch tile."""
    chunk = pl.program_id(1)

    # hidden is None in Recurrent.forward -> zero-init (h0, c0) per batch tile.
    @pl.when(chunk == 0)
    def _():
        h_sc[...] = jnp.zeros_like(h_sc)
        c_sc[...] = jnp.zeros_like(c_sc)

    tc, bt, d_in = x_ref.shape          # static
    Hp = whh_ref.shape[0]               # padded hidden size (multiple of 128)

    # ---- hoisted, time-independent input projection for the whole chunk ----
    # One (tc*bt, d_in) x (d_in, 4Hp) MXU matmul (bf16 operands, f32 acc)
    # plus the combined bias, staged once in VMEM.
    x_all = x_ref[...].reshape(tc * bt, d_in)
    gx = jnp.dot(x_all, wih_ref[...], preferred_element_type=jnp.float32)
    gx_sc[...] = (gx + b_ref[...]).reshape(tc, bt, 4 * Hp)

    whh = whh_ref[...]                  # resident recurrent weight, loaded once

    def step(s, carry):
        h, c = carry
        # Small per-step recurrent matmul (weight-push bound when bt is small).
        # TODO(synk): for tiny bt, pltpu.matmul_push_rhs/acc_lhs could keep
        # W_hh staged in the MXU across the tc unrolled steps.
        gates = gx_sc[s] + jnp.dot(h.astype(whh.dtype), whh,
                                   preferred_element_type=jnp.float32)
        # Gate slices are lane-aligned because Hp is a multiple of 128.
        i_g = jax.nn.sigmoid(gates[:, 0 * Hp:1 * Hp])
        f_g = jax.nn.sigmoid(gates[:, 1 * Hp:2 * Hp])
        g_g = jnp.tanh(gates[:, 2 * Hp:3 * Hp])
        o_g = jax.nn.sigmoid(gates[:, 3 * Hp:4 * Hp])
        c_new = f_g * c + i_g * g_g
        h_new = o_g * jnp.tanh(c_new)
        if pad_tail:
            # Padded tail steps of the last chunk must not advance the state.
            keep = (chunk * tc + s) < seq_len
            c_new = jnp.where(keep, c_new, c)
            h_new = jnp.where(keep, h_new, h)
        hst_sc[s] = h_new.astype(hst_sc.dtype)   # time-major staging (full-tile)
        return h_new, c_new

    h_fin, c_fin = lax.fori_loop(0, tc, step, (h_sc[...], c_sc[...]),
                                 unroll=True)
    h_sc[...] = h_fin
    c_sc[...] = c_fin

    # Batch-major chunk store: relayout the (tc, bt, Hp) staging buffer into
    # the (bt, tc, Hp) output block with static-index copies.  Pure VMEM-side
    # work off the serial recurrence critical path; removes the wrapper-side
    # HBM transpose of the full output tensor.
    for s in range(tc):
        out_ref[:, s, :] = hst_sc[s]

    # Final cell state (final h is redundant: it equals outputs[:, seq_len-1]
    # because reverse=False).
    @pl.when(chunk == pl.num_programs(1) - 1)
    def _():
        cN_ref[...] = c_fin.astype(cN_ref.dtype)


def recurrent_lstm_forward(inputs, w_ih, w_hh, b_ih, b_hh, *,
                           compute_dtype=jnp.bfloat16, out_dtype=None,
                           time_chunk=None):
    """Pallas equivalent of Recurrent(cell=LSTMCell(...)).forward(inputs).

    inputs: (B, T, D_in) float32 (batch-first, like the PyTorch module)
    w_ih:   (4H, D_in), w_hh: (4H, H), b_ih/b_hh: (4H,)
    returns (outputs (B, T, H), (h_n (1, B, H), c_n (1, B, H)))
    """
    B, T, D_in = inputs.shape
    four_h, H = w_hh.shape
    assert four_h == 4 * H

    if out_dtype is None:
        # bf16 writeback halves the dominant streamed output traffic; h is
        # tanh-bounded so the precision loss is benign.
        out_dtype = jnp.bfloat16 if compute_dtype == jnp.bfloat16 else inputs.dtype
    cby = 2 if compute_dtype == jnp.bfloat16 else 4
    oby = 2 if out_dtype == jnp.bfloat16 else 4

    Hp = _round_up(H, 128)      # lane-aligned gate blocks, full-width stores
    # TODO(synk): for H << 128 this per-gate padding wastes up to Hp/H x
    # compute/HBM; a sublane-packed 4-gate layout would avoid it.
    B_pad = _round_up(B, 8)     # f32 sublane multiple

    # ---- generation-aware tiling -------------------------------------------
    vmem_cap = _vmem_capacity_bytes()

    # Split the batch across TensorCores only on 2-TC chips (v4/v5p/v7x) and
    # only if each half keeps >= 256 rows (MXU-friendly M).  On 1-TC v5e/v6e a
    # split is pure serialization overhead.
    if _tensorcores_per_chip() >= 2 and B_pad % 16 == 0 and B_pad // 2 >= 256:
        nb = 2
    else:
        nb = 1
    bt = B_pad // nb

    # The output block is (bt, tc, Hp): tc sits on the sublane (second-minor)
    # dim, so it must be a multiple of the dtype's sublane tile unless a
    # single chunk covers the whole (padded) sequence.
    sub = 8 if oby >= 4 else 16

    def footprint(tc):
        # Conservative: resident weights counted double-buffered so the
        # fallback path (no Buffered(1)) also fits.
        fixed = (D_in * 4 * Hp + Hp * 4 * Hp) * cby * 2 + 4 * Hp * 4 * 2
        streamed = (tc * bt * D_in * cby            # x chunk
                    + tc * bt * Hp * oby            # output chunk
                    + bt * Hp * oby) * 2            # final c
        scratch = (2 * bt * Hp * 4                  # h, c carries (f32)
                   + tc * bt * 4 * Hp * 4           # hoisted gates (f32)
                   + tc * bt * Hp * oby)            # h staging
        return fixed + streamed + scratch

    budget = max(16 << 20, (vmem_cap * 3) // 4)
    if time_chunk is not None:
        tc = int(time_chunk)
        assert tc == _round_up(T, tc) or tc % sub == 0, (
            "time_chunk must be a sublane multiple unless it covers all of T")
    elif T <= 32 and footprint(T) <= budget:
        tc = T                                       # whole sequence, no padding
    else:
        tc = sub
        for cand in (32, 16, 8):
            if cand % sub == 0 and footprint(cand) <= budget:
                tc = cand
                break
    T_pad = _round_up(T, tc)
    nc = T_pad // tc

    # VMEM limit clamped to the chip's physical capacity (v7x is 64 MiB).
    vmem_limit = int(min(max(footprint(tc) + (4 << 20), 16 << 20),
                         (vmem_cap * 7) // 8))

    # ---- weight / bias prep: pad each gate block H -> Hp, pre-transpose ----
    def _pad_gate_rows(w):                       # (4H, X) -> (4, Hp, X)
        w4 = w.reshape(4, H, -1)
        return jnp.pad(w4, ((0, 0), (0, Hp - H), (0, 0)))

    wih_t = _pad_gate_rows(w_ih).transpose(2, 0, 1).reshape(D_in, 4 * Hp)
    wih_t = wih_t.astype(compute_dtype)
    whh4 = _pad_gate_rows(w_hh)                                  # (4, Hp, H)
    whh4 = jnp.pad(whh4, ((0, 0), (0, 0), (0, Hp - H)))          # (4, Hp, Hp)
    whh_t = whh4.transpose(2, 0, 1).reshape(Hp, 4 * Hp).astype(compute_dtype)
    bias = jnp.pad((b_ih + b_hh).reshape(4, H), ((0, 0), (0, Hp - H)))
    bias = bias.reshape(1, 4 * Hp).astype(jnp.float32)

    # Time-major, batch/time-padded input in the compute dtype (the dynamic
    # per-step index inside the kernel lands on the cheap leading axis).
    x_tm = jnp.transpose(inputs, (1, 0, 2))
    x_tm = jnp.pad(x_tm, ((0, T_pad - T), (0, B_pad - B), (0, 0)))
    x_tm = x_tm.astype(compute_dtype)

    kernel = functools.partial(_lstm_chunk_kernel, seq_len=T,
                               pad_tail=(T_pad != T))

    batch_sem = (getattr(pltpu, "CORE_PARALLEL", "parallel")
                 if nb > 1 else "arbitrary")

    def _build(single_buffer_weights):
        def resident(shape):
            imap = lambda b, c: (0, 0)
            if single_buffer_weights:
                # Constant index_map -> fetched once; one buffer is enough.
                return pl.BlockSpec(shape, imap, pipeline_mode=pl.Buffered(1))
            return pl.BlockSpec(shape, imap)

        grid_spec = pltpu.PrefetchScalarGridSpec(
            num_scalar_prefetch=0,
            grid=(nb, nc),                    # (batch tiles, time chunks)
            in_specs=[
                pl.BlockSpec((tc, bt, D_in), lambda b, c: (c, b, 0)),  # x chunk
                resident((D_in, 4 * Hp)),                              # W_ih^T
                resident((Hp, 4 * Hp)),                                # W_hh^T
                resident((1, 4 * Hp)),                                 # bias
            ],
            out_specs=[
                pl.BlockSpec((bt, tc, Hp), lambda b, c: (b, c, 0)),    # outputs
                pl.BlockSpec((bt, Hp), lambda b, c: (b, 0)),           # final c
            ],
            scratch_shapes=[
                pltpu.VMEM((bt, Hp), jnp.float32),          # h carry
                pltpu.VMEM((bt, Hp), jnp.float32),          # c carry
                pltpu.VMEM((tc, bt, 4 * Hp), jnp.float32),  # hoisted gates
                pltpu.VMEM((tc, bt, Hp), out_dtype),        # h staging
            ],
        )
        return pl.pallas_call(
            kernel,
            grid_spec=grid_spec,
            out_shape=(
                jax.ShapeDtypeStruct((B_pad, T_pad, Hp), out_dtype),
                jax.ShapeDtypeStruct((B_pad, Hp), out_dtype),
            ),
            compiler_params=pltpu.CompilerParams(
                dimension_semantics=(batch_sem, "arbitrary"),  # time is a carry
                vmem_limit_bytes=vmem_limit,
            ),
        )

    try:
        out_bm, c_last = _build(True)(x_tm, wih_t, whh_t, bias)
    except Exception:
        # Older jax without BlockSpec.pipeline_mode / pl.Buffered(1): fall back
        # to default double-buffered resident weights (identical numerics).
        out_bm, c_last = _build(False)(x_tm, wih_t, whh_t, bias)

    outputs = out_bm[:B, :T, :H]                # (B, T, H); identity when unpadded
    h_n = outputs[:, -1, :][jnp.newaxis]        # (1, B, H) -- valid since reverse=False
    c_n = c_last[jnp.newaxis, :B, :H]           # (1, B, H)
    return outputs, (h_n, c_n)


def _reference_lstm(inputs, w_ih, w_hh, b_ih, b_hh):
    """Pure-JAX reference (mirrors torch.nn.LSTMCell unrolled by Recurrent)."""
    B, T, _ = inputs.shape
    H = w_hh.shape[1]

    def step(carry, x_t):
        h, c = carry
        gates = x_t @ w_ih.T + b_ih + h @ w_hh.T + b_hh
        i, f, g, o = jnp.split(gates, 4, axis=-1)
        i, f, o = jax.nn.sigmoid(i), jax.nn.sigmoid(f), jax.nn.sigmoid(o)
        g = jnp.tanh(g)
        c_new = f * c + i * g
        h_new = o * jnp.tanh(c_new)
        return (h_new, c_new), h_new

    h0 = jnp.zeros((B, H), inputs.dtype)
    c0 = jnp.zeros((B, H), inputs.dtype)
    (h_n, c_n), ys = jax.lax.scan(step, (h0, c0), jnp.transpose(inputs, (1, 0, 2)))
    return jnp.transpose(ys, (1, 0, 2)), (h_n[None], c_n[None])


if __name__ == "__main__":
    # Small shapes: batch=2, seq=16, input_size=16, hidden=32.
    B, T, D_in, H = 2, 16, 16, 32

    key = jax.random.PRNGKey(0)
    k_x, k_wih, k_whh, k_bih, k_bhh = jax.random.split(key, 5)

    scale = 1.0 / jnp.sqrt(jnp.float32(H))   # PyTorch LSTMCell init range
    inputs = jax.random.normal(k_x, (B, T, D_in), dtype=jnp.float32)
    w_ih = jax.random.uniform(k_wih, (4 * H, D_in), jnp.float32, -scale, scale)
    w_hh = jax.random.uniform(k_whh, (4 * H, H), jnp.float32, -scale, scale)
    b_ih = jax.random.uniform(k_bih, (4 * H,), jnp.float32, -scale, scale)
    b_hh = jax.random.uniform(k_bhh, (4 * H,), jnp.float32, -scale, scale)

    ref_out, (ref_h, ref_c) = _reference_lstm(inputs, w_ih, w_hh, b_ih, b_hh)

    # 1) f32 end-to-end path: faithful to the PyTorch module's numerics.
    out32, (h32, c32) = recurrent_lstm_forward(
        inputs, w_ih, w_hh, b_ih, b_hh,
        compute_dtype=jnp.float32, out_dtype=jnp.float32)
    jax.block_until_ready((out32, h32, c32))
    assert jnp.allclose(out32, ref_out, atol=5e-5, rtol=5e-5)
    assert jnp.allclose(h32, ref_h, atol=5e-5, rtol=5e-5)
    assert jnp.allclose(c32, ref_c, atol=5e-5, rtol=5e-5)

    # 2) Default fast path: bf16 weights/activations, f32 accumulation/state.
    outbf, (hbf, cbf) = recurrent_lstm_forward(inputs, w_ih, w_hh, b_ih, b_hh)
    jax.block_until_ready((outbf, hbf, cbf))
    assert jnp.allclose(outbf.astype(jnp.float32), ref_out, atol=5e-2, rtol=5e-2)
    assert jnp.allclose(hbf.astype(jnp.float32), ref_h, atol=5e-2, rtol=5e-2)
    assert jnp.allclose(cbf.astype(jnp.float32), ref_c, atol=5e-2, rtol=5e-2)

    # 3) Multi-chunk + padded time tail (T=13 -> T_pad=16 with tc=8).
    inputs13 = inputs[:, :13]
    ref13, (rh13, rc13) = _reference_lstm(inputs13, w_ih, w_hh, b_ih, b_hh)
    out13, (h13, c13) = recurrent_lstm_forward(
        inputs13, w_ih, w_hh, b_ih, b_hh,
        compute_dtype=jnp.float32, out_dtype=jnp.float32, time_chunk=8)
    jax.block_until_ready((out13, h13, c13))
    assert jnp.allclose(out13, ref13, atol=5e-5, rtol=5e-5)
    assert jnp.allclose(h13, rh13, atol=5e-5, rtol=5e-5)
    assert jnp.allclose(c13, rc13, atol=5e-5, rtol=5e-5)

    # TODO(synk): with_attention=True / get_attention=True path needs the
    # concrete attention cell's forward (not defined in this module).
    print("KERNEL_OK")
</pallas_src>

<mosaic_0001>
module attributes {stable_mosaic.version = 11 : i64} {
  func.func @_lstm_chunk_kernel(%arg0: i32, %arg1: i32, %arg2: memref<16x8x16xf32, #tpu.memory_space<vmem>>, %arg3: memref<16x512xf32, #tpu.memory_space<vmem>>, %arg4: memref<128x512xf32, #tpu.memory_space<vmem>>, %arg5: memref<1x512xf32, #tpu.memory_space<vmem>>, %arg6: memref<8x16x128xf32, #tpu.memory_space<vmem>>, %arg7: memref<8x128xf32, #tpu.memory_space<vmem>>, %arg8: memref<8x128xf32, #tpu.memory_space<vmem>>, %arg9: memref<8x128xf32, #tpu.memory_space<vmem>>, %arg10: memref<16x8x512xf32, #tpu.memory_space<vmem>>, %arg11: memref<16x8x128xf32, #tpu.memory_space<vmem>>) attributes {dimension_semantics = [#tpu.dimension_semantics<arbitrary>, #tpu.dimension_semantics<arbitrary>], iteration_bounds = array<i64: 1, 1>, scalar_prefetch = 0 : i64, scratch_operands = 4 : i64, tpu.core_type = #tpu.core_type<tc>, window_params = [{transform_indices = @transform_0, window_bounds = array<i64: 16, 8, 16>}, {pipeline_mode = #tpu.pipeline_mode<synchronous>, transform_indices = @transform_1, window_bounds = array<i64: 16, 512>}, {pipeline_mode = #tpu.pipeline_mode<synchronous>, transform_indices = @transform_2, window_bounds = array<i64: 128, 512>}, {pipeline_mode = #tpu.pipeline_mode<synchronous>, transform_indices = @transform_3, window_bounds = array<i64: 1, 512>}, {transform_indices = @transform_4, window_bounds = array<i64: 8, 16, 128>}, {transform_indices = @transform_5, window_bounds = array<i64: 8, 128>}]} {
    %c0_i32 = arith.constant 0 : i32
    %0 = arith.cmpi eq, %arg1, %c0_i32 : i32
    %1 = arith.extui %0 : i1 to i32
    %c0_i32_0 = arith.constant 0 : i32
    %2 = arith.cmpi ne, %1, %c0_i32_0 : i32
    scf.if %2 {
      %cst_232 = arith.constant 0.000000e+00 : f32
      %644 = vector.broadcast %cst_232 : f32 to vector<8x128xf32>
      %c0_233 = arith.constant 0 : index
      %c0_234 = arith.constant 0 : index
      %645 = vector.load %arg8[%c0_233, %c0_234] : memref<8x128xf32, #tpu.memory_space<vmem>>, vector<8x128xf32>
      tpu.vector_store %arg8[%c0_233, %c0_234], %644 {strides = array<i32>} : memref<8x128xf32, #tpu.memory_space<vmem>>, vector<8x128xf32>,
      %cst_235 = arith.constant 0.000000e+00 : f32
      %646 = vector.broadcast %cst_235 : f32 to vector<8x128xf32>
      %c0_236 = arith.constant 0 : index
      %c0_237 = arith.constant 0 : index
      %647 = vector.load %arg9[%c0_236, %c0_237] : memref<8x128xf32, #tpu.memory_space<vmem>>, vector<8x128xf32>
      tpu.vector_store %arg9[%c0_236, %c0_237], %646 {strides = array<i32>} : memref<8x128xf32, #tpu.memory_space<vmem>>, vector<8x128xf32>,
    } else {
    }
    %c0 = arith.constant 0 : index
    %c0_1 = arith.constant 0 : index
    %c0_2 = arith.constant 0 : index
    %3 = vector.load %arg2[%c0, %c0_1, %c0_2] : memref<16x8x16xf32, #tpu.memory_space<vmem>>, vector<16x8x16xf32>
    %4 = vector.shape_cast %3 : vector<16x8x16xf32> to vector<128x16xf32>
    %c0_3 = arith.constant 0 : index
    %c0_4 = arith.constant 0 : index
    %5 = vector.load %arg3[%c0_3, %c0_4] : memref<16x512xf32, #tpu.memory_space<vmem>>, vector<16x512xf32>
    %cst = arith.constant dense<0.000000e+00> : vector<128x512xf32>
    %6 = tpu.matmul %4, %5, %cst {dimension_numbers = #tpu.dot_dimension_numbers<[1], [0], [0], [1], [0, 0, 1, 1], [], []>} : vector<128x16xf32>, vector<16x512xf32>, vector<128x512xf32> -> vector<128x512xf32>
    %c0_5 = arith.constant 0 : index
    %c0_6 = arith.constant 0 : index
    %7 = vector.load %arg5[%c0_5, %c0_6] : memref<1x512xf32, #tpu.memory_space<vmem>>, vector<1x512xf32>
    %8 = vector.broadcast %7 : vector<1x512xf32> to vector<128x512xf32>
    %9 = arith.addf %6, %8 : vector<128x512xf32>
    %10 = vector.shape_cast %9 : vector<128x512xf32> to vector<16x8x512xf32>
    %c0_7 = arith.constant 0 : index
    %c0_8 = arith.constant 0 : index
    %c0_9 = arith.constant 0 : index
    %11 = vector.load %arg10[%c0_7, %c0_8, %c0_9] : memref<16x8x512xf32, #tpu.memory_space<vmem>>, vector<16x8x512xf32>
    tpu.vector_store %arg10[%c0_7, %c0_8, %c0_9], %10 {strides = array<i32>} : memref<16x8x512xf32, #tpu.memory_space<vmem>>, vector<16x8x512xf32>,
    %c0_10 = arith.constant 0 : index
    %c0_11 = arith.constant 0 : index
    %12 = vector.load %arg4[%c0_10, %c0_11] : memref<128x512xf32, #tpu.memory_space<vmem>>, vector<128x512xf32>
    %c0_12 = arith.constant 0 : index
    %c0_13 = arith.constant 0 : index
    %13 = vector.load %arg8[%c0_12, %c0_13] : memref<8x128xf32, #tpu.memory_space<vmem>>, vector<8x128xf32>
    %c0_14 = arith.constant 0 : index
    %c0_15 = arith.constant 0 : index
    %14 = vector.load %arg9[%c0_14, %c0_15] : memref<8x128xf32, #tpu.memory_space<vmem>>, vector<8x128xf32>
    %c0_i32_16 = arith.constant 0 : i32
    %15 = arith.index_cast %c0_i32_16 : i32 to index
    %c0_17 = arith.constant 0 : index
    %c0_18 = arith.constant 0 : index
    %16 = vector.load %arg10[%15, %c0_17, %c0_18] : memref<16x8x512xf32, #tpu.memory_space<vmem>>, vector<1x8x512xf32>
    %17 = vector.shape_cast %16 : vector<1x8x512xf32> to vector<8x512xf32>
    %cst_19 = arith.constant dense<0.000000e+00> : vector<8x512xf32>
    %18 = tpu.matmul %13, %12, %cst_19 {dimension_numbers = #tpu.dot_dimension_numbers<[1], [0], [0], [1], [0, 0, 1, 1], [], []>} : vector<8x128xf32>, vector<128x512xf32>, vector<8x512xf32> -> vector<8x512xf32>
    %19 = arith.addf %17, %18 : vector<8x512xf32>
    %20 = vector.extract_strided_slice %19 {offsets = [0, 0], sizes = [8, 128], strides = [1, 1]} : vector<8x512xf32> to vector<8x128xf32>
    %21 = arith.negf %20 : vector<8x128xf32>
    %22 = math.exp %21 : vector<8x128xf32>
    %cst_20 = arith.constant 1.000000e+00 : f32
    %23 = vector.broadcast %cst_20 : f32 to vector<8x128xf32>
    %24 = arith.addf %23, %22 : vector<8x128xf32>
    %25 = arith.divf %23, %24 : vector<8x128xf32>
    %26 = vector.extract_strided_slice %19 {offsets = [0, 128], sizes = [8, 128], strides = [1, 1]} : vector<8x512xf32> to vector<8x128xf32>
    %27 = arith.negf %26 : vector<8x128xf32>
    %28 = math.exp %27 : vector<8x128xf32>
    %cst_21 = arith.constant 1.000000e+00 : f32
    %29 = vector.broadcast %cst_21 : f32 to vector<8x128xf32>
    %30 = arith.addf %29, %28 : vector<8x128xf32>
    %31 = arith.divf %29, %30 : vector<8x128xf32>
    %32 = vector.extract_strided_slice %19 {offsets = [0, 256], sizes = [8, 128], strides = [1, 1]} : vector<8x512xf32> to vector<8x128xf32>
    %33 = math.tanh %32 : vector<8x128xf32>
    %34 = vector.extract_strided_slice %19 {offsets = [0, 384], sizes = [8, 128], strides = [1, 1]} : vector<8x512xf32> to vector<8x128xf32>
    %35 = arith.negf %34 : vector<8x128xf32>
    %36 = math.exp %35 : vector<8x128xf32>
    %cst_22 = arith.constant 1.000000e+00 : f32
    %37 = vector.broadcast %cst_22 : f32 to vector<8x128xf32>
    %38 = arith.addf %37, %36 : vector<8x128xf32>
    %39 = arith.divf %37, %38 : vector<8x128xf32>
    %40 = arith.mulf %31, %14 : vector<8x128xf32>
    %41 = arith.mulf %25, %33 : vector<8x128xf32>
    %42 = arith.addf %40, %41 : vector<8x128xf32>
    %43 = math.tanh %42 : vector<8x128xf32>
    %44 = arith.mulf %39, %43 : vector<8x128xf32>
    %45 = arith.index_cast %c0_i32_16 : i32 to index
    %c0_23 = arith.constant 0 : index
    %c0_24 = arith.constant 0 : index
    %46 = vector.load %arg11[%45, %c0_23, %c0_24] : memref<16x8x128xf32, #tpu.memory_space<vmem>>, vector<1x8x128xf32>
    %47 = vector.shape_cast %46 : vector<1x8x128xf32> to vector<8x128xf32>
    %48 = vector.shape_cast %44 : vector<8x128xf32> to vector<1x8x128xf32>
    tpu.vector_store %arg11[%45, %c0_23, %c0_24], %48 {strides = array<i32>} : memref<16x8x128xf32, #tpu.memory_space<vmem>>, vector<1x8x128xf32>,
    %c1_i32 = arith.constant 1 : i32
    %49 = arith.index_cast %c1_i32 : i32 to index
    %c0_25 = arith.constant 0 : index
    %c0_26 = arith.constant 0 : index
    %50 = vector.load %arg10[%49, %c0_25, %c0_26] : memref<16x8x512xf32, #tpu.memory_space<vmem>>, vector<1x8x512xf32>
    %51 = vector.shape_cast %50 : vector<1x8x512xf32> to vector<8x512xf32>
    %cst_27 = arith.constant dense<0.000000e+00> : vector<8x512xf32>
    %52 = tpu.matmul %44, %12, %cst_27 {dimension_numbers = #tpu.dot_dimension_numbers<[1], [0], [0], [1], [0, 0, 1, 1], [], []>} : vector<8x128xf32>, vector<128x512xf32>, vector<8x512xf32> -> vector<8x512xf32>
    %53 = arith.addf %51, %52 : vector<8x512xf32>
    %54 = vector.extract_strided_slice %53 {offsets = [0, 0], sizes = [8, 128], strides = [1, 1]} : vector<8x512xf32> to vector<8x128xf32>
    %55 = arith.negf %54 : vector<8x128xf32>
    %56 = math.exp %55 : vector<8x128xf32>
    %cst_28 = arith.constant 1.000000e+00 : f32
    %57 = vector.broadcast %cst_28 : f32 to vector<8x128xf32>
    %58 = arith.addf %57, %56 : vector<8x128xf32>
    %59 = arith.divf %57, %58 : vector<8x128xf32>
    %60 = vector.extract_strided_slice %53 {offsets = [0, 128], sizes = [8, 128], strides = [1, 1]} : vector<8x512xf32> to vector<8x128xf32>
    %61 = arith.negf %60 : vector<8x128xf32>
    %62 = math.exp %61 : vector<8x128xf32>
    %cst_29 = arith.constant 1.000000e+00 : f32
    %63 = vector.broadcast %cst_29 : f32 to vector<8x128xf32>
    %64 = arith.addf %63, %62 : vector<8x128xf32>
    %65 = arith.divf %63, %64 : vector<8x128xf32>
    %66 = vector.extract_strided_slice %53 {offsets = [0, 256], sizes = [8, 128], strides = [1, 1]} : vector<8x512xf32> to vector<8x128xf32>
    %67 = math.tanh %66 : vector<8x128xf32>
    %68 = vector.extract_strided_slice %53 {offsets = [0, 384], sizes = [8, 128], strides = [1, 1]} : vector<8x512xf32> to vector<8x128xf32>
    %69 = arith.negf %68 : vector<8x128xf32>
    %70 = math.exp %69 : vector<8x128xf32>
    %cst_30 = arith.constant 1.000000e+00 : f32
    %71 = vector.broadcast %cst_30 : f32 to vector<8x128xf32>
    %72 = arith.addf %71, %70 : vector<8x128xf32>
    %73 = arith.divf %71, %72 : vector<8x128xf32>
    %74 = arith.mulf %65, %42 : vector<8x128xf32>
    %75 = arith.mulf %59, %67 : vector<8x128xf32>
    %76 = arith.addf %74, %75 : vector<8x128xf32>
    %77 = math.tanh %76 : vector<8x128xf32>
    %78 = arith.mulf %73, %77 : vector<8x128xf32>
    %79 = arith.index_cast %c1_i32 : i32 to index
    %c0_31 = arith.constant 0 : index
    %c0_32 = arith.constant 0 : index
    %80 = vector.load %arg11[%79, %c0_31, %c0_32] : memref<16x8x128xf32, #tpu.memory_space<vmem>>, vector<1x8x128xf32>
    %81 = vector.shape_cast %80 : vector<1x8x128xf32> to vector<8x128xf32>
    %82 = vector.shape_cast %78 : vector<8x128xf32> to vector<1x8x128xf32>
    tpu.vector_store %arg11[%79, %c0_31, %c0_32], %82 {strides = array<i32>} : memref<16x8x128xf32, #tpu.memory_space<vmem>>, vector<1x8x128xf32>,
    %c2_i32 = arith.constant 2 : i32
    %83 = arith.index_cast %c2_i32 : i32 to index
    %c0_33 = arith.constant 0 : index
    %c0_34 = arith.constant 0 : index
    %84 = vector.load %arg10[%83, %c0_33, %c0_34] : memref<16x8x512xf32, #tpu.memory_space<vmem>>, vector<1x8x512xf32>
    %85 = vector.shape_cast %84 : vector<1x8x512xf32> to vector<8x512xf32>
    %cst_35 = arith.constant dense<0.000000e+00> : vector<8x512xf32>
    %86 = tpu.matmul %78, %12, %cst_35 {dimension_numbers = #tpu.dot_dimension_numbers<[1], [0], [0], [1], [0, 0, 1, 1], [], []>} : vector<8x128xf32>, vector<128x512xf32>, vector<8x512xf32> -> vector<8x512xf32>
    %87 = arith.addf %85, %86 : vector<8x512xf32>
    %88 = vector.extract_strided_slice %87 {offsets = [0, 0], sizes = [8, 128], strides = [1, 1]} : vector<8x512xf32> to vector<8x128xf32>
    %89 = arith.negf %88 : vector<8x128xf32>
    %90 = math.exp %89 : vector<8x128xf32>
    %cst_36 = arith.constant 1.000000e+00 : f32
    %91 = vector.broadcast %cst_36 : f32 to vector<8x128xf32>
    %92 = arith.addf %91, %90 : vector<8x128xf32>
    %93 = arith.divf %91, %92 : vector<8x128xf32>
    %94 = vector.extract_strided_slice %87 {offsets = [0, 128], sizes = [8, 128], strides = [1, 1]} : vector<8x512xf32> to vector<8x128xf32>
    %95 = arith.negf %94 : vector<8x128xf32>
    %96 = math.exp %95 : vector<8x128xf32>
    %cst_37 = arith.constant 1.000000e+00 : f32
    %97 = vector.broadcast %cst_37 : f32 to vector<8x128xf32>
    %98 = arith.addf %97, %96 : vector<8x128xf32>
    %99 = arith.divf %97, %98 : vector<8x128xf32>
    %100 = vector.extract_strided_slice %87 {offsets = [0, 256], sizes = [8, 128], strides = [1, 1]} : vector<8x512xf32> to vector<8x128xf32>
    %101 = math.tanh %100 : vector<8x128xf32>
    %102 = vector.extract_strided_slice %87 {offsets = [0, 384], sizes = [8, 128], strides = [1, 1]} : vector<8x512xf32> to vector<8x128xf32>
    %103 = arith.negf %102 : vector<8x128xf32>
    %104 = math.exp %103 : vector<8x128xf32>
    %cst_38 = arith.constant 1.000000e+00 : f32
    %105 = vector.broadcast %cst_38 : f32 to vector<8x128xf32>
    %106 = arith.addf %105, %104 : vector<8x128xf32>
    %107 = arith.divf %105, %106 : vector<8x128xf32>
    %108 = arith.mulf %99, %76 : vector<8x128xf32>
    %109 = arith.mulf %93, %101 : vector<8x128xf32>
    %110 = arith.addf %108, %109 : vector<8x128xf32>
    %111 = math.tanh %110 : vector<8x128xf32>
    %112 = arith.mulf %107, %111 : vector<8x128xf32>
    %113 = arith.index_cast %c2_i32 : i32 to index
    %c0_39 = arith.constant 0 : index
    %c0_40 = arith.constant 0 : index
    %114 = vector.load %arg11[%113, %c0_39, %c0_40] : memref<16x8x128xf32, #tpu.memory_space<vmem>>, vector<1x8x128xf32>
    %115 = vector.shape_cast %114 : vector<1x8x128xf32> to vector<8x128xf32>
    %116 = vector.shape_cast %112 : vector<8x128xf32> to vector<1x8x128xf32>
    tpu.vector_store %arg11[%113, %c0_39, %c0_40], %116 {strides = array<i32>} : memref<16x8x128xf32, #tpu.memory_space<vmem>>, vector<1x8x128xf32>,
    %c3_i32 = arith.constant 3 : i32
    %117 = arith.index_cast %c3_i32 : i32 to index
    %c0_41 = arith.constant 0 : index
    %c0_42 = arith.constant 0 : index
    %118 = vector.load %arg10[%117, %c0_41, %c0_42] : memref<16x8x512xf32, #tpu.memory_space<vmem>>, vector<1x8x512xf32>
    %119 = vector.shape_cast %118 : vector<1x8x512xf32> to vector<8x512xf32>
    %cst_43 = arith.constant dense<0.000000e+00> : vector<8x512xf32>
    %120 = tpu.matmul %112, %12, %cst_43 {dimension_numbers = #tpu.dot_dimension_numbers<[1], [0], [0], [1], [0, 0, 1, 1], [], []>} : vector<8x128xf32>, vector<128x512xf32>, vector<8x512xf32> -> vector<8x512xf32>
    %121 = arith.addf %119, %120 : vector<8x512xf32>
    %122 = vector.extract_strided_slice %121 {offsets = [0, 0], sizes = [8, 128], strides = [1, 1]} : vector<8x512xf32> to vector<8x128xf32>
    %123 = arith.negf %122 : vector<8x128xf32>
    %124 = math.exp %123 : vector<8x128xf32>
    %cst_44 = arith.constant 1.000000e+00 : f32
    %125 = vector.broadcast %cst_44 : f32 to vector<8x128xf32>
    %126 = arith.addf %125, %124 : vector<8x128xf32>
    %127 = arith.divf %125, %126 : vector<8x128xf32>
    %128 = vector.extract_strided_slice %121 {offsets = [0, 128], sizes = [8, 128], strides = [1, 1]} : vector<8x512xf32> to vector<8x128xf32>
    %129 = arith.negf %128 : vector<8x128xf32>
    %130 = math.exp %129 : vector<8x128xf32>
    %cst_45 = arith.constant 1.000000e+00 : f32
    %131 = vector.broadcast %cst_45 : f32 to vector<8x128xf32>
    %132 = arith.addf %131, %130 : vector<8x128xf32>
    %133 = arith.divf %131, %132 : vector<8x128xf32>
    %134 = vector.extract_strided_slice %121 {offsets = [0, 256], sizes = [8, 128], strides = [1, 1]} : vector<8x512xf32> to vector<8x128xf32>
    %135 = math.tanh %134 : vector<8x128xf32>
    %136 = vector.extract_strided_slice %121 {offsets = [0, 384], sizes = [8, 128], strides = [1, 1]} : vector<8x512xf32> to vector<8x128xf32>
    %137 = arith.negf %136 : vector<8x128xf32>
    %138 = math.exp %137 : vector<8x128xf32>
    %cst_46 = arith.constant 1.000000e+00 : f32
    %139 = vector.broadcast %cst_46 : f32 to vector<8x128xf32>
    %140 = arith.addf %139, %138 : vector<8x128xf32>
    %141 = arith.divf %139, %140 : vector<8x128xf32>
    %142 = arith.mulf %133, %110 : vector<8x128xf32>
    %143 = arith.mulf %127, %135 : vector<8x128xf32>
    %144 = arith.addf %142, %143 : vector<8x128xf32>
    %145 = math.tanh %144 : vector<8x128xf32>
    %146 = arith.mulf %141, %145 : vector<8x128xf32>
    %147 = arith.index_cast %c3_i32 : i32 to index
    %c0_47 = arith.constant 0 : index
    %c0_48 = arith.constant 0 : index
    %148 = vector.load %arg11[%147, %c0_47, %c0_48] : memref<16x8x128xf32, #tpu.memory_space<vmem>>, vector<1x8x128xf32>
    %149 = vector.shape_cast %148 : vector<1x8x128xf32> to vector<8x128xf32>
    %150 = vector.shape_cast %146 : vector<8x128xf32> to vector<1x8x128xf32>
    tpu.vector_store %arg11[%147, %c0_47, %c0_48], %150 {strides = array<i32>} : memref<16x8x128xf32, #tpu.memory_space<vmem>>, vector<1x8x128xf32>,
    %c4_i32 = arith.constant 4 : i32
    %151 = arith.index_cast %c4_i32 : i32 to index
    %c0_49 = arith.constant 0 : index
    %c0_50 = arith.constant 0 : index
    %152 = vector.load %arg10[%151, %c0_49, %c0_50] : memref<16x8x512xf32, #tpu.memory_space<vmem>>, vector<1x8x512xf32>
    %153 = vector.shape_cast %152 : vector<1x8x512xf32> to vector<8x512xf32>
    %cst_51 = arith.constant dense<0.000000e+00> : vector<8x512xf32>
    %154 = tpu.matmul %146, %12, %cst_51 {dimension_numbers = #tpu.dot_dimension_numbers<[1], [0], [0], [1], [0, 0, 1, 1], [], []>} : vector<8x128xf32>, vector<128x512xf32>, vector<8x512xf32> -> vector<8x512xf32>
    %155 = arith.addf %153, %154 : vector<8x512xf32>
    %156 = vector.extract_strided_slice %155 {offsets = [0, 0], sizes = [8, 128], strides = [1, 1]} : vector<8x512xf32> to vector<8x128xf32>
    %157 = arith.negf %156 : vector<8x128xf32>
    %158 = math.exp %157 : vector<8x128xf32>
    %cst_52 = arith.constant 1.000000e+00 : f32
    %159 = vector.broadcast %cst_52 : f32 to vector<8x128xf32>
    %160 = arith.addf %159, %158 : vector<8x128xf32>
    %161 = arith.divf %159, %160 : vector<8x128xf32>
    %162 = vector.extract_strided_slice %155 {offsets = [0, 128], sizes = [8, 128], strides = [1, 1]} : vector<8x512xf32> to vector<8x128xf32>
    %163 = arith.negf %162 : vector<8x128xf32>
    %164 = math.exp %163 : vector<8x128xf32>
    %cst_53 = arith.constant 1.000000e+00 : f32
    %165 = vector.broadcast %cst_53 : f32 to vector<8x128xf32>
    %166 = arith.addf %165, %164 : vector<8x128xf32>
    %167 = arith.divf %165, %166 : vector<8x128xf32>
    %168 = vector.extract_strided_slice %155 {offsets = [0, 256], sizes = [8, 128], strides = [1, 1]} : vector<8x512xf32> to vector<8x128xf32>
    %169 = math.tanh %168 : vector<8x128xf32>
    %170 = vector.extract_strided_slice %155 {offsets = [0, 384], sizes = [8, 128], strides = [1, 1]} : vector<8x512xf32> to vector<8x128xf32>
    %171 = arith.negf %170 : vector<8x128xf32>
    %172 = math.exp %171 : vector<8x128xf32>
    %cst_54 = arith.constant 1.000000e+00 : f32
    %173 = vector.broadcast %cst_54 : f32 to vector<8x128xf32>
    %174 = arith.addf %173, %172 : vector<8x128xf32>
    %175 = arith.divf %173, %174 : vector<8x128xf32>
    %176 = arith.mulf %167, %144 : vector<8x128xf32>
    %177 = arith.mulf %161, %169 : vector<8x128xf32>
    %178 = arith.addf %176, %177 : vector<8x128xf32>
    %179 = math.tanh %178 : vector<8x128xf32>
    %180 = arith.mulf %175, %179 : vector<8x128xf32>
    %181 = arith.index_cast %c4_i32 : i32 to index
    %c0_55 = arith.constant 0 : index
    %c0_56 = arith.constant 0 : index
    %182 = vector.load %arg11[%181, %c0_55, %c0_56] : memref<16x8x128xf32, #tpu.memory_space<vmem>>, vector<1x8x128xf32>
    %183 = vector.shape_cast %182 : vector<1x8x128xf32> to vector<8x128xf32>
    %184 = vector.shape_cast %180 : vector<8x128xf32> to vector<1x8x128xf32>
    tpu.vector_store %arg11[%181, %c0_55, %c0_56], %184 {strides = array<i32>} : memref<16x8x128xf32, #tpu.memory_space<vmem>>, vector<1x8x128xf32>,
    %c5_i32 = arith.constant 5 : i32
    %185 = arith.index_cast %c5_i32 : i32 to index
    %c0_57 = arith.constant 0 : index
    %c0_58 = arith.constant 0 : index
    %186 = vector.load %arg10[%185, %c0_57, %c0_58] : memref<16x8x512xf32, #tpu.memory_space<vmem>>, vector<1x8x512xf32>
    %187 = vector.shape_cast %186 : vector<1x8x512xf32> to vector<8x512xf32>
    %cst_59 = arith.constant dense<0.000000e+00> : vector<8x512xf32>
    %188 = tpu.matmul %180, %12, %cst_59 {dimension_numbers = #tpu.dot_dimension_numbers<[1], [0], [0], [1], [0, 0, 1, 1], [], []>} : vector<8x128xf32>, vector<128x512xf32>, vector<8x512xf32> -> vector<8x512xf32>
    %189 = arith.addf %187, %188 : vector<8x512xf32>
    %190 = vector.extract_strided_slice %189 {offsets = [0, 0], sizes = [8, 128], strides = [1, 1]} : vector<8x512xf32> to vector<8x128xf32>
    %191 = arith.negf %190 : vector<8x128xf32>
    %192 = math.exp %191 : vector<8x128xf32>
    %cst_60 = arith.constant 1.000000e+00 : f32
    %193 = vector.broadcast %cst_60 : f32 to vector<8x128xf32>
    %194 = arith.addf %193, %192 : vector<8x128xf32>
    %195 = arith.divf %193, %194 : vector<8x128xf32>
    %196 = vector.extract_strided_slice %189 {offsets = [0, 128], sizes = [8, 128], strides = [1, 1]} : vector<8x512xf32> to vector<8x128xf32>
    %197 = arith.negf %196 : vector<8x128xf32>
    %198 = math.exp %197 : vector<8x128xf32>
    %cst_61 = arith.constant 1.000000e+00 : f32
    %199 = vector.broadcast %cst_61 : f32 to vector<8x128xf32>
    %200 = arith.addf %199, %198 : vector<8x128xf32>
    %201 = arith.divf %199, %200 : vector<8x128xf32>
    %202 = vector.extract_strided_slice %189 {offsets = [0, 256], sizes = [8, 128], strides = [1, 1]} : vector<8x512xf32> to vector<8x128xf32>
    %203 = math.tanh %202 : vector<8x128xf32>
    %204 = vector.extract_strided_slice %189 {offsets = [0, 384], sizes = [8, 128], strides = [1, 1]} : vector<8x512xf32> to vector<8x128xf32>
    %205 = arith.negf %204 : vector<8x128xf32>
    %206 = math.exp %205 : vector<8x128xf32>
    %cst_62 = arith.constant 1.000000e+00 : f32
    %207 = vector.broadcast %cst_62 : f32 to vector<8x128xf32>
    %208 = arith.addf %207, %206 : vector<8x128xf32>
    %209 = arith.divf %207, %208 : vector<8x128xf32>
    %210 = arith.mulf %201, %178 : vector<8x128xf32>
    %211 = arith.mulf %195, %203 : vector<8x128xf32>
    %212 = arith.addf %210, %211 : vector<8x128xf32>
    %213 = math.tanh %212 : vector<8x128xf32>
    %214 = arith.mulf %209, %213 : vector<8x128xf32>
    %215 = arith.index_cast %c5_i32 : i32 to index
    %c0_63 = arith.constant 0 : index
    %c0_64 = arith.constant 0 : index
    %216 = vector.load %arg11[%215, %c0_63, %c0_64] : memref<16x8x128xf32, #tpu.memory_space<vmem>>, vector<1x8x128xf32>
    %217 = vector.shape_cast %216 : vector<1x8x128xf32> to vector<8x128xf32>
    %218 = vector.shape_cast %214 : vector<8x128xf32> to vector<1x8x128xf32>
    tpu.vector_store %arg11[%215, %c0_63, %c0_64], %218 {strides = array<i32>} : memref<16x8x128xf32, #tpu.memory_space<vmem>>, vector<1x8x128xf32>,
    %c6_i32 = arith.constant 6 : i32
    %219 = arith.index_cast %c6_i32 : i32 to index
    %c0_65 = arith.constant 0 : index
    %c0_66 = arith.constant 0 : index
    %220 = vector.load %arg10[%219, %c0_65, %c0_66] : memref<16x8x512xf32, #tpu.memory_space<vmem>>, vector<1x8x512xf32>
    %221 = vector.shape_cast %220 : vector<1x8x512xf32> to vector<8x512xf32>
    %cst_67 = arith.constant dense<0.000000e+00> : vector<8x512xf32>
    %222 = tpu.matmul %214, %12, %cst_67 {dimension_numbers = #tpu.dot_dimension_numbers<[1], [0], [0], [1], [0, 0, 1, 1], [], []>} : vector<8x128xf32>, vector<128x512xf32>, vector<8x512xf32> -> vector<8x512xf32>
    %223 = arith.addf %221, %222 : vector<8x512xf32>
    %224 = vector.extract_strided_slice %223 {offsets = [0, 0], sizes = [8, 128], strides = [1, 1]} : vector<8x512xf32> to vector<8x128xf32>
    %225 = arith.negf %224 : vector<8x128xf32>
    %226 = math.exp %225 : vector<8x128xf32>
    %cst_68 = arith.constant 1.000000e+00 : f32
    %227 = vector.broadcast %cst_68 : f32 to vector<8x128xf32>
    %228 = arith.addf %227, %226 : vector<8x128xf32>
    %229 = arith.divf %227, %228 : vector<8x128xf32>
    %230 = vector.extract_strided_slice %223 {offsets = [0, 128], sizes = [8, 128], strides = [1, 1]} : vector<8x512xf32> to vector<8x128xf32>
    %231 = arith.negf %230 : vector<8x128xf32>
    %232 = math.exp %231 : vector<8x128xf32>
    %cst_69 = arith.constant 1.000000e+00 : f32
    %233 = vector.broadcast %cst_69 : f32 to vector<8x128xf32>
    %234 = arith.addf %233, %232 : vector<8x128xf32>
    %235 = arith.divf %233, %234 : vector<8x128xf32>
    %236 = vector.extract_strided_slice %223 {offsets = [0, 256], sizes = [8, 128], strides = [1, 1]} : vector<8x512xf32> to vector<8x128xf32>
    %237 = math.tanh %236 : vector<8x128xf32>
    %238 = vector.extract_strided_slice %223 {offsets = [0, 384], sizes = [8, 128], strides = [1, 1]} : vector<8x512xf32> to vector<8x128xf32>
    %239 = arith.negf %238 : vector<8x128xf32>
    %240 = math.exp %239 : vector<8x128xf32>
    %cst_70 = arith.constant 1.000000e+00 : f32
    %241 = vector.broadcast %cst_70 : f32 to vector<8x128xf32>
    %242 = arith.addf %241, %240 : vector<8x128xf32>
    %243 = arith.divf %241, %242 : vector<8x128xf32>
    %244 = arith.mulf %235, %212 : vector<8x128xf32>
    %245 = arith.mulf %229, %237 : vector<8x128xf32>
    %246 = arith.addf %244, %245 : vector<8x128xf32>
    %247 = math.tanh %246 : vector<8x128xf32>
    %248 = arith.mulf %243, %247 : vector<8x128xf32>
    %249 = arith.index_cast %c6_i32 : i32 to index
    %c0_71 = arith.constant 0 : index
    %c0_72 = arith.constant 0 : index
    %250 = vector.load %arg11[%249, %c0_71, %c0_72] : memref<16x8x128xf32, #tpu.memory_space<vmem>>, vector<1x8x128xf32>
    %251 = vector.shape_cast %250 : vector<1x8x128xf32> to vector<8x128xf32>
    %252 = vector.shape_cast %248 : vector<8x128xf32> to vector<1x8x128xf32>
    tpu.vector_store %arg11[%249, %c0_71, %c0_72], %252 {strides = array<i32>} : memref<16x8x128xf32, #tpu.memory_space<vmem>>, vector<1x8x128xf32>,
    %c7_i32 = arith.constant 7 : i32
    %253 = arith.index_cast %c7_i32 : i32 to index
    %c0_73 = arith.constant 0 : index
    %c0_74 = arith.constant 0 : index
    %254 = vector.load %arg10[%253, %c0_73, %c0_74] : memref<16x8x512xf32, #tpu.memory_space<vmem>>, vector<1x8x512xf32>
    %255 = vector.shape_cast %254 : vector<1x8x512xf32> to vector<8x512xf32>
    %cst_75 = arith.constant dense<0.000000e+00> : vector<8x512xf32>
    %256 = tpu.matmul %248, %12, %cst_75 {dimension_numbers = #tpu.dot_dimension_numbers<[1], [0], [0], [1], [0, 0, 1, 1], [], []>} : vector<8x128xf32>, vector<128x512xf32>, vector<8x512xf32> -> vector<8x512xf32>
    %257 = arith.addf %255, %256 : vector<8x512xf32>
    %258 = vector.extract_strided_slice %257 {offsets = [0, 0], sizes = [8, 128], strides = [1, 1]} : vector<8x512xf32> to vector<8x128xf32>
    %259 = arith.negf %258 : vector<8x128xf32>
    %260 = math.exp %259 : vector<8x128xf32>
    %cst_76 = arith.constant 1.000000e+00 : f32
    %261 = vector.broadcast %cst_76 : f32 to vector<8x128xf32>
    %262 = arith.addf %261, %260 : vector<8x128xf32>
    %263 = arith.divf %261, %262 : vector<8x128xf32>
    %264 = vector.extract_strided_slice %257 {offsets = [0, 128], sizes = [8, 128], strides = [1, 1]} : vector<8x512xf32> to vector<8x128xf32>
    %265 = arith.negf %264 : vector<8x128xf32>
    %266 = math.exp %265 : vector<8x128xf32>
    %cst_77 = arith.constant 1.000000e+00 : f32
    %267 = vector.broadcast %cst_77 : f32 to vector<8x128xf32>
    %268 = arith.addf %267, %266 : vector<8x128xf32>
    %269 = arith.divf %267, %268 : vector<8x128xf32>
    %270 = vector.extract_strided_slice %257 {offsets = [0, 256], sizes = [8, 128], strides = [1, 1]} : vector<8x512xf32> to vector<8x128xf32>
    %271 = math.tanh %270 : vector<8x128xf32>
    %272 = vector.extract_strided_slice %257 {offsets = [0, 384], sizes = [8, 128], strides = [1, 1]} : vector<8x512xf32> to vector<8x128xf32>
    %273 = arith.negf %272 : vector<8x128xf32>
    %274 = math.exp %273 : vector<8x128xf32>
    %cst_78 = arith.constant 1.000000e+00 : f32
    %275 = vector.broadcast %cst_78 : f32 to vector<8x128xf32>
    %276 = arith.addf %275, %274 : vector<8x128xf32>
    %277 = arith.divf %275, %276 : vector<8x128xf32>
    %278 = arith.mulf %269, %246 : vector<8x128xf32>
    %279 = arith.mulf %263, %271 : vector<8x128xf32>
    %280 = arith.addf %278, %279 : vector<8x128xf32>
    %281 = math.tanh %280 : vector<8x128xf32>
    %282 = arith.mulf %277, %281 : vector<8x128xf32>
    %283 = arith.index_cast %c7_i32 : i32 to index
    %c0_79 = arith.constant 0 : index
    %c0_80 = arith.constant 0 : index
    %284 = vector.load %arg11[%283, %c0_79, %c0_80] : memref<16x8x128xf32, #tpu.memory_space<vmem>>, vector<1x8x128xf32>
    %285 = vector.shape_cast %284 : vector<1x8x128xf32> to vector<8x128xf32>
    %286 = vector.shape_cast %282 : vector<8x128xf32> to vector<1x8x128xf32>
    tpu.vector_store %arg11[%283, %c0_79, %c0_80], %286 {strides = array<i32>} : memref<16x8x128xf32, #tpu.memory_space<vmem>>, vector<1x8x128xf32>,
    %c8_i32 = arith.constant 8 : i32
    %287 = arith.index_cast %c8_i32 : i32 to index
    %c0_81 = arith.constant 0 : index
    %c0_82 = arith.constant 0 : index
    %288 = vector.load %arg10[%287, %c0_81, %c0_82] : memref<16x8x512xf32, #tpu.memory_space<vmem>>, vector<1x8x512xf32>
    %289 = vector.shape_cast %288 : vector<1x8x512xf32> to vector<8x512xf32>
    %cst_83 = arith.constant dense<0.000000e+00> : vector<8x512xf32>
    %290 = tpu.matmul %282, %12, %cst_83 {dimension_numbers = #tpu.dot_dimension_numbers<[1], [0], [0], [1], [0, 0, 1, 1], [], []>} : vector<8x128xf32>, vector<128x512xf32>, vector<8x512xf32> -> vector<8x512xf32>
    %291 = arith.addf %289, %290 : vector<8x512xf32>
    %292 = vector.extract_strided_slice %291 {offsets = [0, 0], sizes = [8, 128], strides = [1, 1]} : vector<8x512xf32> to vector<8x128xf32>
    %293 = arith.negf %292 : vector<8x128xf32>
    %294 = math.exp %293 : vector<8x128xf32>
    %cst_84 = arith.constant 1.000000e+00 : f32
    %295 = vector.broadcast %cst_84 : f32 to vector<8x128xf32>
    %296 = arith.addf %295, %294 : vector<8x128xf32>
    %297 = arith.divf %295, %296 : vector<8x128xf32>
    %298 = vector.extract_strided_slice %291 {offsets = [0, 128], sizes = [8, 128], strides = [1, 1]} : vector<8x512xf32> to vector<8x128xf32>
    %299 = arith.negf %298 : vector<8x128xf32>
    %300 = math.exp %299 : vector<8x128xf32>
    %cst_85 = arith.constant 1.000000e+00 : f32
    %301 = vector.broadcast %cst_85 : f32 to vector<8x128xf32>
    %302 = arith.addf %301, %300 : vector<8x128xf32>
    %303 = arith.divf %301, %302 : vector<8x128xf32>
    %304 = vector.extract_strided_slice %291 {offsets = [0, 256], sizes = [8, 128], strides = [1, 1]} : vector<8x512xf32> to vector<8x128xf32>
    %305 = math.tanh %304 : vector<8x128xf32>
    %306 = vector.extract_strided_slice %291 {offsets = [0, 384], sizes = [8, 128], strides = [1, 1]} : vector<8x512xf32> to vector<8x128xf32>
    %307 = arith.negf %306 : vector<8x128xf32>
    %308 = math.exp %307 : vector<8x128xf32>
    %cst_86 = arith.constant 1.000000e+00 : f32
    %309 = vector.broadcast %cst_86 : f32 to vector<8x128xf32>
    %310 = arith.addf %309, %308 : vector<8x128xf32>
    %311 = arith.divf %309, %310 : vector<8x128xf32>
    %312 = arith.mulf %303, %280 : vector<8x128xf32>
    %313 = arith.mulf %297, %305 : vector<8x128xf32>
    %314 = arith.addf %312, %313 : vector<8x128xf32>
    %315 = math.tanh %314 : vector<8x128xf32>
    %316 = arith.mulf %311, %315 : vector<8x128xf32>
    %317 = arith.index_cast %c8_i32 : i32 to index
    %c0_87 = arith.constant 0 : index
    %c0_88 = arith.constant 0 : index
    %318 = vector.load %arg11[%317, %c0_87, %c0_88] : memref<16x8x128xf32, #tpu.memory_space<vmem>>, vector<1x8x128xf32>
    %319 = vector.shape_cast %318 : vector<1x8x128xf32> to vector<8x128xf32>
    %320 = vector.shape_cast %316 : vector<8x128xf32> to vector<1x8x128xf32>
    tpu.vector_store %arg11[%317, %c0_87, %c0_88], %320 {strides = array<i32>} : memref<16x8x128xf32, #tpu.memory_space<vmem>>, vector<1x8x128xf32>,
    %c9_i32 = arith.constant 9 : i32
    %321 = arith.index_cast %c9_i32 : i32 to index
    %c0_89 = arith.constant 0 : index
    %c0_90 = arith.constant 0 : index
    %322 = vector.load %arg10[%321, %c0_89, %c0_90] : memref<16x8x512xf32, #tpu.memory_space<vmem>>, vector<1x8x512xf32>
    %323 = vector.shape_cast %322 : vector<1x8x512xf32> to vector<8x512xf32>
    %cst_91 = arith.constant dense<0.000000e+00> : vector<8x512xf32>
    %324 = tpu.matmul %316, %12, %cst_91 {dimension_numbers = #tpu.dot_dimension_numbers<[1], [0], [0], [1], [0, 0, 1, 1], [], []>} : vector<8x128xf32>, vector<128x512xf32>, vector<8x512xf32> -> vector<8x512xf32>
    %325 = arith.addf %323, %324 : vector<8x512xf32>
    %326 = vector.extract_strided_slice %325 {offsets = [0, 0], sizes = [8, 128], strides = [1, 1]} : vector<8x512xf32> to vector<8x128xf32>
    %327 = arith.negf %326 : vector<8x128xf32>
    %328 = math.exp %327 : vector<8x128xf32>
    %cst_92 = arith.constant 1.000000e+00 : f32
    %329 = vector.broadcast %cst_92 : f32 to vector<8x128xf32>
    %330 = arith.addf %329, %328 : vector<8x128xf32>
    %331 = arith.divf %329, %330 : vector<8x128xf32>
    %332 = vector.extract_strided_slice %325 {offsets = [0, 128], sizes = [8, 128], strides = [1, 1]} : vector<8x512xf32> to vector<8x128xf32>
    %333 = arith.negf %332 : vector<8x128xf32>
    %334 = math.exp %333 : vector<8x128xf32>
    %cst_93 = arith.constant 1.000000e+00 : f32
    %335 = vector.broadcast %cst_93 : f32 to vector<8x128xf32>
    %336 = arith.addf %335, %334 : vector<8x128xf32>
    %337 = arith.divf %335, %336 : vector<8x128xf32>
    %338 = vector.extract_strided_slice %325 {offsets = [0, 256], sizes = [8, 128], strides = [1, 1]} : vector<8x512xf32> to vector<8x128xf32>
    %339 = math.tanh %338 : vector<8x128xf32>
    %340 = vector.extract_strided_slice %325 {offsets = [0, 384], sizes = [8, 128], strides = [1, 1]} : vector<8x512xf32> to vector<8x128xf32>
    %341 = arith.negf %340 : vector<8x128xf32>
    %342 = math.exp %341 : vector<8x128xf32>
    %cst_94 = arith.constant 1.000000e+00 : f32
    %343 = vector.broadcast %cst_94 : f32 to vector<8x128xf32>
    %344 = arith.addf %343, %342 : vector<8x128xf32>
    %345 = arith.divf %343, %344 : vector<8x128xf32>
    %346 = arith.mulf %337, %314 : vector<8x128xf32>
    %347 = arith.mulf %331, %339 : vector<8x128xf32>
    %348 = arith.addf %346, %347 : vector<8x128xf32>
    %349 = math.tanh %348 : vector<8x128xf32>
    %350 = arith.mulf %345, %349 : vector<8x128xf32>
    %351 = arith.index_cast %c9_i32 : i32 to index
    %c0_95 = arith.constant 0 : index
    %c0_96 = arith.constant 0 : index
    %352 = vector.load %arg11[%351, %c0_95, %c0_96] : memref<16x8x128xf32, #tpu.memory_space<vmem>>, vector<1x8x128xf32>
    %353 = vector.shape_cast %352 : vector<1x8x128xf32> to vector<8x128xf32>
    %354 = vector.shape_cast %350 : vector<8x128xf32> to vector<1x8x128xf32>
    tpu.vector_store %arg11[%351, %c0_95, %c0_96], %354 {strides = array<i32>} : memref<16x8x128xf32, #tpu.memory_space<vmem>>, vector<1x8x128xf32>,
    %c10_i32 = arith.constant 10 : i32
    %355 = arith.index_cast %c10_i32 : i32 to index
    %c0_97 = arith.constant 0 : index
    %c0_98 = arith.constant 0 : index
    %356 = vector.load %arg10[%355, %c0_97, %c0_98] : memref<16x8x512xf32, #tpu.memory_space<vmem>>, vector<1x8x512xf32>
    %357 = vector.shape_cast %356 : vector<1x8x512xf32> to vector<8x512xf32>
    %cst_99 = arith.constant dense<0.000000e+00> : vector<8x512xf32>
    %358 = tpu.matmul %350, %12, %cst_99 {dimension_numbers = #tpu.dot_dimension_numbers<[1], [0], [0], [1], [0, 0, 1, 1], [], []>} : vector<8x128xf32>, vector<128x512xf32>, vector<8x512xf32> -> vector<8x512xf32>
    %359 = arith.addf %357, %358 : vector<8x512xf32>
    %360 = vector.extract_strided_slice %359 {offsets = [0, 0], sizes = [8, 128], strides = [1, 1]} : vector<8x512xf32> to vector<8x128xf32>
    %361 = arith.negf %360 : vector<8x128xf32>
    %362 = math.exp %361 : vector<8x128xf32>
    %cst_100 = arith.constant 1.000000e+00 : f32
    %363 = vector.broadcast %cst_100 : f32 to vector<8x128xf32>
    %364 = arith.addf %363, %362 : vector<8x128xf32>
    %365 = arith.divf %363, %364 : vector<8x128xf32>
    %366 = vector.extract_strided_slice %359 {offsets = [0, 128], sizes = [8, 128], strides = [1, 1]} : vector<8x512xf32> to vector<8x128xf32>
    %367 = arith.negf %366 : vector<8x128xf32>
    %368 = math.exp %367 : vector<8x128xf32>
    %cst_101 = arith.constant 1.000000e+00 : f32
    %369 = vector.broadcast %cst_101 : f32 to vector<8x128xf32>
    %370 = arith.addf %369, %368 : vector<8x128xf32>
    %371 = arith.divf %369, %370 : vector<8x128xf32>
    %372 = vector.extract_strided_slice %359 {offsets = [0, 256], sizes = [8, 128], strides = [1, 1]} : vector<8x512xf32> to vector<8x128xf32>
    %373 = math.tanh %372 : vector<8x128xf32>
    %374 = vector.extract_strided_slice %359 {offsets = [0, 384], sizes = [8, 128], strides = [1, 1]} : vector<8x512xf32> to vector<8x128xf32>
    %375 = arith.negf %374 : vector<8x128xf32>
    %376 = math.exp %375 : vector<8x128xf32>
    %cst_102 = arith.constant 1.000000e+00 : f32
    %377 = vector.broadcast %cst_102 : f32 to vector<8x128xf32>
    %378 = arith.addf %377, %376 : vector<8x128xf32>
    %379 = arith.divf %377, %378 : vector<8x128xf32>
    %380 = arith.mulf %371, %348 : vector<8x128xf32>
    %381 = arith.mulf %365, %373 : vector<8x128xf32>
    %382 = arith.addf %380, %381 : vector<8x128xf32>
    %383 = math.tanh %382 : vector<8x128xf32>
    %384 = arith.mulf %379, %383 : vector<8x128xf32>
    %385 = arith.index_cast %c10_i32 : i32 to index
    %c0_103 = arith.constant 0 : index
    %c0_104 = arith.constant 0 : index
    %386 = vector.load %arg11[%385, %c0_103, %c0_104] : memref<16x8x128xf32, #tpu.memory_space<vmem>>, vector<1x8x128xf32>
    %387 = vector.shape_cast %386 : vector<1x8x128xf32> to vector<8x128xf32>
    %388 = vector.shape_cast %384 : vector<8x128xf32> to vector<1x8x128xf32>
    tpu.vector_store %arg11[%385, %c0_103, %c0_104], %388 {strides = array<i32>} : memref<16x8x128xf32, #tpu.memory_space<vmem>>, vector<1x8x128xf32>,
    %c11_i32 = arith.constant 11 : i32
    %389 = arith.index_cast %c11_i32 : i32 to index
    %c0_105 = arith.constant 0 : index
    %c0_106 = arith.constant 0 : index
    %390 = vector.load %arg10[%389, %c0_105, %c0_106] : memref<16x8x512xf32, #tpu.memory_space<vmem>>, vector<1x8x512xf32>
    %391 = vector.shape_cast %390 : vector<1x8x512xf32> to vector<8x512xf32>
    %cst_107 = arith.constant dense<0.000000e+00> : vector<8x512xf32>
    %392 = tpu.matmul %384, %12, %cst_107 {dimension_numbers = #tpu.dot_dimension_numbers<[1], [0], [0], [1], [0, 0, 1, 1], [], []>} : vector<8x128xf32>, vector<128x512xf32>, vector<8x512xf32> -> vector<8x512xf32>
    %393 = arith.addf %391, %392 : vector<8x512xf32>
    %394 = vector.extract_strided_slice %393 {offsets = [0, 0], sizes = [8, 128], strides = [1, 1]} : vector<8x512xf32> to vector<8x128xf32>
    %395 = arith.negf %394 : vector<8x128xf32>
    %396 = math.exp %395 : vector<8x128xf32>
    %cst_108 = arith.constant 1.000000e+00 : f32
    %397 = vector.broadcast %cst_108 : f32 to vector<8x128xf32>
    %398 = arith.addf %397, %396 : vector<8x128xf32>
    %399 = arith.divf %397, %398 : vector<8x128xf32>
    %400 = vector.extract_strided_slice %393 {offsets = [0, 128], sizes = [8, 128], strides = [1, 1]} : vector<8x512xf32> to vector<8x128xf32>
    %401 = arith.negf %400 : vector<8x128xf32>
    %402 = math.exp %401 : vector<8x128xf32>
    %cst_109 = arith.constant 1.000000e+00 : f32
    %403 = vector.broadcast %cst_109 : f32 to vector<8x128xf32>
    %404 = arith.addf %403, %402 : vector<8x128xf32>
    %405 = arith.divf %403, %404 : vector<8x128xf32>
    %406 = vector.extract_strided_slice %393 {offsets = [0, 256], sizes = [8, 128], strides = [1, 1]} : vector<8x512xf32> to vector<8x128xf32>
    %407 = math.tanh %406 : vector<8x128xf32>
    %408 = vector.extract_strided_slice %393 {offsets = [0, 384], sizes = [8, 128], strides = [1, 1]} : vector<8x512xf32> to vector<8x128xf32>
    %409 = arith.negf %408 : vector<8x128xf32>
    %410 = math.exp %409 : vector<8x128xf32>
    %cst_110 = arith.constant 1.000000e+00 : f32
    %411 = vector.broadcast %cst_110 : f32 to vector<8x128xf32>
    %412 = arith.addf %411, %410 : vector<8x128xf32>
    %413 = arith.divf %411, %412 : vector<8x128xf32>
    %414 = arith.mulf %405, %382 : vector<8x128xf32>
    %415 = arith.mulf %399, %407 : vector<8x128xf32>
    %416 = arith.addf %414, %415 : vector<8x128xf32>
    %417 = math.tanh %416 : vector<8x128xf32>
    %418 = arith.mulf %413, %417 : vector<8x128xf32>
    %419 = arith.index_cast %c11_i32 : i32 to index
    %c0_111 = arith.constant 0 : index
    %c0_112 = arith.constant 0 : index
    %420 = vector.load %arg11[%419, %c0_111, %c0_112] : memref<16x8x128xf32, #tpu.memory_space<vmem>>, vector<1x8x128xf32>
    %421 = vector.shape_cast %420 : vector<1x8x128xf32> to vector<8x128xf32>
    %422 = vector.shape_cast %418 : vector<8x128xf32> to vector<1x8x128xf32>
    tpu.vector_store %arg11[%419, %c0_111, %c0_112], %422 {strides = array<i32>} : memref<16x8x128xf32, #tpu.memory_space<vmem>>, vector<1x8x128xf32>,
    %c12_i32 = arith.constant 12 : i32
    %423 = arith.index_cast %c12_i32 : i32 to index
    %c0_113 = arith.constant 0 : index
    %c0_114 = arith.constant 0 : index
    %424 = vector.load %arg10[%423, %c0_113, %c0_114] : memref<16x8x512xf32, #tpu.memory_space<vmem>>, vector<1x8x512xf32>
    %425 = vector.shape_cast %424 : vector<1x8x512xf32> to vector<8x512xf32>
    %cst_115 = arith.constant dense<0.000000e+00> : vector<8x512xf32>
    %426 = tpu.matmul %418, %12, %cst_115 {dimension_numbers = #tpu.dot_dimension_numbers<[1], [0], [0], [1], [0, 0, 1, 1], [], []>} : vector<8x128xf32>, vector<128x512xf32>, vector<8x512xf32> -> vector<8x512xf32>
    %427 = arith.addf %425, %426 : vector<8x512xf32>
    %428 = vector.extract_strided_slice %427 {offsets = [0, 0], sizes = [8, 128], strides = [1, 1]} : vector<8x512xf32> to vector<8x128xf32>
    %429 = arith.negf %428 : vector<8x128xf32>
    %430 = math.exp %429 : vector<8x128xf32>
    %cst_116 = arith.constant 1.000000e+00 : f32
    %431 = vector.broadcast %cst_116 : f32 to vector<8x128xf32>
    %432 = arith.addf %431, %430 : vector<8x128xf32>
    %433 = arith.divf %431, %432 : vector<8x128xf32>
    %434 = vector.extract_strided_slice %427 {offsets = [0, 128], sizes = [8, 128], strides = [1, 1]} : vector<8x512xf32> to vector<8x128xf32>
    %435 = arith.negf %434 : vector<8x128xf32>
    %436 = math.exp %435 : vector<8x128xf32>
    %cst_117 = arith.constant 1.000000e+00 : f32
    %437 = vector.broadcast %cst_117 : f32 to vector<8x128xf32>
    %438 = arith.addf %437, %436 : vector<8x128xf32>
    %439 = arith.divf %437, %438 : vector<8x128xf32>
    %440 = vector.extract_strided_slice %427 {offsets = [0, 256], sizes = [8, 128], strides = [1, 1]} : vector<8x512xf32> to vector<8x128xf32>
    %441 = math.tanh %440 : vector<8x128xf32>
    %442 = vector.extract_strided_slice %427 {offsets = [0, 384], sizes = [8, 128], strides = [1, 1]} : vector<8x512xf32> to vector<8x128xf32>
    %443 = arith.negf %442 : vector<8x128xf32>
    %444 = math.exp %443 : vector<8x128xf32>
    %cst_118 = arith.constant 1.000000e+00 : f32
    %445 = vector.broadcast %cst_118 : f32 to vector<8x128xf32>
    %446 = arith.addf %445, %444 : vector<8x128xf32>
    %447 = arith.divf %445, %446 : vector<8x128xf32>
    %448 = arith.mulf %439, %416 : vector<8x128xf32>
    %449 = arith.mulf %433, %441 : vector<8x128xf32>
    %450 = arith.addf %448, %449 : vector<8x128xf32>
    %451 = math.tanh %450 : vector<8x128xf32>
    %452 = arith.mulf %447, %451 : vector<8x128xf32>
    %453 = arith.index_cast %c12_i32 : i32 to index
    %c0_119 = arith.constant 0 : index
    %c0_120 = arith.constant 0 : index
    %454 = vector.load %arg11[%453, %c0_119, %c0_120] : memref<16x8x128xf32, #tpu.memory_space<vmem>>, vector<1x8x128xf32>
    %455 = vector.shape_cast %454 : vector<1x8x128xf32> to vector<8x128xf32>
    %456 = vector.shape_cast %452 : vector<8x128xf32> to vector<1x8x128xf32>
    tpu.vector_store %arg11[%453, %c0_119, %c0_120], %456 {strides = array<i32>} : memref<16x8x128xf32, #tpu.memory_space<vmem>>, vector<1x8x128xf32>,
    %c13_i32 = arith.constant 13 : i32
    %457 = arith.index_cast %c13_i32 : i32 to index
    %c0_121 = arith.constant 0 : index
    %c0_122 = arith.constant 0 : index
    %458 = vector.load %arg10[%457, %c0_121, %c0_122] : memref<16x8x512xf32, #tpu.memory_space<vmem>>, vector<1x8x512xf32>
    %459 = vector.shape_cast %458 : vector<1x8x512xf32> to vector<8x512xf32>
    %cst_123 = arith.constant dense<0.000000e+00> : vector<8x512xf32>
    %460 = tpu.matmul %452, %12, %cst_123 {dimension_numbers = #tpu.dot_dimension_numbers<[1], [0], [0], [1], [0, 0, 1, 1], [], []>} : vector<8x128xf32>, vector<128x512xf32>, vector<8x512xf32> -> vector<8x512xf32>
    %461 = arith.addf %459, %460 : vector<8x512xf32>
    %462 = vector.extract_strided_slice %461 {offsets = [0, 0], sizes = [8, 128], strides = [1, 1]} : vector<8x512xf32> to vector<8x128xf32>
    %463 = arith.negf %462 : vector<8x128xf32>
    %464 = math.exp %463 : vector<8x128xf32>
    %cst_124 = arith.constant 1.000000e+00 : f32
    %465 = vector.broadcast %cst_124 : f32 to vector<8x128xf32>
    %466 = arith.addf %465, %464 : vector<8x128xf32>
    %467 = arith.divf %465, %466 : vector<8x128xf32>
    %468 = vector.extract_strided_slice %461 {offsets = [0, 128], sizes = [8, 128], strides = [1, 1]} : vector<8x512xf32> to vector<8x128xf32>
    %469 = arith.negf %468 : vector<8x128xf32>
    %470 = math.exp %469 : vector<8x128xf32>
    %cst_125 = arith.constant 1.000000e+00 : f32
    %471 = vector.broadcast %cst_125 : f32 to vector<8x128xf32>
    %472 = arith.addf %471, %470 : vector<8x128xf32>
    %473 = arith.divf %471, %472 : vector<8x128xf32>
    %474 = vector.extract_strided_slice %461 {offsets = [0, 256], sizes = [8, 128], strides = [1, 1]} : vector<8x512xf32> to vector<8x128xf32>
    %475 = math.tanh %474 : vector<8x128xf32>
    %476 = vector.extract_strided_slice %461 {offsets = [0, 384], sizes = [8, 128], strides = [1, 1]} : vector<8x512xf32> to vector<8x128xf32>
    %477 = arith.negf %476 : vector<8x128xf32>
    %478 = math.exp %477 : vector<8x128xf32>
    %cst_126 = arith.constant 1.000000e+00 : f32
    %479 = vector.broadcast %cst_126 : f32 to vector<8x128xf32>
    %480 = arith.addf %479, %478 : vector<8x128xf32>
    %481 = arith.divf %479, %480 : vector<8x128xf32>
    %482 = arith.mulf %473, %450 : vector<8x128xf32>
    %483 = arith.mulf %467, %475 : vector<8x128xf32>
    %484 = arith.addf %482, %483 : vector<8x128xf32>
    %485 = math.tanh %484 : vector<8x128xf32>
    %486 = arith.mulf %481, %485 : vector<8x128xf32>
    %487 = arith.index_cast %c13_i32 : i32 to index
    %c0_127 = arith.constant 0 : index
    %c0_128 = arith.constant 0 : index
    %488 = vector.load %arg11[%487, %c0_127, %c0_128] : memref<16x8x128xf32, #tpu.memory_space<vmem>>, vector<1x8x128xf32>
    %489 = vector.shape_cast %488 : vector<1x8x128xf32> to vector<8x128xf32>
    %490 = vector.shape_cast %486 : vector<8x128xf32> to vector<1x8x128xf32>
    tpu.vector_store %arg11[%487, %c0_127, %c0_128], %490 {strides = array<i32>} : memref<16x8x128xf32, #tpu.memory_space<vmem>>, vector<1x8x128xf32>,
    %c14_i32 = arith.constant 14 : i32
    %491 = arith.index_cast %c14_i32 : i32 to index
    %c0_129 = arith.constant 0 : index
    %c0_130 = arith.constant 0 : index
    %492 = vector.load %arg10[%491, %c0_129, %c0_130] : memref<16x8x512xf32, #tpu.memory_space<vmem>>, vector<1x8x512xf32>
    %493 = vector.shape_cast %492 : vector<1x8x512xf32> to vector<8x512xf32>
    %cst_131 = arith.constant dense<0.000000e+00> : vector<8x512xf32>
    %494 = tpu.matmul %486, %12, %cst_131 {dimension_numbers = #tpu.dot_dimension_numbers<[1], [0], [0], [1], [0, 0, 1, 1], [], []>} : vector<8x128xf32>, vector<128x512xf32>, vector<8x512xf32> -> vector<8x512xf32>
    %495 = arith.addf %493, %494 : vector<8x512xf32>
    %496 = vector.extract_strided_slice %495 {offsets = [0, 0], sizes = [8, 128], strides = [1, 1]} : vector<8x512xf32> to vector<8x128xf32>
    %497 = arith.negf %496 : vector<8x128xf32>
    %498 = math.exp %497 : vector<8x128xf32>
    %cst_132 = arith.constant 1.000000e+00 : f32
    %499 = vector.broadcast %cst_132 : f32 to vector<8x128xf32>
    %500 = arith.addf %499, %498 : vector<8x128xf32>
    %501 = arith.divf %499, %500 : vector<8x128xf32>
    %502 = vector.extract_strided_slice %495 {offsets = [0, 128], sizes = [8, 128], strides = [1, 1]} : vector<8x512xf32> to vector<8x128xf32>
    %503 = arith.negf %502 : vector<8x128xf32>
    %504 = math.exp %503 : vector<8x128xf32>
    %cst_133 = arith.constant 1.000000e+00 : f32
    %505 = vector.broadcast %cst_133 : f32 to vector<8x128xf32>
    %506 = arith.addf %505, %504 : vector<8x128xf32>
    %507 = arith.divf %505, %506 : vector<8x128xf32>
    %508 = vector.extract_strided_slice %495 {offsets = [0, 256], sizes = [8, 128], strides = [1, 1]} : vector<8x512xf32> to vector<8x128xf32>
    %509 = math.tanh %508 : vector<8x128xf32>
    %510 = vector.extract_strided_slice %495 {offsets = [0, 384], sizes = [8, 128], strides = [1, 1]} : vector<8x512xf32> to vector<8x128xf32>
    %511 = arith.negf %510 : vector<8x128xf32>
    %512 = math.exp %511 : vector<8x128xf32>
    %cst_134 = arith.constant 1.000000e+00 : f32
    %513 = vector.broadcast %cst_134 : f32 to vector<8x128xf32>
    %514 = arith.addf %513, %512 : vector<8x128xf32>
    %515 = arith.divf %513, %514 : vector<8x128xf32>
    %516 = arith.mulf %507, %484 : vector<8x128xf32>
    %517 = arith.mulf %501, %509 : vector<8x128xf32>
    %518 = arith.addf %516, %517 : vector<8x128xf32>
    %519 = math.tanh %518 : vector<8x128xf32>
    %520 = arith.mulf %515, %519 : vector<8x128xf32>
    %521 = arith.index_cast %c14_i32 : i32 to index
    %c0_135 = arith.constant 0 : index
    %c0_136 = arith.constant 0 : index
    %522 = vector.load %arg11[%521, %c0_135, %c0_136] : memref<16x8x128xf32, #tpu.memory_space<vmem>>, vector<1x8x128xf32>
    %523 = vector.shape_cast %522 : vector<1x8x128xf32> to vector<8x128xf32>
    %524 = vector.shape_cast %520 : vector<8x128xf32> to vector<1x8x128xf32>
    tpu.vector_store %arg11[%521, %c0_135, %c0_136], %524 {strides = array<i32>} : memref<16x8x128xf32, #tpu.memory_space<vmem>>, vector<1x8x128xf32>,
    %c15_i32 = arith.constant 15 : i32
    %525 = arith.index_cast %c15_i32 : i32 to index
    %c0_137 = arith.constant 0 : index
    %c0_138 = arith.constant 0 : index
    %526 = vector.load %arg10[%525, %c0_137, %c0_138] : memref<16x8x512xf32, #tpu.memory_space<vmem>>, vector<1x8x512xf32>
    %527 = vector.shape_cast %526 : vector<1x8x512xf32> to vector<8x512xf32>
    %cst_139 = arith.constant dense<0.000000e+00> : vector<8x512xf32>
    %528 = tpu.matmul %520, %12, %cst_139 {dimension_numbers = #tpu.dot_dimension_numbers<[1], [0], [0], [1], [0, 0, 1, 1], [], []>} : vector<8x128xf32>, vector<128x512xf32>, vector<8x512xf32> -> vector<8x512xf32>
    %529 = arith.addf %527, %528 : vector<8x512xf32>
    %530 = vector.extract_strided_slice %529 {offsets = [0, 0], sizes = [8, 128], strides = [1, 1]} : vector<8x512xf32> to vector<8x128xf32>
    %531 = arith.negf %530 : vector<8x128xf32>
    %532 = math.exp %531 : vector<8x128xf32>
    %cst_140 = arith.constant 1.000000e+00 : f32
    %533 = vector.broadcast %cst_140 : f32 to vector<8x128xf32>
    %534 = arith.addf %533, %532 : vector<8x128xf32>
    %535 = arith.divf %533, %534 : vector<8x128xf32>
    %536 = vector.extract_strided_slice %529 {offsets = [0, 128], sizes = [8, 128], strides = [1, 1]} : vector<8x512xf32> to vector<8x128xf32>
    %537 = arith.negf %536 : vector<8x128xf32>
    %538 = math.exp %537 : vector<8x128xf32>
    %cst_141 = arith.constant 1.000000e+00 : f32
    %539 = vector.broadcast %cst_141 : f32 to vector<8x128xf32>
    %540 = arith.addf %539, %538 : vector<8x128xf32>
    %541 = arith.divf %539, %540 : vector<8x128xf32>
    %542 = vector.extract_strided_slice %529 {offsets = [0, 256], sizes = [8, 128], strides = [1, 1]} : vector<8x512xf32> to vector<8x128xf32>
    %543 = math.tanh %542 : vector<8x128xf32>
    %544 = vector.extract_strided_slice %529 {offsets = [0, 384], sizes = [8, 128], strides = [1, 1]} : vector<8x512xf32> to vector<8x128xf32>
    %545 = arith.negf %544 : vector<8x128xf32>
    %546 = math.exp %545 : vector<8x128xf32>
    %cst_142 = arith.constant 1.000000e+00 : f32
    %547 = vector.broadcast %cst_142 : f32 to vector<8x128xf32>
    %548 = arith.addf %547, %546 : vector<8x128xf32>
    %549 = arith.divf %547, %548 : vector<8x128xf32>
    %550 = arith.mulf %541, %518 : vector<8x128xf32>
    %551 = arith.mulf %535, %543 : vector<8x128xf32>
    %552 = arith.addf %550, %551 : vector<8x128xf32>
    %553 = math.tanh %552 : vector<8x128xf32>
    %554 = arith.mulf %549, %553 : vector<8x128xf32>
    %555 = arith.index_cast %c15_i32 : i32 to index
    %c0_143 = arith.constant 0 : index
    %c0_144 = arith.constant 0 : index
    %556 = vector.load %arg11[%555, %c0_143, %c0_144] : memref<16x8x128xf32, #tpu.memory_space<vmem>>, vector<1x8x128xf32>
    %557 = vector.shape_cast %556 : vector<1x8x128xf32> to vector<8x128xf32>
    %558 = vector.shape_cast %554 : vector<8x128xf32> to vector<1x8x128xf32>
    tpu.vector_store %arg11[%555, %c0_143, %c0_144], %558 {strides = array<i32>} : memref<16x8x128xf32, #tpu.memory_space<vmem>>, vector<1x8x128xf32>,
    %c16_i32 = arith.constant 16 : i32
    %c0_145 = arith.constant 0 : index
    %c0_146 = arith.constant 0 : index
    %559 = vector.load %arg8[%c0_145, %c0_146] : memref<8x128xf32, #tpu.memory_space<vmem>>, vector<8x128xf32>
    tpu.vector_store %arg8[%c0_145, %c0_146], %554 {strides = array<i32>} : memref<8x128xf32, #tpu.memory_space<vmem>>, vector<8x128xf32>,
    %c0_147 = arith.constant 0 : index
    %c0_148 = arith.constant 0 : index
    %560 = vector.load %arg9[%c0_147, %c0_148] : memref<8x128xf32, #tpu.memory_space<vmem>>, vector<8x128xf32>
    tpu.vector_store %arg9[%c0_147, %c0_148], %552 {strides = array<i32>} : memref<8x128xf32, #tpu.memory_space<vmem>>, vector<8x128xf32>,
    %c0_149 = arith.constant 0 : index
    %c0_150 = arith.constant 0 : index
    %c0_151 = arith.constant 0 : index
    %561 = vector.load %arg11[%c0_149, %c0_150, %c0_151] : memref<16x8x128xf32, #tpu.memory_space<vmem>>, vector<1x8x128xf32>
    %562 = vector.shape_cast %561 : vector<1x8x128xf32> to vector<8x128xf32>
    %c0_152 = arith.constant 0 : index
    %c0_153 = arith.constant 0 : index
    %c0_154 = arith.constant 0 : index
    %563 = vector.load %arg6[%c0_152, %c0_153, %c0_154] : memref<8x16x128xf32, #tpu.memory_space<vmem>>, vector<8x1x128xf32>
    %564 = vector.shape_cast %563 : vector<8x1x128xf32> to vector<8x128xf32>
    %565 = vector.shape_cast %562 : vector<8x128xf32> to vector<8x1x128xf32>
    tpu.vector_store %arg6[%c0_152, %c0_153, %c0_154], %565 {strides = array<i32>} : memref<8x16x128xf32, #tpu.memory_space<vmem>>, vector<8x1x128xf32>,
    %c1 = arith.constant 1 : index
    %c0_155 = arith.constant 0 : index
    %c0_156 = arith.constant 0 : index
    %566 = vector.load %arg11[%c1, %c0_155, %c0_156] : memref<16x8x128xf32, #tpu.memory_space<vmem>>, vector<1x8x128xf32>
    %567 = vector.shape_cast %566 : vector<1x8x128xf32> to vector<8x128xf32>
    %c0_157 = arith.constant 0 : index
    %c1_158 = arith.constant 1 : index
    %c0_159 = arith.constant 0 : index
    %568 = vector.load %arg6[%c0_157, %c1_158, %c0_159] : memref<8x16x128xf32, #tpu.memory_space<vmem>>, vector<8x1x128xf32>
    %569 = vector.shape_cast %568 : vector<8x1x128xf32> to vector<8x128xf32>
    %570 = vector.shape_cast %567 : vector<8x128xf32> to vector<8x1x128xf32>
    tpu.vector_store %arg6[%c0_157, %c1_158, %c0_159], %570 {strides = array<i32>} : memref<8x16x128xf32, #tpu.memory_space<vmem>>, vector<8x1x128xf32>,
    %c2 = arith.constant 2 : index
    %c0_160 = arith.constant 0 : index
    %c0_161 = arith.constant 0 : index
    %571 = vector.load %arg11[%c2, %c0_160, %c0_161] : memref<16x8x128xf32, #tpu.memory_space<vmem>>, vector<1x8x128xf32>
    %572 = vector.shape_cast %571 : vector<1x8x128xf32> to vector<8x128xf32>
    %c0_162 = arith.constant 0 : index
    %c2_163 = arith.constant 2 : index
    %c0_164 = arith.constant 0 : index
    %573 = vector.load %arg6[%c0_162, %c2_163, %c0_164] : memref<8x16x128xf32, #tpu.memory_space<vmem>>, vector<8x1x128xf32>
    %574 = vector.shape_cast %573 : vector<8x1x128xf32> to vector<8x128xf32>
    %575 = vector.shape_cast %572 : vector<8x128xf32> to vector<8x1x128xf32>
    tpu.vector_store %arg6[%c0_162, %c2_163, %c0_164], %575 {strides = array<i32>} : memref<8x16x128xf32, #tpu.memory_space<vmem>>, vector<8x1x128xf32>,
    %c3 = arith.constant 3 : index
    %c0_165 = arith.constant 0 : index
    %c0_166 = arith.constant 0 : index
    %576 = vector.load %arg11[%c3, %c0_165, %c0_166] : memref<16x8x128xf32, #tpu.memory_space<vmem>>, vector<1x8x128xf32>
    %577 = vector.shape_cast %576 : vector<1x8x128xf32> to vector<8x128xf32>
    %c0_167 = arith.constant 0 : index
    %c3_168 = arith.constant 3 : index
    %c0_169 = arith.constant 0 : index
    %578 = vector.load %arg6[%c0_167, %c3_168, %c0_169] : memref<8x16x128xf32, #tpu.memory_space<vmem>>, vector<8x1x128xf32>
    %579 = vector.shape_cast %578 : vector<8x1x128xf32> to vector<8x128xf32>
    %580 = vector.shape_cast %577 : vector<8x128xf32> to vector<8x1x128xf32>
    tpu.vector_store %arg6[%c0_167, %c3_168, %c0_169], %580 {strides = array<i32>} : memref<8x16x128xf32, #tpu.memory_space<vmem>>, vector<8x1x128xf32>,
    %c4 = arith.constant 4 : index
    %c0_170 = arith.constant 0 : index
    %c0_171 = arith.constant 0 : index
    %581 = vector.load %arg11[%c4, %c0_170, %c0_171] : memref<16x8x128xf32, #tpu.memory_space<vmem>>, vector<1x8x128xf32>
    %582 = vector.shape_cast %581 : vector<1x8x128xf32> to vector<8x128xf32>
    %c0_172 = arith.constant 0 : index
    %c4_173 = arith.constant 4 : index
    %c0_174 = arith.constant 0 : index
    %583 = vector.load %arg6[%c0_172, %c4_173, %c0_174] : memref<8x16x128xf32, #tpu.memory_space<vmem>>, vector<8x1x128xf32>
    %584 = vector.shape_cast %583 : vector<8x1x128xf32> to vector<8x128xf32>
    %585 = vector.shape_cast %582 : vector<8x128xf32> to vector<8x1x128xf32>
    tpu.vector_store %arg6[%c0_172, %c4_173, %c0_174], %585 {strides = array<i32>} : memref<8x16x128xf32, #tpu.memory_space<vmem>>, vector<8x1x128xf32>,
    %c5 = arith.constant 5 : index
    %c0_175 = arith.constant 0 : index
    %c0_176 = arith.constant 0 : index
    %586 = vector.load %arg11[%c5, %c0_175, %c0_176] : memref<16x8x128xf32, #tpu.memory_space<vmem>>, vector<1x8x128xf32>
    %587 = vector.shape_cast %586 : vector<1x8x128xf32> to vector<8x128xf32>
    %c0_177 = arith.constant 0 : index
    %c5_178 = arith.constant 5 : index
    %c0_179 = arith.constant 0 : index
    %588 = vector.load %arg6[%c0_177, %c5_178, %c0_179] : memref<8x16x128xf32, #tpu.memory_space<vmem>>, vector<8x1x128xf32>
    %589 = vector.shape_cast %588 : vector<8x1x128xf32> to vector<8x128xf32>
    %590 = vector.shape_cast %587 : vector<8x128xf32> to vector<8x1x128xf32>
    tpu.vector_store %arg6[%c0_177, %c5_178, %c0_179], %590 {strides = array<i32>} : memref<8x16x128xf32, #tpu.memory_space<vmem>>, vector<8x1x128xf32>,
    %c6 = arith.constant 6 : index
    %c0_180 = arith.constant 0 : index
    %c0_181 = arith.constant 0 : index
    %591 = vector.load %arg11[%c6, %c0_180, %c0_181] : memref<16x8x128xf32, #tpu.memory_space<vmem>>, vector<1x8x128xf32>
    %592 = vector.shape_cast %591 : vector<1x8x128xf32> to vector<8x128xf32>
    %c0_182 = arith.constant 0 : index
    %c6_183 = arith.constant 6 : index
    %c0_184 = arith.constant 0 : index
    %593 = vector.load %arg6[%c0_182, %c6_183, %c0_184] : memref<8x16x128xf32, #tpu.memory_space<vmem>>, vector<8x1x128xf32>
    %594 = vector.shape_cast %593 : vector<8x1x128xf32> to vector<8x128xf32>
    %595 = vector.shape_cast %592 : vector<8x128xf32> to vector<8x1x128xf32>
    tpu.vector_store %arg6[%c0_182, %c6_183, %c0_184], %595 {strides = array<i32>} : memref<8x16x128xf32, #tpu.memory_space<vmem>>, vector<8x1x128xf32>,
    %c7 = arith.constant 7 : index
    %c0_185 = arith.constant 0 : index
    %c0_186 = arith.constant 0 : index
    %596 = vector.load %arg11[%c7, %c0_185, %c0_186] : memref<16x8x128xf32, #tpu.memory_space<vmem>>, vector<1x8x128xf32>
    %597 = vector.shape_cast %596 : vector<1x8x128xf32> to vector<8x128xf32>
    %c0_187 = arith.constant 0 : index
    %c7_188 = arith.constant 7 : index
    %c0_189 = arith.constant 0 : index
    %598 = vector.load %arg6[%c0_187, %c7_188, %c0_189] : memref<8x16x128xf32, #tpu.memory_space<vmem>>, vector<8x1x128xf32>
    %599 = vector.shape_cast %598 : vector<8x1x128xf32> to vector<8x128xf32>
    %600 = vector.shape_cast %597 : vector<8x128xf32> to vector<8x1x128xf32>
    tpu.vector_store %arg6[%c0_187, %c7_188, %c0_189], %600 {strides = array<i32>} : memref<8x16x128xf32, #tpu.memory_space<vmem>>, vector<8x1x128xf32>,
    %c8 = arith.constant 8 : index
    %c0_190 = arith.constant 0 : index
    %c0_191 = arith.constant 0 : index
    %601 = vector.load %arg11[%c8, %c0_190, %c0_191] : memref<16x8x128xf32, #tpu.memory_space<vmem>>, vector<1x8x128xf32>
    %602 = vector.shape_cast %601 : vector<1x8x128xf32> to vector<8x128xf32>
    %c0_192 = arith.constant 0 : index
    %c8_193 = arith.constant 8 : index
    %c0_194 = arith.constant 0 : index
    %603 = vector.load %arg6[%c0_192, %c8_193, %c0_194] : memref<8x16x128xf32, #tpu.memory_space<vmem>>, vector<8x1x128xf32>
    %604 = vector.shape_cast %603 : vector<8x1x128xf32> to vector<8x128xf32>
    %605 = vector.shape_cast %602 : vector<8x128xf32> to vector<8x1x128xf32>
    tpu.vector_store %arg6[%c0_192, %c8_193, %c0_194], %605 {strides = array<i32>} : memref<8x16x128xf32, #tpu.memory_space<vmem>>, vector<8x1x128xf32>,
    %c9 = arith.constant 9 : index
    %c0_195 = arith.constant 0 : index
    %c0_196 = arith.constant 0 : index
    %606 = vector.load %arg11[%c9, %c0_195, %c0_196] : memref<16x8x128xf32, #tpu.memory_space<vmem>>, vector<1x8x128xf32>
    %607 = vector.shape_cast %606 : vector<1x8x128xf32> to vector<8x128xf32>
    %c0_197 = arith.constant 0 : index
    %c9_198 = arith.constant 9 : index
    %c0_199 = arith.constant 0 : index
    %608 = vector.load %arg6[%c0_197, %c9_198, %c0_199] : memref<8x16x128xf32, #tpu.memory_space<vmem>>, vector<8x1x128xf32>
    %609 = vector.shape_cast %608 : vector<8x1x128xf32> to vector<8x128xf32>
    %610 = vector.shape_cast %607 : vector<8x128xf32> to vector<8x1x128xf32>
    tpu.vector_store %arg6[%c0_197, %c9_198, %c0_199], %610 {strides = array<i32>} : memref<8x16x128xf32, #tpu.memory_space<vmem>>, vector<8x1x128xf32>,
    %c10 = arith.constant 10 : index
    %c0_200 = arith.constant 0 : index
    %c0_201 = arith.constant 0 : index
    %611 = vector.load %arg11[%c10, %c0_200, %c0_201] : memref<16x8x128xf32, #tpu.memory_space<vmem>>, vector<1x8x128xf32>
    %612 = vector.shape_cast %611 : vector<1x8x128xf32> to vector<8x128xf32>
    %c0_202 = arith.constant 0 : index
    %c10_203 = arith.constant 10 : index
    %c0_204 = arith.constant 0 : index
    %613 = vector.load %arg6[%c0_202, %c10_203, %c0_204] : memref<8x16x128xf32, #tpu.memory_space<vmem>>, vector<8x1x128xf32>
    %614 = vector.shape_cast %613 : vector<8x1x128xf32> to vector<8x128xf32>
    %615 = vector.shape_cast %612 : vector<8x128xf32> to vector<8x1x128xf32>
    tpu.vector_store %arg6[%c0_202, %c10_203, %c0_204], %615 {strides = array<i32>} : memref<8x16x128xf32, #tpu.memory_space<vmem>>, vector<8x1x128xf32>,
    %c11 = arith.constant 11 : index
    %c0_205 = arith.constant 0 : index
    %c0_206 = arith.constant 0 : index
    %616 = vector.load %arg11[%c11, %c0_205, %c0_206] : memref<16x8x128xf32, #tpu.memory_space<vmem>>, vector<1x8x128xf32>
    %617 = vector.shape_cast %616 : vector<1x8x128xf32> to vector<8x128xf32>
    %c0_207 = arith.constant 0 : index
    %c11_208 = arith.constant 11 : index
    %c0_209 = arith.constant 0 : index
    %618 = vector.load %arg6[%c0_207, %c11_208, %c0_209] : memref<8x16x128xf32, #tpu.memory_space<vmem>>, vector<8x1x128xf32>
    %619 = vector.shape_cast %618 : vector<8x1x128xf32> to vector<8x128xf32>
    %620 = vector.shape_cast %617 : vector<8x128xf32> to vector<8x1x128xf32>
    tpu.vector_store %arg6[%c0_207, %c11_208, %c0_209], %620 {strides = array<i32>} : memref<8x16x128xf32, #tpu.memory_space<vmem>>, vector<8x1x128xf32>,
    %c12 = arith.constant 12 : index
    %c0_210 = arith.constant 0 : index
    %c0_211 = arith.constant 0 : index
    %621 = vector.load %arg11[%c12, %c0_210, %c0_211] : memref<16x8x128xf32, #tpu.memory_space<vmem>>, vector<1x8x128xf32>
    %622 = vector.shape_cast %621 : vector<1x8x128xf32> to vector<8x128xf32>
    %c0_212 = arith.constant 0 : index
    %c12_213 = arith.constant 12 : index
    %c0_214 = arith.constant 0 : index
    %623 = vector.load %arg6[%c0_212, %c12_213, %c0_214] : memref<8x16x128xf32, #tpu.memory_space<vmem>>, vector<8x1x128xf32>
    %624 = vector.shape_cast %623 : vector<8x1x128xf32> to vector<8x128xf32>
    %625 = vector.shape_cast %622 : vector<8x128xf32> to vector<8x1x128xf32>
    tpu.vector_store %arg6[%c0_212, %c12_213, %c0_214], %625 {strides = array<i32>} : memref<8x16x128xf32, #tpu.memory_space<vmem>>, vector<8x1x128xf32>,
    %c13 = arith.constant 13 : index
    %c0_215 = arith.constant 0 : index
    %c0_216 = arith.constant 0 : index
    %626 = vector.load %arg11[%c13, %c0_215, %c0_216] : memref<16x8x128xf32, #tpu.memory_space<vmem>>, vector<1x8x128xf32>
    %627 = vector.shape_cast %626 : vector<1x8x128xf32> to vector<8x128xf32>
    %c0_217 = arith.constant 0 : index
    %c13_218 = arith.constant 13 : index
    %c0_219 = arith.constant 0 : index
    %628 = vector.load %arg6[%c0_217, %c13_218, %c0_219] : memref<8x16x128xf32, #tpu.memory_space<vmem>>, vector<8x1x128xf32>
    %629 = vector.shape_cast %628 : vector<8x1x128xf32> to vector<8x128xf32>
    %630 = vector.shape_cast %627 : vector<8x128xf32> to vector<8x1x128xf32>
    tpu.vector_store %arg6[%c0_217, %c13_218, %c0_219], %630 {strides = array<i32>} : memref<8x16x128xf32, #tpu.memory_space<vmem>>, vector<8x1x128xf32>,
    %c14 = arith.constant 14 : index
    %c0_220 = arith.constant 0 : index
    %c0_221 = arith.constant 0 : index
    %631 = vector.load %arg11[%c14, %c0_220, %c0_221] : memref<16x8x128xf32, #tpu.memory_space<vmem>>, vector<1x8x128xf32>
    %632 = vector.shape_cast %631 : vector<1x8x128xf32> to vector<8x128xf32>
    %c0_222 = arith.constant 0 : index
    %c14_223 = arith.constant 14 : index
    %c0_224 = arith.constant 0 : index
    %633 = vector.load %arg6[%c0_222, %c14_223, %c0_224] : memref<8x16x128xf32, #tpu.memory_space<vmem>>, vector<8x1x128xf32>
    %634 = vector.shape_cast %633 : vector<8x1x128xf32> to vector<8x128xf32>
    %635 = vector.shape_cast %632 : vector<8x128xf32> to vector<8x1x128xf32>
    tpu.vector_store %arg6[%c0_222, %c14_223, %c0_224], %635 {strides = array<i32>} : memref<8x16x128xf32, #tpu.memory_space<vmem>>, vector<8x1x128xf32>,
    %c15 = arith.constant 15 : index
    %c0_225 = arith.constant 0 : index
    %c0_226 = arith.constant 0 : index
    %636 = vector.load %arg11[%c15, %c0_225, %c0_226] : memref<16x8x128xf32, #tpu.memory_space<vmem>>, vector<1x8x128xf32>
    %637 = vector.shape_cast %636 : vector<1x8x128xf32> to vector<8x128xf32>
    %c0_227 = arith.constant 0 : index
    %c15_228 = arith.constant 15 : index
    %c0_229 = arith.constant 0 : index
    %638 = vector.load %arg6[%c0_227, %c15_228, %c0_229] : memref<8x16x128xf32, #tpu.memory_space<vmem>>, vector<8x1x128xf32>
    %639 = vector.shape_cast %638 : vector<8x1x128xf32> to vector<8x128xf32>
    %640 = vector.shape_cast %637 : vector<8x128xf32> to vector<8x1x128xf32>
    tpu.vector_store %arg6[%c0_227, %c15_228, %c0_229], %640 {strides = array<i32>} : memref<8x16x128xf32, #tpu.memory_space<vmem>>, vector<8x1x128xf32>,
    %c0_i32_230 = arith.constant 0 : i32
    %641 = arith.cmpi eq, %arg1, %c0_i32_230 : i32
    %642 = arith.extui %641 : i1 to i32
    %c0_i32_231 = arith.constant 0 : i32
    %643 = arith.cmpi ne, %642, %c0_i32_231 : i32
    scf.if %643 {
      %c0_232 = arith.constant 0 : index
      %c0_233 = arith.constant 0 : index
      %644 = vector.load %arg7[%c0_232, %c0_233] : memref<8x128xf32, #tpu.memory_space<vmem>>, vector<8x128xf32>
      tpu.vector_store %arg7[%c0_232, %c0_233], %552 {strides = array<i32>} : memref<8x128xf32, #tpu.memory_space<vmem>>, vector<8x128xf32>,
    } else {
    }
    return
  }
  func.func @transform_0(%arg0: i32, %arg1: i32) -> (i32, i32, i32) {
    %c0_i32 = arith.constant 0 : i32
    %c0_i32_0 = arith.constant 0 : i32
    return %arg1, %arg0, %c0_i32 : i32, i32, i32
  }
  func.func @transform_1(%arg0: i32, %arg1: i32) -> (i32, i32) {
    %c0_i32 = arith.constant 0 : i32
    %c0_i32_0 = arith.constant 0 : i32
    %c0_i32_1 = arith.constant 0 : i32
    return %c0_i32, %c0_i32_0 : i32, i32
  }
  func.func @transform_2(%arg0: i32, %arg1: i32) -> (i32, i32) {
    %c0_i32 = arith.constant 0 : i32
    %c0_i32_0 = arith.constant 0 : i32
    %c0_i32_1 = arith.constant 0 : i32
    return %c0_i32, %c0_i32_0 : i32, i32
  }
  func.func @transform_3(%arg0: i32, %arg1: i32) -> (i32, i32) {
    %c0_i32 = arith.constant 0 : i32
    %c0_i32_0 = arith.constant 0 : i32
    %c0_i32_1 = arith.constant 0 : i32
    return %c0_i32, %c0_i32_0 : i32, i32
  }
  func.func @transform_4(%arg0: i32, %arg1: i32) -> (i32, i32, i32) {
    %c0_i32 = arith.constant 0 : i32
    %c0_i32_0 = arith.constant 0 : i32
    return %arg0, %arg1, %c0_i32 : i32, i32, i32
  }
  func.func @transform_5(%arg0: i32, %arg1: i32) -> (i32, i32) {
    %c0_i32 = arith.constant 0 : i32
    %c0_i32_0 = arith.constant 0 : i32
    return %arg0, %c0_i32 : i32, i32
  }
}

module attributes {stable_mosaic.version = 11 : i64} {
  func.func @_lstm_chunk_kernel(%arg0: i32, %arg1: i32, %arg2: memref<16x8x16xf32, #tpu.memory_space<vmem>>, %arg3: memref<16x512xf32, #tpu.memory_space<vmem>>, %arg4: memref<128x512xf32, #tpu.memory_space<vmem>>, %arg5: memref<1x512xf32, #tpu.memory_space<vmem>>, %arg6: memref<8x16x128xf32, #tpu.memory_space<vmem>>, %arg7: memref<8x128xf32, #tpu.memory_space<vmem>>, %arg8: memref<8x128xf32, #tpu.memory_space<vmem>>, %arg9: memref<8x128xf32, #tpu.memory_space<vmem>>, %arg10: memref<16x8x512xf32, #tpu.memory_space<vmem>>, %arg11: memref<16x8x128xf32, #tpu.memory_space<vmem>>) attributes {dimension_semantics = [#tpu.dimension_semantics<arbitrary>, #tpu.dimension_semantics<arbitrary>], iteration_bounds = array<i64: 1, 1>, scalar_prefetch = 0 : i64, scratch_operands = 4 : i64, tpu.core_type = #tpu.core_type<tc>, window_params = [{transform_indices = @transform_0, window_bounds = array<i64: 16, 8, 16>}, {pipeline_mode = #tpu.pipeline_mode<synchronous>, transform_indices = @transform_1, window_bounds = array<i64: 16, 512>}, {pipeline_mode = #tpu.pipeline_mode<synchronous>, transform_indices = @transform_2, window_bounds = array<i64: 128, 512>}, {pipeline_mode = #tpu.pipeline_mode<synchronous>, transform_indices = @transform_3, window_bounds = array<i64: 1, 512>}, {transform_indices = @transform_4, window_bounds = array<i64: 8, 16, 128>}, {transform_indices = @transform_5, window_bounds = array<i64: 8, 128>}]} {
    %c0_i32 = arith.constant 0 : i32
    %0 = arith.cmpi eq, %arg1, %c0_i32 : i32
    %1 = arith.extui %0 : i1 to i32
    %c0_i32_0 = arith.constant 0 : i32
    %2 = arith.cmpi ne, %1, %c0_i32_0 : i32
    scf.if %2 {
      %cst_232 = arith.constant 0.000000e+00 : f32
      %644 = vector.broadcast %cst_232 : f32 to vector<8x128xf32>
      %c0_233 = arith.constant 0 : index
      %c0_234 = arith.constant 0 : index
      %645 = vector.load %arg8[%c0_233, %c0_234] : memref<8x128xf32, #tpu.memory_space<vmem>>, vector<8x128xf32>
      tpu.vector_store %arg8[%c0_233, %c0_234], %644 {strides = array<i32>} : memref<8x128xf32, #tpu.memory_space<vmem>>, vector<8x128xf32>,
      %cst_235 = arith.constant 0.000000e+00 : f32
      %646 = vector.broadcast %cst_235 : f32 to vector<8x128xf32>
      %c0_236 = arith.constant 0 : index
      %c0_237 = arith.constant 0 : index
      %647 = vector.load %arg9[%c0_236, %c0_237] : memref<8x128xf32, #tpu.memory_space<vmem>>, vector<8x128xf32>
      tpu.vector_store %arg9[%c0_236, %c0_237], %646 {strides = array<i32>} : memref<8x128xf32, #tpu.memory_space<vmem>>, vector<8x128xf32>,
    } else {
    }
    %c0 = arith.constant 0 : index
    %c0_1 = arith.constant 0 : index
    %c0_2 = arith.constant 0 : index
    %3 = vector.load %arg2[%c0, %c0_1, %c0_2] : memref<16x8x16xf32, #tpu.memory_space<vmem>>, vector<16x8x16xf32>
    %4 = vector.shape_cast %3 : vector<16x8x16xf32> to vector<128x16xf32>
    %c0_3 = arith.constant 0 : index
    %c0_4 = arith.constant 0 : index
    %5 = vector.load %arg3[%c0_3, %c0_4] : memref<16x512xf32, #tpu.memory_space<vmem>>, vector<16x512xf32>
    %cst = arith.constant dense<0.000000e+00> : vector<128x512xf32>
    %6 = tpu.matmul %4, %5, %cst {dimension_numbers = #tpu.dot_dimension_numbers<[1], [0], [0], [1], [0, 0, 1, 1], [], []>} : vector<128x16xf32>, vector<16x512xf32>, vector<128x512xf32> -> vector<128x512xf32>
    %c0_5 = arith.constant 0 : index
    %c0_6 = arith.constant 0 : index
    %7 = vector.load %arg5[%c0_5, %c0_6] : memref<1x512xf32, #tpu.memory_space<vmem>>, vector<1x512xf32>
    %8 = vector.broadcast %7 : vector<1x512xf32> to vector<128x512xf32>
    %9 = arith.addf %6, %8 : vector<128x512xf32>
    %10 = vector.shape_cast %9 : vector<128x512xf32> to vector<16x8x512xf32>
    %c0_7 = arith.constant 0 : index
    %c0_8 = arith.constant 0 : index
    %c0_9 = arith.constant 0 : index
    %11 = vector.load %arg10[%c0_7, %c0_8, %c0_9] : memref<16x8x512xf32, #tpu.memory_space<vmem>>, vector<16x8x512xf32>
    tpu.vector_store %arg10[%c0_7, %c0_8, %c0_9], %10 {strides = array<i32>} : memref<16x8x512xf32, #tpu.memory_space<vmem>>, vector<16x8x512xf32>,
    %c0_10 = arith.constant 0 : index
    %c0_11 = arith.constant 0 : index
    %12 = vector.load %arg4[%c0_10, %c0_11] : memref<128x512xf32, #tpu.memory_space<vmem>>, vector<128x512xf32>
    %c0_12 = arith.constant 0 : index
    %c0_13 = arith.constant 0 : index
    %13 = vector.load %arg8[%c0_12, %c0_13] : memref<8x128xf32, #tpu.memory_space<vmem>>, vector<8x128xf32>
    %c0_14 = arith.constant 0 : index
    %c0_15 = arith.constant 0 : index
    %14 = vector.load %arg9[%c0_14, %c0_15] : memref<8x128xf32, #tpu.memory_space<vmem>>, vector<8x128xf32>
    %c0_i32_16 = arith.constant 0 : i32
    %15 = arith.index_cast %c0_i32_16 : i32 to index
    %c0_17 = arith.constant 0 : index
    %c0_18 = arith.constant 0 : index
    %16 = vector.load %arg10[%15, %c0_17, %c0_18] : memref<16x8x512xf32, #tpu.memory_space<vmem>>, vector<1x8x512xf32>
    %17 = vector.shape_cast %16 : vector<1x8x512xf32> to vector<8x512xf32>
    %cst_19 = arith.constant dense<0.000000e+00> : vector<8x512xf32>
    %18 = tpu.matmul %13, %12, %cst_19 {dimension_numbers = #tpu.dot_dimension_numbers<[1], [0], [0], [1], [0, 0, 1, 1], [], []>} : vector<8x128xf32>, vector<128x512xf32>, vector<8x512xf32> -> vector<8x512xf32>
    %19 = arith.addf %17, %18 : vector<8x512xf32>
    %20 = vector.extract_strided_slice %19 {offsets = [0, 0], sizes = [8, 128], strides = [1, 1]} : vector<8x512xf32> to vector<8x128xf32>
    %21 = arith.negf %20 : vector<8x128xf32>
    %22 = math.exp %21 : vector<8x128xf32>
    %cst_20 = arith.constant 1.000000e+00 : f32
    %23 = vector.broadcast %cst_20 : f32 to vector<8x128xf32>
    %24 = arith.addf %23, %22 : vector<8x128xf32>
    %25 = arith.divf %23, %24 : vector<8x128xf32>
    %26 = vector.extract_strided_slice %19 {offsets = [0, 128], sizes = [8, 128], strides = [1, 1]} : vector<8x512xf32> to vector<8x128xf32>
    %27 = arith.negf %26 : vector<8x128xf32>
    %28 = math.exp %27 : vector<8x128xf32>
    %cst_21 = arith.constant 1.000000e+00 : f32
    %29 = vector.broadcast %cst_21 : f32 to vector<8x128xf32>
    %30 = arith.addf %29, %28 : vector<8x128xf32>
    %31 = arith.divf %29, %30 : vector<8x128xf32>
    %32 = vector.extract_strided_slice %19 {offsets = [0, 256], sizes = [8, 128], strides = [1, 1]} : vector<8x512xf32> to vector<8x128xf32>
    %33 = math.tanh %32 : vector<8x128xf32>
    %34 = vector.extract_strided_slice %19 {offsets = [0, 384], sizes = [8, 128], strides = [1, 1]} : vector<8x512xf32> to vector<8x128xf32>
    %35 = arith.negf %34 : vector<8x128xf32>
    %36 = math.exp %35 : vector<8x128xf32>
    %cst_22 = arith.constant 1.000000e+00 : f32
    %37 = vector.broadcast %cst_22 : f32 to vector<8x128xf32>
    %38 = arith.addf %37, %36 : vector<8x128xf32>
    %39 = arith.divf %37, %38 : vector<8x128xf32>
    %40 = arith.mulf %31, %14 : vector<8x128xf32>
    %41 = arith.mulf %25, %33 : vector<8x128xf32>
    %42 = arith.addf %40, %41 : vector<8x128xf32>
    %43 = math.tanh %42 : vector<8x128xf32>
    %44 = arith.mulf %39, %43 : vector<8x128xf32>
    %45 = arith.index_cast %c0_i32_16 : i32 to index
    %c0_23 = arith.constant 0 : index
    %c0_24 = arith.constant 0 : index
    %46 = vector.load %arg11[%45, %c0_23, %c0_24] : memref<16x8x128xf32, #tpu.memory_space<vmem>>, vector<1x8x128xf32>
    %47 = vector.shape_cast %46 : vector<1x8x128xf32> to vector<8x128xf32>
    %48 = vector.shape_cast %44 : vector<8x128xf32> to vector<1x8x128xf32>
    tpu.vector_store %arg11[%45, %c0_23, %c0_24], %48 {strides = array<i32>} : memref<16x8x128xf32, #tpu.memory_space<vmem>>, vector<1x8x128xf32>,
    %c1_i32 = arith.constant 1 : i32
    %49 = arith.index_cast %c1_i32 : i32 to index
    %c0_25 = arith.constant 0 : index
    %c0_26 = arith.constant 0 : index
    %50 = vector.load %arg10[%49, %c0_25, %c0_26] : memref<16x8x512xf32, #tpu.memory_space<vmem>>, vector<1x8x512xf32>
    %51 = vector.shape_cast %50 : vector<1x8x512xf32> to vector<8x512xf32>
    %cst_27 = arith.constant dense<0.000000e+00> : vector<8x512xf32>
    %52 = tpu.matmul %44, %12, %cst_27 {dimension_numbers = #tpu.dot_dimension_numbers<[1], [0], [0], [1], [0, 0, 1, 1], [], []>} : vector<8x128xf32>, vector<128x512xf32>, vector<8x512xf32> -> vector<8x512xf32>
    %53 = arith.addf %51, %52 : vector<8x512xf32>
    %54 = vector.extract_strided_slice %53 {offsets = [0, 0], sizes = [8, 128], strides = [1, 1]} : vector<8x512xf32> to vector<8x128xf32>
    %55 = arith.negf %54 : vector<8x128xf32>
    %56 = math.exp %55 : vector<8x128xf32>
    %cst_28 = arith.constant 1.000000e+00 : f32
    %57 = vector.broadcast %cst_28 : f32 to vector<8x128xf32>
    %58 = arith.addf %57, %56 : vector<8x128xf32>
    %59 = arith.divf %57, %58 : vector<8x128xf32>
    %60 = vector.extract_strided_slice %53 {offsets = [0, 128], sizes = [8, 128], strides = [1, 1]} : vector<8x512xf32> to vector<8x128xf32>
    %61 = arith.negf %60 : vector<8x128xf32>
    %62 = math.exp %61 : vector<8x128xf32>
    %cst_29 = arith.constant 1.000000e+00 : f32
    %63 = vector.broadcast %cst_29 : f32 to vector<8x128xf32>
    %64 = arith.addf %63, %62 : vector<8x128xf32>
    %65 = arith.divf %63, %64 : vector<8x128xf32>
    %66 = vector.extract_strided_slice %53 {offsets = [0, 256], sizes = [8, 128], strides = [1, 1]} : vector<8x512xf32> to vector<8x128xf32>
    %67 = math.tanh %66 : vector<8x128xf32>
    %68 = vector.extract_strided_slice %53 {offsets = [0, 384], sizes = [8, 128], strides = [1, 1]} : vector<8x512xf32> to vector<8x128xf32>
    %69 = arith.negf %68 : vector<8x128xf32>
    %70 = math.exp %69 : vector<8x128xf32>
    %cst_30 = arith.constant 1.000000e+00 : f32
    %71 = vector.broadcast %cst_30 : f32 to vector<8x128xf32>
    %72 = arith.addf %71, %70 : vector<8x128xf32>
    %73 = arith.divf %71, %72 : vector<8x128xf32>
    %74 = arith.mulf %65, %42 : vector<8x128xf32>
    %75 = arith.mulf %59, %67 : vector<8x128xf32>
    %76 = arith.addf %74, %75 : vector<8x128xf32>
    %77 = math.tanh %76 : vector<8x128xf32>
    %78 = arith.mulf %73, %77 : vector<8x128xf32>
    %79 = arith.index_cast %c1_i32 : i32 to index
    %c0_31 = arith.constant 0 : index
    %c0_32 = arith.constant 0 : index
    %80 = vector.load %arg11[%79, %c0_31, %c0_32] : memref<16x8x128xf32, #tpu.memory_space<vmem>>, vector<1x8x128xf32>
    %81 = vector.shape_cast %80 : vector<1x8x128xf32> to vector<8x128xf32>
    %82 = vector.shape_cast %78 : vector<8x128xf32> to vector<1x8x128xf32>
    tpu.vector_store %arg11[%79, %c0_31, %c0_32], %82 {strides = array<i32>} : memref<16x8x128xf32, #tpu.memory_space<vmem>>, vector<1x8x128xf32>,
    %c2_i32 = arith.constant 2 : i32
    %83 = arith.index_cast %c2_i32 : i32 to index
    %c0_33 = arith.constant 0 : index
    %c0_34 = arith.constant 0 : index
    %84 = vector.load %arg10[%83, %c0_33, %c0_34] : memref<16x8x512xf32, #tpu.memory_space<vmem>>, vector<1x8x512xf32>
    %85 = vector.shape_cast %84 : vector<1x8x512xf32> to vector<8x512xf32>
    %cst_35 = arith.constant dense<0.000000e+00> : vector<8x512xf32>
    %86 = tpu.matmul %78, %12, %cst_35 {dimension_numbers = #tpu.dot_dimension_numbers<[1], [0], [0], [1], [0, 0, 1, 1], [], []>} : vector<8x128xf32>, vector<128x512xf32>, vector<8x512xf32> -> vector<8x512xf32>
    %87 = arith.addf %85, %86 : vector<8x512xf32>
    %88 = vector.extract_strided_slice %87 {offsets = [0, 0], sizes = [8, 128], strides = [1, 1]} : vector<8x512xf32> to vector<8x128xf32>
    %89 = arith.negf %88 : vector<8x128xf32>
    %90 = math.exp %89 : vector<8x128xf32>
    %cst_36 = arith.constant 1.000000e+00 : f32
    %91 = vector.broadcast %cst_36 : f32 to vector<8x128xf32>
    %92 = arith.addf %91, %90 : vector<8x128xf32>
    %93 = arith.divf %91, %92 : vector<8x128xf32>
    %94 = vector.extract_strided_slice %87 {offsets = [0, 128], sizes = [8, 128], strides = [1, 1]} : vector<8x512xf32> to vector<8x128xf32>
    %95 = arith.negf %94 : vector<8x128xf32>
    %96 = math.exp %95 : vector<8x128xf32>
    %cst_37 = arith.constant 1.000000e+00 : f32
    %97 = vector.broadcast %cst_37 : f32 to vector<8x128xf32>
    %98 = arith.addf %97, %96 : vector<8x128xf32>
    %99 = arith.divf %97, %98 : vector<8x128xf32>
    %100 = vector.extract_strided_slice %87 {offsets = [0, 256], sizes = [8, 128], strides = [1, 1]} : vector<8x512xf32> to vector<8x128xf32>
    %101 = math.tanh %100 : vector<8x128xf32>
    %102 = vector.extract_strided_slice %87 {offsets = [0, 384], sizes = [8, 128], strides = [1, 1]} : vector<8x512xf32> to vector<8x128xf32>
    %103 = arith.negf %102 : vector<8x128xf32>
    %104 = math.exp %103 : vector<8x128xf32>
    %cst_38 = arith.constant 1.000000e+00 : f32
    %105 = vector.broadcast %cst_38 : f32 to vector<8x128xf32>
    %106 = arith.addf %105, %104 : vector<8x128xf32>
    %107 = arith.divf %105, %106 : vector<8x128xf32>
    %108 = arith.mulf %99, %76 : vector<8x128xf32>
    %109 = arith.mulf %93, %101 : vector<8x128xf32>
    %110 = arith.addf %108, %109 : vector<8x128xf32>
    %111 = math.tanh %110 : vector<8x128xf32>
    %112 = arith.mulf %107, %111 : vector<8x128xf32>
    %113 = arith.index_cast %c2_i32 : i32 to index
    %c0_39 = arith.constant 0 : index
    %c0_40 = arith.constant 0 : index
    %114 = vector.load %arg11[%113, %c0_39, %c0_40] : memref<16x8x128xf32, #tpu.memory_space<vmem>>, vector<1x8x128xf32>
    %115 = vector.shape_cast %114 : vector<1x8x128xf32> to vector<8x128xf32>
    %116 = vector.shape_cast %112 : vector<8x128xf32> to vector<1x8x128xf32>
    tpu.vector_store %arg11[%113, %c0_39, %c0_40], %116 {strides = array<i32>} : memref<16x8x128xf32, #tpu.memory_space<vmem>>, vector<1x8x128xf32>,
    %c3_i32 = arith.constant 3 : i32
    %117 = arith.index_cast %c3_i32 : i32 to index
    %c0_41 = arith.constant 0 : index
    %c0_42 = arith.constant 0 : index
    %118 = vector.load %arg10[%117, %c0_41, %c0_42] : memref<16x8x512xf32, #tpu.memory_space<vmem>>, vector<1x8x512xf32>
    %119 = vector.shape_cast %118 : vector<1x8x512xf32> to vector<8x512xf32>
    %cst_43 = arith.constant dense<0.000000e+00> : vector<8x512xf32>
    %120 = tpu.matmul %112, %12, %cst_43 {dimension_numbers = #tpu.dot_dimension_numbers<[1], [0], [0], [1], [0, 0, 1, 1], [], []>} : vector<8x128xf32>, vector<128x512xf32>, vector<8x512xf32> -> vector<8x512xf32>
    %121 = arith.addf %119, %120 : vector<8x512xf32>
    %122 = vector.extract_strided_slice %121 {offsets = [0, 0], sizes = [8, 128], strides = [1, 1]} : vector<8x512xf32> to vector<8x128xf32>
    %123 = arith.negf %122 : vector<8x128xf32>
    %124 = math.exp %123 : vector<8x128xf32>
    %cst_44 = arith.constant 1.000000e+00 : f32
    %125 = vector.broadcast %cst_44 : f32 to vector<8x128xf32>
    %126 = arith.addf %125, %124 : vector<8x128xf32>
    %127 = arith.divf %125, %126 : vector<8x128xf32>
    %128 = vector.extract_strided_slice %121 {offsets = [0, 128], sizes = [8, 128], strides = [1, 1]} : vector<8x512xf32> to vector<8x128xf32>
    %129 = arith.negf %128 : vector<8x128xf32>
    %130 = math.exp %129 : vector<8x128xf32>
    %cst_45 = arith.constant 1.000000e+00 : f32
    %131 = vector.broadcast %cst_45 : f32 to vector<8x128xf32>
    %132 = arith.addf %131, %130 : vector<8x128xf32>
    %133 = arith.divf %131, %132 : vector<8x128xf32>
    %134 = vector.extract_strided_slice %121 {offsets = [0, 256], sizes = [8, 128], strides = [1, 1]} : vector<8x512xf32> to vector<8x128xf32>
    %135 = math.tanh %134 : vector<8x128xf32>
    %136 = vector.extract_strided_slice %121 {offsets = [0, 384], sizes = [8, 128], strides = [1, 1]} : vector<8x512xf32> to vector<8x128xf32>
    %137 = arith.negf %136 : vector<8x128xf32>
    %138 = math.exp %137 : vector<8x128xf32>
    %cst_46 = arith.constant 1.000000e+00 : f32
    %139 = vector.broadcast %cst_46 : f32 to vector<8x128xf32>
    %140 = arith.addf %139, %138 : vector<8x128xf32>
    %141 = arith.divf %139, %140 : vector<8x128xf32>
    %142 = arith.mulf %133, %110 : vector<8x128xf32>
    %143 = arith.mulf %127, %135 : vector<8x128xf32>
    %144 = arith.addf %142, %143 : vector<8x128xf32>
    %145 = math.tanh %144 : vector<8x128xf32>
    %146 = arith.mulf %141, %145 : vector<8x128xf32>
    %147 = arith.index_cast %c3_i32 : i32 to index
    %c0_47 = arith.constant 0 : index
    %c0_48 = arith.constant 0 : index
    %148 = vector.load %arg11[%147, %c0_47, %c0_48] : memref<16x8x128xf32, #tpu.memory_space<vmem>>, vector<1x8x128xf32>
    %149 = vector.shape_cast %148 : vector<1x8x128xf32> to vector<8x128xf32>
    %150 = vector.shape_cast %146 : vector<8x128xf32> to vector<1x8x128xf32>
    tpu.vector_store %arg11[%147, %c0_47, %c0_48], %150 {strides = array<i32>} : memref<16x8x128xf32, #tpu.memory_space<vmem>>, vector<1x8x128xf32>,
    %c4_i32 = arith.constant 4 : i32
    %151 = arith.index_cast %c4_i32 : i32 to index
    %c0_49 = arith.constant 0 : index
    %c0_50 = arith.constant 0 : index
    %152 = vector.load %arg10[%151, %c0_49, %c0_50] : memref<16x8x512xf32, #tpu.memory_space<vmem>>, vector<1x8x512xf32>
    %153 = vector.shape_cast %152 : vector<1x8x512xf32> to vector<8x512xf32>
    %cst_51 = arith.constant dense<0.000000e+00> : vector<8x512xf32>
    %154 = tpu.matmul %146, %12, %cst_51 {dimension_numbers = #tpu.dot_dimension_numbers<[1], [0], [0], [1], [0, 0, 1, 1], [], []>} : vector<8x128xf32>, vector<128x512xf32>, vector<8x512xf32> -> vector<8x512xf32>
    %155 = arith.addf %153, %154 : vector<8x512xf32>
    %156 = vector.extract_strided_slice %155 {offsets = [0, 0], sizes = [8, 128], strides = [1, 1]} : vector<8x512xf32> to vector<8x128xf32>
    %157 = arith.negf %156 : vector<8x128xf32>
    %158 = math.exp %157 : vector<8x128xf32>
    %cst_52 = arith.constant 1.000000e+00 : f32
    %159 = vector.broadcast %cst_52 : f32 to vector<8x128xf32>
    %160 = arith.addf %159, %158 : vector<8x128xf32>
    %161 = arith.divf %159, %160 : vector<8x128xf32>
    %162 = vector.extract_strided_slice %155 {offsets = [0, 128], sizes = [8, 128], strides = [1, 1]} : vector<8x512xf32> to vector<8x128xf32>
    %163 = arith.negf %162 : vector<8x128xf32>
    %164 = math.exp %163 : vector<8x128xf32>
    %cst_53 = arith.constant 1.000000e+00 : f32
    %165 = vector.broadcast %cst_53 : f32 to vector<8x128xf32>
    %166 = arith.addf %165, %164 : vector<8x128xf32>
    %167 = arith.divf %165, %166 : vector<8x128xf32>
    %168 = vector.extract_strided_slice %155 {offsets = [0, 256], sizes = [8, 128], strides = [1, 1]} : vector<8x512xf32> to vector<8x128xf32>
    %169 = math.tanh %168 : vector<8x128xf32>
    %170 = vector.extract_strided_slice %155 {offsets = [0, 384], sizes = [8, 128], strides = [1, 1]} : vector<8x512xf32> to vector<8x128xf32>
    %171 = arith.negf %170 : vector<8x128xf32>
    %172 = math.exp %171 : vector<8x128xf32>
    %cst_54 = arith.constant 1.000000e+00 : f32
    %173 = vector.broadcast %cst_54 : f32 to vector<8x128xf32>
    %174 = arith.addf %173, %172 : vector<8x128xf32>
    %175 = arith.divf %173, %174 : vector<8x128xf32>
    %176 = arith.mulf %167, %144 : vector<8x128xf32>
    %177 = arith.mulf %161, %169 : vector<8x128xf32>
    %178 = arith.addf %176, %177 : vector<8x128xf32>
    %179 = math.tanh %178 : vector<8x128xf32>
    %180 = arith.mulf %175, %179 : vector<8x128xf32>
    %181 = arith.index_cast %c4_i32 : i32 to index
    %c0_55 = arith.constant 0 : index
    %c0_56 = arith.constant 0 : index
    %182 = vector.load %arg11[%181, %c0_55, %c0_56] : memref<16x8x128xf32, #tpu.memory_space<vmem>>, vector<1x8x128xf32>
    %183 = vector.shape_cast %182 : vector<1x8x128xf32> to vector<8x128xf32>
    %184 = vector.shape_cast %180 : vector<8x128xf32> to vector<1x8x128xf32>
    tpu.vector_store %arg11[%181, %c0_55, %c0_56], %184 {strides = array<i32>} : memref<16x8x128xf32, #tpu.memory_space<vmem>>, vector<1x8x128xf32>,
    %c5_i32 = arith.constant 5 : i32
    %185 = arith.index_cast %c5_i32 : i32 to index
    %c0_57 = arith.constant 0 : index
    %c0_58 = arith.constant 0 : index
    %186 = vector.load %arg10[%185, %c0_57, %c0_58] : memref<16x8x512xf32, #tpu.memory_space<vmem>>, vector<1x8x512xf32>
    %187 = vector.shape_cast %186 : vector<1x8x512xf32> to vector<8x512xf32>
    %cst_59 = arith.constant dense<0.000000e+00> : vector<8x512xf32>
    %188 = tpu.matmul %180, %12, %cst_59 {dimension_numbers = #tpu.dot_dimension_numbers<[1], [0], [0], [1], [0, 0, 1, 1], [], []>} : vector<8x128xf32>, vector<128x512xf32>, vector<8x512xf32> -> vector<8x512xf32>
    %189 = arith.addf %187, %188 : vector<8x512xf32>
    %190 = vector.extract_strided_slice %189 {offsets = [0, 0], sizes = [8, 128], strides = [1, 1]} : vector<8x512xf32> to vector<8x128xf32>
    %191 = arith.negf %190 : vector<8x128xf32>
    %192 = math.exp %191 : vector<8x128xf32>
    %cst_60 = arith.constant 1.000000e+00 : f32
    %193 = vector.broadcast %cst_60 : f32 to vector<8x128xf32>
    %194 = arith.addf %193, %192 : vector<8x128xf32>
    %195 = arith.divf %193, %194 : vector<8x128xf32>
    %196 = vector.extract_strided_slice %189 {offsets = [0, 128], sizes = [8, 128], strides = [1, 1]} : vector<8x512xf32> to vector<8x128xf32>
    %197 = arith.negf %196 : vector<8x128xf32>
    %198 = math.exp %197 : vector<8x128xf32>
    %cst_61 = arith.constant 1.000000e+00 : f32
    %199 = vector.broadcast %cst_61 : f32 to vector<8x128xf32>
    %200 = arith.addf %199, %198 : vector<8x128xf32>
    %201 = arith.divf %199, %200 : vector<8x128xf32>
    %202 = vector.extract_strided_slice %189 {offsets = [0, 256], sizes = [8, 128], strides = [1, 1]} : vector<8x512xf32> to vector<8x128xf32>
    %203 = math.tanh %202 : vector<8x128xf32>
    %204 = vector.extract_strided_slice %189 {offsets = [0, 384], sizes = [8, 128], strides = [1, 1]} : vector<8x512xf32> to vector<8x128xf32>
    %205 = arith.negf %204 : vector<8x128xf32>
    %206 = math.exp %205 : vector<8x128xf32>
    %cst_62 = arith.constant 1.000000e+00 : f32
    %207 = vector.broadcast %cst_62 : f32 to vector<8x128xf32>
    %208 = arith.addf %207, %206 : vector<8x128xf32>
    %209 = arith.divf %207, %208 : vector<8x128xf32>
    %210 = arith.mulf %201, %178 : vector<8x128xf32>
    %211 = arith.mulf %195, %203 : vector<8x128xf32>
    %212 = arith.addf %210, %211 : vector<8x128xf32>
    %213 = math.tanh %212 : vector<8x128xf32>
    %214 = arith.mulf %209, %213 : vector<8x128xf32>
    %215 = arith.index_cast %c5_i32 : i32 to index
    %c0_63 = arith.constant 0 : index
    %c0_64 = arith.constant 0 : index
    %216 = vector.load %arg11[%215, %c0_63, %c0_64] : memref<16x8x128xf32, #tpu.memory_space<vmem>>, vector<1x8x128xf32>
    %217 = vector.shape_cast %216 : vector<1x8x128xf32> to vector<8x128xf32>
    %218 = vector.shape_cast %214 : vector<8x128xf32> to vector<1x8x128xf32>
    tpu.vector_store %arg11[%215, %c0_63, %c0_64], %218 {strides = array<i32>} : memref<16x8x128xf32, #tpu.memory_space<vmem>>, vector<1x8x128xf32>,
    %c6_i32 = arith.constant 6 : i32
    %219 = arith.index_cast %c6_i32 : i32 to index
    %c0_65 = arith.constant 0 : index
    %c0_66 = arith.constant 0 : index
    %220 = vector.load %arg10[%219, %c0_65, %c0_66] : memref<16x8x512xf32, #tpu.memory_space<vmem>>, vector<1x8x512xf32>
    %221 = vector.shape_cast %220 : vector<1x8x512xf32> to vector<8x512xf32>
    %cst_67 = arith.constant dense<0.000000e+00> : vector<8x512xf32>
    %222 = tpu.matmul %214, %12, %cst_67 {dimension_numbers = #tpu.dot_dimension_numbers<[1], [0], [0], [1], [0, 0, 1, 1], [], []>} : vector<8x128xf32>, vector<128x512xf32>, vector<8x512xf32> -> vector<8x512xf32>
    %223 = arith.addf %221, %222 : vector<8x512xf32>
    %224 = vector.extract_strided_slice %223 {offsets = [0, 0], sizes = [8, 128], strides = [1, 1]} : vector<8x512xf32> to vector<8x128xf32>
    %225 = arith.negf %224 : vector<8x128xf32>
    %226 = math.exp %225 : vector<8x128xf32>
    %cst_68 = arith.constant 1.000000e+00 : f32
    %227 = vector.broadcast %cst_68 : f32 to vector<8x128xf32>
    %228 = arith.addf %227, %226 : vector<8x128xf32>
    %229 = arith.divf %227, %228 : vector<8x128xf32>
    %230 = vector.extract_strided_slice %223 {offsets = [0, 128], sizes = [8, 128], strides = [1, 1]} : vector<8x512xf32> to vector<8x128xf32>
    %231 = arith.negf %230 : vector<8x128xf32>
    %232 = math.exp %231 : vector<8x128xf32>
    %cst_69 = arith.constant 1.000000e+00 : f32
    %233 = vector.broadcast %cst_69 : f32 to vector<8x128xf32>
    %234 = arith.addf %233, %232 : vector<8x128xf32>
    %235 = arith.divf %233, %234 : vector<8x128xf32>
    %236 = vector.extract_strided_slice %223 {offsets = [0, 256], sizes = [8, 128], strides = [1, 1]} : vector<8x512xf32> to vector<8x128xf32>
    %237 = math.tanh %236 : vector<8x128xf32>
    %238 = vector.extract_strided_slice %223 {offsets = [0, 384], sizes = [8, 128], strides = [1, 1]} : vector<8x512xf32> to vector<8x128xf32>
    %239 = arith.negf %238 : vector<8x128xf32>
    %240 = math.exp %239 : vector<8x128xf32>
    %cst_70 = arith.constant 1.000000e+00 : f32
    %241 = vector.broadcast %cst_70 : f32 to vector<8x128xf32>
    %242 = arith.addf %241, %240 : vector<8x128xf32>
    %243 = arith.divf %241, %242 : vector<8x128xf32>
    %244 = arith.mulf %235, %212 : vector<8x128xf32>
    %245 = arith.mulf %229, %237 : vector<8x128xf32>
    %246 = arith.addf %244, %245 : vector<8x128xf32>
    %247 = math.tanh %246 : vector<8x128xf32>
    %248 = arith.mulf %243, %247 : vector<8x128xf32>
    %249 = arith.index_cast %c6_i32 : i32 to index
    %c0_71 = arith.constant 0 : index
    %c0_72 = arith.constant 0 : index
    %250 = vector.load %arg11[%249, %c0_71, %c0_72] : memref<16x8x128xf32, #tpu.memory_space<vmem>>, vector<1x8x128xf32>
    %251 = vector.shape_cast %250 : vector<1x8x128xf32> to vector<8x128xf32>
    %252 = vector.shape_cast %248 : vector<8x128xf32> to vector<1x8x128xf32>
    tpu.vector_store %arg11[%249, %c0_71, %c0_72], %252 {strides = array<i32>} : memref<16x8x128xf32, #tpu.memory_space<vmem>>, vector<1x8x128xf32>,
    %c7_i32 = arith.constant 7 : i32
    %253 = arith.index_cast %c7_i32 : i32 to index
    %c0_73 = arith.constant 0 : index
    %c0_74 = arith.constant 0 : index
    %254 = vector.load %arg10[%253, %c0_73, %c0_74] : memref<16x8x512xf32, #tpu.memory_space<vmem>>, vector<1x8x512xf32>
    %255 = vector.shape_cast %254 : vector<1x8x512xf32> to vector<8x512xf32>
    %cst_75 = arith.constant dense<0.000000e+00> : vector<8x512xf32>
    %256 = tpu.matmul %248, %12, %cst_75 {dimension_numbers = #tpu.dot_dimension_numbers<[1], [0], [0], [1], [0, 0, 1, 1], [], []>} : vector<8x128xf32>, vector<128x512xf32>, vector<8x512xf32> -> vector<8x512xf32>
    %257 = arith.addf %255, %256 : vector<8x512xf32>
    %258 = vector.extract_strided_slice %257 {offsets = [0, 0], sizes = [8, 128], strides = [1, 1]} : vector<8x512xf32> to vector<8x128xf32>
    %259 = arith.negf %258 : vector<8x128xf32>
    %260 = math.exp %259 : vector<8x128xf32>
    %cst_76 = arith.constant 1.000000e+00 : f32
    %261 = vector.broadcast %cst_76 : f32 to vector<8x128xf32>
    %262 = arith.addf %261, %260 : vector<8x128xf32>
    %263 = arith.divf %261, %262 : vector<8x128xf32>
    %264 = vector.extract_strided_slice %257 {offsets = [0, 128], sizes = [8, 128], strides = [1, 1]} : vector<8x512xf32> to vector<8x128xf32>
    %265 = arith.negf %264 : vector<8x128xf32>
    %266 = math.exp %265 : vector<8x128xf32>
    %cst_77 = arith.constant 1.000000e+00 : f32
    %267 = vector.broadcast %cst_77 : f32 to vector<8x128xf32>
    %268 = arith.addf %267, %266 : vector<8x128xf32>
    %269 = arith.divf %267, %268 : vector<8x128xf32>
    %270 = vector.extract_strided_slice %257 {offsets = [0, 256], sizes = [8, 128], strides = [1, 1]} : vector<8x512xf32> to vector<8x128xf32>
    %271 = math.tanh %270 : vector<8x128xf32>
    %272 = vector.extract_strided_slice %257 {offsets = [0, 384], sizes = [8, 128], strides = [1, 1]} : vector<8x512xf32> to vector<8x128xf32>
    %273 = arith.negf %272 : vector<8x128xf32>
    %274 = math.exp %273 : vector<8x128xf32>
    %cst_78 = arith.constant 1.000000e+00 : f32
    %275 = vector.broadcast %cst_78 : f32 to vector<8x128xf32>
    %276 = arith.addf %275, %274 : vector<8x128xf32>
    %277 = arith.divf %275, %276 : vector<8x128xf32>
    %278 = arith.mulf %269, %246 : vector<8x128xf32>
    %279 = arith.mulf %263, %271 : vector<8x128xf32>
    %280 = arith.addf %278, %279 : vector<8x128xf32>
    %281 = math.tanh %280 : vector<8x128xf32>
    %282 = arith.mulf %277, %281 : vector<8x128xf32>
    %283 = arith.index_cast %c7_i32 : i32 to index
    %c0_79 = arith.constant 0 : index
    %c0_80 = arith.constant 0 : index
    %284 = vector.load %arg11[%283, %c0_79, %c0_80] : memref<16x8x128xf32, #tpu.memory_space<vmem>>, vector<1x8x128xf32>
    %285 = vector.shape_cast %284 : vector<1x8x128xf32> to vector<8x128xf32>
    %286 = vector.shape_cast %282 : vector<8x128xf32> to vector<1x8x128xf32>
    tpu.vector_store %arg11[%283, %c0_79, %c0_80], %286 {strides = array<i32>} : memref<16x8x128xf32, #tpu.memory_space<vmem>>, vector<1x8x128xf32>,
    %c8_i32 = arith.constant 8 : i32
    %287 = arith.index_cast %c8_i32 : i32 to index
    %c0_81 = arith.constant 0 : index
    %c0_82 = arith.constant 0 : index
    %288 = vector.load %arg10[%287, %c0_81, %c0_82] : memref<16x8x512xf32, #tpu.memory_space<vmem>>, vector<1x8x512xf32>
    %289 = vector.shape_cast %288 : vector<1x8x512xf32> to vector<8x512xf32>
    %cst_83 = arith.constant dense<0.000000e+00> : vector<8x512xf32>
    %290 = tpu.matmul %282, %12, %cst_83 {dimension_numbers = #tpu.dot_dimension_numbers<[1], [0], [0], [1], [0, 0, 1, 1], [], []>} : vector<8x128xf32>, vector<128x512xf32>, vector<8x512xf32> -> vector<8x512xf32>
    %291 = arith.addf %289, %290 : vector<8x512xf32>
    %292 = vector.extract_strided_slice %291 {offsets = [0, 0], sizes = [8, 128], strides = [1, 1]} : vector<8x512xf32> to vector<8x128xf32>
    %293 = arith.negf %292 : vector<8x128xf32>
    %294 = math.exp %293 : vector<8x128xf32>
    %cst_84 = arith.constant 1.000000e+00 : f32
    %295 = vector.broadcast %cst_84 : f32 to vector<8x128xf32>
    %296 = arith.addf %295, %294 : vector<8x128xf32>
    %297 = arith.divf %295, %296 : vector<8x128xf32>
    %298 = vector.extract_strided_slice %291 {offsets = [0, 128], sizes = [8, 128], strides = [1, 1]} : vector<8x512xf32> to vector<8x128xf32>
    %299 = arith.negf %298 : vector<8x128xf32>
    %300 = math.exp %299 : vector<8x128xf32>
    %cst_85 = arith.constant 1.000000e+00 : f32
    %301 = vector.broadcast %cst_85 : f32 to vector<8x128xf32>
    %302 = arith.addf %301, %300 : vector<8x128xf32>
    %303 = arith.divf %301, %302 : vector<8x128xf32>
    %304 = vector.extract_strided_slice %291 {offsets = [0, 256], sizes = [8, 128], strides = [1, 1]} : vector<8x512xf32> to vector<8x128xf32>
    %305 = math.tanh %304 : vector<8x128xf32>
    %306 = vector.extract_strided_slice %291 {offsets = [0, 384], sizes = [8, 128], strides = [1, 1]} : vector<8x512xf32> to vector<8x128xf32>
    %307 = arith.negf %306 : vector<8x128xf32>
    %308 = math.exp %307 : vector<8x128xf32>
    %cst_86 = arith.constant 1.000000e+00 : f32
    %309 = vector.broadcast %cst_86 : f32 to vector<8x128xf32>
    %310 = arith.addf %309, %308 : vector<8x128xf32>
    %311 = arith.divf %309, %310 : vector<8x128xf32>
    %312 = arith.mulf %303, %280 : vector<8x128xf32>
    %313 = arith.mulf %297, %305 : vector<8x128xf32>
    %314 = arith.addf %312, %313 : vector<8x128xf32>
    %315 = math.tanh %314 : vector<8x128xf32>
    %316 = arith.mulf %311, %315 : vector<8x128xf32>
    %317 = arith.index_cast %c8_i32 : i32 to index
    %c0_87 = arith.constant 0 : index
    %c0_88 = arith.constant 0 : index
    %318 = vector.load %arg11[%317, %c0_87, %c0_88] : memref<16x8x128xf32, #tpu.memory_space<vmem>>, vector<1x8x128xf32>
    %319 = vector.shape_cast %318 : vector<1x8x128xf32> to vector<8x128xf32>
    %320 = vector.shape_cast %316 : vector<8x128xf32> to vector<1x8x128xf32>
    tpu.vector_store %arg11[%317, %c0_87, %c0_88], %320 {strides = array<i32>} : memref<16x8x128xf32, #tpu.memory_space<vmem>>, vector<1x8x128xf32>,
    %c9_i32 = arith.constant 9 : i32
    %321 = arith.index_cast %c9_i32 : i32 to index
    %c0_89 = arith.constant 0 : index
    %c0_90 = arith.constant 0 : index
    %322 = vector.load %arg10[%321, %c0_89, %c0_90] : memref<16x8x512xf32, #tpu.memory_space<vmem>>, vector<1x8x512xf32>
    %323 = vector.shape_cast %322 : vector<1x8x512xf32> to vector<8x512xf32>
    %cst_91 = arith.constant dense<0.000000e+00> : vector<8x512xf32>
    %324 = tpu.matmul %316, %12, %cst_91 {dimension_numbers = #tpu.dot_dimension_numbers<[1], [0], [0], [1], [0, 0, 1, 1], [], []>} : vector<8x128xf32>, vector<128x512xf32>, vector<8x512xf32> -> vector<8x512xf32>
    %325 = arith.addf %323, %324 : vector<8x512xf32>
    %326 = vector.extract_strided_slice %325 {offsets = [0, 0], sizes = [8, 128], strides = [1, 1]} : vector<8x512xf32> to vector<8x128xf32>
    %327 = arith.negf %326 : vector<8x128xf32>
    %328 = math.exp %327 : vector<8x128xf32>
    %cst_92 = arith.constant 1.000000e+00 : f32
    %329 = vector.broadcast %cst_92 : f32 to vector<8x128xf32>
    %330 = arith.addf %329, %328 : vector<8x128xf32>
    %331 = arith.divf %329, %330 : vector<8x128xf32>
    %332 = vector.extract_strided_slice %325 {offsets = [0, 128], sizes = [8, 128], strides = [1, 1]} : vector<8x512xf32> to vector<8x128xf32>
    %333 = arith.negf %332 : vector<8x128xf32>
    %334 = math.exp %333 : vector<8x128xf32>
    %cst_93 = arith.constant 1.000000e+00 : f32
    %335 = vector.broadcast %cst_93 : f32 to vector<8x128xf32>
    %336 = arith.addf %335, %334 : vector<8x128xf32>
    %337 = arith.divf %335, %336 : vector<8x128xf32>
    %338 = vector.extract_strided_slice %325 {offsets = [0, 256], sizes = [8, 128], strides = [1, 1]} : vector<8x512xf32> to vector<8x128xf32>
    %339 = math.tanh %338 : vector<8x128xf32>
    %340 = vector.extract_strided_slice %325 {offsets = [0, 384], sizes = [8, 128], strides = [1, 1]} : vector<8x512xf32> to vector<8x128xf32>
    %341 = arith.negf %340 : vector<8x128xf32>
    %342 = math.exp %341 : vector<8x128xf32>
    %cst_94 = arith.constant 1.000000e+00 : f32
    %343 = vector.broadcast %cst_94 : f32 to vector<8x128xf32>
    %344 = arith.addf %343, %342 : vector<8x128xf32>
    %345 = arith.divf %343, %344 : vector<8x128xf32>
    %346 = arith.mulf %337, %314 : vector<8x128xf32>
    %347 = arith.mulf %331, %339 : vector<8x128xf32>
    %348 = arith.addf %346, %347 : vector<8x128xf32>
    %349 = math.tanh %348 : vector<8x128xf32>
    %350 = arith.mulf %345, %349 : vector<8x128xf32>
    %351 = arith.index_cast %c9_i32 : i32 to index
    %c0_95 = arith.constant 0 : index
    %c0_96 = arith.constant 0 : index
    %352 = vector.load %arg11[%351, %c0_95, %c0_96] : memref<16x8x128xf32, #tpu.memory_space<vmem>>, vector<1x8x128xf32>
    %353 = vector.shape_cast %352 : vector<1x8x128xf32> to vector<8x128xf32>
    %354 = vector.shape_cast %350 : vector<8x128xf32> to vector<1x8x128xf32>
    tpu.vector_store %arg11[%351, %c0_95, %c0_96], %354 {strides = array<i32>} : memref<16x8x128xf32, #tpu.memory_space<vmem>>, vector<1x8x128xf32>,
    %c10_i32 = arith.constant 10 : i32
    %355 = arith.index_cast %c10_i32 : i32 to index
    %c0_97 = arith.constant 0 : index
    %c0_98 = arith.constant 0 : index
    %356 = vector.load %arg10[%355, %c0_97, %c0_98] : memref<16x8x512xf32, #tpu.memory_space<vmem>>, vector<1x8x512xf32>
    %357 = vector.shape_cast %356 : vector<1x8x512xf32> to vector<8x512xf32>
    %cst_99 = arith.constant dense<0.000000e+00> : vector<8x512xf32>
    %358 = tpu.matmul %350, %12, %cst_99 {dimension_numbers = #tpu.dot_dimension_numbers<[1], [0], [0], [1], [0, 0, 1, 1], [], []>} : vector<8x128xf32>, vector<128x512xf32>, vector<8x512xf32> -> vector<8x512xf32>
    %359 = arith.addf %357, %358 : vector<8x512xf32>
    %360 = vector.extract_strided_slice %359 {offsets = [0, 0], sizes = [8, 128], strides = [1, 1]} : vector<8x512xf32> to vector<8x128xf32>
    %361 = arith.negf %360 : vector<8x128xf32>
    %362 = math.exp %361 : vector<8x128xf32>
    %cst_100 = arith.constant 1.000000e+00 : f32
    %363 = vector.broadcast %cst_100 : f32 to vector<8x128xf32>
    %364 = arith.addf %363, %362 : vector<8x128xf32>
    %365 = arith.divf %363, %364 : vector<8x128xf32>
    %366 = vector.extract_strided_slice %359 {offsets = [0, 128], sizes = [8, 128], strides = [1, 1]} : vector<8x512xf32> to vector<8x128xf32>
    %367 = arith.negf %366 : vector<8x128xf32>
    %368 = math.exp %367 : vector<8x128xf32>
    %cst_101 = arith.constant 1.000000e+00 : f32
    %369 = vector.broadcast %cst_101 : f32 to vector<8x128xf32>
    %370 = arith.addf %369, %368 : vector<8x128xf32>
    %371 = arith.divf %369, %370 : vector<8x128xf32>
    %372 = vector.extract_strided_slice %359 {offsets = [0, 256], sizes = [8, 128], strides = [1, 1]} : vector<8x512xf32> to vector<8x128xf32>
    %373 = math.tanh %372 : vector<8x128xf32>
    %374 = vector.extract_strided_slice %359 {offsets = [0, 384], sizes = [8, 128], strides = [1, 1]} : vector<8x512xf32> to vector<8x128xf32>
    %375 = arith.negf %374 : vector<8x128xf32>
    %376 = math.exp %375 : vector<8x128xf32>
    %cst_102 = arith.constant 1.000000e+00 : f32
    %377 = vector.broadcast %cst_102 : f32 to vector<8x128xf32>
    %378 = arith.addf %377, %376 : vector<8x128xf32>
    %379 = arith.divf %377, %378 : vector<8x128xf32>
    %380 = arith.mulf %371, %348 : vector<8x128xf32>
    %381 = arith.mulf %365, %373 : vector<8x128xf32>
    %382 = arith.addf %380, %381 : vector<8x128xf32>
    %383 = math.tanh %382 : vector<8x128xf32>
    %384 = arith.mulf %379, %383 : vector<8x128xf32>
    %385 = arith.index_cast %c10_i32 : i32 to index
    %c0_103 = arith.constant 0 : index
    %c0_104 = arith.constant 0 : index
    %386 = vector.load %arg11[%385, %c0_103, %c0_104] : memref<16x8x128xf32, #tpu.memory_space<vmem>>, vector<1x8x128xf32>
    %387 = vector.shape_cast %386 : vector<1x8x128xf32> to vector<8x128xf32>
    %388 = vector.shape_cast %384 : vector<8x128xf32> to vector<1x8x128xf32>
    tpu.vector_store %arg11[%385, %c0_103, %c0_104], %388 {strides = array<i32>} : memref<16x8x128xf32, #tpu.memory_space<vmem>>, vector<1x8x128xf32>,
    %c11_i32 = arith.constant 11 : i32
    %389 = arith.index_cast %c11_i32 : i32 to index
    %c0_105 = arith.constant 0 : index
    %c0_106 = arith.constant 0 : index
    %390 = vector.load %arg10[%389, %c0_105, %c0_106] : memref<16x8x512xf32, #tpu.memory_space<vmem>>, vector<1x8x512xf32>
    %391 = vector.shape_cast %390 : vector<1x8x512xf32> to vector<8x512xf32>
    %cst_107 = arith.constant dense<0.000000e+00> : vector<8x512xf32>
    %392 = tpu.matmul %384, %12, %cst_107 {dimension_numbers = #tpu.dot_dimension_numbers<[1], [0], [0], [1], [0, 0, 1, 1], [], []>} : vector<8x128xf32>, vector<128x512xf32>, vector<8x512xf32> -> vector<8x512xf32>
    %393 = arith.addf %391, %392 : vector<8x512xf32>
    %394 = vector.extract_strided_slice %393 {offsets = [0, 0], sizes = [8, 128], strides = [1, 1]} : vector<8x512xf32> to vector<8x128xf32>
    %395 = arith.negf %394 : vector<8x128xf32>
    %396 = math.exp %395 : vector<8x128xf32>
    %cst_108 = arith.constant 1.000000e+00 : f32
    %397 = vector.broadcast %cst_108 : f32 to vector<8x128xf32>
    %398 = arith.addf %397, %396 : vector<8x128xf32>
    %399 = arith.divf %397, %398 : vector<8x128xf32>
    %400 = vector.extract_strided_slice %393 {offsets = [0, 128], sizes = [8, 128], strides = [1, 1]} : vector<8x512xf32> to vector<8x128xf32>
    %401 = arith.negf %400 : vector<8x128xf32>
    %402 = math.exp %401 : vector<8x128xf32>
    %cst_109 = arith.constant 1.000000e+00 : f32
    %403 = vector.broadcast %cst_109 : f32 to vector<8x128xf32>
    %404 = arith.addf %403, %402 : vector<8x128xf32>
    %405 = arith.divf %403, %404 : vector<8x128xf32>
    %406 = vector.extract_strided_slice %393 {offsets = [0, 256], sizes = [8, 128], strides = [1, 1]} : vector<8x512xf32> to vector<8x128xf32>
    %407 = math.tanh %406 : vector<8x128xf32>
    %408 = vector.extract_strided_slice %393 {offsets = [0, 384], sizes = [8, 128], strides = [1, 1]} : vector<8x512xf32> to vector<8x128xf32>
    %409 = arith.negf %408 : vector<8x128xf32>
    %410 = math.exp %409 : vector<8x128xf32>
    %cst_110 = arith.constant 1.000000e+00 : f32
    %411 = vector.broadcast %cst_110 : f32 to vector<8x128xf32>
    %412 = arith.addf %411, %410 : vector<8x128xf32>
    %413 = arith.divf %411, %412 : vector<8x128xf32>
    %414 = arith.mulf %405, %382 : vector<8x128xf32>
    %415 = arith.mulf %399, %407 : vector<8x128xf32>
    %416 = arith.addf %414, %415 : vector<8x128xf32>
    %417 = math.tanh %416 : vector<8x128xf32>
    %418 = arith.mulf %413, %417 : vector<8x128xf32>
    %419 = arith.index_cast %c11_i32 : i32 to index
    %c0_111 = arith.constant 0 : index
    %c0_112 = arith.constant 0 : index
    %420 = vector.load %arg11[%419, %c0_111, %c0_112] : memref<16x8x128xf32, #tpu.memory_space<vmem>>, vector<1x8x128xf32>
    %421 = vector.shape_cast %420 : vector<1x8x128xf32> to vector<8x128xf32>
    %422 = vector.shape_cast %418 : vector<8x128xf32> to vector<1x8x128xf32>
    tpu.vector_store %arg11[%419, %c0_111, %c0_112], %422 {strides = array<i32>} : memref<16x8x128xf32, #tpu.memory_space<vmem>>, vector<1x8x128xf32>,
    %c12_i32 = arith.constant 12 : i32
    %423 = arith.index_cast %c12_i32 : i32 to index
    %c0_113 = arith.constant 0 : index
    %c0_114 = arith.constant 0 : index
    %424 = vector.load %arg10[%423, %c0_113, %c0_114] : memref<16x8x512xf32, #tpu.memory_space<vmem>>, vector<1x8x512xf32>
    %425 = vector.shape_cast %424 : vector<1x8x512xf32> to vector<8x512xf32>
    %cst_115 = arith.constant dense<0.000000e+00> : vector<8x512xf32>
    %426 = tpu.matmul %418, %12, %cst_115 {dimension_numbers = #tpu.dot_dimension_numbers<[1], [0], [0], [1], [0, 0, 1, 1], [], []>} : vector<8x128xf32>, vector<128x512xf32>, vector<8x512xf32> -> vector<8x512xf32>
    %427 = arith.addf %425, %426 : vector<8x512xf32>
    %428 = vector.extract_strided_slice %427 {offsets = [0, 0], sizes = [8, 128], strides = [1, 1]} : vector<8x512xf32> to vector<8x128xf32>
    %429 = arith.negf %428 : vector<8x128xf32>
    %430 = math.exp %429 : vector<8x128xf32>
    %cst_116 = arith.constant 1.000000e+00 : f32
    %431 = vector.broadcast %cst_116 : f32 to vector<8x128xf32>
    %432 = arith.addf %431, %430 : vector<8x128xf32>
    %433 = arith.divf %431, %432 : vector<8x128xf32>
    %434 = vector.extract_strided_slice %427 {offsets = [0, 128], sizes = [8, 128], strides = [1, 1]} : vector<8x512xf32> to vector<8x128xf32>
    %435 = arith.negf %434 : vector<8x128xf32>
    %436 = math.exp %435 : vector<8x128xf32>
    %cst_117 = arith.constant 1.000000e+00 : f32
    %437 = vector.broadcast %cst_117 : f32 to vector<8x128xf32>
    %438 = arith.addf %437, %436 : vector<8x128xf32>
    %439 = arith.divf %437, %438 : vector<8x128xf32>
    %440 = vector.extract_strided_slice %427 {offsets = [0, 256], sizes = [8, 128], strides = [1, 1]} : vector<8x512xf32> to vector<8x128xf32>
    %441 = math.tanh %440 : vector<8x128xf32>
    %442 = vector.extract_strided_slice %427 {offsets = [0, 384], sizes = [8, 128], strides = [1, 1]} : vector<8x512xf32> to vector<8x128xf32>
    %443 = arith.negf %442 : vector<8x128xf32>
    %444 = math.exp %443 : vector<8x128xf32>
    %cst_118 = arith.constant 1.000000e+00 : f32
    %445 = vector.broadcast %cst_118 : f32 to vector<8x128xf32>
    %446 = arith.addf %445, %444 : vector<8x128xf32>
    %447 = arith.divf %445, %446 : vector<8x128xf32>
    %448 = arith.mulf %439, %416 : vector<8x128xf32>
    %449 = arith.mulf %433, %441 : vector<8x128xf32>
    %450 = arith.addf %448, %449 : vector<8x128xf32>
    %451 = math.tanh %450 : vector<8x128xf32>
    %452 = arith.mulf %447, %451 : vector<8x128xf32>
    %453 = arith.index_cast %c12_i32 : i32 to index
    %c0_119 = arith.constant 0 : index
    %c0_120 = arith.constant 0 : index
    %454 = vector.load %arg11[%453, %c0_119, %c0_120] : memref<16x8x128xf32, #tpu.memory_space<vmem>>, vector<1x8x128xf32>
    %455 = vector.shape_cast %454 : vector<1x8x128xf32> to vector<8x128xf32>
    %456 = vector.shape_cast %452 : vector<8x128xf32> to vector<1x8x128xf32>
    tpu.vector_store %arg11[%453, %c0_119, %c0_120], %456 {strides = array<i32>} : memref<16x8x128xf32, #tpu.memory_space<vmem>>, vector<1x8x128xf32>,
    %c13_i32 = arith.constant 13 : i32
    %457 = arith.index_cast %c13_i32 : i32 to index
    %c0_121 = arith.constant 0 : index
    %c0_122 = arith.constant 0 : index
    %458 = vector.load %arg10[%457, %c0_121, %c0_122] : memref<16x8x512xf32, #tpu.memory_space<vmem>>, vector<1x8x512xf32>
    %459 = vector.shape_cast %458 : vector<1x8x512xf32> to vector<8x512xf32>
    %cst_123 = arith.constant dense<0.000000e+00> : vector<8x512xf32>
    %460 = tpu.matmul %452, %12, %cst_123 {dimension_numbers = #tpu.dot_dimension_numbers<[1], [0], [0], [1], [0, 0, 1, 1], [], []>} : vector<8x128xf32>, vector<128x512xf32>, vector<8x512xf32> -> vector<8x512xf32>
    %461 = arith.addf %459, %460 : vector<8x512xf32>
    %462 = vector.extract_strided_slice %461 {offsets = [0, 0], sizes = [8, 128], strides = [1, 1]} : vector<8x512xf32> to vector<8x128xf32>
    %463 = arith.negf %462 : vector<8x128xf32>
    %464 = math.exp %463 : vector<8x128xf32>
    %cst_124 = arith.constant 1.000000e+00 : f32
    %465 = vector.broadcast %cst_124 : f32 to vector<8x128xf32>
    %466 = arith.addf %465, %464 : vector<8x128xf32>
    %467 = arith.divf %465, %466 : vector<8x128xf32>
    %468 = vector.extract_strided_slice %461 {offsets = [0, 128], sizes = [8, 128], strides = [1, 1]} : vector<8x512xf32> to vector<8x128xf32>
    %469 = arith.negf %468 : vector<8x128xf32>
    %470 = math.exp %469 : vector<8x128xf32>
    %cst_125 = arith.constant 1.000000e+00 : f32
    %471 = vector.broadcast %cst_125 : f32 to vector<8x128xf32>
    %472 = arith.addf %471, %470 : vector<8x128xf32>
    %473 = arith.divf %471, %472 : vector<8x128xf32>
    %474 = vector.extract_strided_slice %461 {offsets = [0, 256], sizes = [8, 128], strides = [1, 1]} : vector<8x512xf32> to vector<8x128xf32>
    %475 = math.tanh %474 : vector<8x128xf32>
    %476 = vector.extract_strided_slice %461 {offsets = [0, 384], sizes = [8, 128], strides = [1, 1]} : vector<8x512xf32> to vector<8x128xf32>
    %477 = arith.negf %476 : vector<8x128xf32>
    %478 = math.exp %477 : vector<8x128xf32>
    %cst_126 = arith.constant 1.000000e+00 : f32
    %479 = vector.broadcast %cst_126 : f32 to vector<8x128xf32>
    %480 = arith.addf %479, %478 : vector<8x128xf32>
    %481 = arith.divf %479, %480 : vector<8x128xf32>
    %482 = arith.mulf %473, %450 : vector<8x128xf32>
    %483 = arith.mulf %467, %475 : vector<8x128xf32>
    %484 = arith.addf %482, %483 : vector<8x128xf32>
    %485 = math.tanh %484 : vector<8x128xf32>
    %486 = arith.mulf %481, %485 : vector<8x128xf32>
    %487 = arith.index_cast %c13_i32 : i32 to index
    %c0_127 = arith.constant 0 : index
    %c0_128 = arith.constant 0 : index
    %488 = vector.load %arg11[%487, %c0_127, %c0_128] : memref<16x8x128xf32, #tpu.memory_space<vmem>>, vector<1x8x128xf32>
    %489 = vector.shape_cast %488 : vector<1x8x128xf32> to vector<8x128xf32>
    %490 = vector.shape_cast %486 : vector<8x128xf32> to vector<1x8x128xf32>
    tpu.vector_store %arg11[%487, %c0_127, %c0_128], %490 {strides = array<i32>} : memref<16x8x128xf32, #tpu.memory_space<vmem>>, vector<1x8x128xf32>,
    %c14_i32 = arith.constant 14 : i32
    %491 = arith.index_cast %c14_i32 : i32 to index
    %c0_129 = arith.constant 0 : index
    %c0_130 = arith.constant 0 : index
    %492 = vector.load %arg10[%491, %c0_129, %c0_130] : memref<16x8x512xf32, #tpu.memory_space<vmem>>, vector<1x8x512xf32>
    %493 = vector.shape_cast %492 : vector<1x8x512xf32> to vector<8x512xf32>
    %cst_131 = arith.constant dense<0.000000e+00> : vector<8x512xf32>
    %494 = tpu.matmul %486, %12, %cst_131 {dimension_numbers = #tpu.dot_dimension_numbers<[1], [0], [0], [1], [0, 0, 1, 1], [], []>} : vector<8x128xf32>, vector<128x512xf32>, vector<8x512xf32> -> vector<8x512xf32>
    %495 = arith.addf %493, %494 : vector<8x512xf32>
    %496 = vector.extract_strided_slice %495 {offsets = [0, 0], sizes = [8, 128], strides = [1, 1]} : vector<8x512xf32> to vector<8x128xf32>
    %497 = arith.negf %496 : vector<8x128xf32>
    %498 = math.exp %497 : vector<8x128xf32>
    %cst_132 = arith.constant 1.000000e+00 : f32
    %499 = vector.broadcast %cst_132 : f32 to vector<8x128xf32>
    %500 = arith.addf %499, %498 : vector<8x128xf32>
    %501 = arith.divf %499, %500 : vector<8x128xf32>
    %502 = vector.extract_strided_slice %495 {offsets = [0, 128], sizes = [8, 128], strides = [1, 1]} : vector<8x512xf32> to vector<8x128xf32>
    %503 = arith.negf %502 : vector<8x128xf32>
    %504 = math.exp %503 : vector<8x128xf32>
    %cst_133 = arith.constant 1.000000e+00 : f32
    %505 = vector.broadcast %cst_133 : f32 to vector<8x128xf32>
    %506 = arith.addf %505, %504 : vector<8x128xf32>
    %507 = arith.divf %505, %506 : vector<8x128xf32>
    %508 = vector.extract_strided_slice %495 {offsets = [0, 256], sizes = [8, 128], strides = [1, 1]} : vector<8x512xf32> to vector<8x128xf32>
    %509 = math.tanh %508 : vector<8x128xf32>
    %510 = vector.extract_strided_slice %495 {offsets = [0, 384], sizes = [8, 128], strides = [1, 1]} : vector<8x512xf32> to vector<8x128xf32>
    %511 = arith.negf %510 : vector<8x128xf32>
    %512 = math.exp %511 : vector<8x128xf32>
    %cst_134 = arith.constant 1.000000e+00 : f32
    %513 = vector.broadcast %cst_134 : f32 to vector<8x128xf32>
    %514 = arith.addf %513, %512 : vector<8x128xf32>
    %515 = arith.divf %513, %514 : vector<8x128xf32>
    %516 = arith.mulf %507, %484 : vector<8x128xf32>
    %517 = arith.mulf %501, %509 : vector<8x128xf32>
    %518 = arith.addf %516, %517 : vector<8x128xf32>
    %519 = math.tanh %518 : vector<8x128xf32>
    %520 = arith.mulf %515, %519 : vector<8x128xf32>
    %521 = arith.index_cast %c14_i32 : i32 to index
    %c0_135 = arith.constant 0 : index
    %c0_136 = arith.constant 0 : index
    %522 = vector.load %arg11[%521, %c0_135, %c0_136] : memref<16x8x128xf32, #tpu.memory_space<vmem>>, vector<1x8x128xf32>
    %523 = vector.shape_cast %522 : vector<1x8x128xf32> to vector<8x128xf32>
    %524 = vector.shape_cast %520 : vector<8x128xf32> to vector<1x8x128xf32>
    tpu.vector_store %arg11[%521, %c0_135, %c0_136], %524 {strides = array<i32>} : memref<16x8x128xf32, #tpu.memory_space<vmem>>, vector<1x8x128xf32>,
    %c15_i32 = arith.constant 15 : i32
    %525 = arith.index_cast %c15_i32 : i32 to index
    %c0_137 = arith.constant 0 : index
    %c0_138 = arith.constant 0 : index
    %526 = vector.load %arg10[%525, %c0_137, %c0_138] : memref<16x8x512xf32, #tpu.memory_space<vmem>>, vector<1x8x512xf32>
    %527 = vector.shape_cast %526 : vector<1x8x512xf32> to vector<8x512xf32>
    %cst_139 = arith.constant dense<0.000000e+00> : vector<8x512xf32>
    %528 = tpu.matmul %520, %12, %cst_139 {dimension_numbers = #tpu.dot_dimension_numbers<[1], [0], [0], [1], [0, 0, 1, 1], [], []>} : vector<8x128xf32>, vector<128x512xf32>, vector<8x512xf32> -> vector<8x512xf32>
    %529 = arith.addf %527, %528 : vector<8x512xf32>
    %530 = vector.extract_strided_slice %529 {offsets = [0, 0], sizes = [8, 128], strides = [1, 1]} : vector<8x512xf32> to vector<8x128xf32>
    %531 = arith.negf %530 : vector<8x128xf32>
    %532 = math.exp %531 : vector<8x128xf32>
    %cst_140 = arith.constant 1.000000e+00 : f32
    %533 = vector.broadcast %cst_140 : f32 to vector<8x128xf32>
    %534 = arith.addf %533, %532 : vector<8x128xf32>
    %535 = arith.divf %533, %534 : vector<8x128xf32>
    %536 = vector.extract_strided_slice %529 {offsets = [0, 128], sizes = [8, 128], strides = [1, 1]} : vector<8x512xf32> to vector<8x128xf32>
    %537 = arith.negf %536 : vector<8x128xf32>
    %538 = math.exp %537 : vector<8x128xf32>
    %cst_141 = arith.constant 1.000000e+00 : f32
    %539 = vector.broadcast %cst_141 : f32 to vector<8x128xf32>
    %540 = arith.addf %539, %538 : vector<8x128xf32>
    %541 = arith.divf %539, %540 : vector<8x128xf32>
    %542 = vector.extract_strided_slice %529 {offsets = [0, 256], sizes = [8, 128], strides = [1, 1]} : vector<8x512xf32> to vector<8x128xf32>
    %543 = math.tanh %542 : vector<8x128xf32>
    %544 = vector.extract_strided_slice %529 {offsets = [0, 384], sizes = [8, 128], strides = [1, 1]} : vector<8x512xf32> to vector<8x128xf32>
    %545 = arith.negf %544 : vector<8x128xf32>
    %546 = math.exp %545 : vector<8x128xf32>
    %cst_142 = arith.constant 1.000000e+00 : f32
    %547 = vector.broadcast %cst_142 : f32 to vector<8x128xf32>
    %548 = arith.addf %547, %546 : vector<8x128xf32>
    %549 = arith.divf %547, %548 : vector<8x128xf32>
    %550 = arith.mulf %541, %518 : vector<8x128xf32>
    %551 = arith.mulf %535, %543 : vector<8x128xf32>
    %552 = arith.addf %550, %551 : vector<8x128xf32>
    %553 = math.tanh %552 : vector<8x128xf32>
    %554 = arith.mulf %549, %553 : vector<8x128xf32>
    %555 = arith.index_cast %c15_i32 : i32 to index
    %c0_143 = arith.constant 0 : index
    %c0_144 = arith.constant 0 : index
    %556 = vector.load %arg11[%555, %c0_143, %c0_144] : memref<16x8x128xf32, #tpu.memory_space<vmem>>, vector<1x8x128xf32>
    %557 = vector.shape_cast %556 : vector<1x8x128xf32> to vector<8x128xf32>
    %558 = vector.shape_cast %554 : vector<8x128xf32> to vector<1x8x128xf32>
    tpu.vector_store %arg11[%555, %c0_143, %c0_144], %558 {strides = array<i32>} : memref<16x8x128xf32, #tpu.memory_space<vmem>>, vector<1x8x128xf32>,
    %c16_i32 = arith.constant 16 : i32
    %c0_145 = arith.constant 0 : index
    %c0_146 = arith.constant 0 : index
    %559 = vector.load %arg8[%c0_145, %c0_146] : memref<8x128xf32, #tpu.memory_space<vmem>>, vector<8x128xf32>
    tpu.vector_store %arg8[%c0_145, %c0_146], %554 {strides = array<i32>} : memref<8x128xf32, #tpu.memory_space<vmem>>, vector<8x128xf32>,
    %c0_147 = arith.constant 0 : index
    %c0_148 = arith.constant 0 : index
    %560 = vector.load %arg9[%c0_147, %c0_148] : memref<8x128xf32, #tpu.memory_space<vmem>>, vector<8x128xf32>
    tpu.vector_store %arg9[%c0_147, %c0_148], %552 {strides = array<i32>} : memref<8x128xf32, #tpu.memory_space<vmem>>, vector<8x128xf32>,
    %c0_149 = arith.constant 0 : index
    %c0_150 = arith.constant 0 : index
    %c0_151 = arith.constant 0 : index
    %561 = vector.load %arg11[%c0_149, %c0_150, %c0_151] : memref<16x8x128xf32, #tpu.memory_space<vmem>>, vector<1x8x128xf32>
    %562 = vector.shape_cast %561 : vector<1x8x128xf32> to vector<8x128xf32>
    %c0_152 = arith.constant 0 : index
    %c0_153 = arith.constant 0 : index
    %c0_154 = arith.constant 0 : index
    %563 = vector.load %arg6[%c0_152, %c0_153, %c0_154] : memref<8x16x128xf32, #tpu.memory_space<vmem>>, vector<8x1x128xf32>
    %564 = vector.shape_cast %563 : vector<8x1x128xf32> to vector<8x128xf32>
    %565 = vector.shape_cast %562 : vector<8x128xf32> to vector<8x1x128xf32>
    tpu.vector_store %arg6[%c0_152, %c0_153, %c0_154], %565 {strides = array<i32>} : memref<8x16x128xf32, #tpu.memory_space<vmem>>, vector<8x1x128xf32>,
    %c1 = arith.constant 1 : index
    %c0_155 = arith.constant 0 : index
    %c0_156 = arith.constant 0 : index
    %566 = vector.load %arg11[%c1, %c0_155, %c0_156] : memref<16x8x128xf32, #tpu.memory_space<vmem>>, vector<1x8x128xf32>
    %567 = vector.shape_cast %566 : vector<1x8x128xf32> to vector<8x128xf32>
    %c0_157 = arith.constant 0 : index
    %c1_158 = arith.constant 1 : index
    %c0_159 = arith.constant 0 : index
    %568 = vector.load %arg6[%c0_157, %c1_158, %c0_159] : memref<8x16x128xf32, #tpu.memory_space<vmem>>, vector<8x1x128xf32>
    %569 = vector.shape_cast %568 : vector<8x1x128xf32> to vector<8x128xf32>
    %570 = vector.shape_cast %567 : vector<8x128xf32> to vector<8x1x128xf32>
    tpu.vector_store %arg6[%c0_157, %c1_158, %c0_159], %570 {strides = array<i32>} : memref<8x16x128xf32, #tpu.memory_space<vmem>>, vector<8x1x128xf32>,
    %c2 = arith.constant 2 : index
    %c0_160 = arith.constant 0 : index
    %c0_161 = arith.constant 0 : index
    %571 = vector.load %arg11[%c2, %c0_160, %c0_161] : memref<16x8x128xf32, #tpu.memory_space<vmem>>, vector<1x8x128xf32>
    %572 = vector.shape_cast %571 : vector<1x8x128xf32> to vector<8x128xf32>
    %c0_162 = arith.constant 0 : index
    %c2_163 = arith.constant 2 : index
    %c0_164 = arith.constant 0 : index
    %573 = vector.load %arg6[%c0_162, %c2_163, %c0_164] : memref<8x16x128xf32, #tpu.memory_space<vmem>>, vector<8x1x128xf32>
    %574 = vector.shape_cast %573 : vector<8x1x128xf32> to vector<8x128xf32>
    %575 = vector.shape_cast %572 : vector<8x128xf32> to vector<8x1x128xf32>
    tpu.vector_store %arg6[%c0_162, %c2_163, %c0_164], %575 {strides = array<i32>} : memref<8x16x128xf32, #tpu.memory_space<vmem>>, vector<8x1x128xf32>,
    %c3 = arith.constant 3 : index
    %c0_165 = arith.constant 0 : index
    %c0_166 = arith.constant 0 : index
    %576 = vector.load %arg11[%c3, %c0_165, %c0_166] : memref<16x8x128xf32, #tpu.memory_space<vmem>>, vector<1x8x128xf32>
    %577 = vector.shape_cast %576 : vector<1x8x128xf32> to vector<8x128xf32>
    %c0_167 = arith.constant 0 : index
    %c3_168 = arith.constant 3 : index
    %c0_169 = arith.constant 0 : index
    %578 = vector.load %arg6[%c0_167, %c3_168, %c0_169] : memref<8x16x128xf32, #tpu.memory_space<vmem>>, vector<8x1x128xf32>
    %579 = vector.shape_cast %578 : vector<8x1x128xf32> to vector<8x128xf32>
    %580 = vector.shape_cast %577 : vector<8x128xf32> to vector<8x1x128xf32>
    tpu.vector_store %arg6[%c0_167, %c3_168, %c0_169], %580 {strides = array<i32>} : memref<8x16x128xf32, #tpu.memory_space<vmem>>, vector<8x1x128xf32>,
    %c4 = arith.constant 4 : index
    %c0_170 = arith.constant 0 : index
    %c0_171 = arith.constant 0 : index
    %581 = vector.load %arg11[%c4, %c0_170, %c0_171] : memref<16x8x128xf32, #tpu.memory_space<vmem>>, vector<1x8x128xf32>
    %582 = vector.shape_cast %581 : vector<1x8x128xf32> to vector<8x128xf32>
    %c0_172 = arith.constant 0 : index
    %c4_173 = arith.constant 4 : index
    %c0_174 = arith.constant 0 : index
    %583 = vector.load %arg6[%c0_172, %c4_173, %c0_174] : memref<8x16x128xf32, #tpu.memory_space<vmem>>, vector<8x1x128xf32>
    %584 = vector.shape_cast %583 : vector<8x1x128xf32> to vector<8x128xf32>
    %585 = vector.shape_cast %582 : vector<8x128xf32> to vector<8x1x128xf32>
    tpu.vector_store %arg6[%c0_172, %c4_173, %c0_174], %585 {strides = array<i32>} : memref<8x16x128xf32, #tpu.memory_space<vmem>>, vector<8x1x128xf32>,
    %c5 = arith.constant 5 : index
    %c0_175 = arith.constant 0 : index
    %c0_176 = arith.constant 0 : index
    %586 = vector.load %arg11[%c5, %c0_175, %c0_176] : memref<16x8x128xf32, #tpu.memory_space<vmem>>, vector<1x8x128xf32>
    %587 = vector.shape_cast %586 : vector<1x8x128xf32> to vector<8x128xf32>
    %c0_177 = arith.constant 0 : index
    %c5_178 = arith.constant 5 : index
    %c0_179 = arith.constant 0 : index
    %588 = vector.load %arg6[%c0_177, %c5_178, %c0_179] : memref<8x16x128xf32, #tpu.memory_space<vmem>>, vector<8x1x128xf32>
    %589 = vector.shape_cast %588 : vector<8x1x128xf32> to vector<8x128xf32>
    %590 = vector.shape_cast %587 : vector<8x128xf32> to vector<8x1x128xf32>
    tpu.vector_store %arg6[%c0_177, %c5_178, %c0_179], %590 {strides = array<i32>} : memref<8x16x128xf32, #tpu.memory_space<vmem>>, vector<8x1x128xf32>,
    %c6 = arith.constant 6 : index
    %c0_180 = arith.constant 0 : index
    %c0_181 = arith.constant 0 : index
    %591 = vector.load %arg11[%c6, %c0_180, %c0_181] : memref<16x8x128xf32, #tpu.memory_space<vmem>>, vector<1x8x128xf32>
    %592 = vector.shape_cast %591 : vector<1x8x128xf32> to vector<8x128xf32>
    %c0_182 = arith.constant 0 : index
    %c6_183 = arith.constant 6 : index
    %c0_184 = arith.constant 0 : index
    %593 = vector.load %arg6[%c0_182, %c6_183, %c0_184] : memref<8x16x128xf32, #tpu.memory_space<vmem>>, vector<8x1x128xf32>
    %594 = vector.shape_cast %593 : vector<8x1x128xf32> to vector<8x128xf32>
    %595 = vector.shape_cast %592 : vector<8x128xf32> to vector<8x1x128xf32>
    tpu.vector_store %arg6[%c0_182, %c6_183, %c0_184], %595 {strides = array<i32>} : memref<8x16x128xf32, #tpu.memory_space<vmem>>, vector<8x1x128xf32>,
    %c7 = arith.constant 7 : index
    %c0_185 = arith.constant 0 : index
    %c0_186 = arith.constant 0 : index
    %596 = vector.load %arg11[%c7, %c0_185, %c0_186] : memref<16x8x128xf32, #tpu.memory_space<vmem>>, vector<1x8x128xf32>
    %597 = vector.shape_cast %596 : vector<1x8x128xf32> to vector<8x128xf32>
    %c0_187 = arith.constant 0 : index
    %c7_188 = arith.constant 7 : index
    %c0_189 = arith.constant 0 : index
    %598 = vector.load %arg6[%c0_187, %c7_188, %c0_189] : memref<8x16x128xf32, #tpu.memory_space<vmem>>, vector<8x1x128xf32>
    %599 = vector.shape_cast %598 : vector<8x1x128xf32> to vector<8x128xf32>
    %600 = vector.shape_cast %597 : vector<8x128xf32> to vector<8x1x128xf32>
    tpu.vector_store %arg6[%c0_187, %c7_188, %c0_189], %600 {strides = array<i32>} : memref<8x16x128xf32, #tpu.memory_space<vmem>>, vector<8x1x128xf32>,
    %c8 = arith.constant 8 : index
    %c0_190 = arith.constant 0 : index
    %c0_191 = arith.constant 0 : index
    %601 = vector.load %arg11[%c8, %c0_190, %c0_191] : memref<16x8x128xf32, #tpu.memory_space<vmem>>, vector<1x8x128xf32>
    %602 = vector.shape_cast %601 : vector<1x8x128xf32> to vector<8x128xf32>
    %c0_192 = arith.constant 0 : index
    %c8_193 = arith.constant 8 : index
    %c0_194 = arith.constant 0 : index
    %603 = vector.load %arg6[%c0_192, %c8_193, %c0_194] : memref<8x16x128xf32, #tpu.memory_space<vmem>>, vector<8x1x128xf32>
    %604 = vector.shape_cast %603 : vector<8x1x128xf32> to vector<8x128xf32>
    %605 = vector.shape_cast %602 : vector<8x128xf32> to vector<8x1x128xf32>
    tpu.vector_store %arg6[%c0_192, %c8_193, %c0_194], %605 {strides = array<i32>} : memref<8x16x128xf32, #tpu.memory_space<vmem>>, vector<8x1x128xf32>,
    %c9 = arith.constant 9 : index
    %c0_195 = arith.constant 0 : index
    %c0_196 = arith.constant 0 : index
    %606 = vector.load %arg11[%c9, %c0_195, %c0_196] : memref<16x8x128xf32, #tpu.memory_space<vmem>>, vector<1x8x128xf32>
    %607 = vector.shape_cast %606 : vector<1x8x128xf32> to vector<8x128xf32>
    %c0_197 = arith.constant 0 : index
    %c9_198 = arith.constant 9 : index
    %c0_199 = arith.constant 0 : index
    %608 = vector.load %arg6[%c0_197, %c9_198, %c0_199] : memref<8x16x128xf32, #tpu.memory_space<vmem>>, vector<8x1x128xf32>
    %609 = vector.shape_cast %608 : vector<8x1x128xf32> to vector<8x128xf32>
    %610 = vector.shape_cast %607 : vector<8x128xf32> to vector<8x1x128xf32>
    tpu.vector_store %arg6[%c0_197, %c9_198, %c0_199], %610 {strides = array<i32>} : memref<8x16x128xf32, #tpu.memory_space<vmem>>, vector<8x1x128xf32>,
    %c10 = arith.constant 10 : index
    %c0_200 = arith.constant 0 : index
    %c0_201 = arith.constant 0 : index
    %611 = vector.load %arg11[%c10, %c0_200, %c0_201] : memref<16x8x128xf32, #tpu.memory_space<vmem>>, vector<1x8x128xf32>
    %612 = vector.shape_cast %611 : vector<1x8x128xf32> to vector<8x128xf32>
    %c0_202 = arith.constant 0 : index
    %c10_203 = arith.constant 10 : index
    %c0_204 = arith.constant 0 : index
    %613 = vector.load %arg6[%c0_202, %c10_203, %c0_204] : memref<8x16x128xf32, #tpu.memory_space<vmem>>, vector<8x1x128xf32>
    %614 = vector.shape_cast %613 : vector<8x1x128xf32> to vector<8x128xf32>
    %615 = vector.shape_cast %612 : vector<8x128xf32> to vector<8x1x128xf32>
    tpu.vector_store %arg6[%c0_202, %c10_203, %c0_204], %615 {strides = array<i32>} : memref<8x16x128xf32, #tpu.memory_space<vmem>>, vector<8x1x128xf32>,
    %c11 = arith.constant 11 : index
    %c0_205 = arith.constant 0 : index
    %c0_206 = arith.constant 0 : index
    %616 = vector.load %arg11[%c11, %c0_205, %c0_206] : memref<16x8x128xf32, #tpu.memory_space<vmem>>, vector<1x8x128xf32>
    %617 = vector.shape_cast %616 : vector<1x8x128xf32> to vector<8x128xf32>
    %c0_207 = arith.constant 0 : index
    %c11_208 = arith.constant 11 : index
    %c0_209 = arith.constant 0 : index
    %618 = vector.load %arg6[%c0_207, %c11_208, %c0_209] : memref<8x16x128xf32, #tpu.memory_space<vmem>>, vector<8x1x128xf32>
    %619 = vector.shape_cast %618 : vector<8x1x128xf32> to vector<8x128xf32>
    %620 = vector.shape_cast %617 : vector<8x128xf32> to vector<8x1x128xf32>
    tpu.vector_store %arg6[%c0_207, %c11_208, %c0_209], %620 {strides = array<i32>} : memref<8x16x128xf32, #tpu.memory_space<vmem>>, vector<8x1x128xf32>,
    %c12 = arith.constant 12 : index
    %c0_210 = arith.constant 0 : index
    %c0_211 = arith.constant 0 : index
    %621 = vector.load %arg11[%c12, %c0_210, %c0_211] : memref<16x8x128xf32, #tpu.memory_space<vmem>>, vector<1x8x128xf32>
    %622 = vector.shape_cast %621 : vector<1x8x128xf32> to vector<8x128xf32>
    %c0_212 = arith.constant 0 : index
    %c12_213 = arith.constant 12 : index
    %c0_214 = arith.constant 0 : index
    %623 = vector.load %arg6[%c0_212, %c12_213, %c0_214] : memref<8x16x128xf32, #tpu.memory_space<vmem>>, vector<8x1x128xf32>
    %624 = vector.shape_cast %623 : vector<8x1x128xf32> to vector<8x128xf32>
    %625 = vector.shape_cast %622 : vector<8x128xf32> to vector<8x1x128xf32>
    tpu.vector_store %arg6[%c0_212, %c12_213, %c0_214], %625 {strides = array<i32>} : memref<8x16x128xf32, #tpu.memory_space<vmem>>, vector<8x1x128xf32>,
    %c13 = arith.constant 13 : index
    %c0_215 = arith.constant 0 : index
    %c0_216 = arith.constant 0 : index
    %626 = vector.load %arg11[%c13, %c0_215, %c0_216] : memref<16x8x128xf32, #tpu.memory_space<vmem>>, vector<1x8x128xf32>
    %627 = vector.shape_cast %626 : vector<1x8x128xf32> to vector<8x128xf32>
    %c0_217 = arith.constant 0 : index
    %c13_218 = arith.constant 13 : index
    %c0_219 = arith.constant 0 : index
    %628 = vector.load %arg6[%c0_217, %c13_218, %c0_219] : memref<8x16x128xf32, #tpu.memory_space<vmem>>, vector<8x1x128xf32>
    %629 = vector.shape_cast %628 : vector<8x1x128xf32> to vector<8x128xf32>
    %630 = vector.shape_cast %627 : vector<8x128xf32> to vector<8x1x128xf32>
    tpu.vector_store %arg6[%c0_217, %c13_218, %c0_219], %630 {strides = array<i32>} : memref<8x16x128xf32, #tpu.memory_space<vmem>>, vector<8x1x128xf32>,
    %c14 = arith.constant 14 : index
    %c0_220 = arith.constant 0 : index
    %c0_221 = arith.constant 0 : index
    %631 = vector.load %arg11[%c14, %c0_220, %c0_221] : memref<16x8x128xf32, #tpu.memory_space<vmem>>, vector<1x8x128xf32>
    %632 = vector.shape_cast %631 : vector<1x8x128xf32> to vector<8x128xf32>
    %c0_222 = arith.constant 0 : index
    %c14_223 = arith.constant 14 : index
    %c0_224 = arith.constant 0 : index
    %633 = vector.load %arg6[%c0_222, %c14_223, %c0_224] : memref<8x16x128xf32, #tpu.memory_space<vmem>>, vector<8x1x128xf32>
    %634 = vector.shape_cast %633 : vector<8x1x128xf32> to vector<8x128xf32>
    %635 = vector.shape_cast %632 : vector<8x128xf32> to vector<8x1x128xf32>
    tpu.vector_store %arg6[%c0_222, %c14_223, %c0_224], %635 {strides = array<i32>} : memref<8x16x128xf32, #tpu.memory_space<vmem>>, vector<8x1x128xf32>,
    %c15 = arith.constant 15 : index
    %c0_225 = arith.constant 0 : index
    %c0_226 = arith.constant 0 : index
    %636 = vector.load %arg11[%c15, %c0_225, %c0_226] : memref<16x8x128xf32, #tpu.memory_space<vmem>>, vector<1x8x128xf32>
    %637 = vector.shape_cast %636 : vector<1x8x128xf32> to vector<8x128xf32>
    %c0_227 = arith.constant 0 : index
    %c15_228 = arith.constant 15 : index
    %c0_229 = arith.constant 0 : index
    %638 = vector.load %arg6[%c0_227, %c15_228, %c0_229] : memref<8x16x128xf32, #tpu.memory_space<vmem>>, vector<8x1x128xf32>
    %639 = vector.shape_cast %638 : vector<8x1x128xf32> to vector<8x128xf32>
    %640 = vector.shape_cast %637 : vector<8x128xf32> to vector<8x1x128xf32>
    tpu.vector_store %arg6[%c0_227, %c15_228, %c0_229], %640 {strides = array<i32>} : memref<8x16x128xf32, #tpu.memory_space<vmem>>, vector<8x1x128xf32>,
    %c0_i32_230 = arith.constant 0 : i32
    %641 = arith.cmpi eq, %arg1, %c0_i32_230 : i32
    %642 = arith.extui %641 : i1 to i32
    %c0_i32_231 = arith.constant 0 : i32
    %643 = arith.cmpi ne, %642, %c0_i32_231 : i32
    scf.if %643 {
      %c0_232 = arith.constant 0 : index
      %c0_233 = arith.constant 0 : index
      %644 = vector.load %arg7[%c0_232, %c0_233] : memref<8x128xf32, #tpu.memory_space<vmem>>, vector<8x128xf32>
      tpu.vector_store %arg7[%c0_232, %c0_233], %552 {strides = array<i32>} : memref<8x128xf32, #tpu.memory_space<vmem>>, vector<8x128xf32>,
    } else {
    }
    return
  }
  func.func @transform_0(%arg0: i32, %arg1: i32) -> (i32, i32, i32) {
    %c0_i32 = arith.constant 0 : i32
    %c0_i32_0 = arith.constant 0 : i32
    return %arg1, %arg0, %c0_i32 : i32, i32, i32
  }
  func.func @transform_1(%arg0: i32, %arg1: i32) -> (i32, i32) {
    %c0_i32 = arith.constant 0 : i32
    %c0_i32_0 = arith.constant 0 : i32
    %c0_i32_1 = arith.constant 0 : i32
    return %c0_i32, %c0_i32_0 : i32, i32
  }
  func.func @transform_2(%arg0: i32, %arg1: i32) -> (i32, i32) {
    %c0_i32 = arith.constant 0 : i32
    %c0_i32_0 = arith.constant 0 : i32
    %c0_i32_1 = arith.constant 0 : i32
    return %c0_i32, %c0_i32_0 : i32, i32
  }
  func.func @transform_3(%arg0: i32, %arg1: i32) -> (i32, i32) {
    %c0_i32 = arith.constant 0 : i32
    %c0_i32_0 = arith.constant 0 : i32
    %c0_i32_1 = arith.constant 0 : i32
    return %c0_i32, %c0_i32_0 : i32, i32
  }
  func.func @transform_4(%arg0: i32, %arg1: i32) -> (i32, i32, i32) {
    %c0_i32 = arith.constant 0 : i32
    %c0_i32_0 = arith.constant 0 : i32
    return %arg0, %arg1, %c0_i32 : i32, i32, i32
  }
  func.func @transform_5(%arg0: i32, %arg1: i32) -> (i32, i32) {
    %c0_i32 = arith.constant 0 : i32
    %c0_i32_0 = arith.constant 0 : i32
    return %arg0, %c0_i32 : i32, i32
  }
}

</mosaic_0001>

<llo_original>
// kernel: tpu_custom_call.1
$region0: #{tpu_custom_call.1}
  #allocation0 [shape = 'u32[]', space=smem, size = 0x4, offset = 0x4, fixed_abs, tag = 'smem constant byte address 0x4 - core index']
  #allocation1 [shape = 'u32[144,128]{1,0:T(1,128)}', space=vmem, size = 0x12000, scoped, tag = 'internal scratch']
  #allocation2 [shape = 'f32[8,128]{1,0:T(8,128)}', space=vmem, size = 0x1000, scoped, tag = 'scratch operand']
  #allocation3 [shape = 'f32[8,128]{1,0:T(8,128)}', space=vmem, size = 0x1000, scoped, tag = 'scratch operand']
  #allocation4 [shape = 'f32[16,8,512]{2,1,0:T(8,128)}', space=vmem, size = 0x40000, scoped, tag = 'scratch operand']
  #allocation5 [shape = 'f32[16,8,128]{2,1,0:T(8,128)}', space=vmem, size = 0x10000, scoped, tag = 'scratch operand']
  %s0 = inlined_call_operand.hbm [shape: f32[16,8,16], index: 0, kind: input, shape index: {}]
  %s1 = inlined_call_operand.hbm [shape: f32[16,512], index: 1, kind: input, shape index: {}]
  %s2 = inlined_call_operand.hbm [shape: f32[128,512], index: 2, kind: input, shape index: {}]
  %s3 = inlined_call_operand.vmem [shape: f32[1,512], index: 3, kind: input, shape index: {}]
  %s4 = inlined_call_operand.hbm [shape: f32[8,16,128], index: 4, kind: output, shape index: {0}]
  %s5 = inlined_call_operand.hbm [shape: f32[8,128], index: 5, kind: output, shape index: {1}]
  %6 = xla_tuple %s4, %s5
  %s7 = sld [smem:[#allocation0]]
  $region54: #{tpu_custom_call.1} parent=0
    _
  %s9 = ssub.s32 1, %s7
  %s10 = scalar_select 0, %s9, %s7
  $region1: #{tpu_custom_call.1} parent=0
    #allocation6 [shape = 'u8[65536]{0}', space=vmem, size = 0x10000, scoped, tag = 'input window, operand 0, single buffered']
    #allocation7 [shape = 's32[1]{0}', space=sflag, size = 0x4, scoped, tag = 'scoped memory for tpu_custom_call.1']
    #allocation8 [shape = 's32[1]{0}', space=sflag, size = 0x4, scoped, tag = 'scoped memory for tpu_custom_call.1']
    #allocation9 [shape = 'u8[32768]{0}', space=vmem, size = 0x8000, scoped, tag = 'input window, operand 1, single buffered']
    #allocation10 [shape = 's32[1]{0}', space=sflag, size = 0x4, scoped, tag = 'scoped memory for tpu_custom_call.1']
    #allocation11 [shape = 'u8[262144]{0}', space=vmem, size = 0x40000, scoped, tag = 'input window, operand 2, single buffered']
    #allocation12 [shape = 'u8[65536]{0}', space=vmem, size = 0x10000, scoped, tag = 'output window, operand 0, single buffered']
    #allocation13 [shape = 'u8[4096]{0}', space=vmem, size = 0x1000, scoped, tag = 'output window, operand 1, single buffered']
    #allocation14 [shape = 's32[1]{0}', space=sflag, size = 0x4, scoped, tag = 'scoped memory for tpu_custom_call.1']
    %11 = vsyncpa [#allocation7], 0
    %12 = vsyncpa [#allocation10], 0
    %13 = vsyncpa [#allocation8], 0
    %14 = vsyncpa [#allocation14], 0
    // Predicated region
    $region2: #{tpu_custom_call.1} parent=1 // pred_check
      _
    $region3: #{tpu_custom_call.1} parent=1 // pred_check_branch
      %16 = sbr.rel (0) target = $region5
    $region4: #{tpu_custom_call.1} parent=1 // pred_region
      %s18 = ssub.s32 2048, 2048
      %19 = vsyncadd [#allocation7], %s18
      %s20 = sshll.u32 [#allocation6], 4
      %s21 = int_to_ptr.vmem [resolvable:$true] %s20
      %26 = dma.hbm_to_vmem [thread:$0]  %s0, 2048, %s21, [#allocation7], 128, 128, 8
    $region5: #{tpu_custom_call.1} parent=1 // pred_fallthru
      _
    // Predicated region
    $region6: #{tpu_custom_call.1} parent=1 // pred_check
      _
    $region7: #{tpu_custom_call.1} parent=1 // pred_check_branch
      %28 = sbr.rel (0) target = $region9
    $region8: #{tpu_custom_call.1} parent=1 // pred_region
      %s30 = ssub.s32 1024, 1024
      %31 = vsyncadd [#allocation10], %s30
      %s32 = sshll.u32 [#allocation9], 4
      %s33 = int_to_ptr.vmem [resolvable:$true] %s32
      %38 = dma.hbm_to_vmem [thread:$0]  %s1, 1024, %s33, [#allocation10], 512, 512, 32
    $region9: #{tpu_custom_call.1} parent=1 // pred_fallthru
      _
    // Predicated region
    $region10: #{tpu_custom_call.1} parent=1 // pred_check
      _
    $region11: #{tpu_custom_call.1} parent=1 // pred_check_branch
      %40 = sbr.rel (0) target = $region13
    $region12: #{tpu_custom_call.1} parent=1 // pred_region
      %s42 = ssub.s32 8192, 8192
      %43 = vsyncadd [#allocation10], %s42
      %s44 = sshll.u32 [#allocation11], 4
      %s45 = int_to_ptr.vmem [resolvable:$true] %s44
      %50 = dma.hbm_to_vmem [thread:$0]  %s2, 8192, %s45, [#allocation10], 512, 512, 32
    $region13: #{tpu_custom_call.1} parent=1 // pred_fallthru
      _
    // Predicated region
    $region14: #{tpu_custom_call.1} parent=1 // pred_check
      _
    $region15: #{tpu_custom_call.1} parent=1 // pred_check_branch
      %52 = sbr.rel (0) target = $region17
    $region16: #{tpu_custom_call.1} parent=1 // pred_region
      _
    $region17: #{tpu_custom_call.1} parent=1 // pred_fallthru
      _
    // Predicated region
    $region18: #{tpu_custom_call.1} parent=1 // pred_check
      _
    $region19: #{tpu_custom_call.1} parent=1 // pred_check_branch
      %54 = sbr.rel (0) target = $region21
    $region20: #{tpu_custom_call.1} parent=1 // pred_region
      %55 = dma.done [#allocation7], 2048
    $region21: #{tpu_custom_call.1} parent=1 // pred_fallthru
      _
    // Predicated region
    $region22: #{tpu_custom_call.1} parent=1 // pred_check
      _
    $region23: #{tpu_custom_call.1} parent=1 // pred_check_branch
      %57 = sbr.rel (0) target = $region25
    $region24: #{tpu_custom_call.1} parent=1 // pred_region
      %58 = dma.done [#allocation10], 1024
    $region25: #{tpu_custom_call.1} parent=1 // pred_fallthru
      _
    // Predicated region
    $region26: #{tpu_custom_call.1} parent=1 // pred_check
      _
    $region27: #{tpu_custom_call.1} parent=1 // pred_check_branch
      %60 = sbr.rel (0) target = $region29
    $region28: #{tpu_custom_call.1} parent=1 // pred_region
      %61 = dma.done [#allocation10], 8192
    $region29: #{tpu_custom_call.1} parent=1 // pred_fallthru
      _
    %p62 = scmp.eq.s32.totalorder 0, 0
    // Predicated region
    $region30: #{tpu_custom_call.1} parent=1 // pred_check
      %p63 = pneg %p62
    $region31: #{tpu_custom_call.1} parent=1 // pred_check_branch
      %65 = sbr.rel (%p63) target = $region33
    $region32: #{tpu_custom_call.1} parent=1 // pred_region
      %66 = vst [vmem:[#allocation2] sm:$0xff] 0.0
      %67 = vst [vmem:[#allocation3] sm:$0xff] 0.0
    $region33: #{tpu_custom_call.1} parent=1 // pred_fallthru
      _
    %v68 = vld [vmem:[#allocation6] sm:$0xff]
    %v69 = vld [vmem:[#allocation6 + $0x8] sm:$0xff]
    %v70 = vld [vmem:[#allocation6 + $0x10] sm:$0xff]
    %v71 = vld [vmem:[#allocation6 + $0x18] sm:$0xff]
    %v72 = vld [vmem:[#allocation6 + $0x20] sm:$0xff]
    %v73 = vld [vmem:[#allocation6 + $0x28] sm:$0xff]
    %v74 = vld [vmem:[#allocation6 + $0x30] sm:$0xff]
    %v75 = vld [vmem:[#allocation6 + $0x38] sm:$0xff]
    %v76 = vld [vmem:[#allocation6 + $0x40] sm:$0xff]
    %v77 = vld [vmem:[#allocation6 + $0x48] sm:$0xff]
    %v78 = vld [vmem:[#allocation6 + $0x50] sm:$0xff]
    %v79 = vld [vmem:[#allocation6 + $0x58] sm:$0xff]
    %v80 = vld [vmem:[#allocation6 + $0x60] sm:$0xff]
    %v81 = vld [vmem:[#allocation6 + $0x68] sm:$0xff]
    %v82 = vld [vmem:[#allocation6 + $0x70] sm:$0xff]
    %v83 = vld [vmem:[#allocation6 + $0x78] sm:$0xff]
    %v84 = vld [vmem:[#allocation9] sm:$0xff]
    %v85 = vld [vmem:[#allocation9 + $0x8] sm:$0xff]
    %v86 = vld [vmem:[#allocation9 + $0x10] sm:$0xff]
    %v87 = vld [vmem:[#allocation9 + $0x18] sm:$0xff]
    %v88 = vld [vmem:[#allocation9 + $0x20] sm:$0xff]
    %v89 = vld [vmem:[#allocation9 + $0x28] sm:$0xff]
    %v90 = vld [vmem:[#allocation9 + $0x30] sm:$0xff]
    %v91 = vld [vmem:[#allocation9 + $0x38] sm:$0xff]
    %v92 = vld [vmem:[%s3] sm:$0xf]
    %v94 = vlaneseq
    %v95 = vshrl.u32 %v94, 7
    %v96 = vsub.s32 0, %v95
    %v97 = vrot.slane %v92, %v96
    %v98 = vlaneseq
    %v99 = vshrl.u32 %v98, 7
    %v100 = vsub.s32 1, %v99
    %v101 = vrot.slane %v92, %v100
    %v102 = vlaneseq
    %v103 = vshrl.u32 %v102, 7
    %v104 = vsub.s32 2, %v103
    %v105 = vrot.slane %v92, %v104
    %v106 = vlaneseq
    %v107 = vshrl.u32 %v106, 7
    %v108 = vsub.s32 3, %v107
    %v109 = vrot.slane %v92, %v108
    %vm114 = vcmask 130048
    %v116 = vsel %vm114, %v68, 0
    %v119 = vsel %vm114, %v69, 0
    %v122 = vsel %vm114, %v70, 0
    %v125 = vsel %vm114, %v71, 0
    %v128 = vsel %vm114, %v72, 0
    %v131 = vsel %vm114, %v73, 0
    %v134 = vsel %vm114, %v74, 0
    %v137 = vsel %vm114, %v75, 0
    %v140 = vsel %vm114, %v76, 0
    %v143 = vsel %vm114, %v77, 0
    %v146 = vsel %vm114, %v78, 0
    %v149 = vsel %vm114, %v79, 0
    %v152 = vsel %vm114, %v80, 0
    %v155 = vsel %vm114, %v81, 0
    %v158 = vsel %vm114, %v82, 0
    %v161 = vsel %vm114, %v83, 0
    %163 = vmatprep.subr.mxu0 %v85
    %164 = vmatpush1.msra.mxu0 %v84
    %165 = vmatprep.subr.mxu0 %v89
    %166 = vmatpush1.msra.mxu0 %v88
    %167 = vmatprep.subr.mxu0 0.0
    %168 = vmatpush1.msra.mxu0 0.0
    %169 = vmatprep.subr.mxu0 0.0
    %170 = vmatpush1.msra.mxu0 0.0
    %171 = vmatprep.subr.mxu0 0.0
    %172 = vmatpush1.msra.mxu0 0.0
    %173 = vmatprep.subr.mxu0 0.0
    %174 = vmatpush1.msra.mxu0 0.0
    %175 = vmatprep.subr.mxu0 0.0
    %176 = vmatpush1.msra.mxu0 0.0
    %177 = vmatprep.subr.mxu0 0.0
    %178 = vmatpush1.msra.mxu0 0.0
    %179 = vmatprep.subr.mxu0 0.0
    %180 = vmatpush1.msra.mxu0 0.0
    %181 = vmatprep.subr.mxu0 0.0
    %182 = vmatpush1.msra.mxu0 0.0
    %183 = vmatprep.subr.mxu0 0.0
    %184 = vmatpush1.msra.mxu0 0.0
    %185 = vmatprep.subr.mxu0 0.0
    %186 = vmatpush1.msra.mxu0 0.0
    %187 = vmatprep.subr.mxu0 0.0
    %188 = vmatpush1.msra.mxu0 0.0
    %189 = vmatprep.subr.mxu0 0.0
    %190 = vmatpush1.msra.mxu0 0.0
    %191 = vmatprep.subr.mxu0 0.0
    %192 = vmatpush1.msra.mxu0 0.0
    %193 = vmatprep.subr.mxu0 0.0
    %194 = vmatpush1.msra.mxu0 0.0
    %195 = vmatprep.subr.mxu0 0.0
    %196 = vmatpush1.msra.mxu0 0.0
    %197 = vmatprep.subr.mxu0 0.0
    %198 = vmatpush1.msra.mxu0 0.0
    %199 = vmatprep.subr.mxu0 0.0
    %200 = vmatpush1.msra.mxu0 0.0
    %201 = vmatprep.subr.mxu0 0.0
    %202 = vmatpush1.msra.mxu0 0.0
    %203 = vmatprep.subr.mxu0 0.0
    %204 = vmatpush1.msra.mxu0 0.0
    %205 = vmatprep.subr.mxu0 0.0
    %206 = vmatpush1.msra.mxu0 0.0
    %207 = vmatprep.subr.mxu0 0.0
    %208 = vmatpush1.msra.mxu0 0.0
    %209 = vmatprep.subr.mxu0 0.0
    %210 = vmatpush1.msra.mxu0 0.0
    %211 = vmatprep.subr.mxu0 0.0
    %212 = vmatpush1.msra.mxu0 0.0
    %213 = vmatprep.subr.mxu0 0.0
    %214 = vmatpush1.msra.mxu0 0.0
    %215 = vmatprep.subr.mxu0 0.0
    %216 = vmatpush1.msra.mxu0 0.0
    %217 = vmatprep.subr.mxu0 0.0
    %218 = vmatpush1.msra.mxu0 0.0
    %219 = vmatprep.subr.mxu0 0.0
    %220 = vmatpush1.msra.mxu0 0.0
    %221 = vmatprep.subr.mxu0 0.0
    %222 = vmatpush1.msra.mxu0 0.0
    %223 = vmatprep.subr.mxu0 0.0
    %224 = vmatpush1.msra.mxu0 0.0
    %225 = vmatprep.subr.mxu0 0.0
    %226 = vmatpush1.msra.mxu0 0.0
    %227 = vmatprep.mubr.f32.mxu0 0.0
    %228 = vmatmul.mubr.f32.gmra.mrb[0].mxu0 %v116
    %v229 = vpop.f32.mrb[0].mxu0
    %v230 = vadd.f32 %v97, %v229
    %v231 = vpop.f32.mrb[0].mxu0
    %v232 = vadd.f32 %v101, %v231
    %233 = vmatprep.mubr.f32.mxu0 0.0
    %234 = vmatmul.mubr.f32.gmra.mrb[0].mxu0 %v119
    %v235 = vpop.f32.mrb[0].mxu0
    %v236 = vadd.f32 %v97, %v235
    %v237 = vpop.f32.mrb[0].mxu0
    %v238 = vadd.f32 %v101, %v237
    %239 = vmatprep.mubr.f32.mxu0 0.0
    %240 = vmatmul.mubr.f32.gmra.mrb[0].mxu0 %v122
    %v241 = vpop.f32.mrb[0].mxu0
    %v242 = vadd.f32 %v97, %v241
    %v243 = vpop.f32.mrb[0].mxu0
    %v244 = vadd.f32 %v101, %v243
    %245 = vmatprep.mubr.f32.mxu0 0.0
    %246 = vmatmul.mubr.f32.gmra.mrb[0].mxu0 %v125
    %v247 = vpop.f32.mrb[0].mxu0
    %v248 = vadd.f32 %v97, %v247
    %v249 = vpop.f32.mrb[0].mxu0
    %v250 = vadd.f32 %v101, %v249
    %251 = vmatprep.mubr.f32.mxu0 0.0
    %252 = vmatmul.mubr.f32.gmra.mrb[0].mxu0 %v128
    %v253 = vpop.f32.mrb[0].mxu0
    %v254 = vadd.f32 %v97, %v253
    %v255 = vpop.f32.mrb[0].mxu0
    %v256 = vadd.f32 %v101, %v255
    %257 = vmatprep.mubr.f32.mxu0 0.0
    %258 = vmatmul.mubr.f32.gmra.mrb[0].mxu0 %v131
    %v259 = vpop.f32.mrb[0].mxu0
    %v260 = vadd.f32 %v97, %v259
    %v261 = vpop.f32.mrb[0].mxu0
    %v262 = vadd.f32 %v101, %v261
    %263 = vmatprep.mubr.f32.mxu0 0.0
    %264 = vmatmul.mubr.f32.gmra.mrb[0].mxu0 %v134
    %v265 = vpop.f32.mrb[0].mxu0
    %v266 = vadd.f32 %v97, %v265
    %v267 = vpop.f32.mrb[0].mxu0
    %v268 = vadd.f32 %v101, %v267
    %269 = vmatprep.mubr.f32.mxu0 0.0
    %270 = vmatmul.mubr.f32.gmra.mrb[0].mxu0 %v137
    %v271 = vpop.f32.mrb[0].mxu0
    %v272 = vadd.f32 %v97, %v271
    %v273 = vpop.f32.mrb[0].mxu0
    %v274 = vadd.f32 %v101, %v273
    %275 = vmatprep.mubr.f32.mxu0 0.0
    %276 = vmatmul.mubr.f32.gmra.mrb[0].mxu0 %v140
    %v277 = vpop.f32.mrb[0].mxu0
    %v278 = vadd.f32 %v97, %v277
    %v279 = vpop.f32.mrb[0].mxu0
    %v280 = vadd.f32 %v101, %v279
    %281 = vmatprep.mubr.f32.mxu0 0.0
    %282 = vmatmul.mubr.f32.gmra.mrb[0].mxu0 %v143
    %v283 = vpop.f32.mrb[0].mxu0
    %v284 = vadd.f32 %v97, %v283
    %v285 = vpop.f32.mrb[0].mxu0
    %v286 = vadd.f32 %v101, %v285
    %287 = vmatprep.mubr.f32.mxu0 0.0
    %288 = vmatmul.mubr.f32.gmra.mrb[0].mxu0 %v146
    %v289 = vpop.f32.mrb[0].mxu0
    %v290 = vadd.f32 %v97, %v289
    %v291 = vpop.f32.mrb[0].mxu0
    %v292 = vadd.f32 %v101, %v291
    %293 = vmatprep.mubr.f32.mxu0 0.0
    %294 = vmatmul.mubr.f32.gmra.mrb[0].mxu0 %v149
    %v295 = vpop.f32.mrb[0].mxu0
    %v296 = vadd.f32 %v97, %v295
    %v297 = vpop.f32.mrb[0].mxu0
    %v298 = vadd.f32 %v101, %v297
    %299 = vmatprep.mubr.f32.mxu0 0.0
    %300 = vmatmul.mubr.f32.gmra.mrb[0].mxu0 %v152
    %v301 = vpop.f32.mrb[0].mxu0
    %v302 = vadd.f32 %v97, %v301
    %v303 = vpop.f32.mrb[0].mxu0
    %v304 = vadd.f32 %v101, %v303
    %305 = vmatprep.mubr.f32.mxu0 0.0
    %306 = vmatmul.mubr.f32.gmra.mrb[0].mxu0 %v155
    %v307 = vpop.f32.mrb[0].mxu0
    %v308 = vadd.f32 %v97, %v307
    %v309 = vpop.f32.mrb[0].mxu0
    %v310 = vadd.f32 %v101, %v309
    %311 = vmatprep.mubr.f32.mxu0 0.0
    %312 = vmatmul.mubr.f32.gmra.mrb[0].mxu0 %v158
    %v313 = vpop.f32.mrb[0].mxu0
    %v314 = vadd.f32 %v97, %v313
    %v315 = vpop.f32.mrb[0].mxu0
    %v316 = vadd.f32 %v101, %v315
    %317 = vmatprep.mubr.f32.mxu0 0.0
    %318 = vmatmul.mubr.f32.gmra.mrb[0].mxu0 %v161
    %v319 = vpop.f32.mrb[0].mxu0
    %v320 = vadd.f32 %v97, %v319
    %v321 = vpop.f32.mrb[0].mxu0
    %v322 = vadd.f32 %v101, %v321
    %323 = vdwg.mxu0
    %324 = vmatprep.subr.mxu0 %v87
    %325 = vmatpush1.msra.mxu0 %v86
    %326 = vmatprep.subr.mxu0 %v91
    %327 = vmatpush1.msra.mxu0 %v90
    %328 = vmatprep.subr.mxu0 0.0
    %329 = vmatpush1.msra.mxu0 0.0
    %330 = vmatprep.subr.mxu0 0.0
    %331 = vmatpush1.msra.mxu0 0.0
    %332 = vmatprep.subr.mxu0 0.0
    %333 = vmatpush1.msra.mxu0 0.0
    %334 = vmatprep.subr.mxu0 0.0
    %335 = vmatpush1.msra.mxu0 0.0
    %336 = vmatprep.subr.mxu0 0.0
    %337 = vmatpush1.msra.mxu0 0.0
    %338 = vmatprep.subr.mxu0 0.0
    %339 = vmatpush1.msra.mxu0 0.0
    %340 = vmatprep.subr.mxu0 0.0
    %341 = vmatpush1.msra.mxu0 0.0
    %342 = vmatprep.subr.mxu0 0.0
    %343 = vmatpush1.msra.mxu0 0.0
    %344 = vmatprep.subr.mxu0 0.0
    %345 = vmatpush1.msra.mxu0 0.0
    %346 = vmatprep.subr.mxu0 0.0
    %347 = vmatpush1.msra.mxu0 0.0
    %348 = vmatprep.subr.mxu0 0.0
    %349 = vmatpush1.msra.mxu0 0.0
    %350 = vmatprep.subr.mxu0 0.0
    %351 = vmatpush1.msra.mxu0 0.0
    %352 = vmatprep.subr.mxu0 0.0
    %353 = vmatpush1.msra.mxu0 0.0
    %354 = vmatprep.subr.mxu0 0.0
    %355 = vmatpush1.msra.mxu0 0.0
    %356 = vmatprep.subr.mxu0 0.0
    %357 = vmatpush1.msra.mxu0 0.0
    %358 = vmatprep.subr.mxu0 0.0
    %359 = vmatpush1.msra.mxu0 0.0
    %360 = vmatprep.subr.mxu0 0.0
    %361 = vmatpush1.msra.mxu0 0.0
    %362 = vmatprep.subr.mxu0 0.0
    %363 = vmatpush1.msra.mxu0 0.0
    %364 = vmatprep.subr.mxu0 0.0
    %365 = vmatpush1.msra.mxu0 0.0
    %366 = vmatprep.subr.mxu0 0.0
    %367 = vmatpush1.msra.mxu0 0.0
    %368 = vmatprep.subr.mxu0 0.0
    %369 = vmatpush1.msra.mxu0 0.0
    %370 = vmatprep.subr.mxu0 0.0
    %371 = vmatpush1.msra.mxu0 0.0
    %372 = vmatprep.subr.mxu0 0.0
    %373 = vmatpush1.msra.mxu0 0.0
    %374 = vmatprep.subr.mxu0 0.0
    %375 = vmatpush1.msra.mxu0 0.0
    %376 = vmatprep.subr.mxu0 0.0
    %377 = vmatpush1.msra.mxu0 0.0
    %378 = vmatprep.subr.mxu0 0.0
    %379 = vmatpush1.msra.mxu0 0.0
    %380 = vmatprep.subr.mxu0 0.0
    %381 = vmatpush1.msra.mxu0 0.0
    %382 = vmatprep.subr.mxu0 0.0
    %383 = vmatpush1.msra.mxu0 0.0
    %384 = vmatprep.subr.mxu0 0.0
    %385 = vmatpush1.msra.mxu0 0.0
    %386 = vmatprep.subr.mxu0 0.0
    %387 = vmatpush1.msra.mxu0 0.0
    %388 = vmatprep.mubr.f32.mxu0 0.0
    %389 = vmatmul.mubr.f32.gmra.mrb[0].mxu0 %v116
    %v390 = vpop.f32.mrb[0].mxu0
    %v391 = vadd.f32 %v105, %v390
    %v392 = vpop.f32.mrb[0].mxu0
    %v393 = vadd.f32 %v109, %v392
    %394 = vmatprep.mubr.f32.mxu0 0.0
    %395 = vmatmul.mubr.f32.gmra.mrb[0].mxu0 %v119
    %v396 = vpop.f32.mrb[0].mxu0
    %v397 = vadd.f32 %v105, %v396
    %v398 = vpop.f32.mrb[0].mxu0
    %v399 = vadd.f32 %v109, %v398
    %400 = vmatprep.mubr.f32.mxu0 0.0
    %401 = vmatmul.mubr.f32.gmra.mrb[0].mxu0 %v122
    %v402 = vpop.f32.mrb[0].mxu0
    %v403 = vadd.f32 %v105, %v402
    %v404 = vpop.f32.mrb[0].mxu0
    %v405 = vadd.f32 %v109, %v404
    %406 = vmatprep.mubr.f32.mxu0 0.0
    %407 = vmatmul.mubr.f32.gmra.mrb[0].mxu0 %v125
    %v408 = vpop.f32.mrb[0].mxu0
    %v409 = vadd.f32 %v105, %v408
    %v410 = vpop.f32.mrb[0].mxu0
    %v411 = vadd.f32 %v109, %v410
    %412 = vmatprep.mubr.f32.mxu0 0.0
    %413 = vmatmul.mubr.f32.gmra.mrb[0].mxu0 %v128
    %v414 = vpop.f32.mrb[0].mxu0
    %v415 = vadd.f32 %v105, %v414
    %v416 = vpop.f32.mrb[0].mxu0
    %v417 = vadd.f32 %v109, %v416
    %418 = vmatprep.mubr.f32.mxu0 0.0
    %419 = vmatmul.mubr.f32.gmra.mrb[0].mxu0 %v131
    %v420 = vpop.f32.mrb[0].mxu0
    %v421 = vadd.f32 %v105, %v420
    %v422 = vpop.f32.mrb[0].mxu0
    %v423 = vadd.f32 %v109, %v422
    %424 = vmatprep.mubr.f32.mxu0 0.0
    %425 = vmatmul.mubr.f32.gmra.mrb[0].mxu0 %v134
    %v426 = vpop.f32.mrb[0].mxu0
    %v427 = vadd.f32 %v105, %v426
    %v428 = vpop.f32.mrb[0].mxu0
    %v429 = vadd.f32 %v109, %v428
    %430 = vmatprep.mubr.f32.mxu0 0.0
    %431 = vmatmul.mubr.f32.gmra.mrb[0].mxu0 %v137
    %v432 = vpop.f32.mrb[0].mxu0
    %v433 = vadd.f32 %v105, %v432
    %v434 = vpop.f32.mrb[0].mxu0
    %v435 = vadd.f32 %v109, %v434
    %436 = vmatprep.mubr.f32.mxu0 0.0
    %437 = vmatmul.mubr.f32.gmra.mrb[0].mxu0 %v140
    %v438 = vpop.f32.mrb[0].mxu0
    %v439 = vadd.f32 %v105, %v438
    %v440 = vpop.f32.mrb[0].mxu0
    %v441 = vadd.f32 %v109, %v440
    %442 = vmatprep.mubr.f32.mxu0 0.0
    %443 = vmatmul.mubr.f32.gmra.mrb[0].mxu0 %v143
    %v444 = vpop.f32.mrb[0].mxu0
    %v445 = vadd.f32 %v105, %v444
    %v446 = vpop.f32.mrb[0].mxu0
    %v447 = vadd.f32 %v109, %v446
    %448 = vmatprep.mubr.f32.mxu0 0.0
    %449 = vmatmul.mubr.f32.gmra.mrb[0].mxu0 %v146
    %v450 = vpop.f32.mrb[0].mxu0
    %v451 = vadd.f32 %v105, %v450
    %v452 = vpop.f32.mrb[0].mxu0
    %v453 = vadd.f32 %v109, %v452
    %454 = vmatprep.mubr.f32.mxu0 0.0
    %455 = vmatmul.mubr.f32.gmra.mrb[0].mxu0 %v149
    %v456 = vpop.f32.mrb[0].mxu0
    %v457 = vadd.f32 %v105, %v456
    %v458 = vpop.f32.mrb[0].mxu0
    %v459 = vadd.f32 %v109, %v458
    %460 = vmatprep.mubr.f32.mxu0 0.0
    %461 = vmatmul.mubr.f32.gmra.mrb[0].mxu0 %v152
    %v462 = vpop.f32.mrb[0].mxu0
    %v463 = vadd.f32 %v105, %v462
    %v464 = vpop.f32.mrb[0].mxu0
    %v465 = vadd.f32 %v109, %v464
    %466 = vmatprep.mubr.f32.mxu0 0.0
    %467 = vmatmul.mubr.f32.gmra.mrb[0].mxu0 %v155
    %v468 = vpop.f32.mrb[0].mxu0
    %v469 = vadd.f32 %v105, %v468
    %v470 = vpop.f32.mrb[0].mxu0
    %v471 = vadd.f32 %v109, %v470
    %472 = vmatprep.mubr.f32.mxu0 0.0
    %473 = vmatmul.mubr.f32.gmra.mrb[0].mxu0 %v158
    %v474 = vpop.f32.mrb[0].mxu0
    %v475 = vadd.f32 %v105, %v474
    %v476 = vpop.f32.mrb[0].mxu0
    %v477 = vadd.f32 %v109, %v476
    %478 = vmatprep.mubr.f32.mxu0 0.0
    %479 = vmatmul.mubr.f32.gmra.mrb[0].mxu0 %v161
    %v480 = vpop.f32.mrb[0].mxu0
    %v481 = vadd.f32 %v105, %v480
    %v482 = vpop.f32.mrb[0].mxu0
    %v483 = vadd.f32 %v109, %v482
    %484 = vdwg.mxu0
    %485 = vst [vmem:[#allocation4] sm:$0xff] %v230
    %486 = vst [vmem:[#allocation4 + $0x8] sm:$0xff] %v232
    %487 = vst [vmem:[#allocation4 + $0x10] sm:$0xff] %v391
    %488 = vst [vmem:[#allocation4 + $0x18] sm:$0xff] %v393
    %489 = vst [vmem:[#allocation4 + $0x20] sm:$0xff] %v236
    %490 = vst [vmem:[#allocation4 + $0x28] sm:$0xff] %v238
    %491 = vst [vmem:[#allocation4 + $0x30] sm:$0xff] %v397
    %492 = vst [vmem:[#allocation4 + $0x38] sm:$0xff] %v399
    %493 = vst [vmem:[#allocation4 + $0x40] sm:$0xff] %v242
    %494 = vst [vmem:[#allocation4 + $0x48] sm:$0xff] %v244
    %495 = vst [vmem:[#allocation4 + $0x50] sm:$0xff] %v403
    %496 = vst [vmem:[#allocation4 + $0x58] sm:$0xff] %v405
    %497 = vst [vmem:[#allocation4 + $0x60] sm:$0xff] %v248
    %498 = vst [vmem:[#allocation4 + $0x68] sm:$0xff] %v250
    %499 = vst [vmem:[#allocation4 + $0x70] sm:$0xff] %v409
    %500 = vst [vmem:[#allocation4 + $0x78] sm:$0xff] %v411
    %501 = vst [vmem:[#allocation4 + $0x80] sm:$0xff] %v254
    %502 = vst [vmem:[#allocation4 + $0x88] sm:$0xff] %v256
    %503 = vst [vmem:[#allocation4 + $0x90] sm:$0xff] %v415
    %504 = vst [vmem:[#allocation4 + $0x98] sm:$0xff] %v417
    %505 = vst [vmem:[#allocation4 + $0xa0] sm:$0xff] %v260
    %506 = vst [vmem:[#allocation4 + $0xa8] sm:$0xff] %v262
    %507 = vst [vmem:[#allocation4 + $0xb0] sm:$0xff] %v421
    %508 = vst [vmem:[#allocation4 + $0xb8] sm:$0xff] %v423
    %509 = vst [vmem:[#allocation4 + $0xc0] sm:$0xff] %v266
    %510 = vst [vmem:[#allocation4 + $0xc8] sm:$0xff] %v268
    %511 = vst [vmem:[#allocation4 + $0xd0] sm:$0xff] %v427
    %512 = vst [vmem:[#allocation4 + $0xd8] sm:$0xff] %v429
    %513 = vst [vmem:[#allocation4 + $0xe0] sm:$0xff] %v272
    %514 = vst [vmem:[#allocation4 + $0xe8] sm:$0xff] %v274
    %515 = vst [vmem:[#allocation4 + $0xf0] sm:$0xff] %v433
    %516 = vst [vmem:[#allocation4 + $0xf8] sm:$0xff] %v435
    %517 = vst [vmem:[#allocation4 + $0x100] sm:$0xff] %v278
    %518 = vst [vmem:[#allocation4 + $0x108] sm:$0xff] %v280
    %519 = vst [vmem:[#allocation4 + $0x110] sm:$0xff] %v439
    %520 = vst [vmem:[#allocation4 + $0x118] sm:$0xff] %v441
    %521 = vst [vmem:[#allocation4 + $0x120] sm:$0xff] %v284
    %522 = vst [vmem:[#allocation4 + $0x128] sm:$0xff] %v286
    %523 = vst [vmem:[#allocation4 + $0x130] sm:$0xff] %v445
    %524 = vst [vmem:[#allocation4 + $0x138] sm:$0xff] %v447
    %525 = vst [vmem:[#allocation4 + $0x140] sm:$0xff] %v290
    %526 = vst [vmem:[#allocation4 + $0x148] sm:$0xff] %v292
    %527 = vst [vmem:[#allocation4 + $0x150] sm:$0xff] %v451
    %528 = vst [vmem:[#allocation4 + $0x158] sm:$0xff] %v453
    %529 = vst [vmem:[#allocation4 + $0x160] sm:$0xff] %v296
    %530 = vst [vmem:[#allocation4 + $0x168] sm:$0xff] %v298
    %531 = vst [vmem:[#allocation4 + $0x170] sm:$0xff] %v457
    %532 = vst [vmem:[#allocation4 + $0x178] sm:$0xff] %v459
    %533 = vst [vmem:[#allocation4 + $0x180] sm:$0xff] %v302
    %534 = vst [vmem:[#allocation4 + $0x188] sm:$0xff] %v304
    %535 = vst [vmem:[#allocation4 + $0x190] sm:$0xff] %v463
    %536 = vst [vmem:[#allocation4 + $0x198] sm:$0xff] %v465
    %537 = vst [vmem:[#allocation4 + $0x1a0] sm:$0xff] %v308
    %538 = vst [vmem:[#allocation4 + $0x1a8] sm:$0xff] %v310
    %539 = vst [vmem:[#allocation4 + $0x1b0] sm:$0xff] %v469
    %540 = vst [vmem:[#allocation4 + $0x1b8] sm:$0xff] %v471
    %541 = vst [vmem:[#allocation4 + $0x1c0] sm:$0xff] %v314
    %542 = vst [vmem:[#allocation4 + $0x1c8] sm:$0xff] %v316
    %543 = vst [vmem:[#allocation4 + $0x1d0] sm:$0xff] %v475
    %544 = vst [vmem:[#allocation4 + $0x1d8] sm:$0xff] %v477
    %545 = vst [vmem:[#allocation4 + $0x1e0] sm:$0xff] %v320
    %546 = vst [vmem:[#allocation4 + $0x1e8] sm:$0xff] %v322
    %547 = vst [vmem:[#allocation4 + $0x1f0] sm:$0xff] %v481
    %548 = vst [vmem:[#allocation4 + $0x1f8] sm:$0xff] %v483
    %v549 = vld [vmem:[#allocation11] sm:$0xff]
    %v550 = vld [vmem:[#allocation11 + $0x8] sm:$0xff]
    %v551 = vld [vmem:[#allocation11 + $0x10] sm:$0xff]
    %v552 = vld [vmem:[#allocation11 + $0x18] sm:$0xff]
    %v553 = vld [vmem:[#allocation11 + $0x20] sm:$0xff]
    %v554 = vld [vmem:[#allocation11 + $0x28] sm:$0xff]
    %v555 = vld [vmem:[#allocation11 + $0x30] sm:$0xff]
    %v556 = vld [vmem:[#allocation11 + $0x38] sm:$0xff]
    %v557 = vld [vmem:[#allocation11 + $0x40] sm:$0xff]
    %v558 = vld [vmem:[#allocation11 + $0x48] sm:$0xff]
    %v559 = vld [vmem:[#allocation11 + $0x50] sm:$0xff]
    %v560 = vld [vmem:[#allocation11 + $0x58] sm:$0xff]
    %v561 = vld [vmem:[#allocation11 + $0x60] sm:$0xff]
    %v562 = vld [vmem:[#allocation11 + $0x68] sm:$0xff]
    %v563 = vld [vmem:[#allocation11 + $0x70] sm:$0xff]
    %v564 = vld [vmem:[#allocation11 + $0x78] sm:$0xff]
    %v565 = vld [vmem:[#allocation11 + $0x80] sm:$0xff]
    %v566 = vld [vmem:[#allocation11 + $0x88] sm:$0xff]
    %v567 = vld [vmem:[#allocation11 + $0x90] sm:$0xff]
    %v568 = vld [vmem:[#allocation11 + $0x98] sm:$0xff]
    %v569 = vld [vmem:[#allocation11 + $0xa0] sm:$0xff]
    %v570 = vld [vmem:[#allocation11 + $0xa8] sm:$0xff]
    %v571 = vld [vmem:[#allocation11 + $0xb0] sm:$0xff]
    %v572 = vld [vmem:[#allocation11 + $0xb8] sm:$0xff]
    %v573 = vld [vmem:[#allocation11 + $0xc0] sm:$0xff]
    %v574 = vld [vmem:[#allocation11 + $0xc8] sm:$0xff]
    %v575 = vld [vmem:[#allocation11 + $0xd0] sm:$0xff]
    %v576 = vld [vmem:[#allocation11 + $0xd8] sm:$0xff]
    %v577 = vld [vmem:[#allocation11 + $0xe0] sm:$0xff]
    %v578 = vld [vmem:[#allocation11 + $0xe8] sm:$0xff]
    %v579 = vld [vmem:[#allocation11 + $0xf0] sm:$0xff]
    %v580 = vld [vmem:[#allocation11 + $0xf8] sm:$0xff]
    %v581 = vld [vmem:[#allocation11 + $0x100] sm:$0xff]
    %v582 = vld [vmem:[#allocation11 + $0x108] sm:$0xff]
    %v583 = vld [vmem:[#allocation11 + $0x110] sm:$0xff]
    %v584 = vld [vmem:[#allocation11 + $0x118] sm:$0xff]
    %v585 = vld [vmem:[#allocation11 + $0x120] sm:$0xff]
    %v586 = vld [vmem:[#allocation11 + $0x128] sm:$0xff]
    %v587 = vld [vmem:[#allocation11 + $0x130] sm:$0xff]
    %v588 = vld [vmem:[#allocation11 + $0x138] sm:$0xff]
    %v589 = vld [vmem:[#allocation11 + $0x140] sm:$0xff]
    %v590 = vld [vmem:[#allocation11 + $0x148] sm:$0xff]
    %v591 = vld [vmem:[#allocation11 + $0x150] sm:$0xff]
    %v592 = vld [vmem:[#allocation11 + $0x158] sm:$0xff]
    %v593 = vld [vmem:[#allocation11 + $0x160] sm:$0xff]
    %v594 = vld [vmem:[#allocation11 + $0x168] sm:$0xff]
    %v595 = vld [vmem:[#allocation11 + $0x170] sm:$0xff]
    %v596 = vld [vmem:[#allocation11 + $0x178] sm:$0xff]
    %v597 = vld [vmem:[#allocation11 + $0x180] sm:$0xff]
    %v598 = vld [vmem:[#allocation11 + $0x188] sm:$0xff]
    %v599 = vld [vmem:[#allocation11 + $0x190] sm:$0xff]
    %v600 = vld [vmem:[#allocation11 + $0x198] sm:$0xff]
    %v601 = vld [vmem:[#allocation11 + $0x1a0] sm:$0xff]
    %v602 = vld [vmem:[#allocation11 + $0x1a8] sm:$0xff]
    %v603 = vld [vmem:[#allocation11 + $0x1b0] sm:$0xff]
    %v604 = vld [vmem:[#allocation11 + $0x1b8] sm:$0xff]
    %v605 = vld [vmem:[#allocation11 + $0x1c0] sm:$0xff]
    %v606 = vld [vmem:[#allocation11 + $0x1c8] sm:$0xff]
    %v607 = vld [vmem:[#allocation11 + $0x1d0] sm:$0xff]
    %v608 = vld [vmem:[#allocation11 + $0x1d8] sm:$0xff]
    %v609 = vld [vmem:[#allocation11 + $0x1e0] sm:$0xff]
    %v610 = vld [vmem:[#allocation11 + $0x1e8] sm:$0xff]
    %v611 = vld [vmem:[#allocation11 + $0x1f0] sm:$0xff]
    %v612 = vld [vmem:[#allocation11 + $0x1f8] sm:$0xff]
    %v613 = vld [vmem:[#allocation2] sm:$0xff]
    %v614 = vld [vmem:[#allocation3] sm:$0xff]
    %v615 = vld [vmem:[#allocation4] sm:$0xff]
    %v616 = vld [vmem:[#allocation4 + $0x8] sm:$0xff]
    %v617 = vld [vmem:[#allocation4 + $0x10] sm:$0xff]
    %v618 = vld [vmem:[#allocation4 + $0x18] sm:$0xff]
    %619 = vmatprep.subr.mxu0 %v550
    %620 = vmatpush1.msra.mxu0 %v549
    %621 = vmatprep.subr.mxu0 %v554
    %622 = vmatpush1.msra.mxu0 %v553
    %623 = vmatprep.subr.mxu0 %v558
    %624 = vmatpush1.msra.mxu0 %v557
    %625 = vmatprep.subr.mxu0 %v562
    %626 = vmatpush1.msra.mxu0 %v561
    %627 = vmatprep.subr.mxu0 %v566
    %628 = vmatpush1.msra.mxu0 %v565
    %629 = vmatprep.subr.mxu0 %v570
    %630 = vmatpush1.msra.mxu0 %v569
    %631 = vmatprep.subr.mxu0 %v574
    %632 = vmatpush1.msra.mxu0 %v573
    %633 = vmatprep.subr.mxu0 %v578
    %634 = vmatpush1.msra.mxu0 %v577
    %635 = vmatprep.subr.mxu0 %v582
    %636 = vmatpush1.msra.mxu0 %v581
    %637 = vmatprep.subr.mxu0 %v586
    %638 = vmatpush1.msra.mxu0 %v585
    %639 = vmatprep.subr.mxu0 %v590
    %640 = vmatpush1.msra.mxu0 %v589
    %641 = vmatprep.subr.mxu0 %v594
    %642 = vmatpush1.msra.mxu0 %v593
    %643 = vmatprep.subr.mxu0 %v598
    %644 = vmatpush1.msra.mxu0 %v597
    %645 = vmatprep.subr.mxu0 %v602
    %646 = vmatpush1.msra.mxu0 %v601
    %647 = vmatprep.subr.mxu0 %v606
    %648 = vmatpush1.msra.mxu0 %v605
    %649 = vmatprep.subr.mxu0 %v610
    %650 = vmatpush1.msra.mxu0 %v609
    %651 = vmatprep.subr.mxu0 0.0
    %652 = vmatpush1.msra.mxu0 0.0
    %653 = vmatprep.subr.mxu0 0.0
    %654 = vmatpush1.msra.mxu0 0.0
    %655 = vmatprep.subr.mxu0 0.0
    %656 = vmatpush1.msra.mxu0 0.0
    %657 = vmatprep.subr.mxu0 0.0
    %658 = vmatpush1.msra.mxu0 0.0
    %659 = vmatprep.subr.mxu0 0.0
    %660 = vmatpush1.msra.mxu0 0.0
    %661 = vmatprep.subr.mxu0 0.0
    %662 = vmatpush1.msra.mxu0 0.0
    %663 = vmatprep.subr.mxu0 0.0
    %664 = vmatpush1.msra.mxu0 0.0
    %665 = vmatprep.subr.mxu0 0.0
    %666 = vmatpush1.msra.mxu0 0.0
    %667 = vmatprep.subr.mxu0 0.0
    %668 = vmatpush1.msra.mxu0 0.0
    %669 = vmatprep.subr.mxu0 0.0
    %670 = vmatpush1.msra.mxu0 0.0
    %671 = vmatprep.subr.mxu0 0.0
    %672 = vmatpush1.msra.mxu0 0.0
    %673 = vmatprep.subr.mxu0 0.0
    %674 = vmatpush1.msra.mxu0 0.0
    %675 = vmatprep.subr.mxu0 0.0
    %676 = vmatpush1.msra.mxu0 0.0
    %677 = vmatprep.subr.mxu0 0.0
    %678 = vmatpush1.msra.mxu0 0.0
    %679 = vmatprep.subr.mxu0 0.0
    %680 = vmatpush1.msra.mxu0 0.0
    %681 = vmatprep.subr.mxu0 0.0
    %682 = vmatpush1.msra.mxu0 0.0
    %683 = vmatprep.mubr.f32.mxu0 0.0
    %684 = vmatmul.mubr.f32.gmra.mrb[0].mxu0 %v613
    %v685 = vpop.f32.mrb[0].mxu0
    %v686 = vadd.f32 0.0, %v685
    %v687 = vpop.f32.mrb[0].mxu0
    %v688 = vadd.f32 0.0, %v687
    %689 = vdwg.mxu0
    %690 = vmatprep.subr.mxu0 %v552
    %691 = vmatpush1.msra.mxu0 %v551
    %692 = vmatprep.subr.mxu0 %v556
    %693 = vmatpush1.msra.mxu0 %v555
    %694 = vmatprep.subr.mxu0 %v560
    %695 = vmatpush1.msra.mxu0 %v559
    %696 = vmatprep.subr.mxu0 %v564
    %697 = vmatpush1.msra.mxu0 %v563
    %698 = vmatprep.subr.mxu0 %v568
    %699 = vmatpush1.msra.mxu0 %v567
    %700 = vmatprep.subr.mxu0 %v572
    %701 = vmatpush1.msra.mxu0 %v571
    %702 = vmatprep.subr.mxu0 %v576
    %703 = vmatpush1.msra.mxu0 %v575
    %704 = vmatprep.subr.mxu0 %v580
    %705 = vmatpush1.msra.mxu0 %v579
    %706 = vmatprep.subr.mxu0 %v584
    %707 = vmatpush1.msra.mxu0 %v583
    %708 = vmatprep.subr.mxu0 %v588
    %709 = vmatpush1.msra.mxu0 %v587
    %710 = vmatprep.subr.mxu0 %v592
    %711 = vmatpush1.msra.mxu0 %v591
    %712 = vmatprep.subr.mxu0 %v596
    %713 = vmatpush1.msra.mxu0 %v595
    %714 = vmatprep.subr.mxu0 %v600
    %715 = vmatpush1.msra.mxu0 %v599
    %716 = vmatprep.subr.mxu0 %v604
    %717 = vmatpush1.msra.mxu0 %v603
    %718 = vmatprep.subr.mxu0 %v608
    %719 = vmatpush1.msra.mxu0 %v607
    %720 = vmatprep.subr.mxu0 %v612
    %721 = vmatpush1.msra.mxu0 %v611
    %722 = vmatprep.subr.mxu0 0.0
    %723 = vmatpush1.msra.mxu0 0.0
    %724 = vmatprep.subr.mxu0 0.0
    %725 = vmatpush1.msra.mxu0 0.0
    %726 = vmatprep.subr.mxu0 0.0
    %727 = vmatpush1.msra.mxu0 0.0
    %728 = vmatprep.subr.mxu0 0.0
    %729 = vmatpush1.msra.mxu0 0.0
    %730 = vmatprep.subr.mxu0 0.0
    %731 = vmatpush1.msra.mxu0 0.0
    %732 = vmatprep.subr.mxu0 0.0
    %733 = vmatpush1.msra.mxu0 0.0
    %734 = vmatprep.subr.mxu0 0.0
    %735 = vmatpush1.msra.mxu0 0.0
    %736 = vmatprep.subr.mxu0 0.0
    %737 = vmatpush1.msra.mxu0 0.0
    %738 = vmatprep.subr.mxu0 0.0
    %739 = vmatpush1.msra.mxu0 0.0
    %740 = vmatprep.subr.mxu0 0.0
    %741 = vmatpush1.msra.mxu0 0.0
    %742 = vmatprep.subr.mxu0 0.0
    %743 = vmatpush1.msra.mxu0 0.0
    %744 = vmatprep.subr.mxu0 0.0
    %745 = vmatpush1.msra.mxu0 0.0
    %746 = vmatprep.subr.mxu0 0.0
    %747 = vmatpush1.msra.mxu0 0.0
    %748 = vmatprep.subr.mxu0 0.0
    %749 = vmatpush1.msra.mxu0 0.0
    %750 = vmatprep.subr.mxu0 0.0
    %751 = vmatpush1.msra.mxu0 0.0
    %752 = vmatprep.subr.mxu0 0.0
    %753 = vmatpush1.msra.mxu0 0.0
    %754 = vmatprep.mubr.f32.mxu0 0.0
    %755 = vmatmul.mubr.f32.gmra.mrb[0].mxu0 %v613
    %v756 = vpop.f32.mrb[0].mxu0
    %v757 = vadd.f32 0.0, %v756
    %v758 = vpop.f32.mrb[0].mxu0
    %v759 = vadd.f32 0.0, %v758
    %760 = vdwg.mxu0
    %v761 = vadd.f32 %v615, %v686
    %v762 = vadd.f32 %v616, %v688
    %v763 = vadd.f32 %v617, %v757
    %v764 = vadd.f32 %v618, %v759
    %v765 = vxor.u32 %v761, 2147483648
    %v766 = vmul.f32 %v765, 1.442695
    %v767 = vpow.pop %v766
    %v768 = vadd.f32 %v767, 1.0
    %v769 = vrcp.pop %v768
    %v770 = vmul.f32 1.0, %v769
    %v771 = vxor.u32 %v762, 2147483648
    %v772 = vmul.f32 %v771, 1.442695
    %v773 = vpow.pop %v772
    %v774 = vadd.f32 %v773, 1.0
    %v775 = vrcp.pop %v774
    %v776 = vmul.f32 1.0, %v775
    %v777 = vtanh.pop %v763
    %v778 = vxor.u32 %v764, 2147483648
    %v779 = vmul.f32 %v778, 1.442695
    %v780 = vpow.pop %v779
    %v781 = vadd.f32 %v780, 1.0
    %v782 = vrcp.pop %v781
    %v783 = vmul.f32 1.0, %v782
    %v784 = vmul.f32 %v776, %v614
    %v785 = vmul.f32 %v770, %v777
    %v786 = vadd.f32 %v784, %v785
    %v787 = vtanh.pop %v786
    %v788 = vmul.f32 %v783, %v787
    %789 = vst [vmem:[#allocation5] sm:$0xff] %v788
    %s790 = scalar_lea.vmem [#allocation4], 32
    %v791 = vld [vmem:[%s790] sm:$0xff]
    %v792 = vld [vmem:[%s790 + $0x8] sm:$0xff]
    %v793 = vld [vmem:[%s790 + $0x10] sm:$0xff]
    %v794 = vld [vmem:[%s790 + $0x18] sm:$0xff]
    %795 = vmatprep.subr.mxu0 %v550
    %796 = vmatpush1.msra.mxu0 %v549
    %797 = vmatprep.subr.mxu0 %v554
    %798 = vmatpush1.msra.mxu0 %v553
    %799 = vmatprep.subr.mxu0 %v558
    %800 = vmatpush1.msra.mxu0 %v557
    %801 = vmatprep.subr.mxu0 %v562
    %802 = vmatpush1.msra.mxu0 %v561
    %803 = vmatprep.subr.mxu0 %v566
    %804 = vmatpush1.msra.mxu0 %v565
    %805 = vmatprep.subr.mxu0 %v570
    %806 = vmatpush1.msra.mxu0 %v569
    %807 = vmatprep.subr.mxu0 %v574
    %808 = vmatpush1.msra.mxu0 %v573
    %809 = vmatprep.subr.mxu0 %v578
    %810 = vmatpush1.msra.mxu0 %v577
    %811 = vmatprep.subr.mxu0 %v582
    %812 = vmatpush1.msra.mxu0 %v581
    %813 = vmatprep.subr.mxu0 %v586
    %814 = vmatpush1.msra.mxu0 %v585
    %815 = vmatprep.subr.mxu0 %v590
    %816 = vmatpush1.msra.mxu0 %v589
    %817 = vmatprep.subr.mxu0 %v594
    %818 = vmatpush1.msra.mxu0 %v593
    %819 = vmatprep.subr.mxu0 %v598
    %820 = vmatpush1.msra.mxu0 %v597
    %821 = vmatprep.subr.mxu0 %v602
    %822 = vmatpush1.msra.mxu0 %v601
    %823 = vmatprep.subr.mxu0 %v606
    %824 = vmatpush1.msra.mxu0 %v605
    %825 = vmatprep.subr.mxu0 %v610
    %826 = vmatpush1.msra.mxu0 %v609
    %827 = vmatprep.subr.mxu0 0.0
    %828 = vmatpush1.msra.mxu0 0.0
    %829 = vmatprep.subr.mxu0 0.0
    %830 = vmatpush1.msra.mxu0 0.0
    %831 = vmatprep.subr.mxu0 0.0
    %832 = vmatpush1.msra.mxu0 0.0
    %833 = vmatprep.subr.mxu0 0.0
    %834 = vmatpush1.msra.mxu0 0.0
    %835 = vmatprep.subr.mxu0 0.0
    %836 = vmatpush1.msra.mxu0 0.0
    %837 = vmatprep.subr.mxu0 0.0
    %838 = vmatpush1.msra.mxu0 0.0
    %839 = vmatprep.subr.mxu0 0.0
    %840 = vmatpush1.msra.mxu0 0.0
    %841 = vmatprep.subr.mxu0 0.0
    %842 = vmatpush1.msra.mxu0 0.0
    %843 = vmatprep.subr.mxu0 0.0
    %844 = vmatpush1.msra.mxu0 0.0
    %845 = vmatprep.subr.mxu0 0.0
    %846 = vmatpush1.msra.mxu0 0.0
    %847 = vmatprep.subr.mxu0 0.0
    %848 = vmatpush1.msra.mxu0 0.0
    %849 = vmatprep.subr.mxu0 0.0
    %850 = vmatpush1.msra.mxu0 0.0
    %851 = vmatprep.subr.mxu0 0.0
    %852 = vmatpush1.msra.mxu0 0.0
    %853 = vmatprep.subr.mxu0 0.0
    %854 = vmatpush1.msra.mxu0 0.0
    %855 = vmatprep.subr.mxu0 0.0
    %856 = vmatpush1.msra.mxu0 0.0
    %857 = vmatprep.subr.mxu0 0.0
    %858 = vmatpush1.msra.mxu0 0.0
    %859 = vmatprep.mubr.f32.mxu0 0.0
    %860 = vmatmul.mubr.f32.gmra.mrb[0].mxu0 %v788
    %v861 = vpop.f32.mrb[0].mxu0
    %v862 = vadd.f32 0.0, %v861
    %v863 = vpop.f32.mrb[0].mxu0
    %v864 = vadd.f32 0.0, %v863
    %865 = vdwg.mxu0
    %866 = vmatprep.subr.mxu0 %v552
    %867 = vmatpush1.msra.mxu0 %v551
    %868 = vmatprep.subr.mxu0 %v556
    %869 = vmatpush1.msra.mxu0 %v555
    %870 = vmatprep.subr.mxu0 %v560
    %871 = vmatpush1.msra.mxu0 %v559
    %872 = vmatprep.subr.mxu0 %v564
    %873 = vmatpush1.msra.mxu0 %v563
    %874 = vmatprep.subr.mxu0 %v568
    %875 = vmatpush1.msra.mxu0 %v567
    %876 = vmatprep.subr.mxu0 %v572
    %877 = vmatpush1.msra.mxu0 %v571
    %878 = vmatprep.subr.mxu0 %v576
    %879 = vmatpush1.msra.mxu0 %v575
    %880 = vmatprep.subr.mxu0 %v580
    %881 = vmatpush1.msra.mxu0 %v579
    %882 = vmatprep.subr.mxu0 %v584
    %883 = vmatpush1.msra.mxu0 %v583
    %884 = vmatprep.subr.mxu0 %v588
    %885 = vmatpush1.msra.mxu0 %v587
    %886 = vmatprep.subr.mxu0 %v592
    %887 = vmatpush1.msra.mxu0 %v591
    %888 = vmatprep.subr.mxu0 %v596
    %889 = vmatpush1.msra.mxu0 %v595
    %890 = vmatprep.subr.mxu0 %v600
    %891 = vmatpush1.msra.mxu0 %v599
    %892 = vmatprep.subr.mxu0 %v604
    %893 = vmatpush1.msra.mxu0 %v603
    %894 = vmatprep.subr.mxu0 %v608
    %895 = vmatpush1.msra.mxu0 %v607
    %896 = vmatprep.subr.mxu0 %v612
    %897 = vmatpush1.msra.mxu0 %v611
    %898 = vmatprep.subr.mxu0 0.0
    %899 = vmatpush1.msra.mxu0 0.0
    %900 = vmatprep.subr.mxu0 0.0
    %901 = vmatpush1.msra.mxu0 0.0
    %902 = vmatprep.subr.mxu0 0.0
    %903 = vmatpush1.msra.mxu0 0.0
    %904 = vmatprep.subr.mxu0 0.0
    %905 = vmatpush1.msra.mxu0 0.0
    %906 = vmatprep.subr.mxu0 0.0
    %907 = vmatpush1.msra.mxu0 0.0
    %908 = vmatprep.subr.mxu0 0.0
    %909 = vmatpush1.msra.mxu0 0.0
    %910 = vmatprep.subr.mxu0 0.0
    %911 = vmatpush1.msra.mxu0 0.0
    %912 = vmatprep.subr.mxu0 0.0
    %913 = vmatpush1.msra.mxu0 0.0
    %914 = vmatprep.subr.mxu0 0.0
    %915 = vmatpush1.msra.mxu0 0.0
    %916 = vmatprep.subr.mxu0 0.0
    %917 = vmatpush1.msra.mxu0 0.0
    %918 = vmatprep.subr.mxu0 0.0
    %919 = vmatpush1.msra.mxu0 0.0
    %920 = vmatprep.subr.mxu0 0.0
    %921 = vmatpush1.msra.mxu0 0.0
    %922 = vmatprep.subr.mxu0 0.0
    %923 = vmatpush1.msra.mxu0 0.0
    %924 = vmatprep.subr.mxu0 0.0
    %925 = vmatpush1.msra.mxu0 0.0
    %926 = vmatprep.subr.mxu0 0.0
    %927 = vmatpush1.msra.mxu0 0.0
    %928 = vmatprep.subr.mxu0 0.0
    %929 = vmatpush1.msra.mxu0 0.0
    %930 = vmatprep.mubr.f32.mxu0 0.0
    %931 = vmatmul.mubr.f32.gmra.mrb[0].mxu0 %v788
    %v932 = vpop.f32.mrb[0].mxu0
    %v933 = vadd.f32 0.0, %v932
    %v934 = vpop.f32.mrb[0].mxu0
    %v935 = vadd.f32 0.0, %v934
    %936 = vdwg.mxu0
    %v937 = vadd.f32 %v791, %v862
    %v938 = vadd.f32 %v792, %v864
    %v939 = vadd.f32 %v793, %v933
    %v940 = vadd.f32 %v794, %v935
    %v941 = vxor.u32 %v937, 2147483648
    %v942 = vmul.f32 %v941, 1.442695
    %v943 = vpow.pop %v942
    %v944 = vadd.f32 %v943, 1.0
    %v945 = vrcp.pop %v944
    %v946 = vmul.f32 1.0, %v945
    %v947 = vxor.u32 %v938, 2147483648
    %v948 = vmul.f32 %v947, 1.442695
    %v949 = vpow.pop %v948
    %v950 = vadd.f32 %v949, 1.0
    %v951 = vrcp.pop %v950
    %v952 = vmul.f32 1.0, %v951
    %v953 = vtanh.pop %v939
    %v954 = vxor.u32 %v940, 2147483648
    %v955 = vmul.f32 %v954, 1.442695
    %v956 = vpow.pop %v955
    %v957 = vadd.f32 %v956, 1.0
    %v958 = vrcp.pop %v957
    %v959 = vmul.f32 1.0, %v958
    %v960 = vmul.f32 %v952, %v786
    %v961 = vmul.f32 %v946, %v953
    %v962 = vadd.f32 %v960, %v961
    %v963 = vtanh.pop %v962
    %v964 = vmul.f32 %v959, %v963
    %s965 = scalar_lea.vmem [#allocation5], 8
    %966 = vst [vmem:[%s965] sm:$0xff] %v964
    %s967 = scalar_lea.vmem [#allocation4], 64
    %v968 = vld [vmem:[%s967] sm:$0xff]
    %v969 = vld [vmem:[%s967 + $0x8] sm:$0xff]
    %v970 = vld [vmem:[%s967 + $0x10] sm:$0xff]
    %v971 = vld [vmem:[%s967 + $0x18] sm:$0xff]
    %972 = vmatprep.subr.mxu0 %v550
    %973 = vmatpush1.msra.mxu0 %v549
    %974 = vmatprep.subr.mxu0 %v554
    %975 = vmatpush1.msra.mxu0 %v553
    %976 = vmatprep.subr.mxu0 %v558
    %977 = vmatpush1.msra.mxu0 %v557
    %978 = vmatprep.subr.mxu0 %v562
    %979 = vmatpush1.msra.mxu0 %v561
    %980 = vmatprep.subr.mxu0 %v566
    %981 = vmatpush1.msra.mxu0 %v565
    %982 = vmatprep.subr.mxu0 %v570
    %983 = vmatpush1.msra.mxu0 %v569
    %984 = vmatprep.subr.mxu0 %v574
    %985 = vmatpush1.msra.mxu0 %v573
    %986 = vmatprep.subr.mxu0 %v578
    %987 = vmatpush1.msra.mxu0 %v577
    %988 = vmatprep.subr.mxu0 %v582
    %989 = vmatpush1.msra.mxu0 %v581
    %990 = vmatprep.subr.mxu0 %v586
    %991 = vmatpush1.msra.mxu0 %v585
    %992 = vmatprep.subr.mxu0 %v590
    %993 = vmatpush1.msra.mxu0 %v589
    %994 = vmatprep.subr.mxu0 %v594
    %995 = vmatpush1.msra.mxu0 %v593
    %996 = vmatprep.subr.mxu0 %v598
    %997 = vmatpush1.msra.mxu0 %v597
    %998 = vmatprep.subr.mxu0 %v602
    %999 = vmatpush1.msra.mxu0 %v601
    %1000 = vmatprep.subr.mxu0 %v606
    %1001 = vmatpush1.msra.mxu0 %v605
    %1002 = vmatprep.subr.mxu0 %v610
    %1003 = vmatpush1.msra.mxu0 %v609
    %1004 = vmatprep.subr.mxu0 0.0
    %1005 = vmatpush1.msra.mxu0 0.0
    %1006 = vmatprep.subr.mxu0 0.0
    %1007 = vmatpush1.msra.mxu0 0.0
    %1008 = vmatprep.subr.mxu0 0.0
    %1009 = vmatpush1.msra.mxu0 0.0
    %1010 = vmatprep.subr.mxu0 0.0
    %1011 = vmatpush1.msra.mxu0 0.0
    %1012 = vmatprep.subr.mxu0 0.0
    %1013 = vmatpush1.msra.mxu0 0.0
    %1014 = vmatprep.subr.mxu0 0.0
    %1015 = vmatpush1.msra.mxu0 0.0
    %1016 = vmatprep.subr.mxu0 0.0
    %1017 = vmatpush1.msra.mxu0 0.0
    %1018 = vmatprep.subr.mxu0 0.0
    %1019 = vmatpush1.msra.mxu0 0.0
    %1020 = vmatprep.subr.mxu0 0.0
    %1021 = vmatpush1.msra.mxu0 0.0
    %1022 = vmatprep.subr.mxu0 0.0
    %1023 = vmatpush1.msra.mxu0 0.0
    %1024 = vmatprep.subr.mxu0 0.0
    %1025 = vmatpush1.msra.mxu0 0.0
    %1026 = vmatprep.subr.mxu0 0.0
    %1027 = vmatpush1.msra.mxu0 0.0
    %1028 = vmatprep.subr.mxu0 0.0
    %1029 = vmatpush1.msra.mxu0 0.0
    %1030 = vmatprep.subr.mxu0 0.0
    %1031 = vmatpush1.msra.mxu0 0.0
    %1032 = vmatprep.subr.mxu0 0.0
    %1033 = vmatpush1.msra.mxu0 0.0
    %1034 = vmatprep.subr.mxu0 0.0
    %1035 = vmatpush1.msra.mxu0 0.0
    %1036 = vmatprep.mubr.f32.mxu0 0.0
    %1037 = vmatmul.mubr.f32.gmra.mrb[0].mxu0 %v964
    %v1038 = vpop.f32.mrb[0].mxu0
    %v1039 = vadd.f32 0.0, %v1038
    %v1040 = vpop.f32.mrb[0].mxu0
    %v1041 = vadd.f32 0.0, %v1040
    %1042 = vdwg.mxu0
    %1043 = vmatprep.subr.mxu0 %v552
    %1044 = vmatpush1.msra.mxu0 %v551
    %1045 = vmatprep.subr.mxu0 %v556
    %1046 = vmatpush1.msra.mxu0 %v555
    %1047 = vmatprep.subr.mxu0 %v560
    %1048 = vmatpush1.msra.mxu0 %v559
    %1049 = vmatprep.subr.mxu0 %v564
    %1050 = vmatpush1.msra.mxu0 %v563
    %1051 = vmatprep.subr.mxu0 %v568
    %1052 = vmatpush1.msra.mxu0 %v567
    %1053 = vmatprep.subr.mxu0 %v572
    %1054 = vmatpush1.msra.mxu0 %v571
    %1055 = vmatprep.subr.mxu0 %v576
    %1056 = vmatpush1.msra.mxu0 %v575
    %1057 = vmatprep.subr.mxu0 %v580
    %1058 = vmatpush1.msra.mxu0 %v579
    %1059 = vmatprep.subr.mxu0 %v584
    %1060 = vmatpush1.msra.mxu0 %v583
    %1061 = vmatprep.subr.mxu0 %v588
    %1062 = vmatpush1.msra.mxu0 %v587
    %1063 = vmatprep.subr.mxu0 %v592
    %1064 = vmatpush1.msra.mxu0 %v591
    %1065 = vmatprep.subr.mxu0 %v596
    %1066 = vmatpush1.msra.mxu0 %v595
    %1067 = vmatprep.subr.mxu0 %v600
    %1068 = vmatpush1.msra.mxu0 %v599
    %1069 = vmatprep.subr.mxu0 %v604
    %1070 = vmatpush1.msra.mxu0 %v603
    %1071 = vmatprep.subr.mxu0 %v608
    %1072 = vmatpush1.msra.mxu0 %v607
    %1073 = vmatprep.subr.mxu0 %v612
    %1074 = vmatpush1.msra.mxu0 %v611
    %1075 = vmatprep.subr.mxu0 0.0
    %1076 = vmatpush1.msra.mxu0 0.0
    %1077 = vmatprep.subr.mxu0 0.0
    %1078 = vmatpush1.msra.mxu0 0.0
    %1079 = vmatprep.subr.mxu0 0.0
    %1080 = vmatpush1.msra.mxu0 0.0
    %1081 = vmatprep.subr.mxu0 0.0
    %1082 = vmatpush1.msra.mxu0 0.0
    %1083 = vmatprep.subr.mxu0 0.0
    %1084 = vmatpush1.msra.mxu0 0.0
    %1085 = vmatprep.subr.mxu0 0.0
    %1086 = vmatpush1.msra.mxu0 0.0
    %1087 = vmatprep.subr.mxu0 0.0
    %1088 = vmatpush1.msra.mxu0 0.0
    %1089 = vmatprep.subr.mxu0 0.0
    %1090 = vmatpush1.msra.mxu0 0.0
    %1091 = vmatprep.subr.mxu0 0.0
    %1092 = vmatpush1.msra.mxu0 0.0
    %1093 = vmatprep.subr.mxu0 0.0
    %1094 = vmatpush1.msra.mxu0 0.0
    %1095 = vmatprep.subr.mxu0 0.0
    %1096 = vmatpush1.msra.mxu0 0.0
    %1097 = vmatprep.subr.mxu0 0.0
    %1098 = vmatpush1.msra.mxu0 0.0
    %1099 = vmatprep.subr.mxu0 0.0
    %1100 = vmatpush1.msra.mxu0 0.0
    %1101 = vmatprep.subr.mxu0 0.0
    %1102 = vmatpush1.msra.mxu0 0.0
    %1103 = vmatprep.subr.mxu0 0.0
    %1104 = vmatpush1.msra.mxu0 0.0
    %1105 = vmatprep.subr.mxu0 0.0
    %1106 = vmatpush1.msra.mxu0 0.0
    %1107 = vmatprep.mubr.f32.mxu0 0.0
    %1108 = vmatmul.mubr.f32.gmra.mrb[0].mxu0 %v964
    %v1109 = vpop.f32.mrb[0].mxu0
    %v1110 = vadd.f32 0.0, %v1109
    %v1111 = vpop.f32.mrb[0].mxu0
    %v1112 = vadd.f32 0.0, %v1111
    %1113 = vdwg.mxu0
    %v1114 = vadd.f32 %v968, %v1039
    %v1115 = vadd.f32 %v969, %v1041
    %v1116 = vadd.f32 %v970, %v1110
    %v1117 = vadd.f32 %v971, %v1112
    %v1118 = vxor.u32 %v1114, 2147483648
    %v1119 = vmul.f32 %v1118, 1.442695
    %v1120 = vpow.pop %v1119
    %v1121 = vadd.f32 %v1120, 1.0
    %v1122 = vrcp.pop %v1121
    %v1123 = vmul.f32 1.0, %v1122
    %v1124 = vxor.u32 %v1115, 2147483648
    %v1125 = vmul.f32 %v1124, 1.442695
    %v1126 = vpow.pop %v1125
    %v1127 = vadd.f32 %v1126, 1.0
    %v1128 = vrcp.pop %v1127
    %v1129 = vmul.f32 1.0, %v1128
    %v1130 = vtanh.pop %v1116
    %v1131 = vxor.u32 %v1117, 2147483648
    %v1132 = vmul.f32 %v1131, 1.442695
    %v1133 = vpow.pop %v1132
    %v1134 = vadd.f32 %v1133, 1.0
    %v1135 = vrcp.pop %v1134
    %v1136 = vmul.f32 1.0, %v1135
    %v1137 = vmul.f32 %v1129, %v962
    %v1138 = vmul.f32 %v1123, %v1130
    %v1139 = vadd.f32 %v1137, %v1138
    %v1140 = vtanh.pop %v1139
    %v1141 = vmul.f32 %v1136, %v1140
    %s1142 = scalar_lea.vmem [#allocation5], 16
    %1143 = vst [vmem:[%s1142] sm:$0xff] %v1141
    %s1144 = scalar_lea.vmem [#allocation4], 96
    %v1145 = vld [vmem:[%s1144] sm:$0xff]
    %v1146 = vld [vmem:[%s1144 + $0x8] sm:$0xff]
    %v1147 = vld [vmem:[%s1144 + $0x10] sm:$0xff]
    %v1148 = vld [vmem:[%s1144 + $0x18] sm:$0xff]
    %1149 = vmatprep.subr.mxu0 %v550
    %1150 = vmatpush1.msra.mxu0 %v549
    %1151 = vmatprep.subr.mxu0 %v554
    %1152 = vmatpush1.msra.mxu0 %v553
    %1153 = vmatprep.subr.mxu0 %v558
    %1154 = vmatpush1.msra.mxu0 %v557
    %1155 = vmatprep.subr.mxu0 %v562
    %1156 = vmatpush1.msra.mxu0 %v561
    %1157 = vmatprep.subr.mxu0 %v566
    %1158 = vmatpush1.msra.mxu0 %v565
    %1159 = vmatprep.subr.mxu0 %v570
    %1160 = vmatpush1.msra.mxu0 %v569
    %1161 = vmatprep.subr.mxu0 %v574
    %1162 = vmatpush1.msra.mxu0 %v573
    %1163 = vmatprep.subr.mxu0 %v578
    %1164 = vmatpush1.msra.mxu0 %v577
    %1165 = vmatprep.subr.mxu0 %v582
    %1166 = vmatpush1.msra.mxu0 %v581
    %1167 = vmatprep.subr.mxu0 %v586
    %1168 = vmatpush1.msra.mxu0 %v585
    %1169 = vmatprep.subr.mxu0 %v590
    %1170 = vmatpush1.msra.mxu0 %v589
    %1171 = vmatprep.subr.mxu0 %v594
    %1172 = vmatpush1.msra.mxu0 %v593
    %1173 = vmatprep.subr.mxu0 %v598
    %1174 = vmatpush1.msra.mxu0 %v597
    %1175 = vmatprep.subr.mxu0 %v602
    %1176 = vmatpush1.msra.mxu0 %v601
    %1177 = vmatprep.subr.mxu0 %v606
    %1178 = vmatpush1.msra.mxu0 %v605
    %1179 = vmatprep.subr.mxu0 %v610
    %1180 = vmatpush1.msra.mxu0 %v609
    %1181 = vmatprep.subr.mxu0 0.0
    %1182 = vmatpush1.msra.mxu0 0.0
    %1183 = vmatprep.subr.mxu0 0.0
    %1184 = vmatpush1.msra.mxu0 0.0
    %1185 = vmatprep.subr.mxu0 0.0
    %1186 = vmatpush1.msra.mxu0 0.0
    %1187 = vmatprep.subr.mxu0 0.0
    %1188 = vmatpush1.msra.mxu0 0.0
    %1189 = vmatprep.subr.mxu0 0.0
    %1190 = vmatpush1.msra.mxu0 0.0
    %1191 = vmatprep.subr.mxu0 0.0
    %1192 = vmatpush1.msra.mxu0 0.0
    %1193 = vmatprep.subr.mxu0 0.0
    %1194 = vmatpush1.msra.mxu0 0.0
    %1195 = vmatprep.subr.mxu0 0.0
    %1196 = vmatpush1.msra.mxu0 0.0
    %1197 = vmatprep.subr.mxu0 0.0
    %1198 = vmatpush1.msra.mxu0 0.0
    %1199 = vmatprep.subr.mxu0 0.0
    %1200 = vmatpush1.msra.mxu0 0.0
    %1201 = vmatprep.subr.mxu0 0.0
    %1202 = vmatpush1.msra.mxu0 0.0
    %1203 = vmatprep.subr.mxu0 0.0
    %1204 = vmatpush1.msra.mxu0 0.0
    %1205 = vmatprep.subr.mxu0 0.0
    %1206 = vmatpush1.msra.mxu0 0.0
    %1207 = vmatprep.subr.mxu0 0.0
    %1208 = vmatpush1.msra.mxu0 0.0
    %1209 = vmatprep.subr.mxu0 0.0
    %1210 = vmatpush1.msra.mxu0 0.0
    %1211 = vmatprep.subr.mxu0 0.0
    %1212 = vmatpush1.msra.mxu0 0.0
    %1213 = vmatprep.mubr.f32.mxu0 0.0
    %1214 = vmatmul.mubr.f32.gmra.mrb[0].mxu0 %v1141
    %v1215 = vpop.f32.mrb[0].mxu0
    %v1216 = vadd.f32 0.0, %v1215
    %v1217 = vpop.f32.mrb[0].mxu0
    %v1218 = vadd.f32 0.0, %v1217
    %1219 = vdwg.mxu0
    %1220 = vmatprep.subr.mxu0 %v552
    %1221 = vmatpush1.msra.mxu0 %v551
    %1222 = vmatprep.subr.mxu0 %v556
    %1223 = vmatpush1.msra.mxu0 %v555
    %1224 = vmatprep.subr.mxu0 %v560
    %1225 = vmatpush1.msra.mxu0 %v559
    %1226 = vmatprep.subr.mxu0 %v564
    %1227 = vmatpush1.msra.mxu0 %v563
    %1228 = vmatprep.subr.mxu0 %v568
    %1229 = vmatpush1.msra.mxu0 %v567
    %1230 = vmatprep.subr.mxu0 %v572
    %1231 = vmatpush1.msra.mxu0 %v571
    %1232 = vmatprep.subr.mxu0 %v576
    %1233 = vmatpush1.msra.mxu0 %v575
    %1234 = vmatprep.subr.mxu0 %v580
    %1235 = vmatpush1.msra.mxu0 %v579
    %1236 = vmatprep.subr.mxu0 %v584
    %1237 = vmatpush1.msra.mxu0 %v583
    %1238 = vmatprep.subr.mxu0 %v588
    %1239 = vmatpush1.msra.mxu0 %v587
    %1240 = vmatprep.subr.mxu0 %v592
    %1241 = vmatpush1.msra.mxu0 %v591
    %1242 = vmatprep.subr.mxu0 %v596
    %1243 = vmatpush1.msra.mxu0 %v595
    %1244 = vmatprep.subr.mxu0 %v600
    %1245 = vmatpush1.msra.mxu0 %v599
    %1246 = vmatprep.subr.mxu0 %v604
    %1247 = vmatpush1.msra.mxu0 %v603
    %1248 = vmatprep.subr.mxu0 %v608
    %1249 = vmatpush1.msra.mxu0 %v607
    %1250 = vmatprep.subr.mxu0 %v612
    %1251 = vmatpush1.msra.mxu0 %v611
    %1252 = vmatprep.subr.mxu0 0.0
    %1253 = vmatpush1.msra.mxu0 0.0
    %1254 = vmatprep.subr.mxu0 0.0
    %1255 = vmatpush1.msra.mxu0 0.0
    %1256 = vmatprep.subr.mxu0 0.0
    %1257 = vmatpush1.msra.mxu0 0.0
    %1258 = vmatprep.subr.mxu0 0.0
    %1259 = vmatpush1.msra.mxu0 0.0
    %1260 = vmatprep.subr.mxu0 0.0
    %1261 = vmatpush1.msra.mxu0 0.0
    %1262 = vmatprep.subr.mxu0 0.0
    %1263 = vmatpush1.msra.mxu0 0.0
    %1264 = vmatprep.subr.mxu0 0.0
    %1265 = vmatpush1.msra.mxu0 0.0
    %1266 = vmatprep.subr.mxu0 0.0
    %1267 = vmatpush1.msra.mxu0 0.0
    %1268 = vmatprep.subr.mxu0 0.0
    %1269 = vmatpush1.msra.mxu0 0.0
    %1270 = vmatprep.subr.mxu0 0.0
    %1271 = vmatpush1.msra.mxu0 0.0
    %1272 = vmatprep.subr.mxu0 0.0
    %1273 = vmatpush1.msra.mxu0 0.0
    %1274 = vmatprep.subr.mxu0 0.0
    %1275 = vmatpush1.msra.mxu0 0.0
    %1276 = vmatprep.subr.mxu0 0.0
    %1277 = vmatpush1.msra.mxu0 0.0
    %1278 = vmatprep.subr.mxu0 0.0
    %1279 = vmatpush1.msra.mxu0 0.0
    %1280 = vmatprep.subr.mxu0 0.0
    %1281 = vmatpush1.msra.mxu0 0.0
    %1282 = vmatprep.subr.mxu0 0.0
    %1283 = vmatpush1.msra.mxu0 0.0
    %1284 = vmatprep.mubr.f32.mxu0 0.0
    %1285 = vmatmul.mubr.f32.gmra.mrb[0].mxu0 %v1141
    %v1286 = vpop.f32.mrb[0].mxu0
    %v1287 = vadd.f32 0.0, %v1286
    %v1288 = vpop.f32.mrb[0].mxu0
    %v1289 = vadd.f32 0.0, %v1288
    %1290 = vdwg.mxu0
    %v1291 = vadd.f32 %v1145, %v1216
    %v1292 = vadd.f32 %v1146, %v1218
    %v1293 = vadd.f32 %v1147, %v1287
    %v1294 = vadd.f32 %v1148, %v1289
    %v1295 = vxor.u32 %v1291, 2147483648
    %v1296 = vmul.f32 %v1295, 1.442695
    %v1297 = vpow.pop %v1296
    %v1298 = vadd.f32 %v1297, 1.0
    %v1299 = vrcp.pop %v1298
    %v1300 = vmul.f32 1.0, %v1299
    %v1301 = vxor.u32 %v1292, 2147483648
    %v1302 = vmul.f32 %v1301, 1.442695
    %v1303 = vpow.pop %v1302
    %v1304 = vadd.f32 %v1303, 1.0
    %v1305 = vrcp.pop %v1304
    %v1306 = vmul.f32 1.0, %v1305
    %v1307 = vtanh.pop %v1293
    %v1308 = vxor.u32 %v1294, 2147483648
    %v1309 = vmul.f32 %v1308, 1.442695
    %v1310 = vpow.pop %v1309
    %v1311 = vadd.f32 %v1310, 1.0
    %v1312 = vrcp.pop %v1311
    %v1313 = vmul.f32 1.0, %v1312
    %v1314 = vmul.f32 %v1306, %v1139
    %v1315 = vmul.f32 %v1300, %v1307
    %v1316 = vadd.f32 %v1314, %v1315
    %v1317 = vtanh.pop %v1316
    %v1318 = vmul.f32 %v1313, %v1317
    %s1319 = scalar_lea.vmem [#allocation5], 24
    %1320 = vst [vmem:[%s1319] sm:$0xff] %v1318
    %s1321 = scalar_lea.vmem [#allocation4], 128
    %v1322 = vld [vmem:[%s1321] sm:$0xff]
    %v1323 = vld [vmem:[%s1321 + $0x8] sm:$0xff]
    %v1324 = vld [vmem:[%s1321 + $0x10] sm:$0xff]
    %v1325 = vld [vmem:[%s1321 + $0x18] sm:$0xff]
    %1326 = vmatprep.subr.mxu0 %v550
    %1327 = vmatpush1.msra.mxu0 %v549
    %1328 = vmatprep.subr.mxu0 %v554
    %1329 = vmatpush1.msra.mxu0 %v553
    %1330 = vmatprep.subr.mxu0 %v558
    %1331 = vmatpush1.msra.mxu0 %v557
    %1332 = vmatprep.subr.mxu0 %v562
    %1333 = vmatpush1.msra.mxu0 %v561
    %1334 = vmatprep.subr.mxu0 %v566
    %1335 = vmatpush1.msra.mxu0 %v565
    %1336 = vmatprep.subr.mxu0 %v570
    %1337 = vmatpush1.msra.mxu0 %v569
    %1338 = vmatprep.subr.mxu0 %v574
    %1339 = vmatpush1.msra.mxu0 %v573
    %1340 = vmatprep.subr.mxu0 %v578
    %1341 = vmatpush1.msra.mxu0 %v577
    %1342 = vmatprep.subr.mxu0 %v582
    %1343 = vmatpush1.msra.mxu0 %v581
    %1344 = vmatprep.subr.mxu0 %v586
    %1345 = vmatpush1.msra.mxu0 %v585
    %1346 = vmatprep.subr.mxu0 %v590
    %1347 = vmatpush1.msra.mxu0 %v589
    %1348 = vmatprep.subr.mxu0 %v594
    %1349 = vmatpush1.msra.mxu0 %v593
    %1350 = vmatprep.subr.mxu0 %v598
    %1351 = vmatpush1.msra.mxu0 %v597
    %1352 = vmatprep.subr.mxu0 %v602
    %1353 = vmatpush1.msra.mxu0 %v601
    %1354 = vmatprep.subr.mxu0 %v606
    %1355 = vmatpush1.msra.mxu0 %v605
    %1356 = vmatprep.subr.mxu0 %v610
    %1357 = vmatpush1.msra.mxu0 %v609
    %1358 = vmatprep.subr.mxu0 0.0
    %1359 = vmatpush1.msra.mxu0 0.0
    %1360 = vmatprep.subr.mxu0 0.0
    %1361 = vmatpush1.msra.mxu0 0.0
    %1362 = vmatprep.subr.mxu0 0.0
    %1363 = vmatpush1.msra.mxu0 0.0
    %1364 = vmatprep.subr.mxu0 0.0
    %1365 = vmatpush1.msra.mxu0 0.0
    %1366 = vmatprep.subr.mxu0 0.0
    %1367 = vmatpush1.msra.mxu0 0.0
    %1368 = vmatprep.subr.mxu0 0.0
    %1369 = vmatpush1.msra.mxu0 0.0
    %1370 = vmatprep.subr.mxu0 0.0
    %1371 = vmatpush1.msra.mxu0 0.0
    %1372 = vmatprep.subr.mxu0 0.0
    %1373 = vmatpush1.msra.mxu0 0.0
    %1374 = vmatprep.subr.mxu0 0.0
    %1375 = vmatpush1.msra.mxu0 0.0
    %1376 = vmatprep.subr.mxu0 0.0
    %1377 = vmatpush1.msra.mxu0 0.0
    %1378 = vmatprep.subr.mxu0 0.0
    %1379 = vmatpush1.msra.mxu0 0.0
    %1380 = vmatprep.subr.mxu0 0.0
    %1381 = vmatpush1.msra.mxu0 0.0
    %1382 = vmatprep.subr.mxu0 0.0
    %1383 = vmatpush1.msra.mxu0 0.0
    %1384 = vmatprep.subr.mxu0 0.0
    %1385 = vmatpush1.msra.mxu0 0.0
    %1386 = vmatprep.subr.mxu0 0.0
    %1387 = vmatpush1.msra.mxu0 0.0
    %1388 = vmatprep.subr.mxu0 0.0
    %1389 = vmatpush1.msra.mxu0 0.0
    %1390 = vmatprep.mubr.f32.mxu0 0.0
    %1391 = vmatmul.mubr.f32.gmra.mrb[0].mxu0 %v1318
    %v1392 = vpop.f32.mrb[0].mxu0
    %v1393 = vadd.f32 0.0, %v1392
    %v1394 = vpop.f32.mrb[0].mxu0
    %v1395 = vadd.f32 0.0, %v1394
    %1396 = vdwg.mxu0
    %1397 = vmatprep.subr.mxu0 %v552
    %1398 = vmatpush1.msra.mxu0 %v551
    %1399 = vmatprep.subr.mxu0 %v556
    %1400 = vmatpush1.msra.mxu0 %v555
    %1401 = vmatprep.subr.mxu0 %v560
    %1402 = vmatpush1.msra.mxu0 %v559
    %1403 = vmatprep.subr.mxu0 %v564
    %1404 = vmatpush1.msra.mxu0 %v563
    %1405 = vmatprep.subr.mxu0 %v568
    %1406 = vmatpush1.msra.mxu0 %v567
    %1407 = vmatprep.subr.mxu0 %v572
    %1408 = vmatpush1.msra.mxu0 %v571
    %1409 = vmatprep.subr.mxu0 %v576
    %1410 = vmatpush1.msra.mxu0 %v575
    %1411 = vmatprep.subr.mxu0 %v580
    %1412 = vmatpush1.msra.mxu0 %v579
    %1413 = vmatprep.subr.mxu0 %v584
    %1414 = vmatpush1.msra.mxu0 %v583
    %1415 = vmatprep.subr.mxu0 %v588
    %1416 = vmatpush1.msra.mxu0 %v587
    %1417 = vmatprep.subr.mxu0 %v592
    %1418 = vmatpush1.msra.mxu0 %v591
    %1419 = vmatprep.subr.mxu0 %v596
    %1420 = vmatpush1.msra.mxu0 %v595
    %1421 = vmatprep.subr.mxu0 %v600
    %1422 = vmatpush1.msra.mxu0 %v599
    %1423 = vmatprep.subr.mxu0 %v604
    %1424 = vmatpush1.msra.mxu0 %v603
    %1425 = vmatprep.subr.mxu0 %v608
    %1426 = vmatpush1.msra.mxu0 %v607
    %1427 = vmatprep.subr.mxu0 %v612
    %1428 = vmatpush1.msra.mxu0 %v611
    %1429 = vmatprep.subr.mxu0 0.0
    %1430 = vmatpush1.msra.mxu0 0.0
    %1431 = vmatprep.subr.mxu0 0.0
    %1432 = vmatpush1.msra.mxu0 0.0
    %1433 = vmatprep.subr.mxu0 0.0
    %1434 = vmatpush1.msra.mxu0 0.0
    %1435 = vmatprep.subr.mxu0 0.0
    %1436 = vmatpush1.msra.mxu0 0.0
    %1437 = vmatprep.subr.mxu0 0.0
    %1438 = vmatpush1.msra.mxu0 0.0
    %1439 = vmatprep.subr.mxu0 0.0
    %1440 = vmatpush1.msra.mxu0 0.0
    %1441 = vmatprep.subr.mxu0 0.0
    %1442 = vmatpush1.msra.mxu0 0.0
    %1443 = vmatprep.subr.mxu0 0.0
    %1444 = vmatpush1.msra.mxu0 0.0
    %1445 = vmatprep.subr.mxu0 0.0
    %1446 = vmatpush1.msra.mxu0 0.0
    %1447 = vmatprep.subr.mxu0 0.0
    %1448 = vmatpush1.msra.mxu0 0.0
    %1449 = vmatprep.subr.mxu0 0.0
    %1450 = vmatpush1.msra.mxu0 0.0
    %1451 = vmatprep.subr.mxu0 0.0
    %1452 = vmatpush1.msra.mxu0 0.0
    %1453 = vmatprep.subr.mxu0 0.0
    %1454 = vmatpush1.msra.mxu0 0.0
    %1455 = vmatprep.subr.mxu0 0.0
    %1456 = vmatpush1.msra.mxu0 0.0
    %1457 = vmatprep.subr.mxu0 0.0
    %1458 = vmatpush1.msra.mxu0 0.0
    %1459 = vmatprep.subr.mxu0 0.0
    %1460 = vmatpush1.msra.mxu0 0.0
    %1461 = vmatprep.mubr.f32.mxu0 0.0
    %1462 = vmatmul.mubr.f32.gmra.mrb[0].mxu0 %v1318
    %v1463 = vpop.f32.mrb[0].mxu0
    %v1464 = vadd.f32 0.0, %v1463
    %v1465 = vpop.f32.mrb[0].mxu0
    %v1466 = vadd.f32 0.0, %v1465
    %1467 = vdwg.mxu0
    %v1468 = vadd.f32 %v1322, %v1393
    %v1469 = vadd.f32 %v1323, %v1395
    %v1470 = vadd.f32 %v1324, %v1464
    %v1471 = vadd.f32 %v1325, %v1466
    %v1472 = vxor.u32 %v1468, 2147483648
    %v1473 = vmul.f32 %v1472, 1.442695
    %v1474 = vpow.pop %v1473
    %v1475 = vadd.f32 %v1474, 1.0
    %v1476 = vrcp.pop %v1475
    %v1477 = vmul.f32 1.0, %v1476
    %v1478 = vxor.u32 %v1469, 2147483648
    %v1479 = vmul.f32 %v1478, 1.442695
    %v1480 = vpow.pop %v1479
    %v1481 = vadd.f32 %v1480, 1.0
    %v1482 = vrcp.pop %v1481
    %v1483 = vmul.f32 1.0, %v1482
    %v1484 = vtanh.pop %v1470
    %v1485 = vxor.u32 %v1471, 2147483648
    %v1486 = vmul.f32 %v1485, 1.442695
    %v1487 = vpow.pop %v1486
    %v1488 = vadd.f32 %v1487, 1.0
    %v1489 = vrcp.pop %v1488
    %v1490 = vmul.f32 1.0, %v1489
    %v1491 = vmul.f32 %v1483, %v1316
    %v1492 = vmul.f32 %v1477, %v1484
    %v1493 = vadd.f32 %v1491, %v1492
    %v1494 = vtanh.pop %v1493
    %v1495 = vmul.f32 %v1490, %v1494
    %s1496 = scalar_lea.vmem [#allocation5], 32
    %1497 = vst [vmem:[%s1496] sm:$0xff] %v1495
    %s1498 = scalar_lea.vmem [#allocation4], 160
    %v1499 = vld [vmem:[%s1498] sm:$0xff]
    %v1500 = vld [vmem:[%s1498 + $0x8] sm:$0xff]
    %v1501 = vld [vmem:[%s1498 + $0x10] sm:$0xff]
    %v1502 = vld [vmem:[%s1498 + $0x18] sm:$0xff]
    %1503 = vmatprep.subr.mxu0 %v550
    %1504 = vmatpush1.msra.mxu0 %v549
    %1505 = vmatprep.subr.mxu0 %v554
    %1506 = vmatpush1.msra.mxu0 %v553
    %1507 = vmatprep.subr.mxu0 %v558
    %1508 = vmatpush1.msra.mxu0 %v557
    %1509 = vmatprep.subr.mxu0 %v562
    %1510 = vmatpush1.msra.mxu0 %v561
    %1511 = vmatprep.subr.mxu0 %v566
    %1512 = vmatpush1.msra.mxu0 %v565
    %1513 = vmatprep.subr.mxu0 %v570
    %1514 = vmatpush1.msra.mxu0 %v569
    %1515 = vmatprep.subr.mxu0 %v574
    %1516 = vmatpush1.msra.mxu0 %v573
    %1517 = vmatprep.subr.mxu0 %v578
    %1518 = vmatpush1.msra.mxu0 %v577
    %1519 = vmatprep.subr.mxu0 %v582
    %1520 = vmatpush1.msra.mxu0 %v581
    %1521 = vmatprep.subr.mxu0 %v586
    %1522 = vmatpush1.msra.mxu0 %v585
    %1523 = vmatprep.subr.mxu0 %v590
    %1524 = vmatpush1.msra.mxu0 %v589
    %1525 = vmatprep.subr.mxu0 %v594
    %1526 = vmatpush1.msra.mxu0 %v593
    %1527 = vmatprep.subr.mxu0 %v598
    %1528 = vmatpush1.msra.mxu0 %v597
    %1529 = vmatprep.subr.mxu0 %v602
    %1530 = vmatpush1.msra.mxu0 %v601
    %1531 = vmatprep.subr.mxu0 %v606
    %1532 = vmatpush1.msra.mxu0 %v605
    %1533 = vmatprep.subr.mxu0 %v610
    %1534 = vmatpush1.msra.mxu0 %v609
    %1535 = vmatprep.subr.mxu0 0.0
    %1536 = vmatpush1.msra.mxu0 0.0
    %1537 = vmatprep.subr.mxu0 0.0
    %1538 = vmatpush1.msra.mxu0 0.0
    %1539 = vmatprep.subr.mxu0 0.0
    %1540 = vmatpush1.msra.mxu0 0.0
    %1541 = vmatprep.subr.mxu0 0.0
    %1542 = vmatpush1.msra.mxu0 0.0
    %1543 = vmatprep.subr.mxu0 0.0
    %1544 = vmatpush1.msra.mxu0 0.0
    %1545 = vmatprep.subr.mxu0 0.0
    %1546 = vmatpush1.msra.mxu0 0.0
    %1547 = vmatprep.subr.mxu0 0.0
    %1548 = vmatpush1.msra.mxu0 0.0
    %1549 = vmatprep.subr.mxu0 0.0
    %1550 = vmatpush1.msra.mxu0 0.0
    %1551 = vmatprep.subr.mxu0 0.0
    %1552 = vmatpush1.msra.mxu0 0.0
    %1553 = vmatprep.subr.mxu0 0.0
    %1554 = vmatpush1.msra.mxu0 0.0
    %1555 = vmatprep.subr.mxu0 0.0
    %1556 = vmatpush1.msra.mxu0 0.0
    %1557 = vmatprep.subr.mxu0 0.0
    %1558 = vmatpush1.msra.mxu0 0.0
    %1559 = vmatprep.subr.mxu0 0.0
    %1560 = vmatpush1.msra.mxu0 0.0
    %1561 = vmatprep.subr.mxu0 0.0
    %1562 = vmatpush1.msra.mxu0 0.0
    %1563 = vmatprep.subr.mxu0 0.0
    %1564 = vmatpush1.msra.mxu0 0.0
    %1565 = vmatprep.subr.mxu0 0.0
    %1566 = vmatpush1.msra.mxu0 0.0
    %1567 = vmatprep.mubr.f32.mxu0 0.0
    %1568 = vmatmul.mubr.f32.gmra.mrb[0].mxu0 %v1495
    %v1569 = vpop.f32.mrb[0].mxu0
    %v1570 = vadd.f32 0.0, %v1569
    %v1571 = vpop.f32.mrb[0].mxu0
    %v1572 = vadd.f32 0.0, %v1571
    %1573 = vdwg.mxu0
    %1574 = vmatprep.subr.mxu0 %v552
    %1575 = vmatpush1.msra.mxu0 %v551
    %1576 = vmatprep.subr.mxu0 %v556
    %1577 = vmatpush1.msra.mxu0 %v555
    %1578 = vmatprep.subr.mxu0 %v560
    %1579 = vmatpush1.msra.mxu0 %v559
    %1580 = vmatprep.subr.mxu0 %v564
    %1581 = vmatpush1.msra.mxu0 %v563
    %1582 = vmatprep.subr.mxu0 %v568
    %1583 = vmatpush1.msra.mxu0 %v567
    %1584 = vmatprep.subr.mxu0 %v572
    %1585 = vmatpush1.msra.mxu0 %v571
    %1586 = vmatprep.subr.mxu0 %v576
    %1587 = vmatpush1.msra.mxu0 %v575
    %1588 = vmatprep.subr.mxu0 %v580
    %1589 = vmatpush1.msra.mxu0 %v579
    %1590 = vmatprep.subr.mxu0 %v584
    %1591 = vmatpush1.msra.mxu0 %v583
    %1592 = vmatprep.subr.mxu0 %v588
    %1593 = vmatpush1.msra.mxu0 %v587
    %1594 = vmatprep.subr.mxu0 %v592
    %1595 = vmatpush1.msra.mxu0 %v591
    %1596 = vmatprep.subr.mxu0 %v596
    %1597 = vmatpush1.msra.mxu0 %v595
    %1598 = vmatprep.subr.mxu0 %v600
    %1599 = vmatpush1.msra.mxu0 %v599
    %1600 = vmatprep.subr.mxu0 %v604
    %1601 = vmatpush1.msra.mxu0 %v603
    %1602 = vmatprep.subr.mxu0 %v608
    %1603 = vmatpush1.msra.mxu0 %v607
    %1604 = vmatprep.subr.mxu0 %v612
    %1605 = vmatpush1.msra.mxu0 %v611
    %1606 = vmatprep.subr.mxu0 0.0
    %1607 = vmatpush1.msra.mxu0 0.0
    %1608 = vmatprep.subr.mxu0 0.0
    %1609 = vmatpush1.msra.mxu0 0.0
    %1610 = vmatprep.subr.mxu0 0.0
    %1611 = vmatpush1.msra.mxu0 0.0
    %1612 = vmatprep.subr.mxu0 0.0
    %1613 = vmatpush1.msra.mxu0 0.0
    %1614 = vmatprep.subr.mxu0 0.0
    %1615 = vmatpush1.msra.mxu0 0.0
    %1616 = vmatprep.subr.mxu0 0.0
    %1617 = vmatpush1.msra.mxu0 0.0
    %1618 = vmatprep.subr.mxu0 0.0
    %1619 = vmatpush1.msra.mxu0 0.0
    %1620 = vmatprep.subr.mxu0 0.0
    %1621 = vmatpush1.msra.mxu0 0.0
    %1622 = vmatprep.subr.mxu0 0.0
    %1623 = vmatpush1.msra.mxu0 0.0
    %1624 = vmatprep.subr.mxu0 0.0
    %1625 = vmatpush1.msra.mxu0 0.0
    %1626 = vmatprep.subr.mxu0 0.0
    %1627 = vmatpush1.msra.mxu0 0.0
    %1628 = vmatprep.subr.mxu0 0.0
    %1629 = vmatpush1.msra.mxu0 0.0
    %1630 = vmatprep.subr.mxu0 0.0
    %1631 = vmatpush1.msra.mxu0 0.0
    %1632 = vmatprep.subr.mxu0 0.0
    %1633 = vmatpush1.msra.mxu0 0.0
    %1634 = vmatprep.subr.mxu0 0.0
    %1635 = vmatpush1.msra.mxu0 0.0
    %1636 = vmatprep.subr.mxu0 0.0
    %1637 = vmatpush1.msra.mxu0 0.0
    %1638 = vmatprep.mubr.f32.mxu0 0.0
    %1639 = vmatmul.mubr.f32.gmra.mrb[0].mxu0 %v1495
    %v1640 = vpop.f32.mrb[0].mxu0
    %v1641 = vadd.f32 0.0, %v1640
    %v1642 = vpop.f32.mrb[0].mxu0
    %v1643 = vadd.f32 0.0, %v1642
    %1644 = vdwg.mxu0
    %v1645 = vadd.f32 %v1499, %v1570
    %v1646 = vadd.f32 %v1500, %v1572
    %v1647 = vadd.f32 %v1501, %v1641
    %v1648 = vadd.f32 %v1502, %v1643
    %v1649 = vxor.u32 %v1645, 2147483648
    %v1650 = vmul.f32 %v1649, 1.442695
    %v1651 = vpow.pop %v1650
    %v1652 = vadd.f32 %v1651, 1.0
    %v1653 = vrcp.pop %v1652
    %v1654 = vmul.f32 1.0, %v1653
    %v1655 = vxor.u32 %v1646, 2147483648
    %v1656 = vmul.f32 %v1655, 1.442695
    %v1657 = vpow.pop %v1656
    %v1658 = vadd.f32 %v1657, 1.0
    %v1659 = vrcp.pop %v1658
    %v1660 = vmul.f32 1.0, %v1659
    %v1661 = vtanh.pop %v1647
    %v1662 = vxor.u32 %v1648, 2147483648
    %v1663 = vmul.f32 %v1662, 1.442695
    %v1664 = vpow.pop %v1663
    %v1665 = vadd.f32 %v1664, 1.0
    %v1666 = vrcp.pop %v1665
    %v1667 = vmul.f32 1.0, %v1666
    %v1668 = vmul.f32 %v1660, %v1493
    %v1669 = vmul.f32 %v1654, %v1661
    %v1670 = vadd.f32 %v1668, %v1669
    %v1671 = vtanh.pop %v1670
    %v1672 = vmul.f32 %v1667, %v1671
    %s1673 = scalar_lea.vmem [#allocation5], 40
    %1674 = vst [vmem:[%s1673] sm:$0xff] %v1672
    %s1675 = scalar_lea.vmem [#allocation4], 192
    %v1676 = vld [vmem:[%s1675] sm:$0xff]
    %v1677 = vld [vmem:[%s1675 + $0x8] sm:$0xff]
    %v1678 = vld [vmem:[%s1675 + $0x10] sm:$0xff]
    %v1679 = vld [vmem:[%s1675 + $0x18] sm:$0xff]
    %1680 = vmatprep.subr.mxu0 %v550
    %1681 = vmatpush1.msra.mxu0 %v549
    %1682 = vmatprep.subr.mxu0 %v554
    %1683 = vmatpush1.msra.mxu0 %v553
    %1684 = vmatprep.subr.mxu0 %v558
    %1685 = vmatpush1.msra.mxu0 %v557
    %1686 = vmatprep.subr.mxu0 %v562
    %1687 = vmatpush1.msra.mxu0 %v561
    %1688 = vmatprep.subr.mxu0 %v566
    %1689 = vmatpush1.msra.mxu0 %v565
    %1690 = vmatprep.subr.mxu0 %v570
    %1691 = vmatpush1.msra.mxu0 %v569
    %1692 = vmatprep.subr.mxu0 %v574
    %1693 = vmatpush1.msra.mxu0 %v573
    %1694 = vmatprep.subr.mxu0 %v578
    %1695 = vmatpush1.msra.mxu0 %v577
    %1696 = vmatprep.subr.mxu0 %v582
    %1697 = vmatpush1.msra.mxu0 %v581
    %1698 = vmatprep.subr.mxu0 %v586
    %1699 = vmatpush1.msra.mxu0 %v585
    %1700 = vmatprep.subr.mxu0 %v590
    %1701 = vmatpush1.msra.mxu0 %v589
    %1702 = vmatprep.subr.mxu0 %v594
    %1703 = vmatpush1.msra.mxu0 %v593
    %1704 = vmatprep.subr.mxu0 %v598
    %1705 = vmatpush1.msra.mxu0 %v597
    %1706 = vmatprep.subr.mxu0 %v602
    %1707 = vmatpush1.msra.mxu0 %v601
    %1708 = vmatprep.subr.mxu0 %v606
    %1709 = vmatpush1.msra.mxu0 %v605
    %1710 = vmatprep.subr.mxu0 %v610
    %1711 = vmatpush1.msra.mxu0 %v609
    %1712 = vmatprep.subr.mxu0 0.0
    %1713 = vmatpush1.msra.mxu0 0.0
    %1714 = vmatprep.subr.mxu0 0.0
    %1715 = vmatpush1.msra.mxu0 0.0
    %1716 = vmatprep.subr.mxu0 0.0
    %1717 = vmatpush1.msra.mxu0 0.0
    %1718 = vmatprep.subr.mxu0 0.0
    %1719 = vmatpush1.msra.mxu0 0.0
    %1720 = vmatprep.subr.mxu0 0.0
    %1721 = vmatpush1.msra.mxu0 0.0
    %1722 = vmatprep.subr.mxu0 0.0
    %1723 = vmatpush1.msra.mxu0 0.0
    %1724 = vmatprep.subr.mxu0 0.0
    %1725 = vmatpush1.msra.mxu0 0.0
    %1726 = vmatprep.subr.mxu0 0.0
    %1727 = vmatpush1.msra.mxu0 0.0
    %1728 = vmatprep.subr.mxu0 0.0
    %1729 = vmatpush1.msra.mxu0 0.0
    %1730 = vmatprep.subr.mxu0 0.0
    %1731 = vmatpush1.msra.mxu0 0.0
    %1732 = vmatprep.subr.mxu0 0.0
    %1733 = vmatpush1.msra.mxu0 0.0
    %1734 = vmatprep.subr.mxu0 0.0
    %1735 = vmatpush1.msra.mxu0 0.0
    %1736 = vmatprep.subr.mxu0 0.0
    %1737 = vmatpush1.msra.mxu0 0.0
    %1738 = vmatprep.subr.mxu0 0.0
    %1739 = vmatpush1.msra.mxu0 0.0
    %1740 = vmatprep.subr.mxu0 0.0
    %1741 = vmatpush1.msra.mxu0 0.0
    %1742 = vmatprep.subr.mxu0 0.0
    %1743 = vmatpush1.msra.mxu0 0.0
    %1744 = vmatprep.mubr.f32.mxu0 0.0
    %1745 = vmatmul.mubr.f32.gmra.mrb[0].mxu0 %v1672
    %v1746 = vpop.f32.mrb[0].mxu0
    %v1747 = vadd.f32 0.0, %v1746
    %v1748 = vpop.f32.mrb[0].mxu0
    %v1749 = vadd.f32 0.0, %v1748
    %1750 = vdwg.mxu0
    %1751 = vmatprep.subr.mxu0 %v552
    %1752 = vmatpush1.msra.mxu0 %v551
    %1753 = vmatprep.subr.mxu0 %v556
    %1754 = vmatpush1.msra.mxu0 %v555
    %1755 = vmatprep.subr.mxu0 %v560
    %1756 = vmatpush1.msra.mxu0 %v559
    %1757 = vmatprep.subr.mxu0 %v564
    %1758 = vmatpush1.msra.mxu0 %v563
    %1759 = vmatprep.subr.mxu0 %v568
    %1760 = vmatpush1.msra.mxu0 %v567
    %1761 = vmatprep.subr.mxu0 %v572
    %1762 = vmatpush1.msra.mxu0 %v571
    %1763 = vmatprep.subr.mxu0 %v576
    %1764 = vmatpush1.msra.mxu0 %v575
    %1765 = vmatprep.subr.mxu0 %v580
    %1766 = vmatpush1.msra.mxu0 %v579
    %1767 = vmatprep.subr.mxu0 %v584
    %1768 = vmatpush1.msra.mxu0 %v583
    %1769 = vmatprep.subr.mxu0 %v588
    %1770 = vmatpush1.msra.mxu0 %v587
    %1771 = vmatprep.subr.mxu0 %v592
    %1772 = vmatpush1.msra.mxu0 %v591
    %1773 = vmatprep.subr.mxu0 %v596
    %1774 = vmatpush1.msra.mxu0 %v595
    %1775 = vmatprep.subr.mxu0 %v600
    %1776 = vmatpush1.msra.mxu0 %v599
    %1777 = vmatprep.subr.mxu0 %v604
    %1778 = vmatpush1.msra.mxu0 %v603
    %1779 = vmatprep.subr.mxu0 %v608
    %1780 = vmatpush1.msra.mxu0 %v607
    %1781 = vmatprep.subr.mxu0 %v612
    %1782 = vmatpush1.msra.mxu0 %v611
    %1783 = vmatprep.subr.mxu0 0.0
    %1784 = vmatpush1.msra.mxu0 0.0
    %1785 = vmatprep.subr.mxu0 0.0
    %1786 = vmatpush1.msra.mxu0 0.0
    %1787 = vmatprep.subr.mxu0 0.0
    %1788 = vmatpush1.msra.mxu0 0.0
    %1789 = vmatprep.subr.mxu0 0.0
    %1790 = vmatpush1.msra.mxu0 0.0
    %1791 = vmatprep.subr.mxu0 0.0
    %1792 = vmatpush1.msra.mxu0 0.0
    %1793 = vmatprep.subr.mxu0 0.0
    %1794 = vmatpush1.msra.mxu0 0.0
    %1795 = vmatprep.subr.mxu0 0.0
    %1796 = vmatpush1.msra.mxu0 0.0
    %1797 = vmatprep.subr.mxu0 0.0
    %1798 = vmatpush1.msra.mxu0 0.0
    %1799 = vmatprep.subr.mxu0 0.0
    %1800 = vmatpush1.msra.mxu0 0.0
    %1801 = vmatprep.subr.mxu0 0.0
    %1802 = vmatpush1.msra.mxu0 0.0
    %1803 = vmatprep.subr.mxu0 0.0
    %1804 = vmatpush1.msra.mxu0 0.0
    %1805 = vmatprep.subr.mxu0 0.0
    %1806 = vmatpush1.msra.mxu0 0.0
    %1807 = vmatprep.subr.mxu0 0.0
    %1808 = vmatpush1.msra.mxu0 0.0
    %1809 = vmatprep.subr.mxu0 0.0
    %1810 = vmatpush1.msra.mxu0 0.0
    %1811 = vmatprep.subr.mxu0 0.0
    %1812 = vmatpush1.msra.mxu0 0.0
    %1813 = vmatprep.subr.mxu0 0.0
    %1814 = vmatpush1.msra.mxu0 0.0
    %1815 = vmatprep.mubr.f32.mxu0 0.0
    %1816 = vmatmul.mubr.f32.gmra.mrb[0].mxu0 %v1672
    %v1817 = vpop.f32.mrb[0].mxu0
    %v1818 = vadd.f32 0.0, %v1817
    %v1819 = vpop.f32.mrb[0].mxu0
    %v1820 = vadd.f32 0.0, %v1819
    %1821 = vdwg.mxu0
    %v1822 = vadd.f32 %v1676, %v1747
    %v1823 = vadd.f32 %v1677, %v1749
    %v1824 = vadd.f32 %v1678, %v1818
    %v1825 = vadd.f32 %v1679, %v1820
    %v1826 = vxor.u32 %v1822, 2147483648
    %v1827 = vmul.f32 %v1826, 1.442695
    %v1828 = vpow.pop %v1827
    %v1829 = vadd.f32 %v1828, 1.0
    %v1830 = vrcp.pop %v1829
    %v1831 = vmul.f32 1.0, %v1830
    %v1832 = vxor.u32 %v1823, 2147483648
    %v1833 = vmul.f32 %v1832, 1.442695
    %v1834 = vpow.pop %v1833
    %v1835 = vadd.f32 %v1834, 1.0
    %v1836 = vrcp.pop %v1835
    %v1837 = vmul.f32 1.0, %v1836
    %v1838 = vtanh.pop %v1824
    %v1839 = vxor.u32 %v1825, 2147483648
    %v1840 = vmul.f32 %v1839, 1.442695
    %v1841 = vpow.pop %v1840
    %v1842 = vadd.f32 %v1841, 1.0
    %v1843 = vrcp.pop %v1842
    %v1844 = vmul.f32 1.0, %v1843
    %v1845 = vmul.f32 %v1837, %v1670
    %v1846 = vmul.f32 %v1831, %v1838
    %v1847 = vadd.f32 %v1845, %v1846
    %v1848 = vtanh.pop %v1847
    %v1849 = vmul.f32 %v1844, %v1848
    %s1850 = scalar_lea.vmem [#allocation5], 48
    %1851 = vst [vmem:[%s1850] sm:$0xff] %v1849
    %s1852 = scalar_lea.vmem [#allocation4], 224
    %v1853 = vld [vmem:[%s1852] sm:$0xff]
    %v1854 = vld [vmem:[%s1852 + $0x8] sm:$0xff]
    %v1855 = vld [vmem:[%s1852 + $0x10] sm:$0xff]
    %v1856 = vld [vmem:[%s1852 + $0x18] sm:$0xff]
    %1857 = vmatprep.subr.mxu0 %v550
    %1858 = vmatpush1.msra.mxu0 %v549
    %1859 = vmatprep.subr.mxu0 %v554
    %1860 = vmatpush1.msra.mxu0 %v553
    %1861 = vmatprep.subr.mxu0 %v558
    %1862 = vmatpush1.msra.mxu0 %v557
    %1863 = vmatprep.subr.mxu0 %v562
    %1864 = vmatpush1.msra.mxu0 %v561
    %1865 = vmatprep.subr.mxu0 %v566
    %1866 = vmatpush1.msra.mxu0 %v565
    %1867 = vmatprep.subr.mxu0 %v570
    %1868 = vmatpush1.msra.mxu0 %v569
    %1869 = vmatprep.subr.mxu0 %v574
    %1870 = vmatpush1.msra.mxu0 %v573
    %1871 = vmatprep.subr.mxu0 %v578
    %1872 = vmatpush1.msra.mxu0 %v577
    %1873 = vmatprep.subr.mxu0 %v582
    %1874 = vmatpush1.msra.mxu0 %v581
    %1875 = vmatprep.subr.mxu0 %v586
    %1876 = vmatpush1.msra.mxu0 %v585
    %1877 = vmatprep.subr.mxu0 %v590
    %1878 = vmatpush1.msra.mxu0 %v589
    %1879 = vmatprep.subr.mxu0 %v594
    %1880 = vmatpush1.msra.mxu0 %v593
    %1881 = vmatprep.subr.mxu0 %v598
    %1882 = vmatpush1.msra.mxu0 %v597
    %1883 = vmatprep.subr.mxu0 %v602
    %1884 = vmatpush1.msra.mxu0 %v601
    %1885 = vmatprep.subr.mxu0 %v606
    %1886 = vmatpush1.msra.mxu0 %v605
    %1887 = vmatprep.subr.mxu0 %v610
    %1888 = vmatpush1.msra.mxu0 %v609
    %1889 = vmatprep.subr.mxu0 0.0
    %1890 = vmatpush1.msra.mxu0 0.0
    %1891 = vmatprep.subr.mxu0 0.0
    %1892 = vmatpush1.msra.mxu0 0.0
    %1893 = vmatprep.subr.mxu0 0.0
    %1894 = vmatpush1.msra.mxu0 0.0
    %1895 = vmatprep.subr.mxu0 0.0
    %1896 = vmatpush1.msra.mxu0 0.0
    %1897 = vmatprep.subr.mxu0 0.0
    %1898 = vmatpush1.msra.mxu0 0.0
    %1899 = vmatprep.subr.mxu0 0.0
    %1900 = vmatpush1.msra.mxu0 0.0
    %1901 = vmatprep.subr.mxu0 0.0
    %1902 = vmatpush1.msra.mxu0 0.0
    %1903 = vmatprep.subr.mxu0 0.0
    %1904 = vmatpush1.msra.mxu0 0.0
    %1905 = vmatprep.subr.mxu0 0.0
    %1906 = vmatpush1.msra.mxu0 0.0
    %1907 = vmatprep.subr.mxu0 0.0
    %1908 = vmatpush1.msra.mxu0 0.0
    %1909 = vmatprep.subr.mxu0 0.0
    %1910 = vmatpush1.msra.mxu0 0.0
    %1911 = vmatprep.subr.mxu0 0.0
    %1912 = vmatpush1.msra.mxu0 0.0
    %1913 = vmatprep.subr.mxu0 0.0
    %1914 = vmatpush1.msra.mxu0 0.0
    %1915 = vmatprep.subr.mxu0 0.0
    %1916 = vmatpush1.msra.mxu0 0.0
    %1917 = vmatprep.subr.mxu0 0.0
    %1918 = vmatpush1.msra.mxu0 0.0
    %1919 = vmatprep.subr.mxu0 0.0
    %1920 = vmatpush1.msra.mxu0 0.0
    %1921 = vmatprep.mubr.f32.mxu0 0.0
    %1922 = vmatmul.mubr.f32.gmra.mrb[0].mxu0 %v1849
    %v1923 = vpop.f32.mrb[0].mxu0
    %v1924 = vadd.f32 0.0, %v1923
    %v1925 = vpop.f32.mrb[0].mxu0
    %v1926 = vadd.f32 0.0, %v1925
    %1927 = vdwg.mxu0
    %1928 = vmatprep.subr.mxu0 %v552
    %1929 = vmatpush1.msra.mxu0 %v551
    %1930 = vmatprep.subr.mxu0 %v556
    %1931 = vmatpush1.msra.mxu0 %v555
    %1932 = vmatprep.subr.mxu0 %v560
    %1933 = vmatpush1.msra.mxu0 %v559
    %1934 = vmatprep.subr.mxu0 %v564
    %1935 = vmatpush1.msra.mxu0 %v563
    %1936 = vmatprep.subr.mxu0 %v568
    %1937 = vmatpush1.msra.mxu0 %v567
    %1938 = vmatprep.subr.mxu0 %v572
    %1939 = vmatpush1.msra.mxu0 %v571
    %1940 = vmatprep.subr.mxu0 %v576
    %1941 = vmatpush1.msra.mxu0 %v575
    %1942 = vmatprep.subr.mxu0 %v580
    %1943 = vmatpush1.msra.mxu0 %v579
    %1944 = vmatprep.subr.mxu0 %v584
    %1945 = vmatpush1.msra.mxu0 %v583
    %1946 = vmatprep.subr.mxu0 %v588
    %1947 = vmatpush1.msra.mxu0 %v587
    %1948 = vmatprep.subr.mxu0 %v592
    %1949 = vmatpush1.msra.mxu0 %v591
    %1950 = vmatprep.subr.mxu0 %v596
    %1951 = vmatpush1.msra.mxu0 %v595
    %1952 = vmatprep.subr.mxu0 %v600
    %1953 = vmatpush1.msra.mxu0 %v599
    %1954 = vmatprep.subr.mxu0 %v604
    %1955 = vmatpush1.msra.mxu0 %v603
    %1956 = vmatprep.subr.mxu0 %v608
    %1957 = vmatpush1.msra.mxu0 %v607
    %1958 = vmatprep.subr.mxu0 %v612
    %1959 = vmatpush1.msra.mxu0 %v611
    %1960 = vmatprep.subr.mxu0 0.0
    %1961 = vmatpush1.msra.mxu0 0.0
    %1962 = vmatprep.subr.mxu0 0.0
    %1963 = vmatpush1.msra.mxu0 0.0
    %1964 = vmatprep.subr.mxu0 0.0
    %1965 = vmatpush1.msra.mxu0 0.0
    %1966 = vmatprep.subr.mxu0 0.0
    %1967 = vmatpush1.msra.mxu0 0.0
    %1968 = vmatprep.subr.mxu0 0.0
    %1969 = vmatpush1.msra.mxu0 0.0
    %1970 = vmatprep.subr.mxu0 0.0
    %1971 = vmatpush1.msra.mxu0 0.0
    %1972 = vmatprep.subr.mxu0 0.0
    %1973 = vmatpush1.msra.mxu0 0.0
    %1974 = vmatprep.subr.mxu0 0.0
    %1975 = vmatpush1.msra.mxu0 0.0
    %1976 = vmatprep.subr.mxu0 0.0
    %1977 = vmatpush1.msra.mxu0 0.0
    %1978 = vmatprep.subr.mxu0 0.0
    %1979 = vmatpush1.msra.mxu0 0.0
    %1980 = vmatprep.subr.mxu0 0.0
    %1981 = vmatpush1.msra.mxu0 0.0
    %1982 = vmatprep.subr.mxu0 0.0
    %1983 = vmatpush1.msra.mxu0 0.0
    %1984 = vmatprep.subr.mxu0 0.0
    %1985 = vmatpush1.msra.mxu0 0.0
    %1986 = vmatprep.subr.mxu0 0.0
    %1987 = vmatpush1.msra.mxu0 0.0
    %1988 = vmatprep.subr.mxu0 0.0
    %1989 = vmatpush1.msra.mxu0 0.0
    %1990 = vmatprep.subr.mxu0 0.0
    %1991 = vmatpush1.msra.mxu0 0.0
    %1992 = vmatprep.mubr.f32.mxu0 0.0
    %1993 = vmatmul.mubr.f32.gmra.mrb[0].mxu0 %v1849
    %v1994 = vpop.f32.mrb[0].mxu0
    %v1995 = vadd.f32 0.0, %v1994
    %v1996 = vpop.f32.mrb[0].mxu0
    %v1997 = vadd.f32 0.0, %v1996
    %1998 = vdwg.mxu0
    %v1999 = vadd.f32 %v1853, %v1924
    %v2000 = vadd.f32 %v1854, %v1926
    %v2001 = vadd.f32 %v1855, %v1995
    %v2002 = vadd.f32 %v1856, %v1997
    %v2003 = vxor.u32 %v1999, 2147483648
    %v2004 = vmul.f32 %v2003, 1.442695
    %v2005 = vpow.pop %v2004
    %v2006 = vadd.f32 %v2005, 1.0
    %v2007 = vrcp.pop %v2006
    %v2008 = vmul.f32 1.0, %v2007
    %v2009 = vxor.u32 %v2000, 2147483648
    %v2010 = vmul.f32 %v2009, 1.442695
    %v2011 = vpow.pop %v2010
    %v2012 = vadd.f32 %v2011, 1.0
    %v2013 = vrcp.pop %v2012
    %v2014 = vmul.f32 1.0, %v2013
    %v2015 = vtanh.pop %v2001
    %v2016 = vxor.u32 %v2002, 2147483648
    %v2017 = vmul.f32 %v2016, 1.442695
    %v2018 = vpow.pop %v2017
    %v2019 = vadd.f32 %v2018, 1.0
    %v2020 = vrcp.pop %v2019
    %v2021 = vmul.f32 1.0, %v2020
    %v2022 = vmul.f32 %v2014, %v1847
    %v2023 = vmul.f32 %v2008, %v2015
    %v2024 = vadd.f32 %v2022, %v2023
    %v2025 = vtanh.pop %v2024
    %v2026 = vmul.f32 %v2021, %v2025
    %s2027 = scalar_lea.vmem [#allocation5], 56
    %2028 = vst [vmem:[%s2027] sm:$0xff] %v2026
    %s2029 = scalar_lea.vmem [#allocation4], 256
    %v2030 = vld [vmem:[%s2029] sm:$0xff]
    %v2031 = vld [vmem:[%s2029 + $0x8] sm:$0xff]
    %v2032 = vld [vmem:[%s2029 + $0x10] sm:$0xff]
    %v2033 = vld [vmem:[%s2029 + $0x18] sm:$0xff]
    %2034 = vmatprep.subr.mxu0 %v550
    %2035 = vmatpush1.msra.mxu0 %v549
    %2036 = vmatprep.subr.mxu0 %v554
    %2037 = vmatpush1.msra.mxu0 %v553
    %2038 = vmatprep.subr.mxu0 %v558
    %2039 = vmatpush1.msra.mxu0 %v557
    %2040 = vmatprep.subr.mxu0 %v562
    %2041 = vmatpush1.msra.mxu0 %v561
    %2042 = vmatprep.subr.mxu0 %v566
    %2043 = vmatpush1.msra.mxu0 %v565
    %2044 = vmatprep.subr.mxu0 %v570
    %2045 = vmatpush1.msra.mxu0 %v569
    %2046 = vmatprep.subr.mxu0 %v574
    %2047 = vmatpush1.msra.mxu0 %v573
    %2048 = vmatprep.subr.mxu0 %v578
    %2049 = vmatpush1.msra.mxu0 %v577
    %2050 = vmatprep.subr.mxu0 %v582
    %2051 = vmatpush1.msra.mxu0 %v581
    %2052 = vmatprep.subr.mxu0 %v586
    %2053 = vmatpush1.msra.mxu0 %v585
    %2054 = vmatprep.subr.mxu0 %v590
    %2055 = vmatpush1.msra.mxu0 %v589
    %2056 = vmatprep.subr.mxu0 %v594
    %2057 = vmatpush1.msra.mxu0 %v593
    %2058 = vmatprep.subr.mxu0 %v598
    %2059 = vmatpush1.msra.mxu0 %v597
    %2060 = vmatprep.subr.mxu0 %v602
    %2061 = vmatpush1.msra.mxu0 %v601
    %2062 = vmatprep.subr.mxu0 %v606
    %2063 = vmatpush1.msra.mxu0 %v605
    %2064 = vmatprep.subr.mxu0 %v610
    %2065 = vmatpush1.msra.mxu0 %v609
    %2066 = vmatprep.subr.mxu0 0.0
    %2067 = vmatpush1.msra.mxu0 0.0
    %2068 = vmatprep.subr.mxu0 0.0
    %2069 = vmatpush1.msra.mxu0 0.0
    %2070 = vmatprep.subr.mxu0 0.0
    %2071 = vmatpush1.msra.mxu0 0.0
    %2072 = vmatprep.subr.mxu0 0.0
    %2073 = vmatpush1.msra.mxu0 0.0
    %2074 = vmatprep.subr.mxu0 0.0
    %2075 = vmatpush1.msra.mxu0 0.0
    %2076 = vmatprep.subr.mxu0 0.0
    %2077 = vmatpush1.msra.mxu0 0.0
    %2078 = vmatprep.subr.mxu0 0.0
    %2079 = vmatpush1.msra.mxu0 0.0
    %2080 = vmatprep.subr.mxu0 0.0
    %2081 = vmatpush1.msra.mxu0 0.0
    %2082 = vmatprep.subr.mxu0 0.0
    %2083 = vmatpush1.msra.mxu0 0.0
    %2084 = vmatprep.subr.mxu0 0.0
    %2085 = vmatpush1.msra.mxu0 0.0
    %2086 = vmatprep.subr.mxu0 0.0
    %2087 = vmatpush1.msra.mxu0 0.0
    %2088 = vmatprep.subr.mxu0 0.0
    %2089 = vmatpush1.msra.mxu0 0.0
    %2090 = vmatprep.subr.mxu0 0.0
    %2091 = vmatpush1.msra.mxu0 0.0
    %2092 = vmatprep.subr.mxu0 0.0
    %2093 = vmatpush1.msra.mxu0 0.0
    %2094 = vmatprep.subr.mxu0 0.0
    %2095 = vmatpush1.msra.mxu0 0.0
    %2096 = vmatprep.subr.mxu0 0.0
    %2097 = vmatpush1.msra.mxu0 0.0
    %2098 = vmatprep.mubr.f32.mxu0 0.0
    %2099 = vmatmul.mubr.f32.gmra.mrb[0].mxu0 %v2026
    %v2100 = vpop.f32.mrb[0].mxu0
    %v2101 = vadd.f32 0.0, %v2100
    %v2102 = vpop.f32.mrb[0].mxu0
    %v2103 = vadd.f32 0.0, %v2102
    %2104 = vdwg.mxu0
    %2105 = vmatprep.subr.mxu0 %v552
    %2106 = vmatpush1.msra.mxu0 %v551
    %2107 = vmatprep.subr.mxu0 %v556
    %2108 = vmatpush1.msra.mxu0 %v555
    %2109 = vmatprep.subr.mxu0 %v560
    %2110 = vmatpush1.msra.mxu0 %v559
    %2111 = vmatprep.subr.mxu0 %v564
    %2112 = vmatpush1.msra.mxu0 %v563
    %2113 = vmatprep.subr.mxu0 %v568
    %2114 = vmatpush1.msra.mxu0 %v567
    %2115 = vmatprep.subr.mxu0 %v572
    %2116 = vmatpush1.msra.mxu0 %v571
    %2117 = vmatprep.subr.mxu0 %v576
    %2118 = vmatpush1.msra.mxu0 %v575
    %2119 = vmatprep.subr.mxu0 %v580
    %2120 = vmatpush1.msra.mxu0 %v579
    %2121 = vmatprep.subr.mxu0 %v584
    %2122 = vmatpush1.msra.mxu0 %v583
    %2123 = vmatprep.subr.mxu0 %v588
    %2124 = vmatpush1.msra.mxu0 %v587
    %2125 = vmatprep.subr.mxu0 %v592
    %2126 = vmatpush1.msra.mxu0 %v591
    %2127 = vmatprep.subr.mxu0 %v596
    %2128 = vmatpush1.msra.mxu0 %v595
    %2129 = vmatprep.subr.mxu0 %v600
    %2130 = vmatpush1.msra.mxu0 %v599
    %2131 = vmatprep.subr.mxu0 %v604
    %2132 = vmatpush1.msra.mxu0 %v603
    %2133 = vmatprep.subr.mxu0 %v608
    %2134 = vmatpush1.msra.mxu0 %v607
    %2135 = vmatprep.subr.mxu0 %v612
    %2136 = vmatpush1.msra.mxu0 %v611
    %2137 = vmatprep.subr.mxu0 0.0
    %2138 = vmatpush1.msra.mxu0 0.0
    %2139 = vmatprep.subr.mxu0 0.0
    %2140 = vmatpush1.msra.mxu0 0.0
    %2141 = vmatprep.subr.mxu0 0.0
    %2142 = vmatpush1.msra.mxu0 0.0
    %2143 = vmatprep.subr.mxu0 0.0
    %2144 = vmatpush1.msra.mxu0 0.0
    %2145 = vmatprep.subr.mxu0 0.0
    %2146 = vmatpush1.msra.mxu0 0.0
    %2147 = vmatprep.subr.mxu0 0.0
    %2148 = vmatpush1.msra.mxu0 0.0
    %2149 = vmatprep.subr.mxu0 0.0
    %2150 = vmatpush1.msra.mxu0 0.0
    %2151 = vmatprep.subr.mxu0 0.0
    %2152 = vmatpush1.msra.mxu0 0.0
    %2153 = vmatprep.subr.mxu0 0.0
    %2154 = vmatpush1.msra.mxu0 0.0
    %2155 = vmatprep.subr.mxu0 0.0
    %2156 = vmatpush1.msra.mxu0 0.0
    %2157 = vmatprep.subr.mxu0 0.0
    %2158 = vmatpush1.msra.mxu0 0.0
    %2159 = vmatprep.subr.mxu0 0.0
    %2160 = vmatpush1.msra.mxu0 0.0
    %2161 = vmatprep.subr.mxu0 0.0
    %2162 = vmatpush1.msra.mxu0 0.0
    %2163 = vmatprep.subr.mxu0 0.0
    %2164 = vmatpush1.msra.mxu0 0.0
    %2165 = vmatprep.subr.mxu0 0.0
    %2166 = vmatpush1.msra.mxu0 0.0
    %2167 = vmatprep.subr.mxu0 0.0
    %2168 = vmatpush1.msra.mxu0 0.0
    %2169 = vmatprep.mubr.f32.mxu0 0.0
    %2170 = vmatmul.mubr.f32.gmra.mrb[0].mxu0 %v2026
    %v2171 = vpop.f32.mrb[0].mxu0
    %v2172 = vadd.f32 0.0, %v2171
    %v2173 = vpop.f32.mrb[0].mxu0
    %v2174 = vadd.f32 0.0, %v2173
    %2175 = vdwg.mxu0
    %v2176 = vadd.f32 %v2030, %v2101
    %v2177 = vadd.f32 %v2031, %v2103
    %v2178 = vadd.f32 %v2032, %v2172
    %v2179 = vadd.f32 %v2033, %v2174
    %v2180 = vxor.u32 %v2176, 2147483648
    %v2181 = vmul.f32 %v2180, 1.442695
    %v2182 = vpow.pop %v2181
    %v2183 = vadd.f32 %v2182, 1.0
    %v2184 = vrcp.pop %v2183
    %v2185 = vmul.f32 1.0, %v2184
    %v2186 = vxor.u32 %v2177, 2147483648
    %v2187 = vmul.f32 %v2186, 1.442695
    %v2188 = vpow.pop %v2187
    %v2189 = vadd.f32 %v2188, 1.0
    %v2190 = vrcp.pop %v2189
    %v2191 = vmul.f32 1.0, %v2190
    %v2192 = vtanh.pop %v2178
    %v2193 = vxor.u32 %v2179, 2147483648
    %v2194 = vmul.f32 %v2193, 1.442695
    %v2195 = vpow.pop %v2194
    %v2196 = vadd.f32 %v2195, 1.0
    %v2197 = vrcp.pop %v2196
    %v2198 = vmul.f32 1.0, %v2197
    %v2199 = vmul.f32 %v2191, %v2024
    %v2200 = vmul.f32 %v2185, %v2192
    %v2201 = vadd.f32 %v2199, %v2200
    %v2202 = vtanh.pop %v2201
    %v2203 = vmul.f32 %v2198, %v2202
    %s2204 = scalar_lea.vmem [#allocation5], 64
    %2205 = vst [vmem:[%s2204] sm:$0xff] %v2203
    %s2206 = scalar_lea.vmem [#allocation4], 288
    %v2207 = vld [vmem:[%s2206] sm:$0xff]
    %v2208 = vld [vmem:[%s2206 + $0x8] sm:$0xff]
    %v2209 = vld [vmem:[%s2206 + $0x10] sm:$0xff]
    %v2210 = vld [vmem:[%s2206 + $0x18] sm:$0xff]
    %2211 = vmatprep.subr.mxu0 %v550
    %2212 = vmatpush1.msra.mxu0 %v549
    %2213 = vmatprep.subr.mxu0 %v554
    %2214 = vmatpush1.msra.mxu0 %v553
    %2215 = vmatprep.subr.mxu0 %v558
    %2216 = vmatpush1.msra.mxu0 %v557
    %2217 = vmatprep.subr.mxu0 %v562
    %2218 = vmatpush1.msra.mxu0 %v561
    %2219 = vmatprep.subr.mxu0 %v566
    %2220 = vmatpush1.msra.mxu0 %v565
    %2221 = vmatprep.subr.mxu0 %v570
    %2222 = vmatpush1.msra.mxu0 %v569
    %2223 = vmatprep.subr.mxu0 %v574
    %2224 = vmatpush1.msra.mxu0 %v573
    %2225 = vmatprep.subr.mxu0 %v578
    %2226 = vmatpush1.msra.mxu0 %v577
    %2227 = vmatprep.subr.mxu0 %v582
    %2228 = vmatpush1.msra.mxu0 %v581
    %2229 = vmatprep.subr.mxu0 %v586
    %2230 = vmatpush1.msra.mxu0 %v585
    %2231 = vmatprep.subr.mxu0 %v590
    %2232 = vmatpush1.msra.mxu0 %v589
    %2233 = vmatprep.subr.mxu0 %v594
    %2234 = vmatpush1.msra.mxu0 %v593
    %2235 = vmatprep.subr.mxu0 %v598
    %2236 = vmatpush1.msra.mxu0 %v597
    %2237 = vmatprep.subr.mxu0 %v602
    %2238 = vmatpush1.msra.mxu0 %v601
    %2239 = vmatprep.subr.mxu0 %v606
    %2240 = vmatpush1.msra.mxu0 %v605
    %2241 = vmatprep.subr.mxu0 %v610
    %2242 = vmatpush1.msra.mxu0 %v609
    %2243 = vmatprep.subr.mxu0 0.0
    %2244 = vmatpush1.msra.mxu0 0.0
    %2245 = vmatprep.subr.mxu0 0.0
    %2246 = vmatpush1.msra.mxu0 0.0
    %2247 = vmatprep.subr.mxu0 0.0
    %2248 = vmatpush1.msra.mxu0 0.0
    %2249 = vmatprep.subr.mxu0 0.0
    %2250 = vmatpush1.msra.mxu0 0.0
    %2251 = vmatprep.subr.mxu0 0.0
    %2252 = vmatpush1.msra.mxu0 0.0
    %2253 = vmatprep.subr.mxu0 0.0
    %2254 = vmatpush1.msra.mxu0 0.0
    %2255 = vmatprep.subr.mxu0 0.0
    %2256 = vmatpush1.msra.mxu0 0.0
    %2257 = vmatprep.subr.mxu0 0.0
    %2258 = vmatpush1.msra.mxu0 0.0
    %2259 = vmatprep.subr.mxu0 0.0
    %2260 = vmatpush1.msra.mxu0 0.0
    %2261 = vmatprep.subr.mxu0 0.0
    %2262 = vmatpush1.msra.mxu0 0.0
    %2263 = vmatprep.subr.mxu0 0.0
    %2264 = vmatpush1.msra.mxu0 0.0
    %2265 = vmatprep.subr.mxu0 0.0
    %2266 = vmatpush1.msra.mxu0 0.0
    %2267 = vmatprep.subr.mxu0 0.0
    %2268 = vmatpush1.msra.mxu0 0.0
    %2269 = vmatprep.subr.mxu0 0.0
    %2270 = vmatpush1.msra.mxu0 0.0
    %2271 = vmatprep.subr.mxu0 0.0
    %2272 = vmatpush1.msra.mxu0 0.0
    %2273 = vmatprep.subr.mxu0 0.0
    %2274 = vmatpush1.msra.mxu0 0.0
    %2275 = vmatprep.mubr.f32.mxu0 0.0
    %2276 = vmatmul.mubr.f32.gmra.mrb[0].mxu0 %v2203
    %v2277 = vpop.f32.mrb[0].mxu0
    %v2278 = vadd.f32 0.0, %v2277
    %v2279 = vpop.f32.mrb[0].mxu0
    %v2280 = vadd.f32 0.0, %v2279
    %2281 = vdwg.mxu0
    %2282 = vmatprep.subr.mxu0 %v552
    %2283 = vmatpush1.msra.mxu0 %v551
    %2284 = vmatprep.subr.mxu0 %v556
    %2285 = vmatpush1.msra.mxu0 %v555
    %2286 = vmatprep.subr.mxu0 %v560
    %2287 = vmatpush1.msra.mxu0 %v559
    %2288 = vmatprep.subr.mxu0 %v564
    %2289 = vmatpush1.msra.mxu0 %v563
    %2290 = vmatprep.subr.mxu0 %v568
    %2291 = vmatpush1.msra.mxu0 %v567
    %2292 = vmatprep.subr.mxu0 %v572
    %2293 = vmatpush1.msra.mxu0 %v571
    %2294 = vmatprep.subr.mxu0 %v576
    %2295 = vmatpush1.msra.mxu0 %v575
    %2296 = vmatprep.subr.mxu0 %v580
    %2297 = vmatpush1.msra.mxu0 %v579
    %2298 = vmatprep.subr.mxu0 %v584
    %2299 = vmatpush1.msra.mxu0 %v583
    %2300 = vmatprep.subr.mxu0 %v588
    %2301 = vmatpush1.msra.mxu0 %v587
    %2302 = vmatprep.subr.mxu0 %v592
    %2303 = vmatpush1.msra.mxu0 %v591
    %2304 = vmatprep.subr.mxu0 %v596
    %2305 = vmatpush1.msra.mxu0 %v595
    %2306 = vmatprep.subr.mxu0 %v600
    %2307 = vmatpush1.msra.mxu0 %v599
    %2308 = vmatprep.subr.mxu0 %v604
    %2309 = vmatpush1.msra.mxu0 %v603
    %2310 = vmatprep.subr.mxu0 %v608
    %2311 = vmatpush1.msra.mxu0 %v607
    %2312 = vmatprep.subr.mxu0 %v612
    %2313 = vmatpush1.msra.mxu0 %v611
    %2314 = vmatprep.subr.mxu0 0.0
    %2315 = vmatpush1.msra.mxu0 0.0
    %2316 = vmatprep.subr.mxu0 0.0
    %2317 = vmatpush1.msra.mxu0 0.0
    %2318 = vmatprep.subr.mxu0 0.0
    %2319 = vmatpush1.msra.mxu0 0.0
    %2320 = vmatprep.subr.mxu0 0.0
    %2321 = vmatpush1.msra.mxu0 0.0
    %2322 = vmatprep.subr.mxu0 0.0
    %2323 = vmatpush1.msra.mxu0 0.0
    %2324 = vmatprep.subr.mxu0 0.0
    %2325 = vmatpush1.msra.mxu0 0.0
    %2326 = vmatprep.subr.mxu0 0.0
    %2327 = vmatpush1.msra.mxu0 0.0
    %2328 = vmatprep.subr.mxu0 0.0
    %2329 = vmatpush1.msra.mxu0 0.0
    %2330 = vmatprep.subr.mxu0 0.0
    %2331 = vmatpush1.msra.mxu0 0.0
    %2332 = vmatprep.subr.mxu0 0.0
    %2333 = vmatpush1.msra.mxu0 0.0
    %2334 = vmatprep.subr.mxu0 0.0
    %2335 = vmatpush1.msra.mxu0 0.0
    %2336 = vmatprep.subr.mxu0 0.0
    %2337 = vmatpush1.msra.mxu0 0.0
    %2338 = vmatprep.subr.mxu0 0.0
    %2339 = vmatpush1.msra.mxu0 0.0
    %2340 = vmatprep.subr.mxu0 0.0
    %2341 = vmatpush1.msra.mxu0 0.0
    %2342 = vmatprep.subr.mxu0 0.0
    %2343 = vmatpush1.msra.mxu0 0.0
    %2344 = vmatprep.subr.mxu0 0.0
    %2345 = vmatpush1.msra.mxu0 0.0
    %2346 = vmatprep.mubr.f32.mxu0 0.0
    %2347 = vmatmul.mubr.f32.gmra.mrb[0].mxu0 %v2203
    %v2348 = vpop.f32.mrb[0].mxu0
    %v2349 = vadd.f32 0.0, %v2348
    %v2350 = vpop.f32.mrb[0].mxu0
    %v2351 = vadd.f32 0.0, %v2350
    %2352 = vdwg.mxu0
    %v2353 = vadd.f32 %v2207, %v2278
    %v2354 = vadd.f32 %v2208, %v2280
    %v2355 = vadd.f32 %v2209, %v2349
    %v2356 = vadd.f32 %v2210, %v2351
    %v2357 = vxor.u32 %v2353, 2147483648
    %v2358 = vmul.f32 %v2357, 1.442695
    %v2359 = vpow.pop %v2358
    %v2360 = vadd.f32 %v2359, 1.0
    %v2361 = vrcp.pop %v2360
    %v2362 = vmul.f32 1.0, %v2361
    %v2363 = vxor.u32 %v2354, 2147483648
    %v2364 = vmul.f32 %v2363, 1.442695
    %v2365 = vpow.pop %v2364
    %v2366 = vadd.f32 %v2365, 1.0
    %v2367 = vrcp.pop %v2366
    %v2368 = vmul.f32 1.0, %v2367
    %v2369 = vtanh.pop %v2355
    %v2370 = vxor.u32 %v2356, 2147483648
    %v2371 = vmul.f32 %v2370, 1.442695
    %v2372 = vpow.pop %v2371
    %v2373 = vadd.f32 %v2372, 1.0
    %v2374 = vrcp.pop %v2373
    %v2375 = vmul.f32 1.0, %v2374
    %v2376 = vmul.f32 %v2368, %v2201
    %v2377 = vmul.f32 %v2362, %v2369
    %v2378 = vadd.f32 %v2376, %v2377
    %v2379 = vtanh.pop %v2378
    %v2380 = vmul.f32 %v2375, %v2379
    %s2381 = scalar_lea.vmem [#allocation5], 72
    %2382 = vst [vmem:[%s2381] sm:$0xff] %v2380
    %s2383 = scalar_lea.vmem [#allocation4], 320
    %v2384 = vld [vmem:[%s2383] sm:$0xff]
    %v2385 = vld [vmem:[%s2383 + $0x8] sm:$0xff]
    %v2386 = vld [vmem:[%s2383 + $0x10] sm:$0xff]
    %v2387 = vld [vmem:[%s2383 + $0x18] sm:$0xff]
    %2388 = vmatprep.subr.mxu0 %v550
    %2389 = vmatpush1.msra.mxu0 %v549
    %2390 = vmatprep.subr.mxu0 %v554
    %2391 = vmatpush1.msra.mxu0 %v553
    %2392 = vmatprep.subr.mxu0 %v558
    %2393 = vmatpush1.msra.mxu0 %v557
    %2394 = vmatprep.subr.mxu0 %v562
    %2395 = vmatpush1.msra.mxu0 %v561
    %2396 = vmatprep.subr.mxu0 %v566
    %2397 = vmatpush1.msra.mxu0 %v565
    %2398 = vmatprep.subr.mxu0 %v570
    %2399 = vmatpush1.msra.mxu0 %v569
    %2400 = vmatprep.subr.mxu0 %v574
    %2401 = vmatpush1.msra.mxu0 %v573
    %2402 = vmatprep.subr.mxu0 %v578
    %2403 = vmatpush1.msra.mxu0 %v577
    %2404 = vmatprep.subr.mxu0 %v582
    %2405 = vmatpush1.msra.mxu0 %v581
    %2406 = vmatprep.subr.mxu0 %v586
    %2407 = vmatpush1.msra.mxu0 %v585
    %2408 = vmatprep.subr.mxu0 %v590
    %2409 = vmatpush1.msra.mxu0 %v589
    %2410 = vmatprep.subr.mxu0 %v594
    %2411 = vmatpush1.msra.mxu0 %v593
    %2412 = vmatprep.subr.mxu0 %v598
    %2413 = vmatpush1.msra.mxu0 %v597
    %2414 = vmatprep.subr.mxu0 %v602
    %2415 = vmatpush1.msra.mxu0 %v601
    %2416 = vmatprep.subr.mxu0 %v606
    %2417 = vmatpush1.msra.mxu0 %v605
    %2418 = vmatprep.subr.mxu0 %v610
    %2419 = vmatpush1.msra.mxu0 %v609
    %2420 = vmatprep.subr.mxu0 0.0
    %2421 = vmatpush1.msra.mxu0 0.0
    %2422 = vmatprep.subr.mxu0 0.0
    %2423 = vmatpush1.msra.mxu0 0.0
    %2424 = vmatprep.subr.mxu0 0.0
    %2425 = vmatpush1.msra.mxu0 0.0
    %2426 = vmatprep.subr.mxu0 0.0
    %2427 = vmatpush1.msra.mxu0 0.0
    %2428 = vmatprep.subr.mxu0 0.0
    %2429 = vmatpush1.msra.mxu0 0.0
    %2430 = vmatprep.subr.mxu0 0.0
    %2431 = vmatpush1.msra.mxu0 0.0
    %2432 = vmatprep.subr.mxu0 0.0
    %2433 = vmatpush1.msra.mxu0 0.0
    %2434 = vmatprep.subr.mxu0 0.0
    %2435 = vmatpush1.msra.mxu0 0.0
    %2436 = vmatprep.subr.mxu0 0.0
    %2437 = vmatpush1.msra.mxu0 0.0
    %2438 = vmatprep.subr.mxu0 0.0
    %2439 = vmatpush1.msra.mxu0 0.0
    %2440 = vmatprep.subr.mxu0 0.0
    %2441 = vmatpush1.msra.mxu0 0.0
    %2442 = vmatprep.subr.mxu0 0.0
    %2443 = vmatpush1.msra.mxu0 0.0
    %2444 = vmatprep.subr.mxu0 0.0
    %2445 = vmatpush1.msra.mxu0 0.0
    %2446 = vmatprep.subr.mxu0 0.0
    %2447 = vmatpush1.msra.mxu0 0.0
    %2448 = vmatprep.subr.mxu0 0.0
    %2449 = vmatpush1.msra.mxu0 0.0
    %2450 = vmatprep.subr.mxu0 0.0
    %2451 = vmatpush1.msra.mxu0 0.0
    %2452 = vmatprep.mubr.f32.mxu0 0.0
    %2453 = vmatmul.mubr.f32.gmra.mrb[0].mxu0 %v2380
    %v2454 = vpop.f32.mrb[0].mxu0
    %v2455 = vadd.f32 0.0, %v2454
    %v2456 = vpop.f32.mrb[0].mxu0
    %v2457 = vadd.f32 0.0, %v2456
    %2458 = vdwg.mxu0
    %2459 = vmatprep.subr.mxu0 %v552
    %2460 = vmatpush1.msra.mxu0 %v551
    %2461 = vmatprep.subr.mxu0 %v556
    %2462 = vmatpush1.msra.mxu0 %v555
    %2463 = vmatprep.subr.mxu0 %v560
    %2464 = vmatpush1.msra.mxu0 %v559
    %2465 = vmatprep.subr.mxu0 %v564
    %2466 = vmatpush1.msra.mxu0 %v563
    %2467 = vmatprep.subr.mxu0 %v568
    %2468 = vmatpush1.msra.mxu0 %v567
    %2469 = vmatprep.subr.mxu0 %v572
    %2470 = vmatpush1.msra.mxu0 %v571
    %2471 = vmatprep.subr.mxu0 %v576
    %2472 = vmatpush1.msra.mxu0 %v575
    %2473 = vmatprep.subr.mxu0 %v580
    %2474 = vmatpush1.msra.mxu0 %v579
    %2475 = vmatprep.subr.mxu0 %v584
    %2476 = vmatpush1.msra.mxu0 %v583
    %2477 = vmatprep.subr.mxu0 %v588
    %2478 = vmatpush1.msra.mxu0 %v587
    %2479 = vmatprep.subr.mxu0 %v592
    %2480 = vmatpush1.msra.mxu0 %v591
    %2481 = vmatprep.subr.mxu0 %v596
    %2482 = vmatpush1.msra.mxu0 %v595
    %2483 = vmatprep.subr.mxu0 %v600
    %2484 = vmatpush1.msra.mxu0 %v599
    %2485 = vmatprep.subr.mxu0 %v604
    %2486 = vmatpush1.msra.mxu0 %v603
    %2487 = vmatprep.subr.mxu0 %v608
    %2488 = vmatpush1.msra.mxu0 %v607
    %2489 = vmatprep.subr.mxu0 %v612
    %2490 = vmatpush1.msra.mxu0 %v611
    %2491 = vmatprep.subr.mxu0 0.0
    %2492 = vmatpush1.msra.mxu0 0.0
    %2493 = vmatprep.subr.mxu0 0.0
    %2494 = vmatpush1.msra.mxu0 0.0
    %2495 = vmatprep.subr.mxu0 0.0
    %2496 = vmatpush1.msra.mxu0 0.0
    %2497 = vmatprep.subr.mxu0 0.0
    %2498 = vmatpush1.msra.mxu0 0.0
    %2499 = vmatprep.subr.mxu0 0.0
    %2500 = vmatpush1.msra.mxu0 0.0
    %2501 = vmatprep.subr.mxu0 0.0
    %2502 = vmatpush1.msra.mxu0 0.0
    %2503 = vmatprep.subr.mxu0 0.0
    %2504 = vmatpush1.msra.mxu0 0.0
    %2505 = vmatprep.subr.mxu0 0.0
    %2506 = vmatpush1.msra.mxu0 0.0
    %2507 = vmatprep.subr.mxu0 0.0
    %2508 = vmatpush1.msra.mxu0 0.0
    %2509 = vmatprep.subr.mxu0 0.0
    %2510 = vmatpush1.msra.mxu0 0.0
    %2511 = vmatprep.subr.mxu0 0.0
    %2512 = vmatpush1.msra.mxu0 0.0
    %2513 = vmatprep.subr.mxu0 0.0
    %2514 = vmatpush1.msra.mxu0 0.0
    %2515 = vmatprep.subr.mxu0 0.0
    %2516 = vmatpush1.msra.mxu0 0.0
    %2517 = vmatprep.subr.mxu0 0.0
    %2518 = vmatpush1.msra.mxu0 0.0
    %2519 = vmatprep.subr.mxu0 0.0
    %2520 = vmatpush1.msra.mxu0 0.0
    %2521 = vmatprep.subr.mxu0 0.0
    %2522 = vmatpush1.msra.mxu0 0.0
    %2523 = vmatprep.mubr.f32.mxu0 0.0
    %2524 = vmatmul.mubr.f32.gmra.mrb[0].mxu0 %v2380
    %v2525 = vpop.f32.mrb[0].mxu0
    %v2526 = vadd.f32 0.0, %v2525
    %v2527 = vpop.f32.mrb[0].mxu0
    %v2528 = vadd.f32 0.0, %v2527
    %2529 = vdwg.mxu0
    %v2530 = vadd.f32 %v2384, %v2455
    %v2531 = vadd.f32 %v2385, %v2457
    %v2532 = vadd.f32 %v2386, %v2526
    %v2533 = vadd.f32 %v2387, %v2528
    %v2534 = vxor.u32 %v2530, 2147483648
    %v2535 = vmul.f32 %v2534, 1.442695
    %v2536 = vpow.pop %v2535
    %v2537 = vadd.f32 %v2536, 1.0
    %v2538 = vrcp.pop %v2537
    %v2539 = vmul.f32 1.0, %v2538
    %v2540 = vxor.u32 %v2531, 2147483648
    %v2541 = vmul.f32 %v2540, 1.442695
    %v2542 = vpow.pop %v2541
    %v2543 = vadd.f32 %v2542, 1.0
    %v2544 = vrcp.pop %v2543
    %v2545 = vmul.f32 1.0, %v2544
    %v2546 = vtanh.pop %v2532
    %v2547 = vxor.u32 %v2533, 2147483648
    %v2548 = vmul.f32 %v2547, 1.442695
    %v2549 = vpow.pop %v2548
    %v2550 = vadd.f32 %v2549, 1.0
    %v2551 = vrcp.pop %v2550
    %v2552 = vmul.f32 1.0, %v2551
    %v2553 = vmul.f32 %v2545, %v2378
    %v2554 = vmul.f32 %v2539, %v2546
    %v2555 = vadd.f32 %v2553, %v2554
    %v2556 = vtanh.pop %v2555
    %v2557 = vmul.f32 %v2552, %v2556
    %s2558 = scalar_lea.vmem [#allocation5], 80
    %2559 = vst [vmem:[%s2558] sm:$0xff] %v2557
    %s2560 = scalar_lea.vmem [#allocation4], 352
    %v2561 = vld [vmem:[%s2560] sm:$0xff]
    %v2562 = vld [vmem:[%s2560 + $0x8] sm:$0xff]
    %v2563 = vld [vmem:[%s2560 + $0x10] sm:$0xff]
    %v2564 = vld [vmem:[%s2560 + $0x18] sm:$0xff]
    %2565 = vmatprep.subr.mxu0 %v550
    %2566 = vmatpush1.msra.mxu0 %v549
    %2567 = vmatprep.subr.mxu0 %v554
    %2568 = vmatpush1.msra.mxu0 %v553
    %2569 = vmatprep.subr.mxu0 %v558
    %2570 = vmatpush1.msra.mxu0 %v557
    %2571 = vmatprep.subr.mxu0 %v562
    %2572 = vmatpush1.msra.mxu0 %v561
    %2573 = vmatprep.subr.mxu0 %v566
    %2574 = vmatpush1.msra.mxu0 %v565
    %2575 = vmatprep.subr.mxu0 %v570
    %2576 = vmatpush1.msra.mxu0 %v569
    %2577 = vmatprep.subr.mxu0 %v574
    %2578 = vmatpush1.msra.mxu0 %v573
    %2579 = vmatprep.subr.mxu0 %v578
    %2580 = vmatpush1.msra.mxu0 %v577
    %2581 = vmatprep.subr.mxu0 %v582
    %2582 = vmatpush1.msra.mxu0 %v581
    %2583 = vmatprep.subr.mxu0 %v586
    %2584 = vmatpush1.msra.mxu0 %v585
    %2585 = vmatprep.subr.mxu0 %v590
    %2586 = vmatpush1.msra.mxu0 %v589
    %2587 = vmatprep.subr.mxu0 %v594
    %2588 = vmatpush1.msra.mxu0 %v593
    %2589 = vmatprep.subr.mxu0 %v598
    %2590 = vmatpush1.msra.mxu0 %v597
    %2591 = vmatprep.subr.mxu0 %v602
    %2592 = vmatpush1.msra.mxu0 %v601
    %2593 = vmatprep.subr.mxu0 %v606
    %2594 = vmatpush1.msra.mxu0 %v605
    %2595 = vmatprep.subr.mxu0 %v610
    %2596 = vmatpush1.msra.mxu0 %v609
    %2597 = vmatprep.subr.mxu0 0.0
    %2598 = vmatpush1.msra.mxu0 0.0
    %2599 = vmatprep.subr.mxu0 0.0
    %2600 = vmatpush1.msra.mxu0 0.0
    %2601 = vmatprep.subr.mxu0 0.0
    %2602 = vmatpush1.msra.mxu0 0.0
    %2603 = vmatprep.subr.mxu0 0.0
    %2604 = vmatpush1.msra.mxu0 0.0
    %2605 = vmatprep.subr.mxu0 0.0
    %2606 = vmatpush1.msra.mxu0 0.0
    %2607 = vmatprep.subr.mxu0 0.0
    %2608 = vmatpush1.msra.mxu0 0.0
    %2609 = vmatprep.subr.mxu0 0.0
    %2610 = vmatpush1.msra.mxu0 0.0
    %2611 = vmatprep.subr.mxu0 0.0
    %2612 = vmatpush1.msra.mxu0 0.0
    %2613 = vmatprep.subr.mxu0 0.0
    %2614 = vmatpush1.msra.mxu0 0.0
    %2615 = vmatprep.subr.mxu0 0.0
    %2616 = vmatpush1.msra.mxu0 0.0
    %2617 = vmatprep.subr.mxu0 0.0
    %2618 = vmatpush1.msra.mxu0 0.0
    %2619 = vmatprep.subr.mxu0 0.0
    %2620 = vmatpush1.msra.mxu0 0.0
    %2621 = vmatprep.subr.mxu0 0.0
    %2622 = vmatpush1.msra.mxu0 0.0
    %2623 = vmatprep.subr.mxu0 0.0
    %2624 = vmatpush1.msra.mxu0 0.0
    %2625 = vmatprep.subr.mxu0 0.0
    %2626 = vmatpush1.msra.mxu0 0.0
    %2627 = vmatprep.subr.mxu0 0.0
    %2628 = vmatpush1.msra.mxu0 0.0
    %2629 = vmatprep.mubr.f32.mxu0 0.0
    %2630 = vmatmul.mubr.f32.gmra.mrb[0].mxu0 %v2557
    %v2631 = vpop.f32.mrb[0].mxu0
    %v2632 = vadd.f32 0.0, %v2631
    %v2633 = vpop.f32.mrb[0].mxu0
    %v2634 = vadd.f32 0.0, %v2633
    %2635 = vdwg.mxu0
    %2636 = vmatprep.subr.mxu0 %v552
    %2637 = vmatpush1.msra.mxu0 %v551
    %2638 = vmatprep.subr.mxu0 %v556
    %2639 = vmatpush1.msra.mxu0 %v555
    %2640 = vmatprep.subr.mxu0 %v560
    %2641 = vmatpush1.msra.mxu0 %v559
    %2642 = vmatprep.subr.mxu0 %v564
    %2643 = vmatpush1.msra.mxu0 %v563
    %2644 = vmatprep.subr.mxu0 %v568
    %2645 = vmatpush1.msra.mxu0 %v567
    %2646 = vmatprep.subr.mxu0 %v572
    %2647 = vmatpush1.msra.mxu0 %v571
    %2648 = vmatprep.subr.mxu0 %v576
    %2649 = vmatpush1.msra.mxu0 %v575
    %2650 = vmatprep.subr.mxu0 %v580
    %2651 = vmatpush1.msra.mxu0 %v579
    %2652 = vmatprep.subr.mxu0 %v584
    %2653 = vmatpush1.msra.mxu0 %v583
    %2654 = vmatprep.subr.mxu0 %v588
    %2655 = vmatpush1.msra.mxu0 %v587
    %2656 = vmatprep.subr.mxu0 %v592
    %2657 = vmatpush1.msra.mxu0 %v591
    %2658 = vmatprep.subr.mxu0 %v596
    %2659 = vmatpush1.msra.mxu0 %v595
    %2660 = vmatprep.subr.mxu0 %v600
    %2661 = vmatpush1.msra.mxu0 %v599
    %2662 = vmatprep.subr.mxu0 %v604
    %2663 = vmatpush1.msra.mxu0 %v603
    %2664 = vmatprep.subr.mxu0 %v608
    %2665 = vmatpush1.msra.mxu0 %v607
    %2666 = vmatprep.subr.mxu0 %v612
    %2667 = vmatpush1.msra.mxu0 %v611
    %2668 = vmatprep.subr.mxu0 0.0
    %2669 = vmatpush1.msra.mxu0 0.0
    %2670 = vmatprep.subr.mxu0 0.0
    %2671 = vmatpush1.msra.mxu0 0.0
    %2672 = vmatprep.subr.mxu0 0.0
    %2673 = vmatpush1.msra.mxu0 0.0
    %2674 = vmatprep.subr.mxu0 0.0
    %2675 = vmatpush1.msra.mxu0 0.0
    %2676 = vmatprep.subr.mxu0 0.0
    %2677 = vmatpush1.msra.mxu0 0.0
    %2678 = vmatprep.subr.mxu0 0.0
    %2679 = vmatpush1.msra.mxu0 0.0
    %2680 = vmatprep.subr.mxu0 0.0
    %2681 = vmatpush1.msra.mxu0 0.0
    %2682 = vmatprep.subr.mxu0 0.0
    %2683 = vmatpush1.msra.mxu0 0.0
    %2684 = vmatprep.subr.mxu0 0.0
    %2685 = vmatpush1.msra.mxu0 0.0
    %2686 = vmatprep.subr.mxu0 0.0
    %2687 = vmatpush1.msra.mxu0 0.0
    %2688 = vmatprep.subr.mxu0 0.0
    %2689 = vmatpush1.msra.mxu0 0.0
    %2690 = vmatprep.subr.mxu0 0.0
    %2691 = vmatpush1.msra.mxu0 0.0
    %2692 = vmatprep.subr.mxu0 0.0
    %2693 = vmatpush1.msra.mxu0 0.0
    %2694 = vmatprep.subr.mxu0 0.0
    %2695 = vmatpush1.msra.mxu0 0.0
    %2696 = vmatprep.subr.mxu0 0.0
    %2697 = vmatpush1.msra.mxu0 0.0
    %2698 = vmatprep.subr.mxu0 0.0
    %2699 = vmatpush1.msra.mxu0 0.0
    %2700 = vmatprep.mubr.f32.mxu0 0.0
    %2701 = vmatmul.mubr.f32.gmra.mrb[0].mxu0 %v2557
    %v2702 = vpop.f32.mrb[0].mxu0
    %v2703 = vadd.f32 0.0, %v2702
    %v2704 = vpop.f32.mrb[0].mxu0
    %v2705 = vadd.f32 0.0, %v2704
    %2706 = vdwg.mxu0
    %v2707 = vadd.f32 %v2561, %v2632
    %v2708 = vadd.f32 %v2562, %v2634
    %v2709 = vadd.f32 %v2563, %v2703
    %v2710 = vadd.f32 %v2564, %v2705
    %v2711 = vxor.u32 %v2707, 2147483648
    %v2712 = vmul.f32 %v2711, 1.442695
    %v2713 = vpow.pop %v2712
    %v2714 = vadd.f32 %v2713, 1.0
    %v2715 = vrcp.pop %v2714
    %v2716 = vmul.f32 1.0, %v2715
    %v2717 = vxor.u32 %v2708, 2147483648
    %v2718 = vmul.f32 %v2717, 1.442695
    %v2719 = vpow.pop %v2718
    %v2720 = vadd.f32 %v2719, 1.0
    %v2721 = vrcp.pop %v2720
    %v2722 = vmul.f32 1.0, %v2721
    %v2723 = vtanh.pop %v2709
    %v2724 = vxor.u32 %v2710, 2147483648
    %v2725 = vmul.f32 %v2724, 1.442695
    %v2726 = vpow.pop %v2725
    %v2727 = vadd.f32 %v2726, 1.0
    %v2728 = vrcp.pop %v2727
    %v2729 = vmul.f32 1.0, %v2728
    %v2730 = vmul.f32 %v2722, %v2555
    %v2731 = vmul.f32 %v2716, %v2723
    %v2732 = vadd.f32 %v2730, %v2731
    %v2733 = vtanh.pop %v2732
    %v2734 = vmul.f32 %v2729, %v2733
    %s2735 = scalar_lea.vmem [#allocation5], 88
    %2736 = vst [vmem:[%s2735] sm:$0xff] %v2734
    %s2737 = scalar_lea.vmem [#allocation4], 384
    %v2738 = vld [vmem:[%s2737] sm:$0xff]
    %v2739 = vld [vmem:[%s2737 + $0x8] sm:$0xff]
    %v2740 = vld [vmem:[%s2737 + $0x10] sm:$0xff]
    %v2741 = vld [vmem:[%s2737 + $0x18] sm:$0xff]
    %2742 = vmatprep.subr.mxu0 %v550
    %2743 = vmatpush1.msra.mxu0 %v549
    %2744 = vmatprep.subr.mxu0 %v554
    %2745 = vmatpush1.msra.mxu0 %v553
    %2746 = vmatprep.subr.mxu0 %v558
    %2747 = vmatpush1.msra.mxu0 %v557
    %2748 = vmatprep.subr.mxu0 %v562
    %2749 = vmatpush1.msra.mxu0 %v561
    %2750 = vmatprep.subr.mxu0 %v566
    %2751 = vmatpush1.msra.mxu0 %v565
    %2752 = vmatprep.subr.mxu0 %v570
    %2753 = vmatpush1.msra.mxu0 %v569
    %2754 = vmatprep.subr.mxu0 %v574
    %2755 = vmatpush1.msra.mxu0 %v573
    %2756 = vmatprep.subr.mxu0 %v578
    %2757 = vmatpush1.msra.mxu0 %v577
    %2758 = vmatprep.subr.mxu0 %v582
    %2759 = vmatpush1.msra.mxu0 %v581
    %2760 = vmatprep.subr.mxu0 %v586
    %2761 = vmatpush1.msra.mxu0 %v585
    %2762 = vmatprep.subr.mxu0 %v590
    %2763 = vmatpush1.msra.mxu0 %v589
    %2764 = vmatprep.subr.mxu0 %v594
    %2765 = vmatpush1.msra.mxu0 %v593
    %2766 = vmatprep.subr.mxu0 %v598
    %2767 = vmatpush1.msra.mxu0 %v597
    %2768 = vmatprep.subr.mxu0 %v602
    %2769 = vmatpush1.msra.mxu0 %v601
    %2770 = vmatprep.subr.mxu0 %v606
    %2771 = vmatpush1.msra.mxu0 %v605
    %2772 = vmatprep.subr.mxu0 %v610
    %2773 = vmatpush1.msra.mxu0 %v609
    %2774 = vmatprep.subr.mxu0 0.0
    %2775 = vmatpush1.msra.mxu0 0.0
    %2776 = vmatprep.subr.mxu0 0.0
    %2777 = vmatpush1.msra.mxu0 0.0
    %2778 = vmatprep.subr.mxu0 0.0
    %2779 = vmatpush1.msra.mxu0 0.0
    %2780 = vmatprep.subr.mxu0 0.0
    %2781 = vmatpush1.msra.mxu0 0.0
    %2782 = vmatprep.subr.mxu0 0.0
    %2783 = vmatpush1.msra.mxu0 0.0
    %2784 = vmatprep.subr.mxu0 0.0
    %2785 = vmatpush1.msra.mxu0 0.0
    %2786 = vmatprep.subr.mxu0 0.0
    %2787 = vmatpush1.msra.mxu0 0.0
    %2788 = vmatprep.subr.mxu0 0.0
    %2789 = vmatpush1.msra.mxu0 0.0
    %2790 = vmatprep.subr.mxu0 0.0
    %2791 = vmatpush1.msra.mxu0 0.0
    %2792 = vmatprep.subr.mxu0 0.0
    %2793 = vmatpush1.msra.mxu0 0.0
    %2794 = vmatprep.subr.mxu0 0.0
    %2795 = vmatpush1.msra.mxu0 0.0
    %2796 = vmatprep.subr.mxu0 0.0
    %2797 = vmatpush1.msra.mxu0 0.0
    %2798 = vmatprep.subr.mxu0 0.0
    %2799 = vmatpush1.msra.mxu0 0.0
    %2800 = vmatprep.subr.mxu0 0.0
    %2801 = vmatpush1.msra.mxu0 0.0
    %2802 = vmatprep.subr.mxu0 0.0
    %2803 = vmatpush1.msra.mxu0 0.0
    %2804 = vmatprep.subr.mxu0 0.0
    %2805 = vmatpush1.msra.mxu0 0.0
    %2806 = vmatprep.mubr.f32.mxu0 0.0
    %2807 = vmatmul.mubr.f32.gmra.mrb[0].mxu0 %v2734
    %v2808 = vpop.f32.mrb[0].mxu0
    %v2809 = vadd.f32 0.0, %v2808
    %v2810 = vpop.f32.mrb[0].mxu0
    %v2811 = vadd.f32 0.0, %v2810
    %2812 = vdwg.mxu0
    %2813 = vmatprep.subr.mxu0 %v552
    %2814 = vmatpush1.msra.mxu0 %v551
    %2815 = vmatprep.subr.mxu0 %v556
    %2816 = vmatpush1.msra.mxu0 %v555
    %2817 = vmatprep.subr.mxu0 %v560
    %2818 = vmatpush1.msra.mxu0 %v559
    %2819 = vmatprep.subr.mxu0 %v564
    %2820 = vmatpush1.msra.mxu0 %v563
    %2821 = vmatprep.subr.mxu0 %v568
    %2822 = vmatpush1.msra.mxu0 %v567
    %2823 = vmatprep.subr.mxu0 %v572
    %2824 = vmatpush1.msra.mxu0 %v571
    %2825 = vmatprep.subr.mxu0 %v576
    %2826 = vmatpush1.msra.mxu0 %v575
    %2827 = vmatprep.subr.mxu0 %v580
    %2828 = vmatpush1.msra.mxu0 %v579
    %2829 = vmatprep.subr.mxu0 %v584
    %2830 = vmatpush1.msra.mxu0 %v583
    %2831 = vmatprep.subr.mxu0 %v588
    %2832 = vmatpush1.msra.mxu0 %v587
    %2833 = vmatprep.subr.mxu0 %v592
    %2834 = vmatpush1.msra.mxu0 %v591
    %2835 = vmatprep.subr.mxu0 %v596
    %2836 = vmatpush1.msra.mxu0 %v595
    %2837 = vmatprep.subr.mxu0 %v600
    %2838 = vmatpush1.msra.mxu0 %v599
    %2839 = vmatprep.subr.mxu0 %v604
    %2840 = vmatpush1.msra.mxu0 %v603
    %2841 = vmatprep.subr.mxu0 %v608
    %2842 = vmatpush1.msra.mxu0 %v607
    %2843 = vmatprep.subr.mxu0 %v612
    %2844 = vmatpush1.msra.mxu0 %v611
    %2845 = vmatprep.subr.mxu0 0.0
    %2846 = vmatpush1.msra.mxu0 0.0
    %2847 = vmatprep.subr.mxu0 0.0
    %2848 = vmatpush1.msra.mxu0 0.0
    %2849 = vmatprep.subr.mxu0 0.0
    %2850 = vmatpush1.msra.mxu0 0.0
    %2851 = vmatprep.subr.mxu0 0.0
    %2852 = vmatpush1.msra.mxu0 0.0
    %2853 = vmatprep.subr.mxu0 0.0
    %2854 = vmatpush1.msra.mxu0 0.0
    %2855 = vmatprep.subr.mxu0 0.0
    %2856 = vmatpush1.msra.mxu0 0.0
    %2857 = vmatprep.subr.mxu0 0.0
    %2858 = vmatpush1.msra.mxu0 0.0
    %2859 = vmatprep.subr.mxu0 0.0
    %2860 = vmatpush1.msra.mxu0 0.0
    %2861 = vmatprep.subr.mxu0 0.0
    %2862 = vmatpush1.msra.mxu0 0.0
    %2863 = vmatprep.subr.mxu0 0.0
    %2864 = vmatpush1.msra.mxu0 0.0
    %2865 = vmatprep.subr.mxu0 0.0
    %2866 = vmatpush1.msra.mxu0 0.0
    %2867 = vmatprep.subr.mxu0 0.0
    %2868 = vmatpush1.msra.mxu0 0.0
    %2869 = vmatprep.subr.mxu0 0.0
    %2870 = vmatpush1.msra.mxu0 0.0
    %2871 = vmatprep.subr.mxu0 0.0
    %2872 = vmatpush1.msra.mxu0 0.0
    %2873 = vmatprep.subr.mxu0 0.0
    %2874 = vmatpush1.msra.mxu0 0.0
    %2875 = vmatprep.subr.mxu0 0.0
    %2876 = vmatpush1.msra.mxu0 0.0
    %2877 = vmatprep.mubr.f32.mxu0 0.0
    %2878 = vmatmul.mubr.f32.gmra.mrb[0].mxu0 %v2734
    %v2879 = vpop.f32.mrb[0].mxu0
    %v2880 = vadd.f32 0.0, %v2879
    %v2881 = vpop.f32.mrb[0].mxu0
    %v2882 = vadd.f32 0.0, %v2881
    %2883 = vdwg.mxu0
    %v2884 = vadd.f32 %v2738, %v2809
    %v2885 = vadd.f32 %v2739, %v2811
    %v2886 = vadd.f32 %v2740, %v2880
    %v2887 = vadd.f32 %v2741, %v2882
    %v2888 = vxor.u32 %v2884, 2147483648
    %v2889 = vmul.f32 %v2888, 1.442695
    %v2890 = vpow.pop %v2889
    %v2891 = vadd.f32 %v2890, 1.0
    %v2892 = vrcp.pop %v2891
    %v2893 = vmul.f32 1.0, %v2892
    %v2894 = vxor.u32 %v2885, 2147483648
    %v2895 = vmul.f32 %v2894, 1.442695
    %v2896 = vpow.pop %v2895
    %v2897 = vadd.f32 %v2896, 1.0
    %v2898 = vrcp.pop %v2897
    %v2899 = vmul.f32 1.0, %v2898
    %v2900 = vtanh.pop %v2886
    %v2901 = vxor.u32 %v2887, 2147483648
    %v2902 = vmul.f32 %v2901, 1.442695
    %v2903 = vpow.pop %v2902
    %v2904 = vadd.f32 %v2903, 1.0
    %v2905 = vrcp.pop %v2904
    %v2906 = vmul.f32 1.0, %v2905
    %v2907 = vmul.f32 %v2899, %v2732
    %v2908 = vmul.f32 %v2893, %v2900
    %v2909 = vadd.f32 %v2907, %v2908
    %v2910 = vtanh.pop %v2909
    %v2911 = vmul.f32 %v2906, %v2910
    %s2912 = scalar_lea.vmem [#allocation5], 96
    %2913 = vst [vmem:[%s2912] sm:$0xff] %v2911
    %s2914 = scalar_lea.vmem [#allocation4], 416
    %v2915 = vld [vmem:[%s2914] sm:$0xff]
    %v2916 = vld [vmem:[%s2914 + $0x8] sm:$0xff]
    %v2917 = vld [vmem:[%s2914 + $0x10] sm:$0xff]
    %v2918 = vld [vmem:[%s2914 + $0x18] sm:$0xff]
    %2919 = vmatprep.subr.mxu0 %v550
    %2920 = vmatpush1.msra.mxu0 %v549
    %2921 = vmatprep.subr.mxu0 %v554
    %2922 = vmatpush1.msra.mxu0 %v553
    %2923 = vmatprep.subr.mxu0 %v558
    %2924 = vmatpush1.msra.mxu0 %v557
    %2925 = vmatprep.subr.mxu0 %v562
    %2926 = vmatpush1.msra.mxu0 %v561
    %2927 = vmatprep.subr.mxu0 %v566
    %2928 = vmatpush1.msra.mxu0 %v565
    %2929 = vmatprep.subr.mxu0 %v570
    %2930 = vmatpush1.msra.mxu0 %v569
    %2931 = vmatprep.subr.mxu0 %v574
    %2932 = vmatpush1.msra.mxu0 %v573
    %2933 = vmatprep.subr.mxu0 %v578
    %2934 = vmatpush1.msra.mxu0 %v577
    %2935 = vmatprep.subr.mxu0 %v582
    %2936 = vmatpush1.msra.mxu0 %v581
    %2937 = vmatprep.subr.mxu0 %v586
    %2938 = vmatpush1.msra.mxu0 %v585
    %2939 = vmatprep.subr.mxu0 %v590
    %2940 = vmatpush1.msra.mxu0 %v589
    %2941 = vmatprep.subr.mxu0 %v594
    %2942 = vmatpush1.msra.mxu0 %v593
    %2943 = vmatprep.subr.mxu0 %v598
    %2944 = vmatpush1.msra.mxu0 %v597
    %2945 = vmatprep.subr.mxu0 %v602
    %2946 = vmatpush1.msra.mxu0 %v601
    %2947 = vmatprep.subr.mxu0 %v606
    %2948 = vmatpush1.msra.mxu0 %v605
    %2949 = vmatprep.subr.mxu0 %v610
    %2950 = vmatpush1.msra.mxu0 %v609
    %2951 = vmatprep.subr.mxu0 0.0
    %2952 = vmatpush1.msra.mxu0 0.0
    %2953 = vmatprep.subr.mxu0 0.0
    %2954 = vmatpush1.msra.mxu0 0.0
    %2955 = vmatprep.subr.mxu0 0.0
    %2956 = vmatpush1.msra.mxu0 0.0
    %2957 = vmatprep.subr.mxu0 0.0
    %2958 = vmatpush1.msra.mxu0 0.0
    %2959 = vmatprep.subr.mxu0 0.0
    %2960 = vmatpush1.msra.mxu0 0.0
    %2961 = vmatprep.subr.mxu0 0.0
    %2962 = vmatpush1.msra.mxu0 0.0
    %2963 = vmatprep.subr.mxu0 0.0
    %2964 = vmatpush1.msra.mxu0 0.0
    %2965 = vmatprep.subr.mxu0 0.0
    %2966 = vmatpush1.msra.mxu0 0.0
    %2967 = vmatprep.subr.mxu0 0.0
    %2968 = vmatpush1.msra.mxu0 0.0
    %2969 = vmatprep.subr.mxu0 0.0
    %2970 = vmatpush1.msra.mxu0 0.0
    %2971 = vmatprep.subr.mxu0 0.0
    %2972 = vmatpush1.msra.mxu0 0.0
    %2973 = vmatprep.subr.mxu0 0.0
    %2974 = vmatpush1.msra.mxu0 0.0
    %2975 = vmatprep.subr.mxu0 0.0
    %2976 = vmatpush1.msra.mxu0 0.0
    %2977 = vmatprep.subr.mxu0 0.0
    %2978 = vmatpush1.msra.mxu0 0.0
    %2979 = vmatprep.subr.mxu0 0.0
    %2980 = vmatpush1.msra.mxu0 0.0
    %2981 = vmatprep.subr.mxu0 0.0
    %2982 = vmatpush1.msra.mxu0 0.0
    %2983 = vmatprep.mubr.f32.mxu0 0.0
    %2984 = vmatmul.mubr.f32.gmra.mrb[0].mxu0 %v2911
    %v2985 = vpop.f32.mrb[0].mxu0
    %v2986 = vadd.f32 0.0, %v2985
    %v2987 = vpop.f32.mrb[0].mxu0
    %v2988 = vadd.f32 0.0, %v2987
    %2989 = vdwg.mxu0
    %2990 = vmatprep.subr.mxu0 %v552
    %2991 = vmatpush1.msra.mxu0 %v551
    %2992 = vmatprep.subr.mxu0 %v556
    %2993 = vmatpush1.msra.mxu0 %v555
    %2994 = vmatprep.subr.mxu0 %v560
    %2995 = vmatpush1.msra.mxu0 %v559
    %2996 = vmatprep.subr.mxu0 %v564
    %2997 = vmatpush1.msra.mxu0 %v563
    %2998 = vmatprep.subr.mxu0 %v568
    %2999 = vmatpush1.msra.mxu0 %v567
    %3000 = vmatprep.subr.mxu0 %v572
    %3001 = vmatpush1.msra.mxu0 %v571
    %3002 = vmatprep.subr.mxu0 %v576
    %3003 = vmatpush1.msra.mxu0 %v575
    %3004 = vmatprep.subr.mxu0 %v580
    %3005 = vmatpush1.msra.mxu0 %v579
    %3006 = vmatprep.subr.mxu0 %v584
    %3007 = vmatpush1.msra.mxu0 %v583
    %3008 = vmatprep.subr.mxu0 %v588
    %3009 = vmatpush1.msra.mxu0 %v587
    %3010 = vmatprep.subr.mxu0 %v592
    %3011 = vmatpush1.msra.mxu0 %v591
    %3012 = vmatprep.subr.mxu0 %v596
    %3013 = vmatpush1.msra.mxu0 %v595
    %3014 = vmatprep.subr.mxu0 %v600
    %3015 = vmatpush1.msra.mxu0 %v599
    %3016 = vmatprep.subr.mxu0 %v604
    %3017 = vmatpush1.msra.mxu0 %v603
    %3018 = vmatprep.subr.mxu0 %v608
    %3019 = vmatpush1.msra.mxu0 %v607
    %3020 = vmatprep.subr.mxu0 %v612
    %3021 = vmatpush1.msra.mxu0 %v611
    %3022 = vmatprep.subr.mxu0 0.0
    %3023 = vmatpush1.msra.mxu0 0.0
    %3024 = vmatprep.subr.mxu0 0.0
    %3025 = vmatpush1.msra.mxu0 0.0
    %3026 = vmatprep.subr.mxu0 0.0
    %3027 = vmatpush1.msra.mxu0 0.0
    %3028 = vmatprep.subr.mxu0 0.0
    %3029 = vmatpush1.msra.mxu0 0.0
    %3030 = vmatprep.subr.mxu0 0.0
    %3031 = vmatpush1.msra.mxu0 0.0
    %3032 = vmatprep.subr.mxu0 0.0
    %3033 = vmatpush1.msra.mxu0 0.0
    %3034 = vmatprep.subr.mxu0 0.0
    %3035 = vmatpush1.msra.mxu0 0.0
    %3036 = vmatprep.subr.mxu0 0.0
    %3037 = vmatpush1.msra.mxu0 0.0
    %3038 = vmatprep.subr.mxu0 0.0
    %3039 = vmatpush1.msra.mxu0 0.0
    %3040 = vmatprep.subr.mxu0 0.0
    %3041 = vmatpush1.msra.mxu0 0.0
    %3042 = vmatprep.subr.mxu0 0.0
    %3043 = vmatpush1.msra.mxu0 0.0
    %3044 = vmatprep.subr.mxu0 0.0
    %3045 = vmatpush1.msra.mxu0 0.0
    %3046 = vmatprep.subr.mxu0 0.0
    %3047 = vmatpush1.msra.mxu0 0.0
    %3048 = vmatprep.subr.mxu0 0.0
    %3049 = vmatpush1.msra.mxu0 0.0
    %3050 = vmatprep.subr.mxu0 0.0
    %3051 = vmatpush1.msra.mxu0 0.0
    %3052 = vmatprep.subr.mxu0 0.0
    %3053 = vmatpush1.msra.mxu0 0.0
    %3054 = vmatprep.mubr.f32.mxu0 0.0
    %3055 = vmatmul.mubr.f32.gmra.mrb[0].mxu0 %v2911
    %v3056 = vpop.f32.mrb[0].mxu0
    %v3057 = vadd.f32 0.0, %v3056
    %v3058 = vpop.f32.mrb[0].mxu0
    %v3059 = vadd.f32 0.0, %v3058
    %3060 = vdwg.mxu0
    %v3061 = vadd.f32 %v2915, %v2986
    %v3062 = vadd.f32 %v2916, %v2988
    %v3063 = vadd.f32 %v2917, %v3057
    %v3064 = vadd.f32 %v2918, %v3059
    %v3065 = vxor.u32 %v3061, 2147483648
    %v3066 = vmul.f32 %v3065, 1.442695
    %v3067 = vpow.pop %v3066
    %v3068 = vadd.f32 %v3067, 1.0
    %v3069 = vrcp.pop %v3068
    %v3070 = vmul.f32 1.0, %v3069
    %v3071 = vxor.u32 %v3062, 2147483648
    %v3072 = vmul.f32 %v3071, 1.442695
    %v3073 = vpow.pop %v3072
    %v3074 = vadd.f32 %v3073, 1.0
    %v3075 = vrcp.pop %v3074
    %v3076 = vmul.f32 1.0, %v3075
    %v3077 = vtanh.pop %v3063
    %v3078 = vxor.u32 %v3064, 2147483648
    %v3079 = vmul.f32 %v3078, 1.442695
    %v3080 = vpow.pop %v3079
    %v3081 = vadd.f32 %v3080, 1.0
    %v3082 = vrcp.pop %v3081
    %v3083 = vmul.f32 1.0, %v3082
    %v3084 = vmul.f32 %v3076, %v2909
    %v3085 = vmul.f32 %v3070, %v3077
    %v3086 = vadd.f32 %v3084, %v3085
    %v3087 = vtanh.pop %v3086
    %v3088 = vmul.f32 %v3083, %v3087
    %s3089 = scalar_lea.vmem [#allocation5], 104
    %3090 = vst [vmem:[%s3089] sm:$0xff] %v3088
    %s3091 = scalar_lea.vmem [#allocation4], 448
    %v3092 = vld [vmem:[%s3091] sm:$0xff]
    %v3093 = vld [vmem:[%s3091 + $0x8] sm:$0xff]
    %v3094 = vld [vmem:[%s3091 + $0x10] sm:$0xff]
    %v3095 = vld [vmem:[%s3091 + $0x18] sm:$0xff]
    %3096 = vmatprep.subr.mxu0 %v550
    %3097 = vmatpush1.msra.mxu0 %v549
    %3098 = vmatprep.subr.mxu0 %v554
    %3099 = vmatpush1.msra.mxu0 %v553
    %3100 = vmatprep.subr.mxu0 %v558
    %3101 = vmatpush1.msra.mxu0 %v557
    %3102 = vmatprep.subr.mxu0 %v562
    %3103 = vmatpush1.msra.mxu0 %v561
    %3104 = vmatprep.subr.mxu0 %v566
    %3105 = vmatpush1.msra.mxu0 %v565
    %3106 = vmatprep.subr.mxu0 %v570
    %3107 = vmatpush1.msra.mxu0 %v569
    %3108 = vmatprep.subr.mxu0 %v574
    %3109 = vmatpush1.msra.mxu0 %v573
    %3110 = vmatprep.subr.mxu0 %v578
    %3111 = vmatpush1.msra.mxu0 %v577
    %3112 = vmatprep.subr.mxu0 %v582
    %3113 = vmatpush1.msra.mxu0 %v581
    %3114 = vmatprep.subr.mxu0 %v586
    %3115 = vmatpush1.msra.mxu0 %v585
    %3116 = vmatprep.subr.mxu0 %v590
    %3117 = vmatpush1.msra.mxu0 %v589
    %3118 = vmatprep.subr.mxu0 %v594
    %3119 = vmatpush1.msra.mxu0 %v593
    %3120 = vmatprep.subr.mxu0 %v598
    %3121 = vmatpush1.msra.mxu0 %v597
    %3122 = vmatprep.subr.mxu0 %v602
    %3123 = vmatpush1.msra.mxu0 %v601
    %3124 = vmatprep.subr.mxu0 %v606
    %3125 = vmatpush1.msra.mxu0 %v605
    %3126 = vmatprep.subr.mxu0 %v610
    %3127 = vmatpush1.msra.mxu0 %v609
    %3128 = vmatprep.subr.mxu0 0.0
    %3129 = vmatpush1.msra.mxu0 0.0
    %3130 = vmatprep.subr.mxu0 0.0
    %3131 = vmatpush1.msra.mxu0 0.0
    %3132 = vmatprep.subr.mxu0 0.0
    %3133 = vmatpush1.msra.mxu0 0.0
    %3134 = vmatprep.subr.mxu0 0.0
    %3135 = vmatpush1.msra.mxu0 0.0
    %3136 = vmatprep.subr.mxu0 0.0
    %3137 = vmatpush1.msra.mxu0 0.0
    %3138 = vmatprep.subr.mxu0 0.0
    %3139 = vmatpush1.msra.mxu0 0.0
    %3140 = vmatprep.subr.mxu0 0.0
    %3141 = vmatpush1.msra.mxu0 0.0
    %3142 = vmatprep.subr.mxu0 0.0
    %3143 = vmatpush1.msra.mxu0 0.0
    %3144 = vmatprep.subr.mxu0 0.0
    %3145 = vmatpush1.msra.mxu0 0.0
    %3146 = vmatprep.subr.mxu0 0.0
    %3147 = vmatpush1.msra.mxu0 0.0
    %3148 = vmatprep.subr.mxu0 0.0
    %3149 = vmatpush1.msra.mxu0 0.0
    %3150 = vmatprep.subr.mxu0 0.0
    %3151 = vmatpush1.msra.mxu0 0.0
    %3152 = vmatprep.subr.mxu0 0.0
    %3153 = vmatpush1.msra.mxu0 0.0
    %3154 = vmatprep.subr.mxu0 0.0
    %3155 = vmatpush1.msra.mxu0 0.0
    %3156 = vmatprep.subr.mxu0 0.0
    %3157 = vmatpush1.msra.mxu0 0.0
    %3158 = vmatprep.subr.mxu0 0.0
    %3159 = vmatpush1.msra.mxu0 0.0
    %3160 = vmatprep.mubr.f32.mxu0 0.0
    %3161 = vmatmul.mubr.f32.gmra.mrb[0].mxu0 %v3088
    %v3162 = vpop.f32.mrb[0].mxu0
    %v3163 = vadd.f32 0.0, %v3162
    %v3164 = vpop.f32.mrb[0].mxu0
    %v3165 = vadd.f32 0.0, %v3164
    %3166 = vdwg.mxu0
    %3167 = vmatprep.subr.mxu0 %v552
    %3168 = vmatpush1.msra.mxu0 %v551
    %3169 = vmatprep.subr.mxu0 %v556
    %3170 = vmatpush1.msra.mxu0 %v555
    %3171 = vmatprep.subr.mxu0 %v560
    %3172 = vmatpush1.msra.mxu0 %v559
    %3173 = vmatprep.subr.mxu0 %v564
    %3174 = vmatpush1.msra.mxu0 %v563
    %3175 = vmatprep.subr.mxu0 %v568
    %3176 = vmatpush1.msra.mxu0 %v567
    %3177 = vmatprep.subr.mxu0 %v572
    %3178 = vmatpush1.msra.mxu0 %v571
    %3179 = vmatprep.subr.mxu0 %v576
    %3180 = vmatpush1.msra.mxu0 %v575
    %3181 = vmatprep.subr.mxu0 %v580
    %3182 = vmatpush1.msra.mxu0 %v579
    %3183 = vmatprep.subr.mxu0 %v584
    %3184 = vmatpush1.msra.mxu0 %v583
    %3185 = vmatprep.subr.mxu0 %v588
    %3186 = vmatpush1.msra.mxu0 %v587
    %3187 = vmatprep.subr.mxu0 %v592
    %3188 = vmatpush1.msra.mxu0 %v591
    %3189 = vmatprep.subr.mxu0 %v596
    %3190 = vmatpush1.msra.mxu0 %v595
    %3191 = vmatprep.subr.mxu0 %v600
    %3192 = vmatpush1.msra.mxu0 %v599
    %3193 = vmatprep.subr.mxu0 %v604
    %3194 = vmatpush1.msra.mxu0 %v603
    %3195 = vmatprep.subr.mxu0 %v608
    %3196 = vmatpush1.msra.mxu0 %v607
    %3197 = vmatprep.subr.mxu0 %v612
    %3198 = vmatpush1.msra.mxu0 %v611
    %3199 = vmatprep.subr.mxu0 0.0
    %3200 = vmatpush1.msra.mxu0 0.0
    %3201 = vmatprep.subr.mxu0 0.0
    %3202 = vmatpush1.msra.mxu0 0.0
    %3203 = vmatprep.subr.mxu0 0.0
    %3204 = vmatpush1.msra.mxu0 0.0
    %3205 = vmatprep.subr.mxu0 0.0
    %3206 = vmatpush1.msra.mxu0 0.0
    %3207 = vmatprep.subr.mxu0 0.0
    %3208 = vmatpush1.msra.mxu0 0.0
    %3209 = vmatprep.subr.mxu0 0.0
    %3210 = vmatpush1.msra.mxu0 0.0
    %3211 = vmatprep.subr.mxu0 0.0
    %3212 = vmatpush1.msra.mxu0 0.0
    %3213 = vmatprep.subr.mxu0 0.0
    %3214 = vmatpush1.msra.mxu0 0.0
    %3215 = vmatprep.subr.mxu0 0.0
    %3216 = vmatpush1.msra.mxu0 0.0
    %3217 = vmatprep.subr.mxu0 0.0
    %3218 = vmatpush1.msra.mxu0 0.0
    %3219 = vmatprep.subr.mxu0 0.0
    %3220 = vmatpush1.msra.mxu0 0.0
    %3221 = vmatprep.subr.mxu0 0.0
    %3222 = vmatpush1.msra.mxu0 0.0
    %3223 = vmatprep.subr.mxu0 0.0
    %3224 = vmatpush1.msra.mxu0 0.0
    %3225 = vmatprep.subr.mxu0 0.0
    %3226 = vmatpush1.msra.mxu0 0.0
    %3227 = vmatprep.subr.mxu0 0.0
    %3228 = vmatpush1.msra.mxu0 0.0
    %3229 = vmatprep.subr.mxu0 0.0
    %3230 = vmatpush1.msra.mxu0 0.0
    %3231 = vmatprep.mubr.f32.mxu0 0.0
    %3232 = vmatmul.mubr.f32.gmra.mrb[0].mxu0 %v3088
    %v3233 = vpop.f32.mrb[0].mxu0
    %v3234 = vadd.f32 0.0, %v3233
    %v3235 = vpop.f32.mrb[0].mxu0
    %v3236 = vadd.f32 0.0, %v3235
    %3237 = vdwg.mxu0
    %v3238 = vadd.f32 %v3092, %v3163
    %v3239 = vadd.f32 %v3093, %v3165
    %v3240 = vadd.f32 %v3094, %v3234
    %v3241 = vadd.f32 %v3095, %v3236
    %v3242 = vxor.u32 %v3238, 2147483648
    %v3243 = vmul.f32 %v3242, 1.442695
    %v3244 = vpow.pop %v3243
    %v3245 = vadd.f32 %v3244, 1.0
    %v3246 = vrcp.pop %v3245
    %v3247 = vmul.f32 1.0, %v3246
    %v3248 = vxor.u32 %v3239, 2147483648
    %v3249 = vmul.f32 %v3248, 1.442695
    %v3250 = vpow.pop %v3249
    %v3251 = vadd.f32 %v3250, 1.0
    %v3252 = vrcp.pop %v3251
    %v3253 = vmul.f32 1.0, %v3252
    %v3254 = vtanh.pop %v3240
    %v3255 = vxor.u32 %v3241, 2147483648
    %v3256 = vmul.f32 %v3255, 1.442695
    %v3257 = vpow.pop %v3256
    %v3258 = vadd.f32 %v3257, 1.0
    %v3259 = vrcp.pop %v3258
    %v3260 = vmul.f32 1.0, %v3259
    %v3261 = vmul.f32 %v3253, %v3086
    %v3262 = vmul.f32 %v3247, %v3254
    %v3263 = vadd.f32 %v3261, %v3262
    %v3264 = vtanh.pop %v3263
    %v3265 = vmul.f32 %v3260, %v3264
    %s3266 = scalar_lea.vmem [#allocation5], 112
    %3267 = vst [vmem:[%s3266] sm:$0xff] %v3265
    %s3268 = scalar_lea.vmem [#allocation4], 480
    %v3269 = vld [vmem:[%s3268] sm:$0xff]
    %v3270 = vld [vmem:[%s3268 + $0x8] sm:$0xff]
    %v3271 = vld [vmem:[%s3268 + $0x10] sm:$0xff]
    %v3272 = vld [vmem:[%s3268 + $0x18] sm:$0xff]
    %3273 = vmatprep.subr.mxu0 %v550
    %3274 = vmatpush1.msra.mxu0 %v549
    %3275 = vmatprep.subr.mxu0 %v554
    %3276 = vmatpush1.msra.mxu0 %v553
    %3277 = vmatprep.subr.mxu0 %v558
    %3278 = vmatpush1.msra.mxu0 %v557
    %3279 = vmatprep.subr.mxu0 %v562
    %3280 = vmatpush1.msra.mxu0 %v561
    %3281 = vmatprep.subr.mxu0 %v566
    %3282 = vmatpush1.msra.mxu0 %v565
    %3283 = vmatprep.subr.mxu0 %v570
    %3284 = vmatpush1.msra.mxu0 %v569
    %3285 = vmatprep.subr.mxu0 %v574
    %3286 = vmatpush1.msra.mxu0 %v573
    %3287 = vmatprep.subr.mxu0 %v578
    %3288 = vmatpush1.msra.mxu0 %v577
    %3289 = vmatprep.subr.mxu0 %v582
    %3290 = vmatpush1.msra.mxu0 %v581
    %3291 = vmatprep.subr.mxu0 %v586
    %3292 = vmatpush1.msra.mxu0 %v585
    %3293 = vmatprep.subr.mxu0 %v590
    %3294 = vmatpush1.msra.mxu0 %v589
    %3295 = vmatprep.subr.mxu0 %v594
    %3296 = vmatpush1.msra.mxu0 %v593
    %3297 = vmatprep.subr.mxu0 %v598
    %3298 = vmatpush1.msra.mxu0 %v597
    %3299 = vmatprep.subr.mxu0 %v602
    %3300 = vmatpush1.msra.mxu0 %v601
    %3301 = vmatprep.subr.mxu0 %v606
    %3302 = vmatpush1.msra.mxu0 %v605
    %3303 = vmatprep.subr.mxu0 %v610
    %3304 = vmatpush1.msra.mxu0 %v609
    %3305 = vmatprep.subr.mxu0 0.0
    %3306 = vmatpush1.msra.mxu0 0.0
    %3307 = vmatprep.subr.mxu0 0.0
    %3308 = vmatpush1.msra.mxu0 0.0
    %3309 = vmatprep.subr.mxu0 0.0
    %3310 = vmatpush1.msra.mxu0 0.0
    %3311 = vmatprep.subr.mxu0 0.0
    %3312 = vmatpush1.msra.mxu0 0.0
    %3313 = vmatprep.subr.mxu0 0.0
    %3314 = vmatpush1.msra.mxu0 0.0
    %3315 = vmatprep.subr.mxu0 0.0
    %3316 = vmatpush1.msra.mxu0 0.0
    %3317 = vmatprep.subr.mxu0 0.0
    %3318 = vmatpush1.msra.mxu0 0.0
    %3319 = vmatprep.subr.mxu0 0.0
    %3320 = vmatpush1.msra.mxu0 0.0
    %3321 = vmatprep.subr.mxu0 0.0
    %3322 = vmatpush1.msra.mxu0 0.0
    %3323 = vmatprep.subr.mxu0 0.0
    %3324 = vmatpush1.msra.mxu0 0.0
    %3325 = vmatprep.subr.mxu0 0.0
    %3326 = vmatpush1.msra.mxu0 0.0
    %3327 = vmatprep.subr.mxu0 0.0
    %3328 = vmatpush1.msra.mxu0 0.0
    %3329 = vmatprep.subr.mxu0 0.0
    %3330 = vmatpush1.msra.mxu0 0.0
    %3331 = vmatprep.subr.mxu0 0.0
    %3332 = vmatpush1.msra.mxu0 0.0
    %3333 = vmatprep.subr.mxu0 0.0
    %3334 = vmatpush1.msra.mxu0 0.0
    %3335 = vmatprep.subr.mxu0 0.0
    %3336 = vmatpush1.msra.mxu0 0.0
    %3337 = vmatprep.mubr.f32.mxu0 0.0
    %3338 = vmatmul.mubr.f32.gmra.mrb[0].mxu0 %v3265
    %v3339 = vpop.f32.mrb[0].mxu0
    %v3340 = vadd.f32 0.0, %v3339
    %v3341 = vpop.f32.mrb[0].mxu0
    %v3342 = vadd.f32 0.0, %v3341
    %3343 = vdwg.mxu0
    %3344 = vmatprep.subr.mxu0 %v552
    %3345 = vmatpush1.msra.mxu0 %v551
    %3346 = vmatprep.subr.mxu0 %v556
    %3347 = vmatpush1.msra.mxu0 %v555
    %3348 = vmatprep.subr.mxu0 %v560
    %3349 = vmatpush1.msra.mxu0 %v559
    %3350 = vmatprep.subr.mxu0 %v564
    %3351 = vmatpush1.msra.mxu0 %v563
    %3352 = vmatprep.subr.mxu0 %v568
    %3353 = vmatpush1.msra.mxu0 %v567
    %3354 = vmatprep.subr.mxu0 %v572
    %3355 = vmatpush1.msra.mxu0 %v571
    %3356 = vmatprep.subr.mxu0 %v576
    %3357 = vmatpush1.msra.mxu0 %v575
    %3358 = vmatprep.subr.mxu0 %v580
    %3359 = vmatpush1.msra.mxu0 %v579
    %3360 = vmatprep.subr.mxu0 %v584
    %3361 = vmatpush1.msra.mxu0 %v583
    %3362 = vmatprep.subr.mxu0 %v588
    %3363 = vmatpush1.msra.mxu0 %v587
    %3364 = vmatprep.subr.mxu0 %v592
    %3365 = vmatpush1.msra.mxu0 %v591
    %3366 = vmatprep.subr.mxu0 %v596
    %3367 = vmatpush1.msra.mxu0 %v595
    %3368 = vmatprep.subr.mxu0 %v600
    %3369 = vmatpush1.msra.mxu0 %v599
    %3370 = vmatprep.subr.mxu0 %v604
    %3371 = vmatpush1.msra.mxu0 %v603
    %3372 = vmatprep.subr.mxu0 %v608
    %3373 = vmatpush1.msra.mxu0 %v607
    %3374 = vmatprep.subr.mxu0 %v612
    %3375 = vmatpush1.msra.mxu0 %v611
    %3376 = vmatprep.subr.mxu0 0.0
    %3377 = vmatpush1.msra.mxu0 0.0
    %3378 = vmatprep.subr.mxu0 0.0
    %3379 = vmatpush1.msra.mxu0 0.0
    %3380 = vmatprep.subr.mxu0 0.0
    %3381 = vmatpush1.msra.mxu0 0.0
    %3382 = vmatprep.subr.mxu0 0.0
    %3383 = vmatpush1.msra.mxu0 0.0
    %3384 = vmatprep.subr.mxu0 0.0
    %3385 = vmatpush1.msra.mxu0 0.0
    %3386 = vmatprep.subr.mxu0 0.0
    %3387 = vmatpush1.msra.mxu0 0.0
    %3388 = vmatprep.subr.mxu0 0.0
    %3389 = vmatpush1.msra.mxu0 0.0
    %3390 = vmatprep.subr.mxu0 0.0
    %3391 = vmatpush1.msra.mxu0 0.0
    %3392 = vmatprep.subr.mxu0 0.0
    %3393 = vmatpush1.msra.mxu0 0.0
    %3394 = vmatprep.subr.mxu0 0.0
    %3395 = vmatpush1.msra.mxu0 0.0
    %3396 = vmatprep.subr.mxu0 0.0
    %3397 = vmatpush1.msra.mxu0 0.0
    %3398 = vmatprep.subr.mxu0 0.0
    %3399 = vmatpush1.msra.mxu0 0.0
    %3400 = vmatprep.subr.mxu0 0.0
    %3401 = vmatpush1.msra.mxu0 0.0
    %3402 = vmatprep.subr.mxu0 0.0
    %3403 = vmatpush1.msra.mxu0 0.0
    %3404 = vmatprep.subr.mxu0 0.0
    %3405 = vmatpush1.msra.mxu0 0.0
    %3406 = vmatprep.subr.mxu0 0.0
    %3407 = vmatpush1.msra.mxu0 0.0
    %3408 = vmatprep.mubr.f32.mxu0 0.0
    %3409 = vmatmul.mubr.f32.gmra.mrb[0].mxu0 %v3265
    %v3410 = vpop.f32.mrb[0].mxu0
    %v3411 = vadd.f32 0.0, %v3410
    %v3412 = vpop.f32.mrb[0].mxu0
    %v3413 = vadd.f32 0.0, %v3412
    %3414 = vdwg.mxu0
    %v3415 = vadd.f32 %v3269, %v3340
    %v3416 = vadd.f32 %v3270, %v3342
    %v3417 = vadd.f32 %v3271, %v3411
    %v3418 = vadd.f32 %v3272, %v3413
    %v3419 = vxor.u32 %v3415, 2147483648
    %v3420 = vmul.f32 %v3419, 1.442695
    %v3421 = vpow.pop %v3420
    %v3422 = vadd.f32 %v3421, 1.0
    %v3423 = vrcp.pop %v3422
    %v3424 = vmul.f32 1.0, %v3423
    %v3425 = vxor.u32 %v3416, 2147483648
    %v3426 = vmul.f32 %v3425, 1.442695
    %v3427 = vpow.pop %v3426
    %v3428 = vadd.f32 %v3427, 1.0
    %v3429 = vrcp.pop %v3428
    %v3430 = vmul.f32 1.0, %v3429
    %v3431 = vtanh.pop %v3417
    %v3432 = vxor.u32 %v3418, 2147483648
    %v3433 = vmul.f32 %v3432, 1.442695
    %v3434 = vpow.pop %v3433
    %v3435 = vadd.f32 %v3434, 1.0
    %v3436 = vrcp.pop %v3435
    %v3437 = vmul.f32 1.0, %v3436
    %v3438 = vmul.f32 %v3430, %v3263
    %v3439 = vmul.f32 %v3424, %v3431
    %v3440 = vadd.f32 %v3438, %v3439
    %v3441 = vtanh.pop %v3440
    %v3442 = vmul.f32 %v3437, %v3441
    %s3443 = scalar_lea.vmem [#allocation5], 120
    %3444 = vst [vmem:[%s3443] sm:$0xff] %v3442
    %3445 = vst [vmem:[#allocation2] sm:$0xff] %v3442
    %3446 = vst [vmem:[#allocation3] sm:$0xff] %v3440
    %v3447 = vld [vmem:[#allocation5] sm:$0xff]
    %v3449 = vcombine.high %v3447, %v3447
    %v3451 = vunpack.c.l.s4 1966171168
    %v3452 = vunpack.c.0.s8 %v3451
    %v3453 = vlaneseq
    %v3454 = vshrl.u32 %v3453, 7
    %v3455 = vsub.s32 %v3452, %v3454
    %v3456 = vrot.slane %v3447, %v3455
    %v3458 = vunpack.c.l.s4 1966171168
    %v3459 = vunpack.c.0.s8 %v3458
    %v3460 = vlaneseq
    %v3461 = vshrl.u32 %v3460, 7
    %v3462 = vsub.s32 %v3459, %v3461
    %v3463 = vrot.slane %v3449, %v3462
    %v3464 = vcombine.high %v3456, %v3456
    %v3465 = vcombine.high %v3463, %v3463
    %v3467 = vunpack.c.l.s4 1966171168
    %v3468 = vunpack.c.0.s8 %v3467
    %v3469 = vlaneseq
    %v3470 = vshrl.u32 %v3469, 7
    %v3471 = vsub.s32 %v3468, %v3470
    %v3472 = vrot.slane %v3456, %v3471
    %v3474 = vunpack.c.l.s4 1966171168
    %v3475 = vunpack.c.0.s8 %v3474
    %v3476 = vlaneseq
    %v3477 = vshrl.u32 %v3476, 7
    %v3478 = vsub.s32 %v3475, %v3477
    %v3479 = vrot.slane %v3463, %v3478
    %v3481 = vunpack.c.l.s4 1966171168
    %v3482 = vunpack.c.0.s8 %v3481
    %v3483 = vlaneseq
    %v3484 = vshrl.u32 %v3483, 7
    %v3485 = vsub.s32 %v3482, %v3484
    %v3486 = vrot.slane %v3464, %v3485
    %v3488 = vunpack.c.l.s4 1966171168
    %v3489 = vunpack.c.0.s8 %v3488
    %v3490 = vlaneseq
    %v3491 = vshrl.u32 %v3490, 7
    %v3492 = vsub.s32 %v3489, %v3491
    %v3493 = vrot.slane %v3465, %v3492
    %v3494 = vcombine.high %v3472, %v3472
    %v3495 = vcombine.high %v3479, %v3479
    %v3496 = vcombine.high %v3486, %v3486
    %v3497 = vcombine.high %v3493, %v3493
    %3506 = vst [vmem:[#allocation12] sm:$0x1] %v3472
    %3507 = vst [vmem:[#allocation12 + $0x10] sm:$0x1] %v3486
    %3508 = vst [vmem:[#allocation12 + $0x20] sm:$0x1] %v3494
    %3509 = vst [vmem:[#allocation12 + $0x30] sm:$0x1] %v3496
    %3510 = vst [vmem:[#allocation12 + $0x40] sm:$0x1] %v3479
    %3511 = vst [vmem:[#allocation12 + $0x50] sm:$0x1] %v3493
    %3512 = vst [vmem:[#allocation12 + $0x60] sm:$0x1] %v3495
    %3513 = vst [vmem:[#allocation12 + $0x70] sm:$0x1] %v3497
    %v3514 = vld [vmem:[%s965] sm:$0xff]
    %v3516 = vcombine.high %v3514, %v3514
    %v3518 = vunpack.c.l.s4 1966171168
    %v3519 = vunpack.c.0.s8 %v3518
    %v3520 = vlaneseq
    %v3521 = vshrl.u32 %v3520, 7
    %v3522 = vsub.s32 %v3519, %v3521
    %v3523 = vrot.slane %v3514, %v3522
    %v3525 = vunpack.c.l.s4 1966171168
    %v3526 = vunpack.c.0.s8 %v3525
    %v3527 = vlaneseq
    %v3528 = vshrl.u32 %v3527, 7
    %v3529 = vsub.s32 %v3526, %v3528
    %v3530 = vrot.slane %v3516, %v3529
    %v3531 = vcombine.high %v3523, %v3523
    %v3532 = vcombine.high %v3530, %v3530
    %v3534 = vunpack.c.l.s4 1966171168
    %v3535 = vunpack.c.0.s8 %v3534
    %v3536 = vlaneseq
    %v3537 = vshrl.u32 %v3536, 7
    %v3538 = vsub.s32 %v3535, %v3537
    %v3539 = vrot.slane %v3523, %v3538
    %v3541 = vunpack.c.l.s4 1966171168
    %v3542 = vunpack.c.0.s8 %v3541
    %v3543 = vlaneseq
    %v3544 = vshrl.u32 %v3543, 7
    %v3545 = vsub.s32 %v3542, %v3544
    %v3546 = vrot.slane %v3530, %v3545
    %v3548 = vunpack.c.l.s4 1966171168
    %v3549 = vunpack.c.0.s8 %v3548
    %v3550 = vlaneseq
    %v3551 = vshrl.u32 %v3550, 7
    %v3552 = vsub.s32 %v3549, %v3551
    %v3553 = vrot.slane %v3531, %v3552
    %v3555 = vunpack.c.l.s4 1966171168
    %v3556 = vunpack.c.0.s8 %v3555
    %v3557 = vlaneseq
    %v3558 = vshrl.u32 %v3557, 7
    %v3559 = vsub.s32 %v3556, %v3558
    %v3560 = vrot.slane %v3532, %v3559
    %v3561 = vcombine.high %v3539, %v3539
    %v3562 = vcombine.high %v3546, %v3546
    %v3563 = vcombine.high %v3553, %v3553
    %v3564 = vcombine.high %v3560, %v3560
    %3573 = vst [vmem:[#allocation12 + $0x1] sm:$0x1] %v3539
    %3574 = vst [vmem:[#allocation12 + $0x11] sm:$0x1] %v3553
    %3575 = vst [vmem:[#allocation12 + $0x21] sm:$0x1] %v3561
    %3576 = vst [vmem:[#allocation12 + $0x31] sm:$0x1] %v3563
    %3577 = vst [vmem:[#allocation12 + $0x41] sm:$0x1] %v3546
    %3578 = vst [vmem:[#allocation12 + $0x51] sm:$0x1] %v3560
    %3579 = vst [vmem:[#allocation12 + $0x61] sm:$0x1] %v3562
    %3580 = vst [vmem:[#allocation12 + $0x71] sm:$0x1] %v3564
    %v3581 = vld [vmem:[%s1142] sm:$0xff]
    %v3583 = vcombine.high %v3581, %v3581
    %v3585 = vunpack.c.l.s4 1966171168
    %v3586 = vunpack.c.0.s8 %v3585
    %v3587 = vlaneseq
    %v3588 = vshrl.u32 %v3587, 7
    %v3589 = vsub.s32 %v3586, %v3588
    %v3590 = vrot.slane %v3581, %v3589
    %v3592 = vunpack.c.l.s4 1966171168
    %v3593 = vunpack.c.0.s8 %v3592
    %v3594 = vlaneseq
    %v3595 = vshrl.u32 %v3594, 7
    %v3596 = vsub.s32 %v3593, %v3595
    %v3597 = vrot.slane %v3583, %v3596
    %v3598 = vcombine.high %v3590, %v3590
    %v3599 = vcombine.high %v3597, %v3597
    %v3601 = vunpack.c.l.s4 1966171168
    %v3602 = vunpack.c.0.s8 %v3601
    %v3603 = vlaneseq
    %v3604 = vshrl.u32 %v3603, 7
    %v3605 = vsub.s32 %v3602, %v3604
    %v3606 = vrot.slane %v3590, %v3605
    %v3608 = vunpack.c.l.s4 1966171168
    %v3609 = vunpack.c.0.s8 %v3608
    %v3610 = vlaneseq
    %v3611 = vshrl.u32 %v3610, 7
    %v3612 = vsub.s32 %v3609, %v3611
    %v3613 = vrot.slane %v3597, %v3612
    %v3615 = vunpack.c.l.s4 1966171168
    %v3616 = vunpack.c.0.s8 %v3615
    %v3617 = vlaneseq
    %v3618 = vshrl.u32 %v3617, 7
    %v3619 = vsub.s32 %v3616, %v3618
    %v3620 = vrot.slane %v3598, %v3619
    %v3622 = vunpack.c.l.s4 1966171168
    %v3623 = vunpack.c.0.s8 %v3622
    %v3624 = vlaneseq
    %v3625 = vshrl.u32 %v3624, 7
    %v3626 = vsub.s32 %v3623, %v3625
    %v3627 = vrot.slane %v3599, %v3626
    %v3628 = vcombine.high %v3606, %v3606
    %v3629 = vcombine.high %v3613, %v3613
    %v3630 = vcombine.high %v3620, %v3620
    %v3631 = vcombine.high %v3627, %v3627
    %3640 = vst [vmem:[#allocation12 + $0x2] sm:$0x1] %v3606
    %3641 = vst [vmem:[#allocation12 + $0x12] sm:$0x1] %v3620
    %3642 = vst [vmem:[#allocation12 + $0x22] sm:$0x1] %v3628
    %3643 = vst [vmem:[#allocation12 + $0x32] sm:$0x1] %v3630
    %3644 = vst [vmem:[#allocation12 + $0x42] sm:$0x1] %v3613
    %3645 = vst [vmem:[#allocation12 + $0x52] sm:$0x1] %v3627
    %3646 = vst [vmem:[#allocation12 + $0x62] sm:$0x1] %v3629
    %3647 = vst [vmem:[#allocation12 + $0x72] sm:$0x1] %v3631
    %v3648 = vld [vmem:[%s1319] sm:$0xff]
    %v3650 = vcombine.high %v3648, %v3648
    %v3652 = vunpack.c.l.s4 1966171168
    %v3653 = vunpack.c.0.s8 %v3652
    %v3654 = vlaneseq
    %v3655 = vshrl.u32 %v3654, 7
    %v3656 = vsub.s32 %v3653, %v3655
    %v3657 = vrot.slane %v3648, %v3656
    %v3659 = vunpack.c.l.s4 1966171168
    %v3660 = vunpack.c.0.s8 %v3659
    %v3661 = vlaneseq
    %v3662 = vshrl.u32 %v3661, 7
    %v3663 = vsub.s32 %v3660, %v3662
    %v3664 = vrot.slane %v3650, %v3663
    %v3665 = vcombine.high %v3657, %v3657
    %v3666 = vcombine.high %v3664, %v3664
    %v3668 = vunpack.c.l.s4 1966171168
    %v3669 = vunpack.c.0.s8 %v3668
    %v3670 = vlaneseq
    %v3671 = vshrl.u32 %v3670, 7
    %v3672 = vsub.s32 %v3669, %v3671
    %v3673 = vrot.slane %v3657, %v3672
    %v3675 = vunpack.c.l.s4 1966171168
    %v3676 = vunpack.c.0.s8 %v3675
    %v3677 = vlaneseq
    %v3678 = vshrl.u32 %v3677, 7
    %v3679 = vsub.s32 %v3676, %v3678
    %v3680 = vrot.slane %v3664, %v3679
    %v3682 = vunpack.c.l.s4 1966171168
    %v3683 = vunpack.c.0.s8 %v3682
    %v3684 = vlaneseq
    %v3685 = vshrl.u32 %v3684, 7
    %v3686 = vsub.s32 %v3683, %v3685
    %v3687 = vrot.slane %v3665, %v3686
    %v3689 = vunpack.c.l.s4 1966171168
    %v3690 = vunpack.c.0.s8 %v3689
    %v3691 = vlaneseq
    %v3692 = vshrl.u32 %v3691, 7
    %v3693 = vsub.s32 %v3690, %v3692
    %v3694 = vrot.slane %v3666, %v3693
    %v3695 = vcombine.high %v3673, %v3673
    %v3696 = vcombine.high %v3680, %v3680
    %v3697 = vcombine.high %v3687, %v3687
    %v3698 = vcombine.high %v3694, %v3694
    %3707 = vst [vmem:[#allocation12 + $0x3] sm:$0x1] %v3673
    %3708 = vst [vmem:[#allocation12 + $0x13] sm:$0x1] %v3687
    %3709 = vst [vmem:[#allocation12 + $0x23] sm:$0x1] %v3695
    %3710 = vst [vmem:[#allocation12 + $0x33] sm:$0x1] %v3697
    %3711 = vst [vmem:[#allocation12 + $0x43] sm:$0x1] %v3680
    %3712 = vst [vmem:[#allocation12 + $0x53] sm:$0x1] %v3694
    %3713 = vst [vmem:[#allocation12 + $0x63] sm:$0x1] %v3696
    %3714 = vst [vmem:[#allocation12 + $0x73] sm:$0x1] %v3698
    %v3715 = vld [vmem:[%s1496] sm:$0xff]
    %v3717 = vcombine.high %v3715, %v3715
    %v3719 = vunpack.c.l.s4 1966171168
    %v3720 = vunpack.c.0.s8 %v3719
    %v3721 = vlaneseq
    %v3722 = vshrl.u32 %v3721, 7
    %v3723 = vsub.s32 %v3720, %v3722
    %v3724 = vrot.slane %v3715, %v3723
    %v3726 = vunpack.c.l.s4 1966171168
    %v3727 = vunpack.c.0.s8 %v3726
    %v3728 = vlaneseq
    %v3729 = vshrl.u32 %v3728, 7
    %v3730 = vsub.s32 %v3727, %v3729
    %v3731 = vrot.slane %v3717, %v3730
    %v3732 = vcombine.high %v3724, %v3724
    %v3733 = vcombine.high %v3731, %v3731
    %v3735 = vunpack.c.l.s4 1966171168
    %v3736 = vunpack.c.0.s8 %v3735
    %v3737 = vlaneseq
    %v3738 = vshrl.u32 %v3737, 7
    %v3739 = vsub.s32 %v3736, %v3738
    %v3740 = vrot.slane %v3724, %v3739
    %v3742 = vunpack.c.l.s4 1966171168
    %v3743 = vunpack.c.0.s8 %v3742
    %v3744 = vlaneseq
    %v3745 = vshrl.u32 %v3744, 7
    %v3746 = vsub.s32 %v3743, %v3745
    %v3747 = vrot.slane %v3731, %v3746
    %v3749 = vunpack.c.l.s4 1966171168
    %v3750 = vunpack.c.0.s8 %v3749
    %v3751 = vlaneseq
    %v3752 = vshrl.u32 %v3751, 7
    %v3753 = vsub.s32 %v3750, %v3752
    %v3754 = vrot.slane %v3732, %v3753
    %v3756 = vunpack.c.l.s4 1966171168
    %v3757 = vunpack.c.0.s8 %v3756
    %v3758 = vlaneseq
    %v3759 = vshrl.u32 %v3758, 7
    %v3760 = vsub.s32 %v3757, %v3759
    %v3761 = vrot.slane %v3733, %v3760
    %v3762 = vcombine.high %v3740, %v3740
    %v3763 = vcombine.high %v3747, %v3747
    %v3764 = vcombine.high %v3754, %v3754
    %v3765 = vcombine.high %v3761, %v3761
    %3774 = vst [vmem:[#allocation12 + $0x4] sm:$0x1] %v3740
    %3775 = vst [vmem:[#allocation12 + $0x14] sm:$0x1] %v3754
    %3776 = vst [vmem:[#allocation12 + $0x24] sm:$0x1] %v3762
    %3777 = vst [vmem:[#allocation12 + $0x34] sm:$0x1] %v3764
    %3778 = vst [vmem:[#allocation12 + $0x44] sm:$0x1] %v3747
    %3779 = vst [vmem:[#allocation12 + $0x54] sm:$0x1] %v3761
    %3780 = vst [vmem:[#allocation12 + $0x64] sm:$0x1] %v3763
    %3781 = vst [vmem:[#allocation12 + $0x74] sm:$0x1] %v3765
    %v3782 = vld [vmem:[%s1673] sm:$0xff]
    %v3784 = vcombine.high %v3782, %v3782
    %v3786 = vunpack.c.l.s4 1966171168
    %v3787 = vunpack.c.0.s8 %v3786
    %v3788 = vlaneseq
    %v3789 = vshrl.u32 %v3788, 7
    %v3790 = vsub.s32 %v3787, %v3789
    %v3791 = vrot.slane %v3782, %v3790
    %v3793 = vunpack.c.l.s4 1966171168
    %v3794 = vunpack.c.0.s8 %v3793
    %v3795 = vlaneseq
    %v3796 = vshrl.u32 %v3795, 7
    %v3797 = vsub.s32 %v3794, %v3796
    %v3798 = vrot.slane %v3784, %v3797
    %v3799 = vcombine.high %v3791, %v3791
    %v3800 = vcombine.high %v3798, %v3798
    %v3802 = vunpack.c.l.s4 1966171168
    %v3803 = vunpack.c.0.s8 %v3802
    %v3804 = vlaneseq
    %v3805 = vshrl.u32 %v3804, 7
    %v3806 = vsub.s32 %v3803, %v3805
    %v3807 = vrot.slane %v3791, %v3806
    %v3809 = vunpack.c.l.s4 1966171168
    %v3810 = vunpack.c.0.s8 %v3809
    %v3811 = vlaneseq
    %v3812 = vshrl.u32 %v3811, 7
    %v3813 = vsub.s32 %v3810, %v3812
    %v3814 = vrot.slane %v3798, %v3813
    %v3816 = vunpack.c.l.s4 1966171168
    %v3817 = vunpack.c.0.s8 %v3816
    %v3818 = vlaneseq
    %v3819 = vshrl.u32 %v3818, 7
    %v3820 = vsub.s32 %v3817, %v3819
    %v3821 = vrot.slane %v3799, %v3820
    %v3823 = vunpack.c.l.s4 1966171168
    %v3824 = vunpack.c.0.s8 %v3823
    %v3825 = vlaneseq
    %v3826 = vshrl.u32 %v3825, 7
    %v3827 = vsub.s32 %v3824, %v3826
    %v3828 = vrot.slane %v3800, %v3827
    %v3829 = vcombine.high %v3807, %v3807
    %v3830 = vcombine.high %v3814, %v3814
    %v3831 = vcombine.high %v3821, %v3821
    %v3832 = vcombine.high %v3828, %v3828
    %3841 = vst [vmem:[#allocation12 + $0x5] sm:$0x1] %v3807
    %3842 = vst [vmem:[#allocation12 + $0x15] sm:$0x1] %v3821
    %3843 = vst [vmem:[#allocation12 + $0x25] sm:$0x1] %v3829
    %3844 = vst [vmem:[#allocation12 + $0x35] sm:$0x1] %v3831
    %3845 = vst [vmem:[#allocation12 + $0x45] sm:$0x1] %v3814
    %3846 = vst [vmem:[#allocation12 + $0x55] sm:$0x1] %v3828
    %3847 = vst [vmem:[#allocation12 + $0x65] sm:$0x1] %v3830
    %3848 = vst [vmem:[#allocation12 + $0x75] sm:$0x1] %v3832
    %v3849 = vld [vmem:[%s1850] sm:$0xff]
    %v3851 = vcombine.high %v3849, %v3849
    %v3853 = vunpack.c.l.s4 1966171168
    %v3854 = vunpack.c.0.s8 %v3853
    %v3855 = vlaneseq
    %v3856 = vshrl.u32 %v3855, 7
    %v3857 = vsub.s32 %v3854, %v3856
    %v3858 = vrot.slane %v3849, %v3857
    %v3860 = vunpack.c.l.s4 1966171168
    %v3861 = vunpack.c.0.s8 %v3860
    %v3862 = vlaneseq
    %v3863 = vshrl.u32 %v3862, 7
    %v3864 = vsub.s32 %v3861, %v3863
    %v3865 = vrot.slane %v3851, %v3864
    %v3866 = vcombine.high %v3858, %v3858
    %v3867 = vcombine.high %v3865, %v3865
    %v3869 = vunpack.c.l.s4 1966171168
    %v3870 = vunpack.c.0.s8 %v3869
    %v3871 = vlaneseq
    %v3872 = vshrl.u32 %v3871, 7
    %v3873 = vsub.s32 %v3870, %v3872
    %v3874 = vrot.slane %v3858, %v3873
    %v3876 = vunpack.c.l.s4 1966171168
    %v3877 = vunpack.c.0.s8 %v3876
    %v3878 = vlaneseq
    %v3879 = vshrl.u32 %v3878, 7
    %v3880 = vsub.s32 %v3877, %v3879
    %v3881 = vrot.slane %v3865, %v3880
    %v3883 = vunpack.c.l.s4 1966171168
    %v3884 = vunpack.c.0.s8 %v3883
    %v3885 = vlaneseq
    %v3886 = vshrl.u32 %v3885, 7
    %v3887 = vsub.s32 %v3884, %v3886
    %v3888 = vrot.slane %v3866, %v3887
    %v3890 = vunpack.c.l.s4 1966171168
    %v3891 = vunpack.c.0.s8 %v3890
    %v3892 = vlaneseq
    %v3893 = vshrl.u32 %v3892, 7
    %v3894 = vsub.s32 %v3891, %v3893
    %v3895 = vrot.slane %v3867, %v3894
    %v3896 = vcombine.high %v3874, %v3874
    %v3897 = vcombine.high %v3881, %v3881
    %v3898 = vcombine.high %v3888, %v3888
    %v3899 = vcombine.high %v3895, %v3895
    %3908 = vst [vmem:[#allocation12 + $0x6] sm:$0x1] %v3874
    %3909 = vst [vmem:[#allocation12 + $0x16] sm:$0x1] %v3888
    %3910 = vst [vmem:[#allocation12 + $0x26] sm:$0x1] %v3896
    %3911 = vst [vmem:[#allocation12 + $0x36] sm:$0x1] %v3898
    %3912 = vst [vmem:[#allocation12 + $0x46] sm:$0x1] %v3881
    %3913 = vst [vmem:[#allocation12 + $0x56] sm:$0x1] %v3895
    %3914 = vst [vmem:[#allocation12 + $0x66] sm:$0x1] %v3897
    %3915 = vst [vmem:[#allocation12 + $0x76] sm:$0x1] %v3899
    %v3916 = vld [vmem:[%s2027] sm:$0xff]
    %v3918 = vcombine.high %v3916, %v3916
    %v3920 = vunpack.c.l.s4 1966171168
    %v3921 = vunpack.c.0.s8 %v3920
    %v3922 = vlaneseq
    %v3923 = vshrl.u32 %v3922, 7
    %v3924 = vsub.s32 %v3921, %v3923
    %v3925 = vrot.slane %v3916, %v3924
    %v3927 = vunpack.c.l.s4 1966171168
    %v3928 = vunpack.c.0.s8 %v3927
    %v3929 = vlaneseq
    %v3930 = vshrl.u32 %v3929, 7
    %v3931 = vsub.s32 %v3928, %v3930
    %v3932 = vrot.slane %v3918, %v3931
    %v3933 = vcombine.high %v3925, %v3925
    %v3934 = vcombine.high %v3932, %v3932
    %v3936 = vunpack.c.l.s4 1966171168
    %v3937 = vunpack.c.0.s8 %v3936
    %v3938 = vlaneseq
    %v3939 = vshrl.u32 %v3938, 7
    %v3940 = vsub.s32 %v3937, %v3939
    %v3941 = vrot.slane %v3925, %v3940
    %v3943 = vunpack.c.l.s4 1966171168
    %v3944 = vunpack.c.0.s8 %v3943
    %v3945 = vlaneseq
    %v3946 = vshrl.u32 %v3945, 7
    %v3947 = vsub.s32 %v3944, %v3946
    %v3948 = vrot.slane %v3932, %v3947
    %v3950 = vunpack.c.l.s4 1966171168
    %v3951 = vunpack.c.0.s8 %v3950
    %v3952 = vlaneseq
    %v3953 = vshrl.u32 %v3952, 7
    %v3954 = vsub.s32 %v3951, %v3953
    %v3955 = vrot.slane %v3933, %v3954
    %v3957 = vunpack.c.l.s4 1966171168
    %v3958 = vunpack.c.0.s8 %v3957
    %v3959 = vlaneseq
    %v3960 = vshrl.u32 %v3959, 7
    %v3961 = vsub.s32 %v3958, %v3960
    %v3962 = vrot.slane %v3934, %v3961
    %v3963 = vcombine.high %v3941, %v3941
    %v3964 = vcombine.high %v3948, %v3948
    %v3965 = vcombine.high %v3955, %v3955
    %v3966 = vcombine.high %v3962, %v3962
    %3975 = vst [vmem:[#allocation12 + $0x7] sm:$0x1] %v3941
    %3976 = vst [vmem:[#allocation12 + $0x17] sm:$0x1] %v3955
    %3977 = vst [vmem:[#allocation12 + $0x27] sm:$0x1] %v3963
    %3978 = vst [vmem:[#allocation12 + $0x37] sm:$0x1] %v3965
    %3979 = vst [vmem:[#allocation12 + $0x47] sm:$0x1] %v3948
    %3980 = vst [vmem:[#allocation12 + $0x57] sm:$0x1] %v3962
    %3981 = vst [vmem:[#allocation12 + $0x67] sm:$0x1] %v3964
    %3982 = vst [vmem:[#allocation12 + $0x77] sm:$0x1] %v3966
    %v3983 = vld [vmem:[%s2204] sm:$0xff]
    %v3985 = vcombine.high %v3983, %v3983
    %v3987 = vunpack.c.l.s4 1966171168
    %v3988 = vunpack.c.0.s8 %v3987
    %v3989 = vlaneseq
    %v3990 = vshrl.u32 %v3989, 7
    %v3991 = vsub.s32 %v3988, %v3990
    %v3992 = vrot.slane %v3983, %v3991
    %v3994 = vunpack.c.l.s4 1966171168
    %v3995 = vunpack.c.0.s8 %v3994
    %v3996 = vlaneseq
    %v3997 = vshrl.u32 %v3996, 7
    %v3998 = vsub.s32 %v3995, %v3997
    %v3999 = vrot.slane %v3985, %v3998
    %v4000 = vcombine.high %v3992, %v3992
    %v4001 = vcombine.high %v3999, %v3999
    %v4003 = vunpack.c.l.s4 1966171168
    %v4004 = vunpack.c.0.s8 %v4003
    %v4005 = vlaneseq
    %v4006 = vshrl.u32 %v4005, 7
    %v4007 = vsub.s32 %v4004, %v4006
    %v4008 = vrot.slane %v3992, %v4007
    %v4010 = vunpack.c.l.s4 1966171168
    %v4011 = vunpack.c.0.s8 %v4010
    %v4012 = vlaneseq
    %v4013 = vshrl.u32 %v4012, 7
    %v4014 = vsub.s32 %v4011, %v4013
    %v4015 = vrot.slane %v3999, %v4014
    %v4017 = vunpack.c.l.s4 1966171168
    %v4018 = vunpack.c.0.s8 %v4017
    %v4019 = vlaneseq
    %v4020 = vshrl.u32 %v4019, 7
    %v4021 = vsub.s32 %v4018, %v4020
    %v4022 = vrot.slane %v4000, %v4021
    %v4024 = vunpack.c.l.s4 1966171168
    %v4025 = vunpack.c.0.s8 %v4024
    %v4026 = vlaneseq
    %v4027 = vshrl.u32 %v4026, 7
    %v4028 = vsub.s32 %v4025, %v4027
    %v4029 = vrot.slane %v4001, %v4028
    %v4030 = vcombine.high %v4008, %v4008
    %v4031 = vcombine.high %v4015, %v4015
    %v4032 = vcombine.high %v4022, %v4022
    %v4033 = vcombine.high %v4029, %v4029
    %4042 = vst [vmem:[#allocation12 + $0x8] sm:$0x1] %v4008
    %4043 = vst [vmem:[#allocation12 + $0x18] sm:$0x1] %v4022
    %4044 = vst [vmem:[#allocation12 + $0x28] sm:$0x1] %v4030
    %4045 = vst [vmem:[#allocation12 + $0x38] sm:$0x1] %v4032
    %4046 = vst [vmem:[#allocation12 + $0x48] sm:$0x1] %v4015
    %4047 = vst [vmem:[#allocation12 + $0x58] sm:$0x1] %v4029
    %4048 = vst [vmem:[#allocation12 + $0x68] sm:$0x1] %v4031
    %4049 = vst [vmem:[#allocation12 + $0x78] sm:$0x1] %v4033
    %v4050 = vld [vmem:[%s2381] sm:$0xff]
    %v4052 = vcombine.high %v4050, %v4050
    %v4054 = vunpack.c.l.s4 1966171168
    %v4055 = vunpack.c.0.s8 %v4054
    %v4056 = vlaneseq
    %v4057 = vshrl.u32 %v4056, 7
    %v4058 = vsub.s32 %v4055, %v4057
    %v4059 = vrot.slane %v4050, %v4058
    %v4061 = vunpack.c.l.s4 1966171168
    %v4062 = vunpack.c.0.s8 %v4061
    %v4063 = vlaneseq
    %v4064 = vshrl.u32 %v4063, 7
    %v4065 = vsub.s32 %v4062, %v4064
    %v4066 = vrot.slane %v4052, %v4065
    %v4067 = vcombine.high %v4059, %v4059
    %v4068 = vcombine.high %v4066, %v4066
    %v4070 = vunpack.c.l.s4 1966171168
    %v4071 = vunpack.c.0.s8 %v4070
    %v4072 = vlaneseq
    %v4073 = vshrl.u32 %v4072, 7
    %v4074 = vsub.s32 %v4071, %v4073
    %v4075 = vrot.slane %v4059, %v4074
    %v4077 = vunpack.c.l.s4 1966171168
    %v4078 = vunpack.c.0.s8 %v4077
    %v4079 = vlaneseq
    %v4080 = vshrl.u32 %v4079, 7
    %v4081 = vsub.s32 %v4078, %v4080
    %v4082 = vrot.slane %v4066, %v4081
    %v4084 = vunpack.c.l.s4 1966171168
    %v4085 = vunpack.c.0.s8 %v4084
    %v4086 = vlaneseq
    %v4087 = vshrl.u32 %v4086, 7
    %v4088 = vsub.s32 %v4085, %v4087
    %v4089 = vrot.slane %v4067, %v4088
    %v4091 = vunpack.c.l.s4 1966171168
    %v4092 = vunpack.c.0.s8 %v4091
    %v4093 = vlaneseq
    %v4094 = vshrl.u32 %v4093, 7
    %v4095 = vsub.s32 %v4092, %v4094
    %v4096 = vrot.slane %v4068, %v4095
    %v4097 = vcombine.high %v4075, %v4075
    %v4098 = vcombine.high %v4082, %v4082
    %v4099 = vcombine.high %v4089, %v4089
    %v4100 = vcombine.high %v4096, %v4096
    %4109 = vst [vmem:[#allocation12 + $0x9] sm:$0x1] %v4075
    %4110 = vst [vmem:[#allocation12 + $0x19] sm:$0x1] %v4089
    %4111 = vst [vmem:[#allocation12 + $0x29] sm:$0x1] %v4097
    %4112 = vst [vmem:[#allocation12 + $0x39] sm:$0x1] %v4099
    %4113 = vst [vmem:[#allocation12 + $0x49] sm:$0x1] %v4082
    %4114 = vst [vmem:[#allocation12 + $0x59] sm:$0x1] %v4096
    %4115 = vst [vmem:[#allocation12 + $0x69] sm:$0x1] %v4098
    %4116 = vst [vmem:[#allocation12 + $0x79] sm:$0x1] %v4100
    %v4117 = vld [vmem:[%s2558] sm:$0xff]
    %v4119 = vcombine.high %v4117, %v4117
    %v4121 = vunpack.c.l.s4 1966171168
    %v4122 = vunpack.c.0.s8 %v4121
    %v4123 = vlaneseq
    %v4124 = vshrl.u32 %v4123, 7
    %v4125 = vsub.s32 %v4122, %v4124
    %v4126 = vrot.slane %v4117, %v4125
    %v4128 = vunpack.c.l.s4 1966171168
    %v4129 = vunpack.c.0.s8 %v4128
    %v4130 = vlaneseq
    %v4131 = vshrl.u32 %v4130, 7
    %v4132 = vsub.s32 %v4129, %v4131
    %v4133 = vrot.slane %v4119, %v4132
    %v4134 = vcombine.high %v4126, %v4126
    %v4135 = vcombine.high %v4133, %v4133
    %v4137 = vunpack.c.l.s4 1966171168
    %v4138 = vunpack.c.0.s8 %v4137
    %v4139 = vlaneseq
    %v4140 = vshrl.u32 %v4139, 7
    %v4141 = vsub.s32 %v4138, %v4140
    %v4142 = vrot.slane %v4126, %v4141
    %v4144 = vunpack.c.l.s4 1966171168
    %v4145 = vunpack.c.0.s8 %v4144
    %v4146 = vlaneseq
    %v4147 = vshrl.u32 %v4146, 7
    %v4148 = vsub.s32 %v4145, %v4147
    %v4149 = vrot.slane %v4133, %v4148
    %v4151 = vunpack.c.l.s4 1966171168
    %v4152 = vunpack.c.0.s8 %v4151
    %v4153 = vlaneseq
    %v4154 = vshrl.u32 %v4153, 7
    %v4155 = vsub.s32 %v4152, %v4154
    %v4156 = vrot.slane %v4134, %v4155
    %v4158 = vunpack.c.l.s4 1966171168
    %v4159 = vunpack.c.0.s8 %v4158
    %v4160 = vlaneseq
    %v4161 = vshrl.u32 %v4160, 7
    %v4162 = vsub.s32 %v4159, %v4161
    %v4163 = vrot.slane %v4135, %v4162
    %v4164 = vcombine.high %v4142, %v4142
    %v4165 = vcombine.high %v4149, %v4149
    %v4166 = vcombine.high %v4156, %v4156
    %v4167 = vcombine.high %v4163, %v4163
    %4176 = vst [vmem:[#allocation12 + $0xa] sm:$0x1] %v4142
    %4177 = vst [vmem:[#allocation12 + $0x1a] sm:$0x1] %v4156
    %4178 = vst [vmem:[#allocation12 + $0x2a] sm:$0x1] %v4164
    %4179 = vst [vmem:[#allocation12 + $0x3a] sm:$0x1] %v4166
    %4180 = vst [vmem:[#allocation12 + $0x4a] sm:$0x1] %v4149
    %4181 = vst [vmem:[#allocation12 + $0x5a] sm:$0x1] %v4163
    %4182 = vst [vmem:[#allocation12 + $0x6a] sm:$0x1] %v4165
    %4183 = vst [vmem:[#allocation12 + $0x7a] sm:$0x1] %v4167
    %v4184 = vld [vmem:[%s2735] sm:$0xff]
    %v4186 = vcombine.high %v4184, %v4184
    %v4188 = vunpack.c.l.s4 1966171168
    %v4189 = vunpack.c.0.s8 %v4188
    %v4190 = vlaneseq
    %v4191 = vshrl.u32 %v4190, 7
    %v4192 = vsub.s32 %v4189, %v4191
    %v4193 = vrot.slane %v4184, %v4192
    %v4195 = vunpack.c.l.s4 1966171168
    %v4196 = vunpack.c.0.s8 %v4195
    %v4197 = vlaneseq
    %v4198 = vshrl.u32 %v4197, 7
    %v4199 = vsub.s32 %v4196, %v4198
    %v4200 = vrot.slane %v4186, %v4199
    %v4201 = vcombine.high %v4193, %v4193
    %v4202 = vcombine.high %v4200, %v4200
    %v4204 = vunpack.c.l.s4 1966171168
    %v4205 = vunpack.c.0.s8 %v4204
    %v4206 = vlaneseq
    %v4207 = vshrl.u32 %v4206, 7
    %v4208 = vsub.s32 %v4205, %v4207
    %v4209 = vrot.slane %v4193, %v4208
    %v4211 = vunpack.c.l.s4 1966171168
    %v4212 = vunpack.c.0.s8 %v4211
    %v4213 = vlaneseq
    %v4214 = vshrl.u32 %v4213, 7
    %v4215 = vsub.s32 %v4212, %v4214
    %v4216 = vrot.slane %v4200, %v4215
    %v4218 = vunpack.c.l.s4 1966171168
    %v4219 = vunpack.c.0.s8 %v4218
    %v4220 = vlaneseq
    %v4221 = vshrl.u32 %v4220, 7
    %v4222 = vsub.s32 %v4219, %v4221
    %v4223 = vrot.slane %v4201, %v4222
    %v4225 = vunpack.c.l.s4 1966171168
    %v4226 = vunpack.c.0.s8 %v4225
    %v4227 = vlaneseq
    %v4228 = vshrl.u32 %v4227, 7
    %v4229 = vsub.s32 %v4226, %v4228
    %v4230 = vrot.slane %v4202, %v4229
    %v4231 = vcombine.high %v4209, %v4209
    %v4232 = vcombine.high %v4216, %v4216
    %v4233 = vcombine.high %v4223, %v4223
    %v4234 = vcombine.high %v4230, %v4230
    %4243 = vst [vmem:[#allocation12 + $0xb] sm:$0x1] %v4209
    %4244 = vst [vmem:[#allocation12 + $0x1b] sm:$0x1] %v4223
    %4245 = vst [vmem:[#allocation12 + $0x2b] sm:$0x1] %v4231
    %4246 = vst [vmem:[#allocation12 + $0x3b] sm:$0x1] %v4233
    %4247 = vst [vmem:[#allocation12 + $0x4b] sm:$0x1] %v4216
    %4248 = vst [vmem:[#allocation12 + $0x5b] sm:$0x1] %v4230
    %4249 = vst [vmem:[#allocation12 + $0x6b] sm:$0x1] %v4232
    %4250 = vst [vmem:[#allocation12 + $0x7b] sm:$0x1] %v4234
    %v4251 = vld [vmem:[%s2912] sm:$0xff]
    %v4253 = vcombine.high %v4251, %v4251
    %v4255 = vunpack.c.l.s4 1966171168
    %v4256 = vunpack.c.0.s8 %v4255
    %v4257 = vlaneseq
    %v4258 = vshrl.u32 %v4257, 7
    %v4259 = vsub.s32 %v4256, %v4258
    %v4260 = vrot.slane %v4251, %v4259
    %v4262 = vunpack.c.l.s4 1966171168
    %v4263 = vunpack.c.0.s8 %v4262
    %v4264 = vlaneseq
    %v4265 = vshrl.u32 %v4264, 7
    %v4266 = vsub.s32 %v4263, %v4265
    %v4267 = vrot.slane %v4253, %v4266
    %v4268 = vcombine.high %v4260, %v4260
    %v4269 = vcombine.high %v4267, %v4267
    %v4271 = vunpack.c.l.s4 1966171168
    %v4272 = vunpack.c.0.s8 %v4271
    %v4273 = vlaneseq
    %v4274 = vshrl.u32 %v4273, 7
    %v4275 = vsub.s32 %v4272, %v4274
    %v4276 = vrot.slane %v4260, %v4275
    %v4278 = vunpack.c.l.s4 1966171168
    %v4279 = vunpack.c.0.s8 %v4278
    %v4280 = vlaneseq
    %v4281 = vshrl.u32 %v4280, 7
    %v4282 = vsub.s32 %v4279, %v4281
    %v4283 = vrot.slane %v4267, %v4282
    %v4285 = vunpack.c.l.s4 1966171168
    %v4286 = vunpack.c.0.s8 %v4285
    %v4287 = vlaneseq
    %v4288 = vshrl.u32 %v4287, 7
    %v4289 = vsub.s32 %v4286, %v4288
    %v4290 = vrot.slane %v4268, %v4289
    %v4292 = vunpack.c.l.s4 1966171168
    %v4293 = vunpack.c.0.s8 %v4292
    %v4294 = vlaneseq
    %v4295 = vshrl.u32 %v4294, 7
    %v4296 = vsub.s32 %v4293, %v4295
    %v4297 = vrot.slane %v4269, %v4296
    %v4298 = vcombine.high %v4276, %v4276
    %v4299 = vcombine.high %v4283, %v4283
    %v4300 = vcombine.high %v4290, %v4290
    %v4301 = vcombine.high %v4297, %v4297
    %4310 = vst [vmem:[#allocation12 + $0xc] sm:$0x1] %v4276
    %4311 = vst [vmem:[#allocation12 + $0x1c] sm:$0x1] %v4290
    %4312 = vst [vmem:[#allocation12 + $0x2c] sm:$0x1] %v4298
    %4313 = vst [vmem:[#allocation12 + $0x3c] sm:$0x1] %v4300
    %4314 = vst [vmem:[#allocation12 + $0x4c] sm:$0x1] %v4283
    %4315 = vst [vmem:[#allocation12 + $0x5c] sm:$0x1] %v4297
    %4316 = vst [vmem:[#allocation12 + $0x6c] sm:$0x1] %v4299
    %4317 = vst [vmem:[#allocation12 + $0x7c] sm:$0x1] %v4301
    %v4318 = vld [vmem:[%s3089] sm:$0xff]
    %v4320 = vcombine.high %v4318, %v4318
    %v4322 = vunpack.c.l.s4 1966171168
    %v4323 = vunpack.c.0.s8 %v4322
    %v4324 = vlaneseq
    %v4325 = vshrl.u32 %v4324, 7
    %v4326 = vsub.s32 %v4323, %v4325
    %v4327 = vrot.slane %v4318, %v4326
    %v4329 = vunpack.c.l.s4 1966171168
    %v4330 = vunpack.c.0.s8 %v4329
    %v4331 = vlaneseq
    %v4332 = vshrl.u32 %v4331, 7
    %v4333 = vsub.s32 %v4330, %v4332
    %v4334 = vrot.slane %v4320, %v4333
    %v4335 = vcombine.high %v4327, %v4327
    %v4336 = vcombine.high %v4334, %v4334
    %v4338 = vunpack.c.l.s4 1966171168
    %v4339 = vunpack.c.0.s8 %v4338
    %v4340 = vlaneseq
    %v4341 = vshrl.u32 %v4340, 7
    %v4342 = vsub.s32 %v4339, %v4341
    %v4343 = vrot.slane %v4327, %v4342
    %v4345 = vunpack.c.l.s4 1966171168
    %v4346 = vunpack.c.0.s8 %v4345
    %v4347 = vlaneseq
    %v4348 = vshrl.u32 %v4347, 7
    %v4349 = vsub.s32 %v4346, %v4348
    %v4350 = vrot.slane %v4334, %v4349
    %v4352 = vunpack.c.l.s4 1966171168
    %v4353 = vunpack.c.0.s8 %v4352
    %v4354 = vlaneseq
    %v4355 = vshrl.u32 %v4354, 7
    %v4356 = vsub.s32 %v4353, %v4355
    %v4357 = vrot.slane %v4335, %v4356
    %v4359 = vunpack.c.l.s4 1966171168
    %v4360 = vunpack.c.0.s8 %v4359
    %v4361 = vlaneseq
    %v4362 = vshrl.u32 %v4361, 7
    %v4363 = vsub.s32 %v4360, %v4362
    %v4364 = vrot.slane %v4336, %v4363
    %v4365 = vcombine.high %v4343, %v4343
    %v4366 = vcombine.high %v4350, %v4350
    %v4367 = vcombine.high %v4357, %v4357
    %v4368 = vcombine.high %v4364, %v4364
    %4377 = vst [vmem:[#allocation12 + $0xd] sm:$0x1] %v4343
    %4378 = vst [vmem:[#allocation12 + $0x1d] sm:$0x1] %v4357
    %4379 = vst [vmem:[#allocation12 + $0x2d] sm:$0x1] %v4365
    %4380 = vst [vmem:[#allocation12 + $0x3d] sm:$0x1] %v4367
    %4381 = vst [vmem:[#allocation12 + $0x4d] sm:$0x1] %v4350
    %4382 = vst [vmem:[#allocation12 + $0x5d] sm:$0x1] %v4364
    %4383 = vst [vmem:[#allocation12 + $0x6d] sm:$0x1] %v4366
    %4384 = vst [vmem:[#allocation12 + $0x7d] sm:$0x1] %v4368
    %v4385 = vld [vmem:[%s3266] sm:$0xff]
    %v4387 = vcombine.high %v4385, %v4385
    %v4389 = vunpack.c.l.s4 1966171168
    %v4390 = vunpack.c.0.s8 %v4389
    %v4391 = vlaneseq
    %v4392 = vshrl.u32 %v4391, 7
    %v4393 = vsub.s32 %v4390, %v4392
    %v4394 = vrot.slane %v4385, %v4393
    %v4396 = vunpack.c.l.s4 1966171168
    %v4397 = vunpack.c.0.s8 %v4396
    %v4398 = vlaneseq
    %v4399 = vshrl.u32 %v4398, 7
    %v4400 = vsub.s32 %v4397, %v4399
    %v4401 = vrot.slane %v4387, %v4400
    %v4402 = vcombine.high %v4394, %v4394
    %v4403 = vcombine.high %v4401, %v4401
    %v4405 = vunpack.c.l.s4 1966171168
    %v4406 = vunpack.c.0.s8 %v4405
    %v4407 = vlaneseq
    %v4408 = vshrl.u32 %v4407, 7
    %v4409 = vsub.s32 %v4406, %v4408
    %v4410 = vrot.slane %v4394, %v4409
    %v4412 = vunpack.c.l.s4 1966171168
    %v4413 = vunpack.c.0.s8 %v4412
    %v4414 = vlaneseq
    %v4415 = vshrl.u32 %v4414, 7
    %v4416 = vsub.s32 %v4413, %v4415
    %v4417 = vrot.slane %v4401, %v4416
    %v4419 = vunpack.c.l.s4 1966171168
    %v4420 = vunpack.c.0.s8 %v4419
    %v4421 = vlaneseq
    %v4422 = vshrl.u32 %v4421, 7
    %v4423 = vsub.s32 %v4420, %v4422
    %v4424 = vrot.slane %v4402, %v4423
    %v4426 = vunpack.c.l.s4 1966171168
    %v4427 = vunpack.c.0.s8 %v4426
    %v4428 = vlaneseq
    %v4429 = vshrl.u32 %v4428, 7
    %v4430 = vsub.s32 %v4427, %v4429
    %v4431 = vrot.slane %v4403, %v4430
    %v4432 = vcombine.high %v4410, %v4410
    %v4433 = vcombine.high %v4417, %v4417
    %v4434 = vcombine.high %v4424, %v4424
    %v4435 = vcombine.high %v4431, %v4431
    %4444 = vst [vmem:[#allocation12 + $0xe] sm:$0x1] %v4410
    %4445 = vst [vmem:[#allocation12 + $0x1e] sm:$0x1] %v4424
    %4446 = vst [vmem:[#allocation12 + $0x2e] sm:$0x1] %v4432
    %4447 = vst [vmem:[#allocation12 + $0x3e] sm:$0x1] %v4434
    %4448 = vst [vmem:[#allocation12 + $0x4e] sm:$0x1] %v4417
    %4449 = vst [vmem:[#allocation12 + $0x5e] sm:$0x1] %v4431
    %4450 = vst [vmem:[#allocation12 + $0x6e] sm:$0x1] %v4433
    %4451 = vst [vmem:[#allocation12 + $0x7e] sm:$0x1] %v4435
    %v4452 = vld [vmem:[%s3443] sm:$0xff]
    %v4454 = vcombine.high %v4452, %v4452
    %v4456 = vunpack.c.l.s4 1966171168
    %v4457 = vunpack.c.0.s8 %v4456
    %v4458 = vlaneseq
    %v4459 = vshrl.u32 %v4458, 7
    %v4460 = vsub.s32 %v4457, %v4459
    %v4461 = vrot.slane %v4452, %v4460
    %v4463 = vunpack.c.l.s4 1966171168
    %v4464 = vunpack.c.0.s8 %v4463
    %v4465 = vlaneseq
    %v4466 = vshrl.u32 %v4465, 7
    %v4467 = vsub.s32 %v4464, %v4466
    %v4468 = vrot.slane %v4454, %v4467
    %v4469 = vcombine.high %v4461, %v4461
    %v4470 = vcombine.high %v4468, %v4468
    %v4472 = vunpack.c.l.s4 1966171168
    %v4473 = vunpack.c.0.s8 %v4472
    %v4474 = vlaneseq
    %v4475 = vshrl.u32 %v4474, 7
    %v4476 = vsub.s32 %v4473, %v4475
    %v4477 = vrot.slane %v4461, %v4476
    %v4479 = vunpack.c.l.s4 1966171168
    %v4480 = vunpack.c.0.s8 %v4479
    %v4481 = vlaneseq
    %v4482 = vshrl.u32 %v4481, 7
    %v4483 = vsub.s32 %v4480, %v4482
    %v4484 = vrot.slane %v4468, %v4483
    %v4486 = vunpack.c.l.s4 1966171168
    %v4487 = vunpack.c.0.s8 %v4486
    %v4488 = vlaneseq
    %v4489 = vshrl.u32 %v4488, 7
    %v4490 = vsub.s32 %v4487, %v4489
    %v4491 = vrot.slane %v4469, %v4490
    %v4493 = vunpack.c.l.s4 1966171168
    %v4494 = vunpack.c.0.s8 %v4493
    %v4495 = vlaneseq
    %v4496 = vshrl.u32 %v4495, 7
    %v4497 = vsub.s32 %v4494, %v4496
    %v4498 = vrot.slane %v4470, %v4497
    %v4499 = vcombine.high %v4477, %v4477
    %v4500 = vcombine.high %v4484, %v4484
    %v4501 = vcombine.high %v4491, %v4491
    %v4502 = vcombine.high %v4498, %v4498
    %4511 = vst [vmem:[#allocation12 + $0xf] sm:$0x1] %v4477
    %4512 = vst [vmem:[#allocation12 + $0x1f] sm:$0x1] %v4491
    %4513 = vst [vmem:[#allocation12 + $0x2f] sm:$0x1] %v4499
    %4514 = vst [vmem:[#allocation12 + $0x3f] sm:$0x1] %v4501
    %4515 = vst [vmem:[#allocation12 + $0x4f] sm:$0x1] %v4484
    %4516 = vst [vmem:[#allocation12 + $0x5f] sm:$0x1] %v4498
    %4517 = vst [vmem:[#allocation12 + $0x6f] sm:$0x1] %v4500
    %4518 = vst [vmem:[#allocation12 + $0x7f] sm:$0x1] %v4502
    // Predicated region
    $region34: #{tpu_custom_call.1} parent=1 // pred_check
      %p4519 = pneg %p62
    $region35: #{tpu_custom_call.1} parent=1 // pred_check_branch
      %4521 = sbr.rel (%p4519) target = $region37
    $region36: #{tpu_custom_call.1} parent=1 // pred_region
      %4522 = vst [vmem:[#allocation13] sm:$0xff] %v3440
    $region37: #{tpu_custom_call.1} parent=1 // pred_fallthru
      _
    // Predicated region
    $region38: #{tpu_custom_call.1} parent=1 // pred_check
      _
    $region39: #{tpu_custom_call.1} parent=1 // pred_check_branch
      %4524 = sbr.rel (0) target = $region41
    $region40: #{tpu_custom_call.1} parent=1 // pred_region
      %s4526 = ssub.s32 2048, 2048
      %4527 = vsyncadd [#allocation8], %s4526
      %s4528 = sshll.u32 [#allocation12], 4
      %s4529 = int_to_ptr.vmem [resolvable:$true] %s4528
      %4534 = dma.vmem_to_hbm [thread:$0]  %s4529, 2048, %s4, [#allocation8], 128, 128, 8
    $region41: #{tpu_custom_call.1} parent=1 // pred_fallthru
      _
    // Predicated region
    $region42: #{tpu_custom_call.1} parent=1 // pred_check
      _
    $region43: #{tpu_custom_call.1} parent=1 // pred_check_branch
      %4536 = sbr.rel (0) target = $region45
    $region44: #{tpu_custom_call.1} parent=1 // pred_region
      %s4538 = ssub.s32 128, 128
      %4539 = vsyncadd [#allocation14], %s4538
      %s4541 = sshll.u32 [#allocation13], 4
      %s4542 = int_to_ptr.vmem [resolvable:$true] %s4541
      %4544 = dma.vmem_to_hbm [thread:$0]  %s4542, 128, %s5, [#allocation14]
    $region45: #{tpu_custom_call.1} parent=1 // pred_fallthru
      _
    // Predicated region
    $region46: #{tpu_custom_call.1} parent=1 // pred_check
      _
    $region47: #{tpu_custom_call.1} parent=1 // pred_check_branch
      %4546 = sbr.rel (0) target = $region49
    $region48: #{tpu_custom_call.1} parent=1 // pred_region
      %4547 = dma.done [#allocation8], 2048
    $region49: #{tpu_custom_call.1} parent=1 // pred_fallthru
      _
    // Predicated region
    $region50: #{tpu_custom_call.1} parent=1 // pred_check
      _
    $region51: #{tpu_custom_call.1} parent=1 // pred_check_branch
      %4549 = sbr.rel (0) target = $region53
    $region52: #{tpu_custom_call.1} parent=1 // pred_region
      %4550 = dma.done [#allocation14], 128
    $region53: #{tpu_custom_call.1} parent=1 // pred_fallthru
      _
    %4551 = vsyncpa [#allocation7], 1
    %4552 = vsyncpa [#allocation10], 1
    %4553 = vsyncpa [#allocation8], 1
    %4554 = vsyncpa [#allocation14], 1

// kernel: tpu_custom_call.1
$region0: #{tpu_custom_call.1}
  #allocation0 [shape = 'u32[]', space=smem, size = 0x4, offset = 0x4, fixed_abs, tag = 'smem constant byte address 0x4 - core index']
  #allocation1 [shape = 'u32[144,128]{1,0:T(1,128)}', space=vmem, size = 0x12000, scoped, tag = 'internal scratch']
  #allocation2 [shape = 'f32[8,128]{1,0:T(8,128)}', space=vmem, size = 0x1000, scoped, tag = 'scratch operand']
  #allocation3 [shape = 'f32[8,128]{1,0:T(8,128)}', space=vmem, size = 0x1000, scoped, tag = 'scratch operand']
  #allocation4 [shape = 'f32[16,8,512]{2,1,0:T(8,128)}', space=vmem, size = 0x40000, scoped, tag = 'scratch operand']
  #allocation5 [shape = 'f32[16,8,128]{2,1,0:T(8,128)}', space=vmem, size = 0x10000, scoped, tag = 'scratch operand']
  %s0 = inlined_call_operand.hbm [shape: f32[16,8,16], index: 0, kind: input, shape index: {}]
  %s1 = inlined_call_operand.hbm [shape: f32[16,512], index: 1, kind: input, shape index: {}]
  %s2 = inlined_call_operand.hbm [shape: f32[128,512], index: 2, kind: input, shape index: {}]
  %s3 = inlined_call_operand.vmem [shape: f32[1,512], index: 3, kind: input, shape index: {}]
  %s4 = inlined_call_operand.hbm [shape: f32[8,16,128], index: 4, kind: output, shape index: {0}]
  %s5 = inlined_call_operand.hbm [shape: f32[8,128], index: 5, kind: output, shape index: {1}]
  %6 = xla_tuple %s4, %s5
  %s7 = sld [smem:[#allocation0]]
  $region54: #{tpu_custom_call.1} parent=0
    _
  %s9 = ssub.s32 1, %s7
  %s10 = scalar_select 0, %s9, %s7
  $region1: #{tpu_custom_call.1} parent=0
    #allocation6 [shape = 'u8[65536]{0}', space=vmem, size = 0x10000, scoped, tag = 'input window, operand 0, single buffered']
    #allocation7 [shape = 's32[1]{0}', space=sflag, size = 0x4, scoped, tag = 'scoped memory for tpu_custom_call.1']
    #allocation8 [shape = 's32[1]{0}', space=sflag, size = 0x4, scoped, tag = 'scoped memory for tpu_custom_call.1']
    #allocation9 [shape = 'u8[32768]{0}', space=vmem, size = 0x8000, scoped, tag = 'input window, operand 1, single buffered']
    #allocation10 [shape = 's32[1]{0}', space=sflag, size = 0x4, scoped, tag = 'scoped memory for tpu_custom_call.1']
    #allocation11 [shape = 'u8[262144]{0}', space=vmem, size = 0x40000, scoped, tag = 'input window, operand 2, single buffered']
    #allocation12 [shape = 'u8[65536]{0}', space=vmem, size = 0x10000, scoped, tag = 'output window, operand 0, single buffered']
    #allocation13 [shape = 'u8[4096]{0}', space=vmem, size = 0x1000, scoped, tag = 'output window, operand 1, single buffered']
    #allocation14 [shape = 's32[1]{0}', space=sflag, size = 0x4, scoped, tag = 'scoped memory for tpu_custom_call.1']
    %11 = vsyncpa [#allocation7], 0
    %12 = vsyncpa [#allocation10], 0
    %13 = vsyncpa [#allocation8], 0
    %14 = vsyncpa [#allocation14], 0
    // Predicated region
    $region2: #{tpu_custom_call.1} parent=1 // pred_check
      _
    $region3: #{tpu_custom_call.1} parent=1 // pred_check_branch
      %16 = sbr.rel (0) target = $region5
    $region4: #{tpu_custom_call.1} parent=1 // pred_region
      %s18 = ssub.s32 2048, 2048
      %19 = vsyncadd [#allocation7], %s18
      %s20 = sshll.u32 [#allocation6], 4
      %s21 = int_to_ptr.vmem [resolvable:$true] %s20
      %26 = dma.hbm_to_vmem [thread:$0]  %s0, 2048, %s21, [#allocation7], 128, 128, 8
    $region5: #{tpu_custom_call.1} parent=1 // pred_fallthru
      _
    // Predicated region
    $region6: #{tpu_custom_call.1} parent=1 // pred_check
      _
    $region7: #{tpu_custom_call.1} parent=1 // pred_check_branch
      %28 = sbr.rel (0) target = $region9
    $region8: #{tpu_custom_call.1} parent=1 // pred_region
      %s30 = ssub.s32 1024, 1024
      %31 = vsyncadd [#allocation10], %s30
      %s32 = sshll.u32 [#allocation9], 4
      %s33 = int_to_ptr.vmem [resolvable:$true] %s32
      %38 = dma.hbm_to_vmem [thread:$0]  %s1, 1024, %s33, [#allocation10], 512, 512, 32
    $region9: #{tpu_custom_call.1} parent=1 // pred_fallthru
      _
    // Predicated region
    $region10: #{tpu_custom_call.1} parent=1 // pred_check
      _
    $region11: #{tpu_custom_call.1} parent=1 // pred_check_branch
      %40 = sbr.rel (0) target = $region13
    $region12: #{tpu_custom_call.1} parent=1 // pred_region
      %s42 = ssub.s32 8192, 8192
      %43 = vsyncadd [#allocation10], %s42
      %s44 = sshll.u32 [#allocation11], 4
      %s45 = int_to_ptr.vmem [resolvable:$true] %s44
      %50 = dma.hbm_to_vmem [thread:$0]  %s2, 8192, %s45, [#allocation10], 512, 512, 32
    $region13: #{tpu_custom_call.1} parent=1 // pred_fallthru
      _
    // Predicated region
    $region14: #{tpu_custom_call.1} parent=1 // pred_check
      _
    $region15: #{tpu_custom_call.1} parent=1 // pred_check_branch
      %52 = sbr.rel (0) target = $region17
    $region16: #{tpu_custom_call.1} parent=1 // pred_region
      _
    $region17: #{tpu_custom_call.1} parent=1 // pred_fallthru
      _
    // Predicated region
    $region18: #{tpu_custom_call.1} parent=1 // pred_check
      _
    $region19: #{tpu_custom_call.1} parent=1 // pred_check_branch
      %54 = sbr.rel (0) target = $region21
    $region20: #{tpu_custom_call.1} parent=1 // pred_region
      %55 = dma.done [#allocation7], 2048
    $region21: #{tpu_custom_call.1} parent=1 // pred_fallthru
      _
    // Predicated region
    $region22: #{tpu_custom_call.1} parent=1 // pred_check
      _
    $region23: #{tpu_custom_call.1} parent=1 // pred_check_branch
      %57 = sbr.rel (0) target = $region25
    $region24: #{tpu_custom_call.1} parent=1 // pred_region
      %58 = dma.done [#allocation10], 1024
    $region25: #{tpu_custom_call.1} parent=1 // pred_fallthru
      _
    // Predicated region
    $region26: #{tpu_custom_call.1} parent=1 // pred_check
      _
    $region27: #{tpu_custom_call.1} parent=1 // pred_check_branch
      %60 = sbr.rel (0) target = $region29
    $region28: #{tpu_custom_call.1} parent=1 // pred_region
      %61 = dma.done [#allocation10], 8192
    $region29: #{tpu_custom_call.1} parent=1 // pred_fallthru
      _
    %p62 = scmp.eq.s32.totalorder 0, 0
    // Predicated region
    $region30: #{tpu_custom_call.1} parent=1 // pred_check
      %p63 = pneg %p62
    $region31: #{tpu_custom_call.1} parent=1 // pred_check_branch
      %65 = sbr.rel (%p63) target = $region33
    $region32: #{tpu_custom_call.1} parent=1 // pred_region
      %66 = vst [vmem:[#allocation2] sm:$0xff] 0.0
      %67 = vst [vmem:[#allocation3] sm:$0xff] 0.0
    $region33: #{tpu_custom_call.1} parent=1 // pred_fallthru
      _
    %v68 = vld [vmem:[#allocation6] sm:$0xff]
    %v69 = vld [vmem:[#allocation6 + $0x8] sm:$0xff]
    %v70 = vld [vmem:[#allocation6 + $0x10] sm:$0xff]
    %v71 = vld [vmem:[#allocation6 + $0x18] sm:$0xff]
    %v72 = vld [vmem:[#allocation6 + $0x20] sm:$0xff]
    %v73 = vld [vmem:[#allocation6 + $0x28] sm:$0xff]
    %v74 = vld [vmem:[#allocation6 + $0x30] sm:$0xff]
    %v75 = vld [vmem:[#allocation6 + $0x38] sm:$0xff]
    %v76 = vld [vmem:[#allocation6 + $0x40] sm:$0xff]
    %v77 = vld [vmem:[#allocation6 + $0x48] sm:$0xff]
    %v78 = vld [vmem:[#allocation6 + $0x50] sm:$0xff]
    %v79 = vld [vmem:[#allocation6 + $0x58] sm:$0xff]
    %v80 = vld [vmem:[#allocation6 + $0x60] sm:$0xff]
    %v81 = vld [vmem:[#allocation6 + $0x68] sm:$0xff]
    %v82 = vld [vmem:[#allocation6 + $0x70] sm:$0xff]
    %v83 = vld [vmem:[#allocation6 + $0x78] sm:$0xff]
    %v84 = vld [vmem:[#allocation9] sm:$0xff]
    %v85 = vld [vmem:[#allocation9 + $0x8] sm:$0xff]
    %v86 = vld [vmem:[#allocation9 + $0x10] sm:$0xff]
    %v87 = vld [vmem:[#allocation9 + $0x18] sm:$0xff]
    %v88 = vld [vmem:[#allocation9 + $0x20] sm:$0xff]
    %v89 = vld [vmem:[#allocation9 + $0x28] sm:$0xff]
    %v90 = vld [vmem:[#allocation9 + $0x30] sm:$0xff]
    %v91 = vld [vmem:[#allocation9 + $0x38] sm:$0xff]
    %v92 = vld [vmem:[%s3] sm:$0xf]
    %v94 = vlaneseq
    %v95 = vshrl.u32 %v94, 7
    %v96 = vsub.s32 0, %v95
    %v97 = vrot.slane %v92, %v96
    %v98 = vlaneseq
    %v99 = vshrl.u32 %v98, 7
    %v100 = vsub.s32 1, %v99
    %v101 = vrot.slane %v92, %v100
    %v102 = vlaneseq
    %v103 = vshrl.u32 %v102, 7
    %v104 = vsub.s32 2, %v103
    %v105 = vrot.slane %v92, %v104
    %v106 = vlaneseq
    %v107 = vshrl.u32 %v106, 7
    %v108 = vsub.s32 3, %v107
    %v109 = vrot.slane %v92, %v108
    %vm114 = vcmask 130048
    %v116 = vsel %vm114, %v68, 0
    %v119 = vsel %vm114, %v69, 0
    %v122 = vsel %vm114, %v70, 0
    %v125 = vsel %vm114, %v71, 0
    %v128 = vsel %vm114, %v72, 0
    %v131 = vsel %vm114, %v73, 0
    %v134 = vsel %vm114, %v74, 0
    %v137 = vsel %vm114, %v75, 0
    %v140 = vsel %vm114, %v76, 0
    %v143 = vsel %vm114, %v77, 0
    %v146 = vsel %vm114, %v78, 0
    %v149 = vsel %vm114, %v79, 0
    %v152 = vsel %vm114, %v80, 0
    %v155 = vsel %vm114, %v81, 0
    %v158 = vsel %vm114, %v82, 0
    %v161 = vsel %vm114, %v83, 0
    %163 = vmatprep.subr.mxu0 %v85
    %164 = vmatpush1.msra.mxu0 %v84
    %165 = vmatprep.subr.mxu0 %v89
    %166 = vmatpush1.msra.mxu0 %v88
    %167 = vmatprep.subr.mxu0 0.0
    %168 = vmatpush1.msra.mxu0 0.0
    %169 = vmatprep.subr.mxu0 0.0
    %170 = vmatpush1.msra.mxu0 0.0
    %171 = vmatprep.subr.mxu0 0.0
    %172 = vmatpush1.msra.mxu0 0.0
    %173 = vmatprep.subr.mxu0 0.0
    %174 = vmatpush1.msra.mxu0 0.0
    %175 = vmatprep.subr.mxu0 0.0
    %176 = vmatpush1.msra.mxu0 0.0
    %177 = vmatprep.subr.mxu0 0.0
    %178 = vmatpush1.msra.mxu0 0.0
    %179 = vmatprep.subr.mxu0 0.0
    %180 = vmatpush1.msra.mxu0 0.0
    %181 = vmatprep.subr.mxu0 0.0
    %182 = vmatpush1.msra.mxu0 0.0
    %183 = vmatprep.subr.mxu0 0.0
    %184 = vmatpush1.msra.mxu0 0.0
    %185 = vmatprep.subr.mxu0 0.0
    %186 = vmatpush1.msra.mxu0 0.0
    %187 = vmatprep.subr.mxu0 0.0
    %188 = vmatpush1.msra.mxu0 0.0
    %189 = vmatprep.subr.mxu0 0.0
    %190 = vmatpush1.msra.mxu0 0.0
    %191 = vmatprep.subr.mxu0 0.0
    %192 = vmatpush1.msra.mxu0 0.0
    %193 = vmatprep.subr.mxu0 0.0
    %194 = vmatpush1.msra.mxu0 0.0
    %195 = vmatprep.subr.mxu0 0.0
    %196 = vmatpush1.msra.mxu0 0.0
    %197 = vmatprep.subr.mxu0 0.0
    %198 = vmatpush1.msra.mxu0 0.0
    %199 = vmatprep.subr.mxu0 0.0
    %200 = vmatpush1.msra.mxu0 0.0
    %201 = vmatprep.subr.mxu0 0.0
    %202 = vmatpush1.msra.mxu0 0.0
    %203 = vmatprep.subr.mxu0 0.0
    %204 = vmatpush1.msra.mxu0 0.0
    %205 = vmatprep.subr.mxu0 0.0
    %206 = vmatpush1.msra.mxu0 0.0
    %207 = vmatprep.subr.mxu0 0.0
    %208 = vmatpush1.msra.mxu0 0.0
    %209 = vmatprep.subr.mxu0 0.0
    %210 = vmatpush1.msra.mxu0 0.0
    %211 = vmatprep.subr.mxu0 0.0
    %212 = vmatpush1.msra.mxu0 0.0
    %213 = vmatprep.subr.mxu0 0.0
    %214 = vmatpush1.msra.mxu0 0.0
    %215 = vmatprep.subr.mxu0 0.0
    %216 = vmatpush1.msra.mxu0 0.0
    %217 = vmatprep.subr.mxu0 0.0
    %218 = vmatpush1.msra.mxu0 0.0
    %219 = vmatprep.subr.mxu0 0.0
    %220 = vmatpush1.msra.mxu0 0.0
    %221 = vmatprep.subr.mxu0 0.0
    %222 = vmatpush1.msra.mxu0 0.0
    %223 = vmatprep.subr.mxu0 0.0
    %224 = vmatpush1.msra.mxu0 0.0
    %225 = vmatprep.subr.mxu0 0.0
    %226 = vmatpush1.msra.mxu0 0.0
    %227 = vmatprep.mubr.f32.mxu0 0.0
    %228 = vmatmul.mubr.f32.gmra.mrb[0].mxu0 %v116
    %v229 = vpop.f32.mrb[0].mxu0
    %v230 = vadd.f32 %v97, %v229
    %v231 = vpop.f32.mrb[0].mxu0
    %v232 = vadd.f32 %v101, %v231
    %233 = vmatprep.mubr.f32.mxu0 0.0
    %234 = vmatmul.mubr.f32.gmra.mrb[0].mxu0 %v119
    %v235 = vpop.f32.mrb[0].mxu0
    %v236 = vadd.f32 %v97, %v235
    %v237 = vpop.f32.mrb[0].mxu0
    %v238 = vadd.f32 %v101, %v237
    %239 = vmatprep.mubr.f32.mxu0 0.0
    %240 = vmatmul.mubr.f32.gmra.mrb[0].mxu0 %v122
    %v241 = vpop.f32.mrb[0].mxu0
    %v242 = vadd.f32 %v97, %v241
    %v243 = vpop.f32.mrb[0].mxu0
    %v244 = vadd.f32 %v101, %v243
    %245 = vmatprep.mubr.f32.mxu0 0.0
    %246 = vmatmul.mubr.f32.gmra.mrb[0].mxu0 %v125
    %v247 = vpop.f32.mrb[0].mxu0
    %v248 = vadd.f32 %v97, %v247
    %v249 = vpop.f32.mrb[0].mxu0
    %v250 = vadd.f32 %v101, %v249
    %251 = vmatprep.mubr.f32.mxu0 0.0
    %252 = vmatmul.mubr.f32.gmra.mrb[0].mxu0 %v128
    %v253 = vpop.f32.mrb[0].mxu0
    %v254 = vadd.f32 %v97, %v253
    %v255 = vpop.f32.mrb[0].mxu0
    %v256 = vadd.f32 %v101, %v255
    %257 = vmatprep.mubr.f32.mxu0 0.0
    %258 = vmatmul.mubr.f32.gmra.mrb[0].mxu0 %v131
    %v259 = vpop.f32.mrb[0].mxu0
    %v260 = vadd.f32 %v97, %v259
    %v261 = vpop.f32.mrb[0].mxu0
    %v262 = vadd.f32 %v101, %v261
    %263 = vmatprep.mubr.f32.mxu0 0.0
    %264 = vmatmul.mubr.f32.gmra.mrb[0].mxu0 %v134
    %v265 = vpop.f32.mrb[0].mxu0
    %v266 = vadd.f32 %v97, %v265
    %v267 = vpop.f32.mrb[0].mxu0
    %v268 = vadd.f32 %v101, %v267
    %269 = vmatprep.mubr.f32.mxu0 0.0
    %270 = vmatmul.mubr.f32.gmra.mrb[0].mxu0 %v137
    %v271 = vpop.f32.mrb[0].mxu0
    %v272 = vadd.f32 %v97, %v271
    %v273 = vpop.f32.mrb[0].mxu0
    %v274 = vadd.f32 %v101, %v273
    %275 = vmatprep.mubr.f32.mxu0 0.0
    %276 = vmatmul.mubr.f32.gmra.mrb[0].mxu0 %v140
    %v277 = vpop.f32.mrb[0].mxu0
    %v278 = vadd.f32 %v97, %v277
    %v279 = vpop.f32.mrb[0].mxu0
    %v280 = vadd.f32 %v101, %v279
    %281 = vmatprep.mubr.f32.mxu0 0.0
    %282 = vmatmul.mubr.f32.gmra.mrb[0].mxu0 %v143
    %v283 = vpop.f32.mrb[0].mxu0
    %v284 = vadd.f32 %v97, %v283
    %v285 = vpop.f32.mrb[0].mxu0
    %v286 = vadd.f32 %v101, %v285
    %287 = vmatprep.mubr.f32.mxu0 0.0
    %288 = vmatmul.mubr.f32.gmra.mrb[0].mxu0 %v146
    %v289 = vpop.f32.mrb[0].mxu0
    %v290 = vadd.f32 %v97, %v289
    %v291 = vpop.f32.mrb[0].mxu0
    %v292 = vadd.f32 %v101, %v291
    %293 = vmatprep.mubr.f32.mxu0 0.0
    %294 = vmatmul.mubr.f32.gmra.mrb[0].mxu0 %v149
    %v295 = vpop.f32.mrb[0].mxu0
    %v296 = vadd.f32 %v97, %v295
    %v297 = vpop.f32.mrb[0].mxu0
    %v298 = vadd.f32 %v101, %v297
    %299 = vmatprep.mubr.f32.mxu0 0.0
    %300 = vmatmul.mubr.f32.gmra.mrb[0].mxu0 %v152
    %v301 = vpop.f32.mrb[0].mxu0
    %v302 = vadd.f32 %v97, %v301
    %v303 = vpop.f32.mrb[0].mxu0
    %v304 = vadd.f32 %v101, %v303
    %305 = vmatprep.mubr.f32.mxu0 0.0
    %306 = vmatmul.mubr.f32.gmra.mrb[0].mxu0 %v155
    %v307 = vpop.f32.mrb[0].mxu0
    %v308 = vadd.f32 %v97, %v307
    %v309 = vpop.f32.mrb[0].mxu0
    %v310 = vadd.f32 %v101, %v309
    %311 = vmatprep.mubr.f32.mxu0 0.0
    %312 = vmatmul.mubr.f32.gmra.mrb[0].mxu0 %v158
    %v313 = vpop.f32.mrb[0].mxu0
    %v314 = vadd.f32 %v97, %v313
    %v315 = vpop.f32.mrb[0].mxu0
    %v316 = vadd.f32 %v101, %v315
    %317 = vmatprep.mubr.f32.mxu0 0.0
    %318 = vmatmul.mubr.f32.gmra.mrb[0].mxu0 %v161
    %v319 = vpop.f32.mrb[0].mxu0
    %v320 = vadd.f32 %v97, %v319
    %v321 = vpop.f32.mrb[0].mxu0
    %v322 = vadd.f32 %v101, %v321
    %323 = vdwg.mxu0
    %324 = vmatprep.subr.mxu0 %v87
    %325 = vmatpush1.msra.mxu0 %v86
    %326 = vmatprep.subr.mxu0 %v91
    %327 = vmatpush1.msra.mxu0 %v90
    %328 = vmatprep.subr.mxu0 0.0
    %329 = vmatpush1.msra.mxu0 0.0
    %330 = vmatprep.subr.mxu0 0.0
    %331 = vmatpush1.msra.mxu0 0.0
    %332 = vmatprep.subr.mxu0 0.0
    %333 = vmatpush1.msra.mxu0 0.0
    %334 = vmatprep.subr.mxu0 0.0
    %335 = vmatpush1.msra.mxu0 0.0
    %336 = vmatprep.subr.mxu0 0.0
    %337 = vmatpush1.msra.mxu0 0.0
    %338 = vmatprep.subr.mxu0 0.0
    %339 = vmatpush1.msra.mxu0 0.0
    %340 = vmatprep.subr.mxu0 0.0
    %341 = vmatpush1.msra.mxu0 0.0
    %342 = vmatprep.subr.mxu0 0.0
    %343 = vmatpush1.msra.mxu0 0.0
    %344 = vmatprep.subr.mxu0 0.0
    %345 = vmatpush1.msra.mxu0 0.0
    %346 = vmatprep.subr.mxu0 0.0
    %347 = vmatpush1.msra.mxu0 0.0
    %348 = vmatprep.subr.mxu0 0.0
    %349 = vmatpush1.msra.mxu0 0.0
    %350 = vmatprep.subr.mxu0 0.0
    %351 = vmatpush1.msra.mxu0 0.0
    %352 = vmatprep.subr.mxu0 0.0
    %353 = vmatpush1.msra.mxu0 0.0
    %354 = vmatprep.subr.mxu0 0.0
    %355 = vmatpush1.msra.mxu0 0.0
    %356 = vmatprep.subr.mxu0 0.0
    %357 = vmatpush1.msra.mxu0 0.0
    %358 = vmatprep.subr.mxu0 0.0
    %359 = vmatpush1.msra.mxu0 0.0
    %360 = vmatprep.subr.mxu0 0.0
    %361 = vmatpush1.msra.mxu0 0.0
    %362 = vmatprep.subr.mxu0 0.0
    %363 = vmatpush1.msra.mxu0 0.0
    %364 = vmatprep.subr.mxu0 0.0
    %365 = vmatpush1.msra.mxu0 0.0
    %366 = vmatprep.subr.mxu0 0.0
    %367 = vmatpush1.msra.mxu0 0.0
    %368 = vmatprep.subr.mxu0 0.0
    %369 = vmatpush1.msra.mxu0 0.0
    %370 = vmatprep.subr.mxu0 0.0
    %371 = vmatpush1.msra.mxu0 0.0
    %372 = vmatprep.subr.mxu0 0.0
    %373 = vmatpush1.msra.mxu0 0.0
    %374 = vmatprep.subr.mxu0 0.0
    %375 = vmatpush1.msra.mxu0 0.0
    %376 = vmatprep.subr.mxu0 0.0
    %377 = vmatpush1.msra.mxu0 0.0
    %378 = vmatprep.subr.mxu0 0.0
    %379 = vmatpush1.msra.mxu0 0.0
    %380 = vmatprep.subr.mxu0 0.0
    %381 = vmatpush1.msra.mxu0 0.0
    %382 = vmatprep.subr.mxu0 0.0
    %383 = vmatpush1.msra.mxu0 0.0
    %384 = vmatprep.subr.mxu0 0.0
    %385 = vmatpush1.msra.mxu0 0.0
    %386 = vmatprep.subr.mxu0 0.0
    %387 = vmatpush1.msra.mxu0 0.0
    %388 = vmatprep.mubr.f32.mxu0 0.0
    %389 = vmatmul.mubr.f32.gmra.mrb[0].mxu0 %v116
    %v390 = vpop.f32.mrb[0].mxu0
    %v391 = vadd.f32 %v105, %v390
    %v392 = vpop.f32.mrb[0].mxu0
    %v393 = vadd.f32 %v109, %v392
    %394 = vmatprep.mubr.f32.mxu0 0.0
    %395 = vmatmul.mubr.f32.gmra.mrb[0].mxu0 %v119
    %v396 = vpop.f32.mrb[0].mxu0
    %v397 = vadd.f32 %v105, %v396
    %v398 = vpop.f32.mrb[0].mxu0
    %v399 = vadd.f32 %v109, %v398
    %400 = vmatprep.mubr.f32.mxu0 0.0
    %401 = vmatmul.mubr.f32.gmra.mrb[0].mxu0 %v122
    %v402 = vpop.f32.mrb[0].mxu0
    %v403 = vadd.f32 %v105, %v402
    %v404 = vpop.f32.mrb[0].mxu0
    %v405 = vadd.f32 %v109, %v404
    %406 = vmatprep.mubr.f32.mxu0 0.0
    %407 = vmatmul.mubr.f32.gmra.mrb[0].mxu0 %v125
    %v408 = vpop.f32.mrb[0].mxu0
    %v409 = vadd.f32 %v105, %v408
    %v410 = vpop.f32.mrb[0].mxu0
    %v411 = vadd.f32 %v109, %v410
    %412 = vmatprep.mubr.f32.mxu0 0.0
    %413 = vmatmul.mubr.f32.gmra.mrb[0].mxu0 %v128
    %v414 = vpop.f32.mrb[0].mxu0
    %v415 = vadd.f32 %v105, %v414
    %v416 = vpop.f32.mrb[0].mxu0
    %v417 = vadd.f32 %v109, %v416
    %418 = vmatprep.mubr.f32.mxu0 0.0
    %419 = vmatmul.mubr.f32.gmra.mrb[0].mxu0 %v131
    %v420 = vpop.f32.mrb[0].mxu0
    %v421 = vadd.f32 %v105, %v420
    %v422 = vpop.f32.mrb[0].mxu0
    %v423 = vadd.f32 %v109, %v422
    %424 = vmatprep.mubr.f32.mxu0 0.0
    %425 = vmatmul.mubr.f32.gmra.mrb[0].mxu0 %v134
    %v426 = vpop.f32.mrb[0].mxu0
    %v427 = vadd.f32 %v105, %v426
    %v428 = vpop.f32.mrb[0].mxu0
    %v429 = vadd.f32 %v109, %v428
    %430 = vmatprep.mubr.f32.mxu0 0.0
    %431 = vmatmul.mubr.f32.gmra.mrb[0].mxu0 %v137
    %v432 = vpop.f32.mrb[0].mxu0
    %v433 = vadd.f32 %v105, %v432
    %v434 = vpop.f32.mrb[0].mxu0
    %v435 = vadd.f32 %v109, %v434
    %436 = vmatprep.mubr.f32.mxu0 0.0
    %437 = vmatmul.mubr.f32.gmra.mrb[0].mxu0 %v140
    %v438 = vpop.f32.mrb[0].mxu0
    %v439 = vadd.f32 %v105, %v438
    %v440 = vpop.f32.mrb[0].mxu0
    %v441 = vadd.f32 %v109, %v440
    %442 = vmatprep.mubr.f32.mxu0 0.0
    %443 = vmatmul.mubr.f32.gmra.mrb[0].mxu0 %v143
    %v444 = vpop.f32.mrb[0].mxu0
    %v445 = vadd.f32 %v105, %v444
    %v446 = vpop.f32.mrb[0].mxu0
    %v447 = vadd.f32 %v109, %v446
    %448 = vmatprep.mubr.f32.mxu0 0.0
    %449 = vmatmul.mubr.f32.gmra.mrb[0].mxu0 %v146
    %v450 = vpop.f32.mrb[0].mxu0
    %v451 = vadd.f32 %v105, %v450
    %v452 = vpop.f32.mrb[0].mxu0
    %v453 = vadd.f32 %v109, %v452
    %454 = vmatprep.mubr.f32.mxu0 0.0
    %455 = vmatmul.mubr.f32.gmra.mrb[0].mxu0 %v149
    %v456 = vpop.f32.mrb[0].mxu0
    %v457 = vadd.f32 %v105, %v456
    %v458 = vpop.f32.mrb[0].mxu0
    %v459 = vadd.f32 %v109, %v458
    %460 = vmatprep.mubr.f32.mxu0 0.0
    %461 = vmatmul.mubr.f32.gmra.mrb[0].mxu0 %v152
    %v462 = vpop.f32.mrb[0].mxu0
    %v463 = vadd.f32 %v105, %v462
    %v464 = vpop.f32.mrb[0].mxu0
    %v465 = vadd.f32 %v109, %v464
    %466 = vmatprep.mubr.f32.mxu0 0.0
    %467 = vmatmul.mubr.f32.gmra.mrb[0].mxu0 %v155
    %v468 = vpop.f32.mrb[0].mxu0
    %v469 = vadd.f32 %v105, %v468
    %v470 = vpop.f32.mrb[0].mxu0
    %v471 = vadd.f32 %v109, %v470
    %472 = vmatprep.mubr.f32.mxu0 0.0
    %473 = vmatmul.mubr.f32.gmra.mrb[0].mxu0 %v158
    %v474 = vpop.f32.mrb[0].mxu0
    %v475 = vadd.f32 %v105, %v474
    %v476 = vpop.f32.mrb[0].mxu0
    %v477 = vadd.f32 %v109, %v476
    %478 = vmatprep.mubr.f32.mxu0 0.0
    %479 = vmatmul.mubr.f32.gmra.mrb[0].mxu0 %v161
    %v480 = vpop.f32.mrb[0].mxu0
    %v481 = vadd.f32 %v105, %v480
    %v482 = vpop.f32.mrb[0].mxu0
    %v483 = vadd.f32 %v109, %v482
    %484 = vdwg.mxu0
    %485 = vst [vmem:[#allocation4] sm:$0xff] %v230
    %486 = vst [vmem:[#allocation4 + $0x8] sm:$0xff] %v232
    %487 = vst [vmem:[#allocation4 + $0x10] sm:$0xff] %v391
    %488 = vst [vmem:[#allocation4 + $0x18] sm:$0xff] %v393
    %489 = vst [vmem:[#allocation4 + $0x20] sm:$0xff] %v236
    %490 = vst [vmem:[#allocation4 + $0x28] sm:$0xff] %v238
    %491 = vst [vmem:[#allocation4 + $0x30] sm:$0xff] %v397
    %492 = vst [vmem:[#allocation4 + $0x38] sm:$0xff] %v399
    %493 = vst [vmem:[#allocation4 + $0x40] sm:$0xff] %v242
    %494 = vst [vmem:[#allocation4 + $0x48] sm:$0xff] %v244
    %495 = vst [vmem:[#allocation4 + $0x50] sm:$0xff] %v403
    %496 = vst [vmem:[#allocation4 + $0x58] sm:$0xff] %v405
    %497 = vst [vmem:[#allocation4 + $0x60] sm:$0xff] %v248
    %498 = vst [vmem:[#allocation4 + $0x68] sm:$0xff] %v250
    %499 = vst [vmem:[#allocation4 + $0x70] sm:$0xff] %v409
    %500 = vst [vmem:[#allocation4 + $0x78] sm:$0xff] %v411
    %501 = vst [vmem:[#allocation4 + $0x80] sm:$0xff] %v254
    %502 = vst [vmem:[#allocation4 + $0x88] sm:$0xff] %v256
    %503 = vst [vmem:[#allocation4 + $0x90] sm:$0xff] %v415
    %504 = vst [vmem:[#allocation4 + $0x98] sm:$0xff] %v417
    %505 = vst [vmem:[#allocation4 + $0xa0] sm:$0xff] %v260
    %506 = vst [vmem:[#allocation4 + $0xa8] sm:$0xff] %v262
    %507 = vst [vmem:[#allocation4 + $0xb0] sm:$0xff] %v421
    %508 = vst [vmem:[#allocation4 + $0xb8] sm:$0xff] %v423
    %509 = vst [vmem:[#allocation4 + $0xc0] sm:$0xff] %v266
    %510 = vst [vmem:[#allocation4 + $0xc8] sm:$0xff] %v268
    %511 = vst [vmem:[#allocation4 + $0xd0] sm:$0xff] %v427
    %512 = vst [vmem:[#allocation4 + $0xd8] sm:$0xff] %v429
    %513 = vst [vmem:[#allocation4 + $0xe0] sm:$0xff] %v272
    %514 = vst [vmem:[#allocation4 + $0xe8] sm:$0xff] %v274
    %515 = vst [vmem:[#allocation4 + $0xf0] sm:$0xff] %v433
    %516 = vst [vmem:[#allocation4 + $0xf8] sm:$0xff] %v435
    %517 = vst [vmem:[#allocation4 + $0x100] sm:$0xff] %v278
    %518 = vst [vmem:[#allocation4 + $0x108] sm:$0xff] %v280
    %519 = vst [vmem:[#allocation4 + $0x110] sm:$0xff] %v439
    %520 = vst [vmem:[#allocation4 + $0x118] sm:$0xff] %v441
    %521 = vst [vmem:[#allocation4 + $0x120] sm:$0xff] %v284
    %522 = vst [vmem:[#allocation4 + $0x128] sm:$0xff] %v286
    %523 = vst [vmem:[#allocation4 + $0x130] sm:$0xff] %v445
    %524 = vst [vmem:[#allocation4 + $0x138] sm:$0xff] %v447
    %525 = vst [vmem:[#allocation4 + $0x140] sm:$0xff] %v290
    %526 = vst [vmem:[#allocation4 + $0x148] sm:$0xff] %v292
    %527 = vst [vmem:[#allocation4 + $0x150] sm:$0xff] %v451
    %528 = vst [vmem:[#allocation4 + $0x158] sm:$0xff] %v453
    %529 = vst [vmem:[#allocation4 + $0x160] sm:$0xff] %v296
    %530 = vst [vmem:[#allocation4 + $0x168] sm:$0xff] %v298
    %531 = vst [vmem:[#allocation4 + $0x170] sm:$0xff] %v457
    %532 = vst [vmem:[#allocation4 + $0x178] sm:$0xff] %v459
    %533 = vst [vmem:[#allocation4 + $0x180] sm:$0xff] %v302
    %534 = vst [vmem:[#allocation4 + $0x188] sm:$0xff] %v304
    %535 = vst [vmem:[#allocation4 + $0x190] sm:$0xff] %v463
    %536 = vst [vmem:[#allocation4 + $0x198] sm:$0xff] %v465
    %537 = vst [vmem:[#allocation4 + $0x1a0] sm:$0xff] %v308
    %538 = vst [vmem:[#allocation4 + $0x1a8] sm:$0xff] %v310
    %539 = vst [vmem:[#allocation4 + $0x1b0] sm:$0xff] %v469
    %540 = vst [vmem:[#allocation4 + $0x1b8] sm:$0xff] %v471
    %541 = vst [vmem:[#allocation4 + $0x1c0] sm:$0xff] %v314
    %542 = vst [vmem:[#allocation4 + $0x1c8] sm:$0xff] %v316
    %543 = vst [vmem:[#allocation4 + $0x1d0] sm:$0xff] %v475
    %544 = vst [vmem:[#allocation4 + $0x1d8] sm:$0xff] %v477
    %545 = vst [vmem:[#allocation4 + $0x1e0] sm:$0xff] %v320
    %546 = vst [vmem:[#allocation4 + $0x1e8] sm:$0xff] %v322
    %547 = vst [vmem:[#allocation4 + $0x1f0] sm:$0xff] %v481
    %548 = vst [vmem:[#allocation4 + $0x1f8] sm:$0xff] %v483
    %v549 = vld [vmem:[#allocation11] sm:$0xff]
    %v550 = vld [vmem:[#allocation11 + $0x8] sm:$0xff]
    %v551 = vld [vmem:[#allocation11 + $0x10] sm:$0xff]
    %v552 = vld [vmem:[#allocation11 + $0x18] sm:$0xff]
    %v553 = vld [vmem:[#allocation11 + $0x20] sm:$0xff]
    %v554 = vld [vmem:[#allocation11 + $0x28] sm:$0xff]
    %v555 = vld [vmem:[#allocation11 + $0x30] sm:$0xff]
    %v556 = vld [vmem:[#allocation11 + $0x38] sm:$0xff]
    %v557 = vld [vmem:[#allocation11 + $0x40] sm:$0xff]
    %v558 = vld [vmem:[#allocation11 + $0x48] sm:$0xff]
    %v559 = vld [vmem:[#allocation11 + $0x50] sm:$0xff]
    %v560 = vld [vmem:[#allocation11 + $0x58] sm:$0xff]
    %v561 = vld [vmem:[#allocation11 + $0x60] sm:$0xff]
    %v562 = vld [vmem:[#allocation11 + $0x68] sm:$0xff]
    %v563 = vld [vmem:[#allocation11 + $0x70] sm:$0xff]
    %v564 = vld [vmem:[#allocation11 + $0x78] sm:$0xff]
    %v565 = vld [vmem:[#allocation11 + $0x80] sm:$0xff]
    %v566 = vld [vmem:[#allocation11 + $0x88] sm:$0xff]
    %v567 = vld [vmem:[#allocation11 + $0x90] sm:$0xff]
    %v568 = vld [vmem:[#allocation11 + $0x98] sm:$0xff]
    %v569 = vld [vmem:[#allocation11 + $0xa0] sm:$0xff]
    %v570 = vld [vmem:[#allocation11 + $0xa8] sm:$0xff]
    %v571 = vld [vmem:[#allocation11 + $0xb0] sm:$0xff]
    %v572 = vld [vmem:[#allocation11 + $0xb8] sm:$0xff]
    %v573 = vld [vmem:[#allocation11 + $0xc0] sm:$0xff]
    %v574 = vld [vmem:[#allocation11 + $0xc8] sm:$0xff]
    %v575 = vld [vmem:[#allocation11 + $0xd0] sm:$0xff]
    %v576 = vld [vmem:[#allocation11 + $0xd8] sm:$0xff]
    %v577 = vld [vmem:[#allocation11 + $0xe0] sm:$0xff]
    %v578 = vld [vmem:[#allocation11 + $0xe8] sm:$0xff]
    %v579 = vld [vmem:[#allocation11 + $0xf0] sm:$0xff]
    %v580 = vld [vmem:[#allocation11 + $0xf8] sm:$0xff]
    %v581 = vld [vmem:[#allocation11 + $0x100] sm:$0xff]
    %v582 = vld [vmem:[#allocation11 + $0x108] sm:$0xff]
    %v583 = vld [vmem:[#allocation11 + $0x110] sm:$0xff]
    %v584 = vld [vmem:[#allocation11 + $0x118] sm:$0xff]
    %v585 = vld [vmem:[#allocation11 + $0x120] sm:$0xff]
    %v586 = vld [vmem:[#allocation11 + $0x128] sm:$0xff]
    %v587 = vld [vmem:[#allocation11 + $0x130] sm:$0xff]
    %v588 = vld [vmem:[#allocation11 + $0x138] sm:$0xff]
    %v589 = vld [vmem:[#allocation11 + $0x140] sm:$0xff]
    %v590 = vld [vmem:[#allocation11 + $0x148] sm:$0xff]
    %v591 = vld [vmem:[#allocation11 + $0x150] sm:$0xff]
    %v592 = vld [vmem:[#allocation11 + $0x158] sm:$0xff]
    %v593 = vld [vmem:[#allocation11 + $0x160] sm:$0xff]
    %v594 = vld [vmem:[#allocation11 + $0x168] sm:$0xff]
    %v595 = vld [vmem:[#allocation11 + $0x170] sm:$0xff]
    %v596 = vld [vmem:[#allocation11 + $0x178] sm:$0xff]
    %v597 = vld [vmem:[#allocation11 + $0x180] sm:$0xff]
    %v598 = vld [vmem:[#allocation11 + $0x188] sm:$0xff]
    %v599 = vld [vmem:[#allocation11 + $0x190] sm:$0xff]
    %v600 = vld [vmem:[#allocation11 + $0x198] sm:$0xff]
    %v601 = vld [vmem:[#allocation11 + $0x1a0] sm:$0xff]
    %v602 = vld [vmem:[#allocation11 + $0x1a8] sm:$0xff]
    %v603 = vld [vmem:[#allocation11 + $0x1b0] sm:$0xff]
    %v604 = vld [vmem:[#allocation11 + $0x1b8] sm:$0xff]
    %v605 = vld [vmem:[#allocation11 + $0x1c0] sm:$0xff]
    %v606 = vld [vmem:[#allocation11 + $0x1c8] sm:$0xff]
    %v607 = vld [vmem:[#allocation11 + $0x1d0] sm:$0xff]
    %v608 = vld [vmem:[#allocation11 + $0x1d8] sm:$0xff]
    %v609 = vld [vmem:[#allocation11 + $0x1e0] sm:$0xff]
    %v610 = vld [vmem:[#allocation11 + $0x1e8] sm:$0xff]
    %v611 = vld [vmem:[#allocation11 + $0x1f0] sm:$0xff]
    %v612 = vld [vmem:[#allocation11 + $0x1f8] sm:$0xff]
    %v613 = vld [vmem:[#allocation2] sm:$0xff]
    %v614 = vld [vmem:[#allocation3] sm:$0xff]
    %v615 = vld [vmem:[#allocation4] sm:$0xff]
    %v616 = vld [vmem:[#allocation4 + $0x8] sm:$0xff]
    %v617 = vld [vmem:[#allocation4 + $0x10] sm:$0xff]
    %v618 = vld [vmem:[#allocation4 + $0x18] sm:$0xff]
    %619 = vmatprep.subr.mxu0 %v550
    %620 = vmatpush1.msra.mxu0 %v549
    %621 = vmatprep.subr.mxu0 %v554
    %622 = vmatpush1.msra.mxu0 %v553
    %623 = vmatprep.subr.mxu0 %v558
    %624 = vmatpush1.msra.mxu0 %v557
    %625 = vmatprep.subr.mxu0 %v562
    %626 = vmatpush1.msra.mxu0 %v561
    %627 = vmatprep.subr.mxu0 %v566
    %628 = vmatpush1.msra.mxu0 %v565
    %629 = vmatprep.subr.mxu0 %v570
    %630 = vmatpush1.msra.mxu0 %v569
    %631 = vmatprep.subr.mxu0 %v574
    %632 = vmatpush1.msra.mxu0 %v573
    %633 = vmatprep.subr.mxu0 %v578
    %634 = vmatpush1.msra.mxu0 %v577
    %635 = vmatprep.subr.mxu0 %v582
    %636 = vmatpush1.msra.mxu0 %v581
    %637 = vmatprep.subr.mxu0 %v586
    %638 = vmatpush1.msra.mxu0 %v585
    %639 = vmatprep.subr.mxu0 %v590
    %640 = vmatpush1.msra.mxu0 %v589
    %641 = vmatprep.subr.mxu0 %v594
    %642 = vmatpush1.msra.mxu0 %v593
    %643 = vmatprep.subr.mxu0 %v598
    %644 = vmatpush1.msra.mxu0 %v597
    %645 = vmatprep.subr.mxu0 %v602
    %646 = vmatpush1.msra.mxu0 %v601
    %647 = vmatprep.subr.mxu0 %v606
    %648 = vmatpush1.msra.mxu0 %v605
    %649 = vmatprep.subr.mxu0 %v610
    %650 = vmatpush1.msra.mxu0 %v609
    %651 = vmatprep.subr.mxu0 0.0
    %652 = vmatpush1.msra.mxu0 0.0
    %653 = vmatprep.subr.mxu0 0.0
    %654 = vmatpush1.msra.mxu0 0.0
    %655 = vmatprep.subr.mxu0 0.0
    %656 = vmatpush1.msra.mxu0 0.0
    %657 = vmatprep.subr.mxu0 0.0
    %658 = vmatpush1.msra.mxu0 0.0
    %659 = vmatprep.subr.mxu0 0.0
    %660 = vmatpush1.msra.mxu0 0.0
    %661 = vmatprep.subr.mxu0 0.0
    %662 = vmatpush1.msra.mxu0 0.0
    %663 = vmatprep.subr.mxu0 0.0
    %664 = vmatpush1.msra.mxu0 0.0
    %665 = vmatprep.subr.mxu0 0.0
    %666 = vmatpush1.msra.mxu0 0.0
    %667 = vmatprep.subr.mxu0 0.0
    %668 = vmatpush1.msra.mxu0 0.0
    %669 = vmatprep.subr.mxu0 0.0
    %670 = vmatpush1.msra.mxu0 0.0
    %671 = vmatprep.subr.mxu0 0.0
    %672 = vmatpush1.msra.mxu0 0.0
    %673 = vmatprep.subr.mxu0 0.0
    %674 = vmatpush1.msra.mxu0 0.0
    %675 = vmatprep.subr.mxu0 0.0
    %676 = vmatpush1.msra.mxu0 0.0
    %677 = vmatprep.subr.mxu0 0.0
    %678 = vmatpush1.msra.mxu0 0.0
    %679 = vmatprep.subr.mxu0 0.0
    %680 = vmatpush1.msra.mxu0 0.0
    %681 = vmatprep.subr.mxu0 0.0
    %682 = vmatpush1.msra.mxu0 0.0
    %683 = vmatprep.mubr.f32.mxu0 0.0
    %684 = vmatmul.mubr.f32.gmra.mrb[0].mxu0 %v613
    %v685 = vpop.f32.mrb[0].mxu0
    %v686 = vadd.f32 0.0, %v685
    %v687 = vpop.f32.mrb[0].mxu0
    %v688 = vadd.f32 0.0, %v687
    %689 = vdwg.mxu0
    %690 = vmatprep.subr.mxu0 %v552
    %691 = vmatpush1.msra.mxu0 %v551
    %692 = vmatprep.subr.mxu0 %v556
    %693 = vmatpush1.msra.mxu0 %v555
    %694 = vmatprep.subr.mxu0 %v560
    %695 = vmatpush1.msra.mxu0 %v559
    %696 = vmatprep.subr.mxu0 %v564
    %697 = vmatpush1.msra.mxu0 %v563
    %698 = vmatprep.subr.mxu0 %v568
    %699 = vmatpush1.msra.mxu0 %v567
    %700 = vmatprep.subr.mxu0 %v572
    %701 = vmatpush1.msra.mxu0 %v571
    %702 = vmatprep.subr.mxu0 %v576
    %703 = vmatpush1.msra.mxu0 %v575
    %704 = vmatprep.subr.mxu0 %v580
    %705 = vmatpush1.msra.mxu0 %v579
    %706 = vmatprep.subr.mxu0 %v584
    %707 = vmatpush1.msra.mxu0 %v583
    %708 = vmatprep.subr.mxu0 %v588
    %709 = vmatpush1.msra.mxu0 %v587
    %710 = vmatprep.subr.mxu0 %v592
    %711 = vmatpush1.msra.mxu0 %v591
    %712 = vmatprep.subr.mxu0 %v596
    %713 = vmatpush1.msra.mxu0 %v595
    %714 = vmatprep.subr.mxu0 %v600
    %715 = vmatpush1.msra.mxu0 %v599
    %716 = vmatprep.subr.mxu0 %v604
    %717 = vmatpush1.msra.mxu0 %v603
    %718 = vmatprep.subr.mxu0 %v608
    %719 = vmatpush1.msra.mxu0 %v607
    %720 = vmatprep.subr.mxu0 %v612
    %721 = vmatpush1.msra.mxu0 %v611
    %722 = vmatprep.subr.mxu0 0.0
    %723 = vmatpush1.msra.mxu0 0.0
    %724 = vmatprep.subr.mxu0 0.0
    %725 = vmatpush1.msra.mxu0 0.0
    %726 = vmatprep.subr.mxu0 0.0
    %727 = vmatpush1.msra.mxu0 0.0
    %728 = vmatprep.subr.mxu0 0.0
    %729 = vmatpush1.msra.mxu0 0.0
    %730 = vmatprep.subr.mxu0 0.0
    %731 = vmatpush1.msra.mxu0 0.0
    %732 = vmatprep.subr.mxu0 0.0
    %733 = vmatpush1.msra.mxu0 0.0
    %734 = vmatprep.subr.mxu0 0.0
    %735 = vmatpush1.msra.mxu0 0.0
    %736 = vmatprep.subr.mxu0 0.0
    %737 = vmatpush1.msra.mxu0 0.0
    %738 = vmatprep.subr.mxu0 0.0
    %739 = vmatpush1.msra.mxu0 0.0
    %740 = vmatprep.subr.mxu0 0.0
    %741 = vmatpush1.msra.mxu0 0.0
    %742 = vmatprep.subr.mxu0 0.0
    %743 = vmatpush1.msra.mxu0 0.0
    %744 = vmatprep.subr.mxu0 0.0
    %745 = vmatpush1.msra.mxu0 0.0
    %746 = vmatprep.subr.mxu0 0.0
    %747 = vmatpush1.msra.mxu0 0.0
    %748 = vmatprep.subr.mxu0 0.0
    %749 = vmatpush1.msra.mxu0 0.0
    %750 = vmatprep.subr.mxu0 0.0
    %751 = vmatpush1.msra.mxu0 0.0
    %752 = vmatprep.subr.mxu0 0.0
    %753 = vmatpush1.msra.mxu0 0.0
    %754 = vmatprep.mubr.f32.mxu0 0.0
    %755 = vmatmul.mubr.f32.gmra.mrb[0].mxu0 %v613
    %v756 = vpop.f32.mrb[0].mxu0
    %v757 = vadd.f32 0.0, %v756
    %v758 = vpop.f32.mrb[0].mxu0
    %v759 = vadd.f32 0.0, %v758
    %760 = vdwg.mxu0
    %v761 = vadd.f32 %v615, %v686
    %v762 = vadd.f32 %v616, %v688
    %v763 = vadd.f32 %v617, %v757
    %v764 = vadd.f32 %v618, %v759
    %v765 = vxor.u32 %v761, 2147483648
    %v766 = vmul.f32 %v765, 1.442695
    %v767 = vpow.pop %v766
    %v768 = vadd.f32 %v767, 1.0
    %v769 = vrcp.pop %v768
    %v770 = vmul.f32 1.0, %v769
    %v771 = vxor.u32 %v762, 2147483648
    %v772 = vmul.f32 %v771, 1.442695
    %v773 = vpow.pop %v772
    %v774 = vadd.f32 %v773, 1.0
    %v775 = vrcp.pop %v774
    %v776 = vmul.f32 1.0, %v775
    %v777 = vtanh.pop %v763
    %v778 = vxor.u32 %v764, 2147483648
    %v779 = vmul.f32 %v778, 1.442695
    %v780 = vpow.pop %v779
    %v781 = vadd.f32 %v780, 1.0
    %v782 = vrcp.pop %v781
    %v783 = vmul.f32 1.0, %v782
    %v784 = vmul.f32 %v776, %v614
    %v785 = vmul.f32 %v770, %v777
    %v786 = vadd.f32 %v784, %v785
    %v787 = vtanh.pop %v786
    %v788 = vmul.f32 %v783, %v787
    %789 = vst [vmem:[#allocation5] sm:$0xff] %v788
    %s790 = scalar_lea.vmem [#allocation4], 32
    %v791 = vld [vmem:[%s790] sm:$0xff]
    %v792 = vld [vmem:[%s790 + $0x8] sm:$0xff]
    %v793 = vld [vmem:[%s790 + $0x10] sm:$0xff]
    %v794 = vld [vmem:[%s790 + $0x18] sm:$0xff]
    %795 = vmatprep.subr.mxu0 %v550
    %796 = vmatpush1.msra.mxu0 %v549
    %797 = vmatprep.subr.mxu0 %v554
    %798 = vmatpush1.msra.mxu0 %v553
    %799 = vmatprep.subr.mxu0 %v558
    %800 = vmatpush1.msra.mxu0 %v557
    %801 = vmatprep.subr.mxu0 %v562
    %802 = vmatpush1.msra.mxu0 %v561
    %803 = vmatprep.subr.mxu0 %v566
    %804 = vmatpush1.msra.mxu0 %v565
    %805 = vmatprep.subr.mxu0 %v570
    %806 = vmatpush1.msra.mxu0 %v569
    %807 = vmatprep.subr.mxu0 %v574
    %808 = vmatpush1.msra.mxu0 %v573
    %809 = vmatprep.subr.mxu0 %v578
    %810 = vmatpush1.msra.mxu0 %v577
    %811 = vmatprep.subr.mxu0 %v582
    %812 = vmatpush1.msra.mxu0 %v581
    %813 = vmatprep.subr.mxu0 %v586
    %814 = vmatpush1.msra.mxu0 %v585
    %815 = vmatprep.subr.mxu0 %v590
    %816 = vmatpush1.msra.mxu0 %v589
    %817 = vmatprep.subr.mxu0 %v594
    %818 = vmatpush1.msra.mxu0 %v593
    %819 = vmatprep.subr.mxu0 %v598
    %820 = vmatpush1.msra.mxu0 %v597
    %821 = vmatprep.subr.mxu0 %v602
    %822 = vmatpush1.msra.mxu0 %v601
    %823 = vmatprep.subr.mxu0 %v606
    %824 = vmatpush1.msra.mxu0 %v605
    %825 = vmatprep.subr.mxu0 %v610
    %826 = vmatpush1.msra.mxu0 %v609
    %827 = vmatprep.subr.mxu0 0.0
    %828 = vmatpush1.msra.mxu0 0.0
    %829 = vmatprep.subr.mxu0 0.0
    %830 = vmatpush1.msra.mxu0 0.0
    %831 = vmatprep.subr.mxu0 0.0
    %832 = vmatpush1.msra.mxu0 0.0
    %833 = vmatprep.subr.mxu0 0.0
    %834 = vmatpush1.msra.mxu0 0.0
    %835 = vmatprep.subr.mxu0 0.0
    %836 = vmatpush1.msra.mxu0 0.0
    %837 = vmatprep.subr.mxu0 0.0
    %838 = vmatpush1.msra.mxu0 0.0
    %839 = vmatprep.subr.mxu0 0.0
    %840 = vmatpush1.msra.mxu0 0.0
    %841 = vmatprep.subr.mxu0 0.0
    %842 = vmatpush1.msra.mxu0 0.0
    %843 = vmatprep.subr.mxu0 0.0
    %844 = vmatpush1.msra.mxu0 0.0
    %845 = vmatprep.subr.mxu0 0.0
    %846 = vmatpush1.msra.mxu0 0.0
    %847 = vmatprep.subr.mxu0 0.0
    %848 = vmatpush1.msra.mxu0 0.0
    %849 = vmatprep.subr.mxu0 0.0
    %850 = vmatpush1.msra.mxu0 0.0
    %851 = vmatprep.subr.mxu0 0.0
    %852 = vmatpush1.msra.mxu0 0.0
    %853 = vmatprep.subr.mxu0 0.0
    %854 = vmatpush1.msra.mxu0 0.0
    %855 = vmatprep.subr.mxu0 0.0
    %856 = vmatpush1.msra.mxu0 0.0
    %857 = vmatprep.subr.mxu0 0.0
    %858 = vmatpush1.msra.mxu0 0.0
    %859 = vmatprep.mubr.f32.mxu0 0.0
    %860 = vmatmul.mubr.f32.gmra.mrb[0].mxu0 %v788
    %v861 = vpop.f32.mrb[0].mxu0
    %v862 = vadd.f32 0.0, %v861
    %v863 = vpop.f32.mrb[0].mxu0
    %v864 = vadd.f32 0.0, %v863
    %865 = vdwg.mxu0
    %866 = vmatprep.subr.mxu0 %v552
    %867 = vmatpush1.msra.mxu0 %v551
    %868 = vmatprep.subr.mxu0 %v556
    %869 = vmatpush1.msra.mxu0 %v555
    %870 = vmatprep.subr.mxu0 %v560
    %871 = vmatpush1.msra.mxu0 %v559
    %872 = vmatprep.subr.mxu0 %v564
    %873 = vmatpush1.msra.mxu0 %v563
    %874 = vmatprep.subr.mxu0 %v568
    %875 = vmatpush1.msra.mxu0 %v567
    %876 = vmatprep.subr.mxu0 %v572
    %877 = vmatpush1.msra.mxu0 %v571
    %878 = vmatprep.subr.mxu0 %v576
    %879 = vmatpush1.msra.mxu0 %v575
    %880 = vmatprep.subr.mxu0 %v580
    %881 = vmatpush1.msra.mxu0 %v579
    %882 = vmatprep.subr.mxu0 %v584
    %883 = vmatpush1.msra.mxu0 %v583
    %884 = vmatprep.subr.mxu0 %v588
    %885 = vmatpush1.msra.mxu0 %v587
    %886 = vmatprep.subr.mxu0 %v592
    %887 = vmatpush1.msra.mxu0 %v591
    %888 = vmatprep.subr.mxu0 %v596
    %889 = vmatpush1.msra.mxu0 %v595
    %890 = vmatprep.subr.mxu0 %v600
    %891 = vmatpush1.msra.mxu0 %v599
    %892 = vmatprep.subr.mxu0 %v604
    %893 = vmatpush1.msra.mxu0 %v603
    %894 = vmatprep.subr.mxu0 %v608
    %895 = vmatpush1.msra.mxu0 %v607
    %896 = vmatprep.subr.mxu0 %v612
    %897 = vmatpush1.msra.mxu0 %v611
    %898 = vmatprep.subr.mxu0 0.0
    %899 = vmatpush1.msra.mxu0 0.0
    %900 = vmatprep.subr.mxu0 0.0
    %901 = vmatpush1.msra.mxu0 0.0
    %902 = vmatprep.subr.mxu0 0.0
    %903 = vmatpush1.msra.mxu0 0.0
    %904 = vmatprep.subr.mxu0 0.0
    %905 = vmatpush1.msra.mxu0 0.0
    %906 = vmatprep.subr.mxu0 0.0
    %907 = vmatpush1.msra.mxu0 0.0
    %908 = vmatprep.subr.mxu0 0.0
    %909 = vmatpush1.msra.mxu0 0.0
    %910 = vmatprep.subr.mxu0 0.0
    %911 = vmatpush1.msra.mxu0 0.0
    %912 = vmatprep.subr.mxu0 0.0
    %913 = vmatpush1.msra.mxu0 0.0
    %914 = vmatprep.subr.mxu0 0.0
    %915 = vmatpush1.msra.mxu0 0.0
    %916 = vmatprep.subr.mxu0 0.0
    %917 = vmatpush1.msra.mxu0 0.0
    %918 = vmatprep.subr.mxu0 0.0
    %919 = vmatpush1.msra.mxu0 0.0
    %920 = vmatprep.subr.mxu0 0.0
    %921 = vmatpush1.msra.mxu0 0.0
    %922 = vmatprep.subr.mxu0 0.0
    %923 = vmatpush1.msra.mxu0 0.0
    %924 = vmatprep.subr.mxu0 0.0
    %925 = vmatpush1.msra.mxu0 0.0
    %926 = vmatprep.subr.mxu0 0.0
    %927 = vmatpush1.msra.mxu0 0.0
    %928 = vmatprep.subr.mxu0 0.0
    %929 = vmatpush1.msra.mxu0 0.0
    %930 = vmatprep.mubr.f32.mxu0 0.0
    %931 = vmatmul.mubr.f32.gmra.mrb[0].mxu0 %v788
    %v932 = vpop.f32.mrb[0].mxu0
    %v933 = vadd.f32 0.0, %v932
    %v934 = vpop.f32.mrb[0].mxu0
    %v935 = vadd.f32 0.0, %v934
    %936 = vdwg.mxu0
    %v937 = vadd.f32 %v791, %v862
    %v938 = vadd.f32 %v792, %v864
    %v939 = vadd.f32 %v793, %v933
    %v940 = vadd.f32 %v794, %v935
    %v941 = vxor.u32 %v937, 2147483648
    %v942 = vmul.f32 %v941, 1.442695
    %v943 = vpow.pop %v942
    %v944 = vadd.f32 %v943, 1.0
    %v945 = vrcp.pop %v944
    %v946 = vmul.f32 1.0, %v945
    %v947 = vxor.u32 %v938, 2147483648
    %v948 = vmul.f32 %v947, 1.442695
    %v949 = vpow.pop %v948
    %v950 = vadd.f32 %v949, 1.0
    %v951 = vrcp.pop %v950
    %v952 = vmul.f32 1.0, %v951
    %v953 = vtanh.pop %v939
    %v954 = vxor.u32 %v940, 2147483648
    %v955 = vmul.f32 %v954, 1.442695
    %v956 = vpow.pop %v955
    %v957 = vadd.f32 %v956, 1.0
    %v958 = vrcp.pop %v957
    %v959 = vmul.f32 1.0, %v958
    %v960 = vmul.f32 %v952, %v786
    %v961 = vmul.f32 %v946, %v953
    %v962 = vadd.f32 %v960, %v961
    %v963 = vtanh.pop %v962
    %v964 = vmul.f32 %v959, %v963
    %s965 = scalar_lea.vmem [#allocation5], 8
    %966 = vst [vmem:[%s965] sm:$0xff] %v964
    %s967 = scalar_lea.vmem [#allocation4], 64
    %v968 = vld [vmem:[%s967] sm:$0xff]
    %v969 = vld [vmem:[%s967 + $0x8] sm:$0xff]
    %v970 = vld [vmem:[%s967 + $0x10] sm:$0xff]
    %v971 = vld [vmem:[%s967 + $0x18] sm:$0xff]
    %972 = vmatprep.subr.mxu0 %v550
    %973 = vmatpush1.msra.mxu0 %v549
    %974 = vmatprep.subr.mxu0 %v554
    %975 = vmatpush1.msra.mxu0 %v553
    %976 = vmatprep.subr.mxu0 %v558
    %977 = vmatpush1.msra.mxu0 %v557
    %978 = vmatprep.subr.mxu0 %v562
    %979 = vmatpush1.msra.mxu0 %v561
    %980 = vmatprep.subr.mxu0 %v566
    %981 = vmatpush1.msra.mxu0 %v565
    %982 = vmatprep.subr.mxu0 %v570
    %983 = vmatpush1.msra.mxu0 %v569
    %984 = vmatprep.subr.mxu0 %v574
    %985 = vmatpush1.msra.mxu0 %v573
    %986 = vmatprep.subr.mxu0 %v578
    %987 = vmatpush1.msra.mxu0 %v577
    %988 = vmatprep.subr.mxu0 %v582
    %989 = vmatpush1.msra.mxu0 %v581
    %990 = vmatprep.subr.mxu0 %v586
    %991 = vmatpush1.msra.mxu0 %v585
    %992 = vmatprep.subr.mxu0 %v590
    %993 = vmatpush1.msra.mxu0 %v589
    %994 = vmatprep.subr.mxu0 %v594
    %995 = vmatpush1.msra.mxu0 %v593
    %996 = vmatprep.subr.mxu0 %v598
    %997 = vmatpush1.msra.mxu0 %v597
    %998 = vmatprep.subr.mxu0 %v602
    %999 = vmatpush1.msra.mxu0 %v601
    %1000 = vmatprep.subr.mxu0 %v606
    %1001 = vmatpush1.msra.mxu0 %v605
    %1002 = vmatprep.subr.mxu0 %v610
    %1003 = vmatpush1.msra.mxu0 %v609
    %1004 = vmatprep.subr.mxu0 0.0
    %1005 = vmatpush1.msra.mxu0 0.0
    %1006 = vmatprep.subr.mxu0 0.0
    %1007 = vmatpush1.msra.mxu0 0.0
    %1008 = vmatprep.subr.mxu0 0.0
    %1009 = vmatpush1.msra.mxu0 0.0
    %1010 = vmatprep.subr.mxu0 0.0
    %1011 = vmatpush1.msra.mxu0 0.0
    %1012 = vmatprep.subr.mxu0 0.0
    %1013 = vmatpush1.msra.mxu0 0.0
    %1014 = vmatprep.subr.mxu0 0.0
    %1015 = vmatpush1.msra.mxu0 0.0
    %1016 = vmatprep.subr.mxu0 0.0
    %1017 = vmatpush1.msra.mxu0 0.0
    %1018 = vmatprep.subr.mxu0 0.0
    %1019 = vmatpush1.msra.mxu0 0.0
    %1020 = vmatprep.subr.mxu0 0.0
    %1021 = vmatpush1.msra.mxu0 0.0
    %1022 = vmatprep.subr.mxu0 0.0
    %1023 = vmatpush1.msra.mxu0 0.0
    %1024 = vmatprep.subr.mxu0 0.0
    %1025 = vmatpush1.msra.mxu0 0.0
    %1026 = vmatprep.subr.mxu0 0.0
    %1027 = vmatpush1.msra.mxu0 0.0
    %1028 = vmatprep.subr.mxu0 0.0
    %1029 = vmatpush1.msra.mxu0 0.0
    %1030 = vmatprep.subr.mxu0 0.0
    %1031 = vmatpush1.msra.mxu0 0.0
    %1032 = vmatprep.subr.mxu0 0.0
    %1033 = vmatpush1.msra.mxu0 0.0
    %1034 = vmatprep.subr.mxu0 0.0
    %1035 = vmatpush1.msra.mxu0 0.0
    %1036 = vmatprep.mubr.f32.mxu0 0.0
    %1037 = vmatmul.mubr.f32.gmra.mrb[0].mxu0 %v964
    %v1038 = vpop.f32.mrb[0].mxu0
    %v1039 = vadd.f32 0.0, %v1038
    %v1040 = vpop.f32.mrb[0].mxu0
    %v1041 = vadd.f32 0.0, %v1040
    %1042 = vdwg.mxu0
    %1043 = vmatprep.subr.mxu0 %v552
    %1044 = vmatpush1.msra.mxu0 %v551
    %1045 = vmatprep.subr.mxu0 %v556
    %1046 = vmatpush1.msra.mxu0 %v555
    %1047 = vmatprep.subr.mxu0 %v560
    %1048 = vmatpush1.msra.mxu0 %v559
    %1049 = vmatprep.subr.mxu0 %v564
    %1050 = vmatpush1.msra.mxu0 %v563
    %1051 = vmatprep.subr.mxu0 %v568
    %1052 = vmatpush1.msra.mxu0 %v567
    %1053 = vmatprep.subr.mxu0 %v572
    %1054 = vmatpush1.msra.mxu0 %v571
    %1055 = vmatprep.subr.mxu0 %v576
    %1056 = vmatpush1.msra.mxu0 %v575
    %1057 = vmatprep.subr.mxu0 %v580
    %1058 = vmatpush1.msra.mxu0 %v579
    %1059 = vmatprep.subr.mxu0 %v584
    %1060 = vmatpush1.msra.mxu0 %v583
    %1061 = vmatprep.subr.mxu0 %v588
    %1062 = vmatpush1.msra.mxu0 %v587
    %1063 = vmatprep.subr.mxu0 %v592
    %1064 = vmatpush1.msra.mxu0 %v591
    %1065 = vmatprep.subr.mxu0 %v596
    %1066 = vmatpush1.msra.mxu0 %v595
    %1067 = vmatprep.subr.mxu0 %v600
    %1068 = vmatpush1.msra.mxu0 %v599
    %1069 = vmatprep.subr.mxu0 %v604
    %1070 = vmatpush1.msra.mxu0 %v603
    %1071 = vmatprep.subr.mxu0 %v608
    %1072 = vmatpush1.msra.mxu0 %v607
    %1073 = vmatprep.subr.mxu0 %v612
    %1074 = vmatpush1.msra.mxu0 %v611
    %1075 = vmatprep.subr.mxu0 0.0
    %1076 = vmatpush1.msra.mxu0 0.0
    %1077 = vmatprep.subr.mxu0 0.0
    %1078 = vmatpush1.msra.mxu0 0.0
    %1079 = vmatprep.subr.mxu0 0.0
    %1080 = vmatpush1.msra.mxu0 0.0
    %1081 = vmatprep.subr.mxu0 0.0
    %1082 = vmatpush1.msra.mxu0 0.0
    %1083 = vmatprep.subr.mxu0 0.0
    %1084 = vmatpush1.msra.mxu0 0.0
    %1085 = vmatprep.subr.mxu0 0.0
    %1086 = vmatpush1.msra.mxu0 0.0
    %1087 = vmatprep.subr.mxu0 0.0
    %1088 = vmatpush1.msra.mxu0 0.0
    %1089 = vmatprep.subr.mxu0 0.0
    %1090 = vmatpush1.msra.mxu0 0.0
    %1091 = vmatprep.subr.mxu0 0.0
    %1092 = vmatpush1.msra.mxu0 0.0
    %1093 = vmatprep.subr.mxu0 0.0
    %1094 = vmatpush1.msra.mxu0 0.0
    %1095 = vmatprep.subr.mxu0 0.0
    %1096 = vmatpush1.msra.mxu0 0.0
    %1097 = vmatprep.subr.mxu0 0.0
    %1098 = vmatpush1.msra.mxu0 0.0
    %1099 = vmatprep.subr.mxu0 0.0
    %1100 = vmatpush1.msra.mxu0 0.0
    %1101 = vmatprep.subr.mxu0 0.0
    %1102 = vmatpush1.msra.mxu0 0.0
    %1103 = vmatprep.subr.mxu0 0.0
    %1104 = vmatpush1.msra.mxu0 0.0
    %1105 = vmatprep.subr.mxu0 0.0
    %1106 = vmatpush1.msra.mxu0 0.0
    %1107 = vmatprep.mubr.f32.mxu0 0.0
    %1108 = vmatmul.mubr.f32.gmra.mrb[0].mxu0 %v964
    %v1109 = vpop.f32.mrb[0].mxu0
    %v1110 = vadd.f32 0.0, %v1109
    %v1111 = vpop.f32.mrb[0].mxu0
    %v1112 = vadd.f32 0.0, %v1111
    %1113 = vdwg.mxu0
    %v1114 = vadd.f32 %v968, %v1039
    %v1115 = vadd.f32 %v969, %v1041
    %v1116 = vadd.f32 %v970, %v1110
    %v1117 = vadd.f32 %v971, %v1112
    %v1118 = vxor.u32 %v1114, 2147483648
    %v1119 = vmul.f32 %v1118, 1.442695
    %v1120 = vpow.pop %v1119
    %v1121 = vadd.f32 %v1120, 1.0
    %v1122 = vrcp.pop %v1121
    %v1123 = vmul.f32 1.0, %v1122
    %v1124 = vxor.u32 %v1115, 2147483648
    %v1125 = vmul.f32 %v1124, 1.442695
    %v1126 = vpow.pop %v1125
    %v1127 = vadd.f32 %v1126, 1.0
    %v1128 = vrcp.pop %v1127
    %v1129 = vmul.f32 1.0, %v1128
    %v1130 = vtanh.pop %v1116
    %v1131 = vxor.u32 %v1117, 2147483648
    %v1132 = vmul.f32 %v1131, 1.442695
    %v1133 = vpow.pop %v1132
    %v1134 = vadd.f32 %v1133, 1.0
    %v1135 = vrcp.pop %v1134
    %v1136 = vmul.f32 1.0, %v1135
    %v1137 = vmul.f32 %v1129, %v962
    %v1138 = vmul.f32 %v1123, %v1130
    %v1139 = vadd.f32 %v1137, %v1138
    %v1140 = vtanh.pop %v1139
    %v1141 = vmul.f32 %v1136, %v1140
    %s1142 = scalar_lea.vmem [#allocation5], 16
    %1143 = vst [vmem:[%s1142] sm:$0xff] %v1141
    %s1144 = scalar_lea.vmem [#allocation4], 96
    %v1145 = vld [vmem:[%s1144] sm:$0xff]
    %v1146 = vld [vmem:[%s1144 + $0x8] sm:$0xff]
    %v1147 = vld [vmem:[%s1144 + $0x10] sm:$0xff]
    %v1148 = vld [vmem:[%s1144 + $0x18] sm:$0xff]
    %1149 = vmatprep.subr.mxu0 %v550
    %1150 = vmatpush1.msra.mxu0 %v549
    %1151 = vmatprep.subr.mxu0 %v554
    %1152 = vmatpush1.msra.mxu0 %v553
    %1153 = vmatprep.subr.mxu0 %v558
    %1154 = vmatpush1.msra.mxu0 %v557
    %1155 = vmatprep.subr.mxu0 %v562
    %1156 = vmatpush1.msra.mxu0 %v561
    %1157 = vmatprep.subr.mxu0 %v566
    %1158 = vmatpush1.msra.mxu0 %v565
    %1159 = vmatprep.subr.mxu0 %v570
    %1160 = vmatpush1.msra.mxu0 %v569
    %1161 = vmatprep.subr.mxu0 %v574
    %1162 = vmatpush1.msra.mxu0 %v573
    %1163 = vmatprep.subr.mxu0 %v578
    %1164 = vmatpush1.msra.mxu0 %v577
    %1165 = vmatprep.subr.mxu0 %v582
    %1166 = vmatpush1.msra.mxu0 %v581
    %1167 = vmatprep.subr.mxu0 %v586
    %1168 = vmatpush1.msra.mxu0 %v585
    %1169 = vmatprep.subr.mxu0 %v590
    %1170 = vmatpush1.msra.mxu0 %v589
    %1171 = vmatprep.subr.mxu0 %v594
    %1172 = vmatpush1.msra.mxu0 %v593
    %1173 = vmatprep.subr.mxu0 %v598
    %1174 = vmatpush1.msra.mxu0 %v597
    %1175 = vmatprep.subr.mxu0 %v602
    %1176 = vmatpush1.msra.mxu0 %v601
    %1177 = vmatprep.subr.mxu0 %v606
    %1178 = vmatpush1.msra.mxu0 %v605
    %1179 = vmatprep.subr.mxu0 %v610
    %1180 = vmatpush1.msra.mxu0 %v609
    %1181 = vmatprep.subr.mxu0 0.0
    %1182 = vmatpush1.msra.mxu0 0.0
    %1183 = vmatprep.subr.mxu0 0.0
    %1184 = vmatpush1.msra.mxu0 0.0
    %1185 = vmatprep.subr.mxu0 0.0
    %1186 = vmatpush1.msra.mxu0 0.0
    %1187 = vmatprep.subr.mxu0 0.0
    %1188 = vmatpush1.msra.mxu0 0.0
    %1189 = vmatprep.subr.mxu0 0.0
    %1190 = vmatpush1.msra.mxu0 0.0
    %1191 = vmatprep.subr.mxu0 0.0
    %1192 = vmatpush1.msra.mxu0 0.0
    %1193 = vmatprep.subr.mxu0 0.0
    %1194 = vmatpush1.msra.mxu0 0.0
    %1195 = vmatprep.subr.mxu0 0.0
    %1196 = vmatpush1.msra.mxu0 0.0
    %1197 = vmatprep.subr.mxu0 0.0
    %1198 = vmatpush1.msra.mxu0 0.0
    %1199 = vmatprep.subr.mxu0 0.0
    %1200 = vmatpush1.msra.mxu0 0.0
    %1201 = vmatprep.subr.mxu0 0.0
    %1202 = vmatpush1.msra.mxu0 0.0
    %1203 = vmatprep.subr.mxu0 0.0
    %1204 = vmatpush1.msra.mxu0 0.0
    %1205 = vmatprep.subr.mxu0 0.0
    %1206 = vmatpush1.msra.mxu0 0.0
    %1207 = vmatprep.subr.mxu0 0.0
    %1208 = vmatpush1.msra.mxu0 0.0
    %1209 = vmatprep.subr.mxu0 0.0
    %1210 = vmatpush1.msra.mxu0 0.0
    %1211 = vmatprep.subr.mxu0 0.0
    %1212 = vmatpush1.msra.mxu0 0.0
    %1213 = vmatprep.mubr.f32.mxu0 0.0
    %1214 = vmatmul.mubr.f32.gmra.mrb[0].mxu0 %v1141
    %v1215 = vpop.f32.mrb[0].mxu0
    %v1216 = vadd.f32 0.0, %v1215
    %v1217 = vpop.f32.mrb[0].mxu0
    %v1218 = vadd.f32 0.0, %v1217
    %1219 = vdwg.mxu0
    %1220 = vmatprep.subr.mxu0 %v552
    %1221 = vmatpush1.msra.mxu0 %v551
    %1222 = vmatprep.subr.mxu0 %v556
    %1223 = vmatpush1.msra.mxu0 %v555
    %1224 = vmatprep.subr.mxu0 %v560
    %1225 = vmatpush1.msra.mxu0 %v559
    %1226 = vmatprep.subr.mxu0 %v564
    %1227 = vmatpush1.msra.mxu0 %v563
    %1228 = vmatprep.subr.mxu0 %v568
    %1229 = vmatpush1.msra.mxu0 %v567
    %1230 = vmatprep.subr.mxu0 %v572
    %1231 = vmatpush1.msra.mxu0 %v571
    %1232 = vmatprep.subr.mxu0 %v576
    %1233 = vmatpush1.msra.mxu0 %v575
    %1234 = vmatprep.subr.mxu0 %v580
    %1235 = vmatpush1.msra.mxu0 %v579
    %1236 = vmatprep.subr.mxu0 %v584
    %1237 = vmatpush1.msra.mxu0 %v583
    %1238 = vmatprep.subr.mxu0 %v588
    %1239 = vmatpush1.msra.mxu0 %v587
    %1240 = vmatprep.subr.mxu0 %v592
    %1241 = vmatpush1.msra.mxu0 %v591
    %1242 = vmatprep.subr.mxu0 %v596
    %1243 = vmatpush1.msra.mxu0 %v595
    %1244 = vmatprep.subr.mxu0 %v600
    %1245 = vmatpush1.msra.mxu0 %v599
    %1246 = vmatprep.subr.mxu0 %v604
    %1247 = vmatpush1.msra.mxu0 %v603
    %1248 = vmatprep.subr.mxu0 %v608
    %1249 = vmatpush1.msra.mxu0 %v607
    %1250 = vmatprep.subr.mxu0 %v612
    %1251 = vmatpush1.msra.mxu0 %v611
    %1252 = vmatprep.subr.mxu0 0.0
    %1253 = vmatpush1.msra.mxu0 0.0
    %1254 = vmatprep.subr.mxu0 0.0
    %1255 = vmatpush1.msra.mxu0 0.0
    %1256 = vmatprep.subr.mxu0 0.0
    %1257 = vmatpush1.msra.mxu0 0.0
    %1258 = vmatprep.subr.mxu0 0.0
    %1259 = vmatpush1.msra.mxu0 0.0
    %1260 = vmatprep.subr.mxu0 0.0
    %1261 = vmatpush1.msra.mxu0 0.0
    %1262 = vmatprep.subr.mxu0 0.0
    %1263 = vmatpush1.msra.mxu0 0.0
    %1264 = vmatprep.subr.mxu0 0.0
    %1265 = vmatpush1.msra.mxu0 0.0
    %1266 = vmatprep.subr.mxu0 0.0
    %1267 = vmatpush1.msra.mxu0 0.0
    %1268 = vmatprep.subr.mxu0 0.0
    %1269 = vmatpush1.msra.mxu0 0.0
    %1270 = vmatprep.subr.mxu0 0.0
    %1271 = vmatpush1.msra.mxu0 0.0
    %1272 = vmatprep.subr.mxu0 0.0
    %1273 = vmatpush1.msra.mxu0 0.0
    %1274 = vmatprep.subr.mxu0 0.0
    %1275 = vmatpush1.msra.mxu0 0.0
    %1276 = vmatprep.subr.mxu0 0.0
    %1277 = vmatpush1.msra.mxu0 0.0
    %1278 = vmatprep.subr.mxu0 0.0
    %1279 = vmatpush1.msra.mxu0 0.0
    %1280 = vmatprep.subr.mxu0 0.0
    %1281 = vmatpush1.msra.mxu0 0.0
    %1282 = vmatprep.subr.mxu0 0.0
    %1283 = vmatpush1.msra.mxu0 0.0
    %1284 = vmatprep.mubr.f32.mxu0 0.0
    %1285 = vmatmul.mubr.f32.gmra.mrb[0].mxu0 %v1141
    %v1286 = vpop.f32.mrb[0].mxu0
    %v1287 = vadd.f32 0.0, %v1286
    %v1288 = vpop.f32.mrb[0].mxu0
    %v1289 = vadd.f32 0.0, %v1288
    %1290 = vdwg.mxu0
    %v1291 = vadd.f32 %v1145, %v1216
    %v1292 = vadd.f32 %v1146, %v1218
    %v1293 = vadd.f32 %v1147, %v1287
    %v1294 = vadd.f32 %v1148, %v1289
    %v1295 = vxor.u32 %v1291, 2147483648
    %v1296 = vmul.f32 %v1295, 1.442695
    %v1297 = vpow.pop %v1296
    %v1298 = vadd.f32 %v1297, 1.0
    %v1299 = vrcp.pop %v1298
    %v1300 = vmul.f32 1.0, %v1299
    %v1301 = vxor.u32 %v1292, 2147483648
    %v1302 = vmul.f32 %v1301, 1.442695
    %v1303 = vpow.pop %v1302
    %v1304 = vadd.f32 %v1303, 1.0
    %v1305 = vrcp.pop %v1304
    %v1306 = vmul.f32 1.0, %v1305
    %v1307 = vtanh.pop %v1293
    %v1308 = vxor.u32 %v1294, 2147483648
    %v1309 = vmul.f32 %v1308, 1.442695
    %v1310 = vpow.pop %v1309
    %v1311 = vadd.f32 %v1310, 1.0
    %v1312 = vrcp.pop %v1311
    %v1313 = vmul.f32 1.0, %v1312
    %v1314 = vmul.f32 %v1306, %v1139
    %v1315 = vmul.f32 %v1300, %v1307
    %v1316 = vadd.f32 %v1314, %v1315
    %v1317 = vtanh.pop %v1316
    %v1318 = vmul.f32 %v1313, %v1317
    %s1319 = scalar_lea.vmem [#allocation5], 24
    %1320 = vst [vmem:[%s1319] sm:$0xff] %v1318
    %s1321 = scalar_lea.vmem [#allocation4], 128
    %v1322 = vld [vmem:[%s1321] sm:$0xff]
    %v1323 = vld [vmem:[%s1321 + $0x8] sm:$0xff]
    %v1324 = vld [vmem:[%s1321 + $0x10] sm:$0xff]
    %v1325 = vld [vmem:[%s1321 + $0x18] sm:$0xff]
    %1326 = vmatprep.subr.mxu0 %v550
    %1327 = vmatpush1.msra.mxu0 %v549
    %1328 = vmatprep.subr.mxu0 %v554
    %1329 = vmatpush1.msra.mxu0 %v553
    %1330 = vmatprep.subr.mxu0 %v558
    %1331 = vmatpush1.msra.mxu0 %v557
    %1332 = vmatprep.subr.mxu0 %v562
    %1333 = vmatpush1.msra.mxu0 %v561
    %1334 = vmatprep.subr.mxu0 %v566
    %1335 = vmatpush1.msra.mxu0 %v565
    %1336 = vmatprep.subr.mxu0 %v570
    %1337 = vmatpush1.msra.mxu0 %v569
    %1338 = vmatprep.subr.mxu0 %v574
    %1339 = vmatpush1.msra.mxu0 %v573
    %1340 = vmatprep.subr.mxu0 %v578
    %1341 = vmatpush1.msra.mxu0 %v577
    %1342 = vmatprep.subr.mxu0 %v582
    %1343 = vmatpush1.msra.mxu0 %v581
    %1344 = vmatprep.subr.mxu0 %v586
    %1345 = vmatpush1.msra.mxu0 %v585
    %1346 = vmatprep.subr.mxu0 %v590
    %1347 = vmatpush1.msra.mxu0 %v589
    %1348 = vmatprep.subr.mxu0 %v594
    %1349 = vmatpush1.msra.mxu0 %v593
    %1350 = vmatprep.subr.mxu0 %v598
    %1351 = vmatpush1.msra.mxu0 %v597
    %1352 = vmatprep.subr.mxu0 %v602
    %1353 = vmatpush1.msra.mxu0 %v601
    %1354 = vmatprep.subr.mxu0 %v606
    %1355 = vmatpush1.msra.mxu0 %v605
    %1356 = vmatprep.subr.mxu0 %v610
    %1357 = vmatpush1.msra.mxu0 %v609
    %1358 = vmatprep.subr.mxu0 0.0
    %1359 = vmatpush1.msra.mxu0 0.0
    %1360 = vmatprep.subr.mxu0 0.0
    %1361 = vmatpush1.msra.mxu0 0.0
    %1362 = vmatprep.subr.mxu0 0.0
    %1363 = vmatpush1.msra.mxu0 0.0
    %1364 = vmatprep.subr.mxu0 0.0
    %1365 = vmatpush1.msra.mxu0 0.0
    %1366 = vmatprep.subr.mxu0 0.0
    %1367 = vmatpush1.msra.mxu0 0.0
    %1368 = vmatprep.subr.mxu0 0.0
    %1369 = vmatpush1.msra.mxu0 0.0
    %1370 = vmatprep.subr.mxu0 0.0
    %1371 = vmatpush1.msra.mxu0 0.0
    %1372 = vmatprep.subr.mxu0 0.0
    %1373 = vmatpush1.msra.mxu0 0.0
    %1374 = vmatprep.subr.mxu0 0.0
    %1375 = vmatpush1.msra.mxu0 0.0
    %1376 = vmatprep.subr.mxu0 0.0
    %1377 = vmatpush1.msra.mxu0 0.0
    %1378 = vmatprep.subr.mxu0 0.0
    %1379 = vmatpush1.msra.mxu0 0.0
    %1380 = vmatprep.subr.mxu0 0.0
    %1381 = vmatpush1.msra.mxu0 0.0
    %1382 = vmatprep.subr.mxu0 0.0
    %1383 = vmatpush1.msra.mxu0 0.0
    %1384 = vmatprep.subr.mxu0 0.0
    %1385 = vmatpush1.msra.mxu0 0.0
    %1386 = vmatprep.subr.mxu0 0.0
    %1387 = vmatpush1.msra.mxu0 0.0
    %1388 = vmatprep.subr.mxu0 0.0
    %1389 = vmatpush1.msra.mxu0 0.0
    %1390 = vmatprep.mubr.f32.mxu0 0.0
    %1391 = vmatmul.mubr.f32.gmra.mrb[0].mxu0 %v1318
    %v1392 = vpop.f32.mrb[0].mxu0
    %v1393 = vadd.f32 0.0, %v1392
    %v1394 = vpop.f32.mrb[0].mxu0
    %v1395 = vadd.f32 0.0, %v1394
    %1396 = vdwg.mxu0
    %1397 = vmatprep.subr.mxu0 %v552
    %1398 = vmatpush1.msra.mxu0 %v551
    %1399 = vmatprep.subr.mxu0 %v556
    %1400 = vmatpush1.msra.mxu0 %v555
    %1401 = vmatprep.subr.mxu0 %v560
    %1402 = vmatpush1.msra.mxu0 %v559
    %1403 = vmatprep.subr.mxu0 %v564
    %1404 = vmatpush1.msra.mxu0 %v563
    %1405 = vmatprep.subr.mxu0 %v568
    %1406 = vmatpush1.msra.mxu0 %v567
    %1407 = vmatprep.subr.mxu0 %v572
    %1408 = vmatpush1.msra.mxu0 %v571
    %1409 = vmatprep.subr.mxu0 %v576
    %1410 = vmatpush1.msra.mxu0 %v575
    %1411 = vmatprep.subr.mxu0 %v580
    %1412 = vmatpush1.msra.mxu0 %v579
    %1413 = vmatprep.subr.mxu0 %v584
    %1414 = vmatpush1.msra.mxu0 %v583
    %1415 = vmatprep.subr.mxu0 %v588
    %1416 = vmatpush1.msra.mxu0 %v587
    %1417 = vmatprep.subr.mxu0 %v592
    %1418 = vmatpush1.msra.mxu0 %v591
    %1419 = vmatprep.subr.mxu0 %v596
    %1420 = vmatpush1.msra.mxu0 %v595
    %1421 = vmatprep.subr.mxu0 %v600
    %1422 = vmatpush1.msra.mxu0 %v599
    %1423 = vmatprep.subr.mxu0 %v604
    %1424 = vmatpush1.msra.mxu0 %v603
    %1425 = vmatprep.subr.mxu0 %v608
    %1426 = vmatpush1.msra.mxu0 %v607
    %1427 = vmatprep.subr.mxu0 %v612
    %1428 = vmatpush1.msra.mxu0 %v611
    %1429 = vmatprep.subr.mxu0 0.0
    %1430 = vmatpush1.msra.mxu0 0.0
    %1431 = vmatprep.subr.mxu0 0.0
    %1432 = vmatpush1.msra.mxu0 0.0
    %1433 = vmatprep.subr.mxu0 0.0
    %1434 = vmatpush1.msra.mxu0 0.0
    %1435 = vmatprep.subr.mxu0 0.0
    %1436 = vmatpush1.msra.mxu0 0.0
    %1437 = vmatprep.subr.mxu0 0.0
    %1438 = vmatpush1.msra.mxu0 0.0
    %1439 = vmatprep.subr.mxu0 0.0
    %1440 = vmatpush1.msra.mxu0 0.0
    %1441 = vmatprep.subr.mxu0 0.0
    %1442 = vmatpush1.msra.mxu0 0.0
    %1443 = vmatprep.subr.mxu0 0.0
    %1444 = vmatpush1.msra.mxu0 0.0
    %1445 = vmatprep.subr.mxu0 0.0
    %1446 = vmatpush1.msra.mxu0 0.0
    %1447 = vmatprep.subr.mxu0 0.0
    %1448 = vmatpush1.msra.mxu0 0.0
    %1449 = vmatprep.subr.mxu0 0.0
    %1450 = vmatpush1.msra.mxu0 0.0
    %1451 = vmatprep.subr.mxu0 0.0
    %1452 = vmatpush1.msra.mxu0 0.0
    %1453 = vmatprep.subr.mxu0 0.0
    %1454 = vmatpush1.msra.mxu0 0.0
    %1455 = vmatprep.subr.mxu0 0.0
    %1456 = vmatpush1.msra.mxu0 0.0
    %1457 = vmatprep.subr.mxu0 0.0
    %1458 = vmatpush1.msra.mxu0 0.0
    %1459 = vmatprep.subr.mxu0 0.0
    %1460 = vmatpush1.msra.mxu0 0.0
    %1461 = vmatprep.mubr.f32.mxu0 0.0
    %1462 = vmatmul.mubr.f32.gmra.mrb[0].mxu0 %v1318
    %v1463 = vpop.f32.mrb[0].mxu0
    %v1464 = vadd.f32 0.0, %v1463
    %v1465 = vpop.f32.mrb[0].mxu0
    %v1466 = vadd.f32 0.0, %v1465
    %1467 = vdwg.mxu0
    %v1468 = vadd.f32 %v1322, %v1393
    %v1469 = vadd.f32 %v1323, %v1395
    %v1470 = vadd.f32 %v1324, %v1464
    %v1471 = vadd.f32 %v1325, %v1466
    %v1472 = vxor.u32 %v1468, 2147483648
    %v1473 = vmul.f32 %v1472, 1.442695
    %v1474 = vpow.pop %v1473
    %v1475 = vadd.f32 %v1474, 1.0
    %v1476 = vrcp.pop %v1475
    %v1477 = vmul.f32 1.0, %v1476
    %v1478 = vxor.u32 %v1469, 2147483648
    %v1479 = vmul.f32 %v1478, 1.442695
    %v1480 = vpow.pop %v1479
    %v1481 = vadd.f32 %v1480, 1.0
    %v1482 = vrcp.pop %v1481
    %v1483 = vmul.f32 1.0, %v1482
    %v1484 = vtanh.pop %v1470
    %v1485 = vxor.u32 %v1471, 2147483648
    %v1486 = vmul.f32 %v1485, 1.442695
    %v1487 = vpow.pop %v1486
    %v1488 = vadd.f32 %v1487, 1.0
    %v1489 = vrcp.pop %v1488
    %v1490 = vmul.f32 1.0, %v1489
    %v1491 = vmul.f32 %v1483, %v1316
    %v1492 = vmul.f32 %v1477, %v1484
    %v1493 = vadd.f32 %v1491, %v1492
    %v1494 = vtanh.pop %v1493
    %v1495 = vmul.f32 %v1490, %v1494
    %s1496 = scalar_lea.vmem [#allocation5], 32
    %1497 = vst [vmem:[%s1496] sm:$0xff] %v1495
    %s1498 = scalar_lea.vmem [#allocation4], 160
    %v1499 = vld [vmem:[%s1498] sm:$0xff]
    %v1500 = vld [vmem:[%s1498 + $0x8] sm:$0xff]
    %v1501 = vld [vmem:[%s1498 + $0x10] sm:$0xff]
    %v1502 = vld [vmem:[%s1498 + $0x18] sm:$0xff]
    %1503 = vmatprep.subr.mxu0 %v550
    %1504 = vmatpush1.msra.mxu0 %v549
    %1505 = vmatprep.subr.mxu0 %v554
    %1506 = vmatpush1.msra.mxu0 %v553
    %1507 = vmatprep.subr.mxu0 %v558
    %1508 = vmatpush1.msra.mxu0 %v557
    %1509 = vmatprep.subr.mxu0 %v562
    %1510 = vmatpush1.msra.mxu0 %v561
    %1511 = vmatprep.subr.mxu0 %v566
    %1512 = vmatpush1.msra.mxu0 %v565
    %1513 = vmatprep.subr.mxu0 %v570
    %1514 = vmatpush1.msra.mxu0 %v569
    %1515 = vmatprep.subr.mxu0 %v574
    %1516 = vmatpush1.msra.mxu0 %v573
    %1517 = vmatprep.subr.mxu0 %v578
    %1518 = vmatpush1.msra.mxu0 %v577
    %1519 = vmatprep.subr.mxu0 %v582
    %1520 = vmatpush1.msra.mxu0 %v581
    %1521 = vmatprep.subr.mxu0 %v586
    %1522 = vmatpush1.msra.mxu0 %v585
    %1523 = vmatprep.subr.mxu0 %v590
    %1524 = vmatpush1.msra.mxu0 %v589
    %1525 = vmatprep.subr.mxu0 %v594
    %1526 = vmatpush1.msra.mxu0 %v593
    %1527 = vmatprep.subr.mxu0 %v598
    %1528 = vmatpush1.msra.mxu0 %v597
    %1529 = vmatprep.subr.mxu0 %v602
    %1530 = vmatpush1.msra.mxu0 %v601
    %1531 = vmatprep.subr.mxu0 %v606
    %1532 = vmatpush1.msra.mxu0 %v605
    %1533 = vmatprep.subr.mxu0 %v610
    %1534 = vmatpush1.msra.mxu0 %v609
    %1535 = vmatprep.subr.mxu0 0.0
    %1536 = vmatpush1.msra.mxu0 0.0
    %1537 = vmatprep.subr.mxu0 0.0
    %1538 = vmatpush1.msra.mxu0 0.0
    %1539 = vmatprep.subr.mxu0 0.0
    %1540 = vmatpush1.msra.mxu0 0.0
    %1541 = vmatprep.subr.mxu0 0.0
    %1542 = vmatpush1.msra.mxu0 0.0
    %1543 = vmatprep.subr.mxu0 0.0
    %1544 = vmatpush1.msra.mxu0 0.0
    %1545 = vmatprep.subr.mxu0 0.0
    %1546 = vmatpush1.msra.mxu0 0.0
    %1547 = vmatprep.subr.mxu0 0.0
    %1548 = vmatpush1.msra.mxu0 0.0
    %1549 = vmatprep.subr.mxu0 0.0
    %1550 = vmatpush1.msra.mxu0 0.0
    %1551 = vmatprep.subr.mxu0 0.0
    %1552 = vmatpush1.msra.mxu0 0.0
    %1553 = vmatprep.subr.mxu0 0.0
    %1554 = vmatpush1.msra.mxu0 0.0
    %1555 = vmatprep.subr.mxu0 0.0
    %1556 = vmatpush1.msra.mxu0 0.0
    %1557 = vmatprep.subr.mxu0 0.0
    %1558 = vmatpush1.msra.mxu0 0.0
    %1559 = vmatprep.subr.mxu0 0.0
    %1560 = vmatpush1.msra.mxu0 0.0
    %1561 = vmatprep.subr.mxu0 0.0
    %1562 = vmatpush1.msra.mxu0 0.0
    %1563 = vmatprep.subr.mxu0 0.0
    %1564 = vmatpush1.msra.mxu0 0.0
    %1565 = vmatprep.subr.mxu0 0.0
    %1566 = vmatpush1.msra.mxu0 0.0
    %1567 = vmatprep.mubr.f32.mxu0 0.0
    %1568 = vmatmul.mubr.f32.gmra.mrb[0].mxu0 %v1495
    %v1569 = vpop.f32.mrb[0].mxu0
    %v1570 = vadd.f32 0.0, %v1569
    %v1571 = vpop.f32.mrb[0].mxu0
    %v1572 = vadd.f32 0.0, %v1571
    %1573 = vdwg.mxu0
    %1574 = vmatprep.subr.mxu0 %v552
    %1575 = vmatpush1.msra.mxu0 %v551
    %1576 = vmatprep.subr.mxu0 %v556
    %1577 = vmatpush1.msra.mxu0 %v555
    %1578 = vmatprep.subr.mxu0 %v560
    %1579 = vmatpush1.msra.mxu0 %v559
    %1580 = vmatprep.subr.mxu0 %v564
    %1581 = vmatpush1.msra.mxu0 %v563
    %1582 = vmatprep.subr.mxu0 %v568
    %1583 = vmatpush1.msra.mxu0 %v567
    %1584 = vmatprep.subr.mxu0 %v572
    %1585 = vmatpush1.msra.mxu0 %v571
    %1586 = vmatprep.subr.mxu0 %v576
    %1587 = vmatpush1.msra.mxu0 %v575
    %1588 = vmatprep.subr.mxu0 %v580
    %1589 = vmatpush1.msra.mxu0 %v579
    %1590 = vmatprep.subr.mxu0 %v584
    %1591 = vmatpush1.msra.mxu0 %v583
    %1592 = vmatprep.subr.mxu0 %v588
    %1593 = vmatpush1.msra.mxu0 %v587
    %1594 = vmatprep.subr.mxu0 %v592
    %1595 = vmatpush1.msra.mxu0 %v591
    %1596 = vmatprep.subr.mxu0 %v596
    %1597 = vmatpush1.msra.mxu0 %v595
    %1598 = vmatprep.subr.mxu0 %v600
    %1599 = vmatpush1.msra.mxu0 %v599
    %1600 = vmatprep.subr.mxu0 %v604
    %1601 = vmatpush1.msra.mxu0 %v603
    %1602 = vmatprep.subr.mxu0 %v608
    %1603 = vmatpush1.msra.mxu0 %v607
    %1604 = vmatprep.subr.mxu0 %v612
    %1605 = vmatpush1.msra.mxu0 %v611
    %1606 = vmatprep.subr.mxu0 0.0
    %1607 = vmatpush1.msra.mxu0 0.0
    %1608 = vmatprep.subr.mxu0 0.0
    %1609 = vmatpush1.msra.mxu0 0.0
    %1610 = vmatprep.subr.mxu0 0.0
    %1611 = vmatpush1.msra.mxu0 0.0
    %1612 = vmatprep.subr.mxu0 0.0
    %1613 = vmatpush1.msra.mxu0 0.0
    %1614 = vmatprep.subr.mxu0 0.0
    %1615 = vmatpush1.msra.mxu0 0.0
    %1616 = vmatprep.subr.mxu0 0.0
    %1617 = vmatpush1.msra.mxu0 0.0
    %1618 = vmatprep.subr.mxu0 0.0
    %1619 = vmatpush1.msra.mxu0 0.0
    %1620 = vmatprep.subr.mxu0 0.0
    %1621 = vmatpush1.msra.mxu0 0.0
    %1622 = vmatprep.subr.mxu0 0.0
    %1623 = vmatpush1.msra.mxu0 0.0
    %1624 = vmatprep.subr.mxu0 0.0
    %1625 = vmatpush1.msra.mxu0 0.0
    %1626 = vmatprep.subr.mxu0 0.0
    %1627 = vmatpush1.msra.mxu0 0.0
    %1628 = vmatprep.subr.mxu0 0.0
    %1629 = vmatpush1.msra.mxu0 0.0
    %1630 = vmatprep.subr.mxu0 0.0
    %1631 = vmatpush1.msra.mxu0 0.0
    %1632 = vmatprep.subr.mxu0 0.0
    %1633 = vmatpush1.msra.mxu0 0.0
    %1634 = vmatprep.subr.mxu0 0.0
    %1635 = vmatpush1.msra.mxu0 0.0
    %1636 = vmatprep.subr.mxu0 0.0
    %1637 = vmatpush1.msra.mxu0 0.0
    %1638 = vmatprep.mubr.f32.mxu0 0.0
    %1639 = vmatmul.mubr.f32.gmra.mrb[0].mxu0 %v1495
    %v1640 = vpop.f32.mrb[0].mxu0
    %v1641 = vadd.f32 0.0, %v1640
    %v1642 = vpop.f32.mrb[0].mxu0
    %v1643 = vadd.f32 0.0, %v1642
    %1644 = vdwg.mxu0
    %v1645 = vadd.f32 %v1499, %v1570
    %v1646 = vadd.f32 %v1500, %v1572
    %v1647 = vadd.f32 %v1501, %v1641
    %v1648 = vadd.f32 %v1502, %v1643
    %v1649 = vxor.u32 %v1645, 2147483648
    %v1650 = vmul.f32 %v1649, 1.442695
    %v1651 = vpow.pop %v1650
    %v1652 = vadd.f32 %v1651, 1.0
    %v1653 = vrcp.pop %v1652
    %v1654 = vmul.f32 1.0, %v1653
    %v1655 = vxor.u32 %v1646, 2147483648
    %v1656 = vmul.f32 %v1655, 1.442695
    %v1657 = vpow.pop %v1656
    %v1658 = vadd.f32 %v1657, 1.0
    %v1659 = vrcp.pop %v1658
    %v1660 = vmul.f32 1.0, %v1659
    %v1661 = vtanh.pop %v1647
    %v1662 = vxor.u32 %v1648, 2147483648
    %v1663 = vmul.f32 %v1662, 1.442695
    %v1664 = vpow.pop %v1663
    %v1665 = vadd.f32 %v1664, 1.0
    %v1666 = vrcp.pop %v1665
    %v1667 = vmul.f32 1.0, %v1666
    %v1668 = vmul.f32 %v1660, %v1493
    %v1669 = vmul.f32 %v1654, %v1661
    %v1670 = vadd.f32 %v1668, %v1669
    %v1671 = vtanh.pop %v1670
    %v1672 = vmul.f32 %v1667, %v1671
    %s1673 = scalar_lea.vmem [#allocation5], 40
    %1674 = vst [vmem:[%s1673] sm:$0xff] %v1672
    %s1675 = scalar_lea.vmem [#allocation4], 192
    %v1676 = vld [vmem:[%s1675] sm:$0xff]
    %v1677 = vld [vmem:[%s1675 + $0x8] sm:$0xff]
    %v1678 = vld [vmem:[%s1675 + $0x10] sm:$0xff]
    %v1679 = vld [vmem:[%s1675 + $0x18] sm:$0xff]
    %1680 = vmatprep.subr.mxu0 %v550
    %1681 = vmatpush1.msra.mxu0 %v549
    %1682 = vmatprep.subr.mxu0 %v554
    %1683 = vmatpush1.msra.mxu0 %v553
    %1684 = vmatprep.subr.mxu0 %v558
    %1685 = vmatpush1.msra.mxu0 %v557
    %1686 = vmatprep.subr.mxu0 %v562
    %1687 = vmatpush1.msra.mxu0 %v561
    %1688 = vmatprep.subr.mxu0 %v566
    %1689 = vmatpush1.msra.mxu0 %v565
    %1690 = vmatprep.subr.mxu0 %v570
    %1691 = vmatpush1.msra.mxu0 %v569
    %1692 = vmatprep.subr.mxu0 %v574
    %1693 = vmatpush1.msra.mxu0 %v573
    %1694 = vmatprep.subr.mxu0 %v578
    %1695 = vmatpush1.msra.mxu0 %v577
    %1696 = vmatprep.subr.mxu0 %v582
    %1697 = vmatpush1.msra.mxu0 %v581
    %1698 = vmatprep.subr.mxu0 %v586
    %1699 = vmatpush1.msra.mxu0 %v585
    %1700 = vmatprep.subr.mxu0 %v590
    %1701 = vmatpush1.msra.mxu0 %v589
    %1702 = vmatprep.subr.mxu0 %v594
    %1703 = vmatpush1.msra.mxu0 %v593
    %1704 = vmatprep.subr.mxu0 %v598
    %1705 = vmatpush1.msra.mxu0 %v597
    %1706 = vmatprep.subr.mxu0 %v602
    %1707 = vmatpush1.msra.mxu0 %v601
    %1708 = vmatprep.subr.mxu0 %v606
    %1709 = vmatpush1.msra.mxu0 %v605
    %1710 = vmatprep.subr.mxu0 %v610
    %1711 = vmatpush1.msra.mxu0 %v609
    %1712 = vmatprep.subr.mxu0 0.0
    %1713 = vmatpush1.msra.mxu0 0.0
    %1714 = vmatprep.subr.mxu0 0.0
    %1715 = vmatpush1.msra.mxu0 0.0
    %1716 = vmatprep.subr.mxu0 0.0
    %1717 = vmatpush1.msra.mxu0 0.0
    %1718 = vmatprep.subr.mxu0 0.0
    %1719 = vmatpush1.msra.mxu0 0.0
    %1720 = vmatprep.subr.mxu0 0.0
    %1721 = vmatpush1.msra.mxu0 0.0
    %1722 = vmatprep.subr.mxu0 0.0
    %1723 = vmatpush1.msra.mxu0 0.0
    %1724 = vmatprep.subr.mxu0 0.0
    %1725 = vmatpush1.msra.mxu0 0.0
    %1726 = vmatprep.subr.mxu0 0.0
    %1727 = vmatpush1.msra.mxu0 0.0
    %1728 = vmatprep.subr.mxu0 0.0
    %1729 = vmatpush1.msra.mxu0 0.0
    %1730 = vmatprep.subr.mxu0 0.0
    %1731 = vmatpush1.msra.mxu0 0.0
    %1732 = vmatprep.subr.mxu0 0.0
    %1733 = vmatpush1.msra.mxu0 0.0
    %1734 = vmatprep.subr.mxu0 0.0
    %1735 = vmatpush1.msra.mxu0 0.0
    %1736 = vmatprep.subr.mxu0 0.0
    %1737 = vmatpush1.msra.mxu0 0.0
    %1738 = vmatprep.subr.mxu0 0.0
    %1739 = vmatpush1.msra.mxu0 0.0
    %1740 = vmatprep.subr.mxu0 0.0
    %1741 = vmatpush1.msra.mxu0 0.0
    %1742 = vmatprep.subr.mxu0 0.0
    %1743 = vmatpush1.msra.mxu0 0.0
    %1744 = vmatprep.mubr.f32.mxu0 0.0
    %1745 = vmatmul.mubr.f32.gmra.mrb[0].mxu0 %v1672
    %v1746 = vpop.f32.mrb[0].mxu0
    %v1747 = vadd.f32 0.0, %v1746
    %v1748 = vpop.f32.mrb[0].mxu0
    %v1749 = vadd.f32 0.0, %v1748
    %1750 = vdwg.mxu0
    %1751 = vmatprep.subr.mxu0 %v552
    %1752 = vmatpush1.msra.mxu0 %v551
    %1753 = vmatprep.subr.mxu0 %v556
    %1754 = vmatpush1.msra.mxu0 %v555
    %1755 = vmatprep.subr.mxu0 %v560
    %1756 = vmatpush1.msra.mxu0 %v559
    %1757 = vmatprep.subr.mxu0 %v564
    %1758 = vmatpush1.msra.mxu0 %v563
    %1759 = vmatprep.subr.mxu0 %v568
    %1760 = vmatpush1.msra.mxu0 %v567
    %1761 = vmatprep.subr.mxu0 %v572
    %1762 = vmatpush1.msra.mxu0 %v571
    %1763 = vmatprep.subr.mxu0 %v576
    %1764 = vmatpush1.msra.mxu0 %v575
    %1765 = vmatprep.subr.mxu0 %v580
    %1766 = vmatpush1.msra.mxu0 %v579
    %1767 = vmatprep.subr.mxu0 %v584
    %1768 = vmatpush1.msra.mxu0 %v583
    %1769 = vmatprep.subr.mxu0 %v588
    %1770 = vmatpush1.msra.mxu0 %v587
    %1771 = vmatprep.subr.mxu0 %v592
    %1772 = vmatpush1.msra.mxu0 %v591
    %1773 = vmatprep.subr.mxu0 %v596
    %1774 = vmatpush1.msra.mxu0 %v595
    %1775 = vmatprep.subr.mxu0 %v600
    %1776 = vmatpush1.msra.mxu0 %v599
    %1777 = vmatprep.subr.mxu0 %v604
    %1778 = vmatpush1.msra.mxu0 %v603
    %1779 = vmatprep.subr.mxu0 %v608
    %1780 = vmatpush1.msra.mxu0 %v607
    %1781 = vmatprep.subr.mxu0 %v612
    %1782 = vmatpush1.msra.mxu0 %v611
    %1783 = vmatprep.subr.mxu0 0.0
    %1784 = vmatpush1.msra.mxu0 0.0
    %1785 = vmatprep.subr.mxu0 0.0
    %1786 = vmatpush1.msra.mxu0 0.0
    %1787 = vmatprep.subr.mxu0 0.0
    %1788 = vmatpush1.msra.mxu0 0.0
    %1789 = vmatprep.subr.mxu0 0.0
    %1790 = vmatpush1.msra.mxu0 0.0
    %1791 = vmatprep.subr.mxu0 0.0
    %1792 = vmatpush1.msra.mxu0 0.0
    %1793 = vmatprep.subr.mxu0 0.0
    %1794 = vmatpush1.msra.mxu0 0.0
    %1795 = vmatprep.subr.mxu0 0.0
    %1796 = vmatpush1.msra.mxu0 0.0
    %1797 = vmatprep.subr.mxu0 0.0
    %1798 = vmatpush1.msra.mxu0 0.0
    %1799 = vmatprep.subr.mxu0 0.0
    %1800 = vmatpush1.msra.mxu0 0.0
    %1801 = vmatprep.subr.mxu0 0.0
    %1802 = vmatpush1.msra.mxu0 0.0
    %1803 = vmatprep.subr.mxu0 0.0
    %1804 = vmatpush1.msra.mxu0 0.0
    %1805 = vmatprep.subr.mxu0 0.0
    %1806 = vmatpush1.msra.mxu0 0.0
    %1807 = vmatprep.subr.mxu0 0.0
    %1808 = vmatpush1.msra.mxu0 0.0
    %1809 = vmatprep.subr.mxu0 0.0
    %1810 = vmatpush1.msra.mxu0 0.0
    %1811 = vmatprep.subr.mxu0 0.0
    %1812 = vmatpush1.msra.mxu0 0.0
    %1813 = vmatprep.subr.mxu0 0.0
    %1814 = vmatpush1.msra.mxu0 0.0
    %1815 = vmatprep.mubr.f32.mxu0 0.0
    %1816 = vmatmul.mubr.f32.gmra.mrb[0].mxu0 %v1672
    %v1817 = vpop.f32.mrb[0].mxu0
    %v1818 = vadd.f32 0.0, %v1817
    %v1819 = vpop.f32.mrb[0].mxu0
    %v1820 = vadd.f32 0.0, %v1819
    %1821 = vdwg.mxu0
    %v1822 = vadd.f32 %v1676, %v1747
    %v1823 = vadd.f32 %v1677, %v1749
    %v1824 = vadd.f32 %v1678, %v1818
    %v1825 = vadd.f32 %v1679, %v1820
    %v1826 = vxor.u32 %v1822, 2147483648
    %v1827 = vmul.f32 %v1826, 1.442695
    %v1828 = vpow.pop %v1827
    %v1829 = vadd.f32 %v1828, 1.0
    %v1830 = vrcp.pop %v1829
    %v1831 = vmul.f32 1.0, %v1830
    %v1832 = vxor.u32 %v1823, 2147483648
    %v1833 = vmul.f32 %v1832, 1.442695
    %v1834 = vpow.pop %v1833
    %v1835 = vadd.f32 %v1834, 1.0
    %v1836 = vrcp.pop %v1835
    %v1837 = vmul.f32 1.0, %v1836
    %v1838 = vtanh.pop %v1824
    %v1839 = vxor.u32 %v1825, 2147483648
    %v1840 = vmul.f32 %v1839, 1.442695
    %v1841 = vpow.pop %v1840
    %v1842 = vadd.f32 %v1841, 1.0
    %v1843 = vrcp.pop %v1842
    %v1844 = vmul.f32 1.0, %v1843
    %v1845 = vmul.f32 %v1837, %v1670
    %v1846 = vmul.f32 %v1831, %v1838
    %v1847 = vadd.f32 %v1845, %v1846
    %v1848 = vtanh.pop %v1847
    %v1849 = vmul.f32 %v1844, %v1848
    %s1850 = scalar_lea.vmem [#allocation5], 48
    %1851 = vst [vmem:[%s1850] sm:$0xff] %v1849
    %s1852 = scalar_lea.vmem [#allocation4], 224
    %v1853 = vld [vmem:[%s1852] sm:$0xff]
    %v1854 = vld [vmem:[%s1852 + $0x8] sm:$0xff]
    %v1855 = vld [vmem:[%s1852 + $0x10] sm:$0xff]
    %v1856 = vld [vmem:[%s1852 + $0x18] sm:$0xff]
    %1857 = vmatprep.subr.mxu0 %v550
    %1858 = vmatpush1.msra.mxu0 %v549
    %1859 = vmatprep.subr.mxu0 %v554
    %1860 = vmatpush1.msra.mxu0 %v553
    %1861 = vmatprep.subr.mxu0 %v558
    %1862 = vmatpush1.msra.mxu0 %v557
    %1863 = vmatprep.subr.mxu0 %v562
    %1864 = vmatpush1.msra.mxu0 %v561
    %1865 = vmatprep.subr.mxu0 %v566
    %1866 = vmatpush1.msra.mxu0 %v565
    %1867 = vmatprep.subr.mxu0 %v570
    %1868 = vmatpush1.msra.mxu0 %v569
    %1869 = vmatprep.subr.mxu0 %v574
    %1870 = vmatpush1.msra.mxu0 %v573
    %1871 = vmatprep.subr.mxu0 %v578
    %1872 = vmatpush1.msra.mxu0 %v577
    %1873 = vmatprep.subr.mxu0 %v582
    %1874 = vmatpush1.msra.mxu0 %v581
    %1875 = vmatprep.subr.mxu0 %v586
    %1876 = vmatpush1.msra.mxu0 %v585
    %1877 = vmatprep.subr.mxu0 %v590
    %1878 = vmatpush1.msra.mxu0 %v589
    %1879 = vmatprep.subr.mxu0 %v594
    %1880 = vmatpush1.msra.mxu0 %v593
    %1881 = vmatprep.subr.mxu0 %v598
    %1882 = vmatpush1.msra.mxu0 %v597
    %1883 = vmatprep.subr.mxu0 %v602
    %1884 = vmatpush1.msra.mxu0 %v601
    %1885 = vmatprep.subr.mxu0 %v606
    %1886 = vmatpush1.msra.mxu0 %v605
    %1887 = vmatprep.subr.mxu0 %v610
    %1888 = vmatpush1.msra.mxu0 %v609
    %1889 = vmatprep.subr.mxu0 0.0
    %1890 = vmatpush1.msra.mxu0 0.0
    %1891 = vmatprep.subr.mxu0 0.0
    %1892 = vmatpush1.msra.mxu0 0.0
    %1893 = vmatprep.subr.mxu0 0.0
    %1894 = vmatpush1.msra.mxu0 0.0
    %1895 = vmatprep.subr.mxu0 0.0
    %1896 = vmatpush1.msra.mxu0 0.0
    %1897 = vmatprep.subr.mxu0 0.0
    %1898 = vmatpush1.msra.mxu0 0.0
    %1899 = vmatprep.subr.mxu0 0.0
    %1900 = vmatpush1.msra.mxu0 0.0
    %1901 = vmatprep.subr.mxu0 0.0
    %1902 = vmatpush1.msra.mxu0 0.0
    %1903 = vmatprep.subr.mxu0 0.0
    %1904 = vmatpush1.msra.mxu0 0.0
    %1905 = vmatprep.subr.mxu0 0.0
    %1906 = vmatpush1.msra.mxu0 0.0
    %1907 = vmatprep.subr.mxu0 0.0
    %1908 = vmatpush1.msra.mxu0 0.0
    %1909 = vmatprep.subr.mxu0 0.0
    %1910 = vmatpush1.msra.mxu0 0.0
    %1911 = vmatprep.subr.mxu0 0.0
    %1912 = vmatpush1.msra.mxu0 0.0
    %1913 = vmatprep.subr.mxu0 0.0
    %1914 = vmatpush1.msra.mxu0 0.0
    %1915 = vmatprep.subr.mxu0 0.0
    %1916 = vmatpush1.msra.mxu0 0.0
    %1917 = vmatprep.subr.mxu0 0.0
    %1918 = vmatpush1.msra.mxu0 0.0
    %1919 = vmatprep.subr.mxu0 0.0
    %1920 = vmatpush1.msra.mxu0 0.0
    %1921 = vmatprep.mubr.f32.mxu0 0.0
    %1922 = vmatmul.mubr.f32.gmra.mrb[0].mxu0 %v1849
    %v1923 = vpop.f32.mrb[0].mxu0
    %v1924 = vadd.f32 0.0, %v1923
    %v1925 = vpop.f32.mrb[0].mxu0
    %v1926 = vadd.f32 0.0, %v1925
    %1927 = vdwg.mxu0
    %1928 = vmatprep.subr.mxu0 %v552
    %1929 = vmatpush1.msra.mxu0 %v551
    %1930 = vmatprep.subr.mxu0 %v556
    %1931 = vmatpush1.msra.mxu0 %v555
    %1932 = vmatprep.subr.mxu0 %v560
    %1933 = vmatpush1.msra.mxu0 %v559
    %1934 = vmatprep.subr.mxu0 %v564
    %1935 = vmatpush1.msra.mxu0 %v563
    %1936 = vmatprep.subr.mxu0 %v568
    %1937 = vmatpush1.msra.mxu0 %v567
    %1938 = vmatprep.subr.mxu0 %v572
    %1939 = vmatpush1.msra.mxu0 %v571
    %1940 = vmatprep.subr.mxu0 %v576
    %1941 = vmatpush1.msra.mxu0 %v575
    %1942 = vmatprep.subr.mxu0 %v580
    %1943 = vmatpush1.msra.mxu0 %v579
    %1944 = vmatprep.subr.mxu0 %v584
    %1945 = vmatpush1.msra.mxu0 %v583
    %1946 = vmatprep.subr.mxu0 %v588
    %1947 = vmatpush1.msra.mxu0 %v587
    %1948 = vmatprep.subr.mxu0 %v592
    %1949 = vmatpush1.msra.mxu0 %v591
    %1950 = vmatprep.subr.mxu0 %v596
    %1951 = vmatpush1.msra.mxu0 %v595
    %1952 = vmatprep.subr.mxu0 %v600
    %1953 = vmatpush1.msra.mxu0 %v599
    %1954 = vmatprep.subr.mxu0 %v604
    %1955 = vmatpush1.msra.mxu0 %v603
    %1956 = vmatprep.subr.mxu0 %v608
    %1957 = vmatpush1.msra.mxu0 %v607
    %1958 = vmatprep.subr.mxu0 %v612
    %1959 = vmatpush1.msra.mxu0 %v611
    %1960 = vmatprep.subr.mxu0 0.0
    %1961 = vmatpush1.msra.mxu0 0.0
    %1962 = vmatprep.subr.mxu0 0.0
    %1963 = vmatpush1.msra.mxu0 0.0
    %1964 = vmatprep.subr.mxu0 0.0
    %1965 = vmatpush1.msra.mxu0 0.0
    %1966 = vmatprep.subr.mxu0 0.0
    %1967 = vmatpush1.msra.mxu0 0.0
    %1968 = vmatprep.subr.mxu0 0.0
    %1969 = vmatpush1.msra.mxu0 0.0
    %1970 = vmatprep.subr.mxu0 0.0
    %1971 = vmatpush1.msra.mxu0 0.0
    %1972 = vmatprep.subr.mxu0 0.0
    %1973 = vmatpush1.msra.mxu0 0.0
    %1974 = vmatprep.subr.mxu0 0.0
    %1975 = vmatpush1.msra.mxu0 0.0
    %1976 = vmatprep.subr.mxu0 0.0
    %1977 = vmatpush1.msra.mxu0 0.0
    %1978 = vmatprep.subr.mxu0 0.0
    %1979 = vmatpush1.msra.mxu0 0.0
    %1980 = vmatprep.subr.mxu0 0.0
    %1981 = vmatpush1.msra.mxu0 0.0
    %1982 = vmatprep.subr.mxu0 0.0
    %1983 = vmatpush1.msra.mxu0 0.0
    %1984 = vmatprep.subr.mxu0 0.0
    %1985 = vmatpush1.msra.mxu0 0.0
    %1986 = vmatprep.subr.mxu0 0.0
    %1987 = vmatpush1.msra.mxu0 0.0
    %1988 = vmatprep.subr.mxu0 0.0
    %1989 = vmatpush1.msra.mxu0 0.0
    %1990 = vmatprep.subr.mxu0 0.0
    %1991 = vmatpush1.msra.mxu0 0.0
    %1992 = vmatprep.mubr.f32.mxu0 0.0
    %1993 = vmatmul.mubr.f32.gmra.mrb[0].mxu0 %v1849
    %v1994 = vpop.f32.mrb[0].mxu0
    %v1995 = vadd.f32 0.0, %v1994
    %v1996 = vpop.f32.mrb[0].mxu0
    %v1997 = vadd.f32 0.0, %v1996
    %1998 = vdwg.mxu0
    %v1999 = vadd.f32 %v1853, %v1924
    %v2000 = vadd.f32 %v1854, %v1926
    %v2001 = vadd.f32 %v1855, %v1995
    %v2002 = vadd.f32 %v1856, %v1997
    %v2003 = vxor.u32 %v1999, 2147483648
    %v2004 = vmul.f32 %v2003, 1.442695
    %v2005 = vpow.pop %v2004
    %v2006 = vadd.f32 %v2005, 1.0
    %v2007 = vrcp.pop %v2006
    %v2008 = vmul.f32 1.0, %v2007
    %v2009 = vxor.u32 %v2000, 2147483648
    %v2010 = vmul.f32 %v2009, 1.442695
    %v2011 = vpow.pop %v2010
    %v2012 = vadd.f32 %v2011, 1.0
    %v2013 = vrcp.pop %v2012
    %v2014 = vmul.f32 1.0, %v2013
    %v2015 = vtanh.pop %v2001
    %v2016 = vxor.u32 %v2002, 2147483648
    %v2017 = vmul.f32 %v2016, 1.442695
    %v2018 = vpow.pop %v2017
    %v2019 = vadd.f32 %v2018, 1.0
    %v2020 = vrcp.pop %v2019
    %v2021 = vmul.f32 1.0, %v2020
    %v2022 = vmul.f32 %v2014, %v1847
    %v2023 = vmul.f32 %v2008, %v2015
    %v2024 = vadd.f32 %v2022, %v2023
    %v2025 = vtanh.pop %v2024
    %v2026 = vmul.f32 %v2021, %v2025
    %s2027 = scalar_lea.vmem [#allocation5], 56
    %2028 = vst [vmem:[%s2027] sm:$0xff] %v2026
    %s2029 = scalar_lea.vmem [#allocation4], 256
    %v2030 = vld [vmem:[%s2029] sm:$0xff]
    %v2031 = vld [vmem:[%s2029 + $0x8] sm:$0xff]
    %v2032 = vld [vmem:[%s2029 + $0x10] sm:$0xff]
    %v2033 = vld [vmem:[%s2029 + $0x18] sm:$0xff]
    %2034 = vmatprep.subr.mxu0 %v550
    %2035 = vmatpush1.msra.mxu0 %v549
    %2036 = vmatprep.subr.mxu0 %v554
    %2037 = vmatpush1.msra.mxu0 %v553
    %2038 = vmatprep.subr.mxu0 %v558
    %2039 = vmatpush1.msra.mxu0 %v557
    %2040 = vmatprep.subr.mxu0 %v562
    %2041 = vmatpush1.msra.mxu0 %v561
    %2042 = vmatprep.subr.mxu0 %v566
    %2043 = vmatpush1.msra.mxu0 %v565
    %2044 = vmatprep.subr.mxu0 %v570
    %2045 = vmatpush1.msra.mxu0 %v569
    %2046 = vmatprep.subr.mxu0 %v574
    %2047 = vmatpush1.msra.mxu0 %v573
    %2048 = vmatprep.subr.mxu0 %v578
    %2049 = vmatpush1.msra.mxu0 %v577
    %2050 = vmatprep.subr.mxu0 %v582
    %2051 = vmatpush1.msra.mxu0 %v581
    %2052 = vmatprep.subr.mxu0 %v586
    %2053 = vmatpush1.msra.mxu0 %v585
    %2054 = vmatprep.subr.mxu0 %v590
    %2055 = vmatpush1.msra.mxu0 %v589
    %2056 = vmatprep.subr.mxu0 %v594
    %2057 = vmatpush1.msra.mxu0 %v593
    %2058 = vmatprep.subr.mxu0 %v598
    %2059 = vmatpush1.msra.mxu0 %v597
    %2060 = vmatprep.subr.mxu0 %v602
    %2061 = vmatpush1.msra.mxu0 %v601
    %2062 = vmatprep.subr.mxu0 %v606
    %2063 = vmatpush1.msra.mxu0 %v605
    %2064 = vmatprep.subr.mxu0 %v610
    %2065 = vmatpush1.msra.mxu0 %v609
    %2066 = vmatprep.subr.mxu0 0.0
    %2067 = vmatpush1.msra.mxu0 0.0
    %2068 = vmatprep.subr.mxu0 0.0
    %2069 = vmatpush1.msra.mxu0 0.0
    %2070 = vmatprep.subr.mxu0 0.0
    %2071 = vmatpush1.msra.mxu0 0.0
    %2072 = vmatprep.subr.mxu0 0.0
    %2073 = vmatpush1.msra.mxu0 0.0
    %2074 = vmatprep.subr.mxu0 0.0
    %2075 = vmatpush1.msra.mxu0 0.0
    %2076 = vmatprep.subr.mxu0 0.0
    %2077 = vmatpush1.msra.mxu0 0.0
    %2078 = vmatprep.subr.mxu0 0.0
    %2079 = vmatpush1.msra.mxu0 0.0
    %2080 = vmatprep.subr.mxu0 0.0
    %2081 = vmatpush1.msra.mxu0 0.0
    %2082 = vmatprep.subr.mxu0 0.0
    %2083 = vmatpush1.msra.mxu0 0.0
    %2084 = vmatprep.subr.mxu0 0.0
    %2085 = vmatpush1.msra.mxu0 0.0
    %2086 = vmatprep.subr.mxu0 0.0
    %2087 = vmatpush1.msra.mxu0 0.0
    %2088 = vmatprep.subr.mxu0 0.0
    %2089 = vmatpush1.msra.mxu0 0.0
    %2090 = vmatprep.subr.mxu0 0.0
    %2091 = vmatpush1.msra.mxu0 0.0
    %2092 = vmatprep.subr.mxu0 0.0
    %2093 = vmatpush1.msra.mxu0 0.0
    %2094 = vmatprep.subr.mxu0 0.0
    %2095 = vmatpush1.msra.mxu0 0.0
    %2096 = vmatprep.subr.mxu0 0.0
    %2097 = vmatpush1.msra.mxu0 0.0
    %2098 = vmatprep.mubr.f32.mxu0 0.0
    %2099 = vmatmul.mubr.f32.gmra.mrb[0].mxu0 %v2026
    %v2100 = vpop.f32.mrb[0].mxu0
    %v2101 = vadd.f32 0.0, %v2100
    %v2102 = vpop.f32.mrb[0].mxu0
    %v2103 = vadd.f32 0.0, %v2102
    %2104 = vdwg.mxu0
    %2105 = vmatprep.subr.mxu0 %v552
    %2106 = vmatpush1.msra.mxu0 %v551
    %2107 = vmatprep.subr.mxu0 %v556
    %2108 = vmatpush1.msra.mxu0 %v555
    %2109 = vmatprep.subr.mxu0 %v560
    %2110 = vmatpush1.msra.mxu0 %v559
    %2111 = vmatprep.subr.mxu0 %v564
    %2112 = vmatpush1.msra.mxu0 %v563
    %2113 = vmatprep.subr.mxu0 %v568
    %2114 = vmatpush1.msra.mxu0 %v567
    %2115 = vmatprep.subr.mxu0 %v572
    %2116 = vmatpush1.msra.mxu0 %v571
    %2117 = vmatprep.subr.mxu0 %v576
    %2118 = vmatpush1.msra.mxu0 %v575
    %2119 = vmatprep.subr.mxu0 %v580
    %2120 = vmatpush1.msra.mxu0 %v579
    %2121 = vmatprep.subr.mxu0 %v584
    %2122 = vmatpush1.msra.mxu0 %v583
    %2123 = vmatprep.subr.mxu0 %v588
    %2124 = vmatpush1.msra.mxu0 %v587
    %2125 = vmatprep.subr.mxu0 %v592
    %2126 = vmatpush1.msra.mxu0 %v591
    %2127 = vmatprep.subr.mxu0 %v596
    %2128 = vmatpush1.msra.mxu0 %v595
    %2129 = vmatprep.subr.mxu0 %v600
    %2130 = vmatpush1.msra.mxu0 %v599
    %2131 = vmatprep.subr.mxu0 %v604
    %2132 = vmatpush1.msra.mxu0 %v603
    %2133 = vmatprep.subr.mxu0 %v608
    %2134 = vmatpush1.msra.mxu0 %v607
    %2135 = vmatprep.subr.mxu0 %v612
    %2136 = vmatpush1.msra.mxu0 %v611
    %2137 = vmatprep.subr.mxu0 0.0
    %2138 = vmatpush1.msra.mxu0 0.0
    %2139 = vmatprep.subr.mxu0 0.0
    %2140 = vmatpush1.msra.mxu0 0.0
    %2141 = vmatprep.subr.mxu0 0.0
    %2142 = vmatpush1.msra.mxu0 0.0
    %2143 = vmatprep.subr.mxu0 0.0
    %2144 = vmatpush1.msra.mxu0 0.0
    %2145 = vmatprep.subr.mxu0 0.0
    %2146 = vmatpush1.msra.mxu0 0.0
    %2147 = vmatprep.subr.mxu0 0.0
    %2148 = vmatpush1.msra.mxu0 0.0
    %2149 = vmatprep.subr.mxu0 0.0
    %2150 = vmatpush1.msra.mxu0 0.0
    %2151 = vmatprep.subr.mxu0 0.0
    %2152 = vmatpush1.msra.mxu0 0.0
    %2153 = vmatprep.subr.mxu0 0.0
    %2154 = vmatpush1.msra.mxu0 0.0
    %2155 = vmatprep.subr.mxu0 0.0
    %2156 = vmatpush1.msra.mxu0 0.0
    %2157 = vmatprep.subr.mxu0 0.0
    %2158 = vmatpush1.msra.mxu0 0.0
    %2159 = vmatprep.subr.mxu0 0.0
    %2160 = vmatpush1.msra.mxu0 0.0
    %2161 = vmatprep.subr.mxu0 0.0
    %2162 = vmatpush1.msra.mxu0 0.0
    %2163 = vmatprep.subr.mxu0 0.0
    %2164 = vmatpush1.msra.mxu0 0.0
    %2165 = vmatprep.subr.mxu0 0.0
    %2166 = vmatpush1.msra.mxu0 0.0
    %2167 = vmatprep.subr.mxu0 0.0
    %2168 = vmatpush1.msra.mxu0 0.0
    %2169 = vmatprep.mubr.f32.mxu0 0.0
    %2170 = vmatmul.mubr.f32.gmra.mrb[0].mxu0 %v2026
    %v2171 = vpop.f32.mrb[0].mxu0
    %v2172 = vadd.f32 0.0, %v2171
    %v2173 = vpop.f32.mrb[0].mxu0
    %v2174 = vadd.f32 0.0, %v2173
    %2175 = vdwg.mxu0
    %v2176 = vadd.f32 %v2030, %v2101
    %v2177 = vadd.f32 %v2031, %v2103
    %v2178 = vadd.f32 %v2032, %v2172
    %v2179 = vadd.f32 %v2033, %v2174
    %v2180 = vxor.u32 %v2176, 2147483648
    %v2181 = vmul.f32 %v2180, 1.442695
    %v2182 = vpow.pop %v2181
    %v2183 = vadd.f32 %v2182, 1.0
    %v2184 = vrcp.pop %v2183
    %v2185 = vmul.f32 1.0, %v2184
    %v2186 = vxor.u32 %v2177, 2147483648
    %v2187 = vmul.f32 %v2186, 1.442695
    %v2188 = vpow.pop %v2187
    %v2189 = vadd.f32 %v2188, 1.0
    %v2190 = vrcp.pop %v2189
    %v2191 = vmul.f32 1.0, %v2190
    %v2192 = vtanh.pop %v2178
    %v2193 = vxor.u32 %v2179, 2147483648
    %v2194 = vmul.f32 %v2193, 1.442695
    %v2195 = vpow.pop %v2194
    %v2196 = vadd.f32 %v2195, 1.0
    %v2197 = vrcp.pop %v2196
    %v2198 = vmul.f32 1.0, %v2197
    %v2199 = vmul.f32 %v2191, %v2024
    %v2200 = vmul.f32 %v2185, %v2192
    %v2201 = vadd.f32 %v2199, %v2200
    %v2202 = vtanh.pop %v2201
    %v2203 = vmul.f32 %v2198, %v2202
    %s2204 = scalar_lea.vmem [#allocation5], 64
    %2205 = vst [vmem:[%s2204] sm:$0xff] %v2203
    %s2206 = scalar_lea.vmem [#allocation4], 288
    %v2207 = vld [vmem:[%s2206] sm:$0xff]
    %v2208 = vld [vmem:[%s2206 + $0x8] sm:$0xff]
    %v2209 = vld [vmem:[%s2206 + $0x10] sm:$0xff]
    %v2210 = vld [vmem:[%s2206 + $0x18] sm:$0xff]
    %2211 = vmatprep.subr.mxu0 %v550
    %2212 = vmatpush1.msra.mxu0 %v549
    %2213 = vmatprep.subr.mxu0 %v554
    %2214 = vmatpush1.msra.mxu0 %v553
    %2215 = vmatprep.subr.mxu0 %v558
    %2216 = vmatpush1.msra.mxu0 %v557
    %2217 = vmatprep.subr.mxu0 %v562
    %2218 = vmatpush1.msra.mxu0 %v561
    %2219 = vmatprep.subr.mxu0 %v566
    %2220 = vmatpush1.msra.mxu0 %v565
    %2221 = vmatprep.subr.mxu0 %v570
    %2222 = vmatpush1.msra.mxu0 %v569
    %2223 = vmatprep.subr.mxu0 %v574
    %2224 = vmatpush1.msra.mxu0 %v573
    %2225 = vmatprep.subr.mxu0 %v578
    %2226 = vmatpush1.msra.mxu0 %v577
    %2227 = vmatprep.subr.mxu0 %v582
    %2228 = vmatpush1.msra.mxu0 %v581
    %2229 = vmatprep.subr.mxu0 %v586
    %2230 = vmatpush1.msra.mxu0 %v585
    %2231 = vmatprep.subr.mxu0 %v590
    %2232 = vmatpush1.msra.mxu0 %v589
    %2233 = vmatprep.subr.mxu0 %v594
    %2234 = vmatpush1.msra.mxu0 %v593
    %2235 = vmatprep.subr.mxu0 %v598
    %2236 = vmatpush1.msra.mxu0 %v597
    %2237 = vmatprep.subr.mxu0 %v602
    %2238 = vmatpush1.msra.mxu0 %v601
    %2239 = vmatprep.subr.mxu0 %v606
    %2240 = vmatpush1.msra.mxu0 %v605
    %2241 = vmatprep.subr.mxu0 %v610
    %2242 = vmatpush1.msra.mxu0 %v609
    %2243 = vmatprep.subr.mxu0 0.0
    %2244 = vmatpush1.msra.mxu0 0.0
    %2245 = vmatprep.subr.mxu0 0.0
    %2246 = vmatpush1.msra.mxu0 0.0
    %2247 = vmatprep.subr.mxu0 0.0
    %2248 = vmatpush1.msra.mxu0 0.0
    %2249 = vmatprep.subr.mxu0 0.0
    %2250 = vmatpush1.msra.mxu0 0.0
    %2251 = vmatprep.subr.mxu0 0.0
    %2252 = vmatpush1.msra.mxu0 0.0
    %2253 = vmatprep.subr.mxu0 0.0
    %2254 = vmatpush1.msra.mxu0 0.0
    %2255 = vmatprep.subr.mxu0 0.0
    %2256 = vmatpush1.msra.mxu0 0.0
    %2257 = vmatprep.subr.mxu0 0.0
    %2258 = vmatpush1.msra.mxu0 0.0
    %2259 = vmatprep.subr.mxu0 0.0
    %2260 = vmatpush1.msra.mxu0 0.0
    %2261 = vmatprep.subr.mxu0 0.0
    %2262 = vmatpush1.msra.mxu0 0.0
    %2263 = vmatprep.subr.mxu0 0.0
    %2264 = vmatpush1.msra.mxu0 0.0
    %2265 = vmatprep.subr.mxu0 0.0
    %2266 = vmatpush1.msra.mxu0 0.0
    %2267 = vmatprep.subr.mxu0 0.0
    %2268 = vmatpush1.msra.mxu0 0.0
    %2269 = vmatprep.subr.mxu0 0.0
    %2270 = vmatpush1.msra.mxu0 0.0
    %2271 = vmatprep.subr.mxu0 0.0
    %2272 = vmatpush1.msra.mxu0 0.0
    %2273 = vmatprep.subr.mxu0 0.0
    %2274 = vmatpush1.msra.mxu0 0.0
    %2275 = vmatprep.mubr.f32.mxu0 0.0
    %2276 = vmatmul.mubr.f32.gmra.mrb[0].mxu0 %v2203
    %v2277 = vpop.f32.mrb[0].mxu0
    %v2278 = vadd.f32 0.0, %v2277
    %v2279 = vpop.f32.mrb[0].mxu0
    %v2280 = vadd.f32 0.0, %v2279
    %2281 = vdwg.mxu0
    %2282 = vmatprep.subr.mxu0 %v552
    %2283 = vmatpush1.msra.mxu0 %v551
    %2284 = vmatprep.subr.mxu0 %v556
    %2285 = vmatpush1.msra.mxu0 %v555
    %2286 = vmatprep.subr.mxu0 %v560
    %2287 = vmatpush1.msra.mxu0 %v559
    %2288 = vmatprep.subr.mxu0 %v564
    %2289 = vmatpush1.msra.mxu0 %v563
    %2290 = vmatprep.subr.mxu0 %v568
    %2291 = vmatpush1.msra.mxu0 %v567
    %2292 = vmatprep.subr.mxu0 %v572
    %2293 = vmatpush1.msra.mxu0 %v571
    %2294 = vmatprep.subr.mxu0 %v576
    %2295 = vmatpush1.msra.mxu0 %v575
    %2296 = vmatprep.subr.mxu0 %v580
    %2297 = vmatpush1.msra.mxu0 %v579
    %2298 = vmatprep.subr.mxu0 %v584
    %2299 = vmatpush1.msra.mxu0 %v583
    %2300 = vmatprep.subr.mxu0 %v588
    %2301 = vmatpush1.msra.mxu0 %v587
    %2302 = vmatprep.subr.mxu0 %v592
    %2303 = vmatpush1.msra.mxu0 %v591
    %2304 = vmatprep.subr.mxu0 %v596
    %2305 = vmatpush1.msra.mxu0 %v595
    %2306 = vmatprep.subr.mxu0 %v600
    %2307 = vmatpush1.msra.mxu0 %v599
    %2308 = vmatprep.subr.mxu0 %v604
    %2309 = vmatpush1.msra.mxu0 %v603
    %2310 = vmatprep.subr.mxu0 %v608
    %2311 = vmatpush1.msra.mxu0 %v607
    %2312 = vmatprep.subr.mxu0 %v612
    %2313 = vmatpush1.msra.mxu0 %v611
    %2314 = vmatprep.subr.mxu0 0.0
    %2315 = vmatpush1.msra.mxu0 0.0
    %2316 = vmatprep.subr.mxu0 0.0
    %2317 = vmatpush1.msra.mxu0 0.0
    %2318 = vmatprep.subr.mxu0 0.0
    %2319 = vmatpush1.msra.mxu0 0.0
    %2320 = vmatprep.subr.mxu0 0.0
    %2321 = vmatpush1.msra.mxu0 0.0
    %2322 = vmatprep.subr.mxu0 0.0
    %2323 = vmatpush1.msra.mxu0 0.0
    %2324 = vmatprep.subr.mxu0 0.0
    %2325 = vmatpush1.msra.mxu0 0.0
    %2326 = vmatprep.subr.mxu0 0.0
    %2327 = vmatpush1.msra.mxu0 0.0
    %2328 = vmatprep.subr.mxu0 0.0
    %2329 = vmatpush1.msra.mxu0 0.0
    %2330 = vmatprep.subr.mxu0 0.0
    %2331 = vmatpush1.msra.mxu0 0.0
    %2332 = vmatprep.subr.mxu0 0.0
    %2333 = vmatpush1.msra.mxu0 0.0
    %2334 = vmatprep.subr.mxu0 0.0
    %2335 = vmatpush1.msra.mxu0 0.0
    %2336 = vmatprep.subr.mxu0 0.0
    %2337 = vmatpush1.msra.mxu0 0.0
    %2338 = vmatprep.subr.mxu0 0.0
    %2339 = vmatpush1.msra.mxu0 0.0
    %2340 = vmatprep.subr.mxu0 0.0
    %2341 = vmatpush1.msra.mxu0 0.0
    %2342 = vmatprep.subr.mxu0 0.0
    %2343 = vmatpush1.msra.mxu0 0.0
    %2344 = vmatprep.subr.mxu0 0.0
    %2345 = vmatpush1.msra.mxu0 0.0
    %2346 = vmatprep.mubr.f32.mxu0 0.0
    %2347 = vmatmul.mubr.f32.gmra.mrb[0].mxu0 %v2203
    %v2348 = vpop.f32.mrb[0].mxu0
    %v2349 = vadd.f32 0.0, %v2348
    %v2350 = vpop.f32.mrb[0].mxu0
    %v2351 = vadd.f32 0.0, %v2350
    %2352 = vdwg.mxu0
    %v2353 = vadd.f32 %v2207, %v2278
    %v2354 = vadd.f32 %v2208, %v2280
    %v2355 = vadd.f32 %v2209, %v2349
    %v2356 = vadd.f32 %v2210, %v2351
    %v2357 = vxor.u32 %v2353, 2147483648
    %v2358 = vmul.f32 %v2357, 1.442695
    %v2359 = vpow.pop %v2358
    %v2360 = vadd.f32 %v2359, 1.0
    %v2361 = vrcp.pop %v2360
    %v2362 = vmul.f32 1.0, %v2361
    %v2363 = vxor.u32 %v2354, 2147483648
    %v2364 = vmul.f32 %v2363, 1.442695
    %v2365 = vpow.pop %v2364
    %v2366 = vadd.f32 %v2365, 1.0
    %v2367 = vrcp.pop %v2366
    %v2368 = vmul.f32 1.0, %v2367
    %v2369 = vtanh.pop %v2355
    %v2370 = vxor.u32 %v2356, 2147483648
    %v2371 = vmul.f32 %v2370, 1.442695
    %v2372 = vpow.pop %v2371
    %v2373 = vadd.f32 %v2372, 1.0
    %v2374 = vrcp.pop %v2373
    %v2375 = vmul.f32 1.0, %v2374
    %v2376 = vmul.f32 %v2368, %v2201
    %v2377 = vmul.f32 %v2362, %v2369
    %v2378 = vadd.f32 %v2376, %v2377
    %v2379 = vtanh.pop %v2378
    %v2380 = vmul.f32 %v2375, %v2379
    %s2381 = scalar_lea.vmem [#allocation5], 72
    %2382 = vst [vmem:[%s2381] sm:$0xff] %v2380
    %s2383 = scalar_lea.vmem [#allocation4], 320
    %v2384 = vld [vmem:[%s2383] sm:$0xff]
    %v2385 = vld [vmem:[%s2383 + $0x8] sm:$0xff]
    %v2386 = vld [vmem:[%s2383 + $0x10] sm:$0xff]
    %v2387 = vld [vmem:[%s2383 + $0x18] sm:$0xff]
    %2388 = vmatprep.subr.mxu0 %v550
    %2389 = vmatpush1.msra.mxu0 %v549
    %2390 = vmatprep.subr.mxu0 %v554
    %2391 = vmatpush1.msra.mxu0 %v553
    %2392 = vmatprep.subr.mxu0 %v558
    %2393 = vmatpush1.msra.mxu0 %v557
    %2394 = vmatprep.subr.mxu0 %v562
    %2395 = vmatpush1.msra.mxu0 %v561
    %2396 = vmatprep.subr.mxu0 %v566
    %2397 = vmatpush1.msra.mxu0 %v565
    %2398 = vmatprep.subr.mxu0 %v570
    %2399 = vmatpush1.msra.mxu0 %v569
    %2400 = vmatprep.subr.mxu0 %v574
    %2401 = vmatpush1.msra.mxu0 %v573
    %2402 = vmatprep.subr.mxu0 %v578
    %2403 = vmatpush1.msra.mxu0 %v577
    %2404 = vmatprep.subr.mxu0 %v582
    %2405 = vmatpush1.msra.mxu0 %v581
    %2406 = vmatprep.subr.mxu0 %v586
    %2407 = vmatpush1.msra.mxu0 %v585
    %2408 = vmatprep.subr.mxu0 %v590
    %2409 = vmatpush1.msra.mxu0 %v589
    %2410 = vmatprep.subr.mxu0 %v594
    %2411 = vmatpush1.msra.mxu0 %v593
    %2412 = vmatprep.subr.mxu0 %v598
    %2413 = vmatpush1.msra.mxu0 %v597
    %2414 = vmatprep.subr.mxu0 %v602
    %2415 = vmatpush1.msra.mxu0 %v601
    %2416 = vmatprep.subr.mxu0 %v606
    %2417 = vmatpush1.msra.mxu0 %v605
    %2418 = vmatprep.subr.mxu0 %v610
    %2419 = vmatpush1.msra.mxu0 %v609
    %2420 = vmatprep.subr.mxu0 0.0
    %2421 = vmatpush1.msra.mxu0 0.0
    %2422 = vmatprep.subr.mxu0 0.0
    %2423 = vmatpush1.msra.mxu0 0.0
    %2424 = vmatprep.subr.mxu0 0.0
    %2425 = vmatpush1.msra.mxu0 0.0
    %2426 = vmatprep.subr.mxu0 0.0
    %2427 = vmatpush1.msra.mxu0 0.0
    %2428 = vmatprep.subr.mxu0 0.0
    %2429 = vmatpush1.msra.mxu0 0.0
    %2430 = vmatprep.subr.mxu0 0.0
    %2431 = vmatpush1.msra.mxu0 0.0
    %2432 = vmatprep.subr.mxu0 0.0
    %2433 = vmatpush1.msra.mxu0 0.0
    %2434 = vmatprep.subr.mxu0 0.0
    %2435 = vmatpush1.msra.mxu0 0.0
    %2436 = vmatprep.subr.mxu0 0.0
    %2437 = vmatpush1.msra.mxu0 0.0
    %2438 = vmatprep.subr.mxu0 0.0
    %2439 = vmatpush1.msra.mxu0 0.0
    %2440 = vmatprep.subr.mxu0 0.0
    %2441 = vmatpush1.msra.mxu0 0.0
    %2442 = vmatprep.subr.mxu0 0.0
    %2443 = vmatpush1.msra.mxu0 0.0
    %2444 = vmatprep.subr.mxu0 0.0
    %2445 = vmatpush1.msra.mxu0 0.0
    %2446 = vmatprep.subr.mxu0 0.0
    %2447 = vmatpush1.msra.mxu0 0.0
    %2448 = vmatprep.subr.mxu0 0.0
    %2449 = vmatpush1.msra.mxu0 0.0
    %2450 = vmatprep.subr.mxu0 0.0
    %2451 = vmatpush1.msra.mxu0 0.0
    %2452 = vmatprep.mubr.f32.mxu0 0.0
    %2453 = vmatmul.mubr.f32.gmra.mrb[0].mxu0 %v2380
    %v2454 = vpop.f32.mrb[0].mxu0
    %v2455 = vadd.f32 0.0, %v2454
    %v2456 = vpop.f32.mrb[0].mxu0
    %v2457 = vadd.f32 0.0, %v2456
    %2458 = vdwg.mxu0
    %2459 = vmatprep.subr.mxu0 %v552
    %2460 = vmatpush1.msra.mxu0 %v551
    %2461 = vmatprep.subr.mxu0 %v556
    %2462 = vmatpush1.msra.mxu0 %v555
    %2463 = vmatprep.subr.mxu0 %v560
    %2464 = vmatpush1.msra.mxu0 %v559
    %2465 = vmatprep.subr.mxu0 %v564
    %2466 = vmatpush1.msra.mxu0 %v563
    %2467 = vmatprep.subr.mxu0 %v568
    %2468 = vmatpush1.msra.mxu0 %v567
    %2469 = vmatprep.subr.mxu0 %v572
    %2470 = vmatpush1.msra.mxu0 %v571
    %2471 = vmatprep.subr.mxu0 %v576
    %2472 = vmatpush1.msra.mxu0 %v575
    %2473 = vmatprep.subr.mxu0 %v580
    %2474 = vmatpush1.msra.mxu0 %v579
    %2475 = vmatprep.subr.mxu0 %v584
    %2476 = vmatpush1.msra.mxu0 %v583
    %2477 = vmatprep.subr.mxu0 %v588
    %2478 = vmatpush1.msra.mxu0 %v587
    %2479 = vmatprep.subr.mxu0 %v592
    %2480 = vmatpush1.msra.mxu0 %v591
    %2481 = vmatprep.subr.mxu0 %v596
    %2482 = vmatpush1.msra.mxu0 %v595
    %2483 = vmatprep.subr.mxu0 %v600
    %2484 = vmatpush1.msra.mxu0 %v599
    %2485 = vmatprep.subr.mxu0 %v604
    %2486 = vmatpush1.msra.mxu0 %v603
    %2487 = vmatprep.subr.mxu0 %v608
    %2488 = vmatpush1.msra.mxu0 %v607
    %2489 = vmatprep.subr.mxu0 %v612
    %2490 = vmatpush1.msra.mxu0 %v611
    %2491 = vmatprep.subr.mxu0 0.0
    %2492 = vmatpush1.msra.mxu0 0.0
    %2493 = vmatprep.subr.mxu0 0.0
    %2494 = vmatpush1.msra.mxu0 0.0
    %2495 = vmatprep.subr.mxu0 0.0
    %2496 = vmatpush1.msra.mxu0 0.0
    %2497 = vmatprep.subr.mxu0 0.0
    %2498 = vmatpush1.msra.mxu0 0.0
    %2499 = vmatprep.subr.mxu0 0.0
    %2500 = vmatpush1.msra.mxu0 0.0
    %2501 = vmatprep.subr.mxu0 0.0
    %2502 = vmatpush1.msra.mxu0 0.0
    %2503 = vmatprep.subr.mxu0 0.0
    %2504 = vmatpush1.msra.mxu0 0.0
    %2505 = vmatprep.subr.mxu0 0.0
    %2506 = vmatpush1.msra.mxu0 0.0
    %2507 = vmatprep.subr.mxu0 0.0
    %2508 = vmatpush1.msra.mxu0 0.0
    %2509 = vmatprep.subr.mxu0 0.0
    %2510 = vmatpush1.msra.mxu0 0.0
    %2511 = vmatprep.subr.mxu0 0.0
    %2512 = vmatpush1.msra.mxu0 0.0
    %2513 = vmatprep.subr.mxu0 0.0
    %2514 = vmatpush1.msra.mxu0 0.0
    %2515 = vmatprep.subr.mxu0 0.0
    %2516 = vmatpush1.msra.mxu0 0.0
    %2517 = vmatprep.subr.mxu0 0.0
    %2518 = vmatpush1.msra.mxu0 0.0
    %2519 = vmatprep.subr.mxu0 0.0
    %2520 = vmatpush1.msra.mxu0 0.0
    %2521 = vmatprep.subr.mxu0 0.0
    %2522 = vmatpush1.msra.mxu0 0.0
    %2523 = vmatprep.mubr.f32.mxu0 0.0
    %2524 = vmatmul.mubr.f32.gmra.mrb[0].mxu0 %v2380
    %v2525 = vpop.f32.mrb[0].mxu0
    %v2526 = vadd.f32 0.0, %v2525
    %v2527 = vpop.f32.mrb[0].mxu0
    %v2528 = vadd.f32 0.0, %v2527
    %2529 = vdwg.mxu0
    %v2530 = vadd.f32 %v2384, %v2455
    %v2531 = vadd.f32 %v2385, %v2457
    %v2532 = vadd.f32 %v2386, %v2526
    %v2533 = vadd.f32 %v2387, %v2528
    %v2534 = vxor.u32 %v2530, 2147483648
    %v2535 = vmul.f32 %v2534, 1.442695
    %v2536 = vpow.pop %v2535
    %v2537 = vadd.f32 %v2536, 1.0
    %v2538 = vrcp.pop %v2537
    %v2539 = vmul.f32 1.0, %v2538
    %v2540 = vxor.u32 %v2531, 2147483648
    %v2541 = vmul.f32 %v2540, 1.442695
    %v2542 = vpow.pop %v2541
    %v2543 = vadd.f32 %v2542, 1.0
    %v2544 = vrcp.pop %v2543
    %v2545 = vmul.f32 1.0, %v2544
    %v2546 = vtanh.pop %v2532
    %v2547 = vxor.u32 %v2533, 2147483648
    %v2548 = vmul.f32 %v2547, 1.442695
    %v2549 = vpow.pop %v2548
    %v2550 = vadd.f32 %v2549, 1.0
    %v2551 = vrcp.pop %v2550
    %v2552 = vmul.f32 1.0, %v2551
    %v2553 = vmul.f32 %v2545, %v2378
    %v2554 = vmul.f32 %v2539, %v2546
    %v2555 = vadd.f32 %v2553, %v2554
    %v2556 = vtanh.pop %v2555
    %v2557 = vmul.f32 %v2552, %v2556
    %s2558 = scalar_lea.vmem [#allocation5], 80
    %2559 = vst [vmem:[%s2558] sm:$0xff] %v2557
    %s2560 = scalar_lea.vmem [#allocation4], 352
    %v2561 = vld [vmem:[%s2560] sm:$0xff]
    %v2562 = vld [vmem:[%s2560 + $0x8] sm:$0xff]
    %v2563 = vld [vmem:[%s2560 + $0x10] sm:$0xff]
    %v2564 = vld [vmem:[%s2560 + $0x18] sm:$0xff]
    %2565 = vmatprep.subr.mxu0 %v550
    %2566 = vmatpush1.msra.mxu0 %v549
    %2567 = vmatprep.subr.mxu0 %v554
    %2568 = vmatpush1.msra.mxu0 %v553
    %2569 = vmatprep.subr.mxu0 %v558
    %2570 = vmatpush1.msra.mxu0 %v557
    %2571 = vmatprep.subr.mxu0 %v562
    %2572 = vmatpush1.msra.mxu0 %v561
    %2573 = vmatprep.subr.mxu0 %v566
    %2574 = vmatpush1.msra.mxu0 %v565
    %2575 = vmatprep.subr.mxu0 %v570
    %2576 = vmatpush1.msra.mxu0 %v569
    %2577 = vmatprep.subr.mxu0 %v574
    %2578 = vmatpush1.msra.mxu0 %v573
    %2579 = vmatprep.subr.mxu0 %v578
    %2580 = vmatpush1.msra.mxu0 %v577
    %2581 = vmatprep.subr.mxu0 %v582
    %2582 = vmatpush1.msra.mxu0 %v581
    %2583 = vmatprep.subr.mxu0 %v586
    %2584 = vmatpush1.msra.mxu0 %v585
    %2585 = vmatprep.subr.mxu0 %v590
    %2586 = vmatpush1.msra.mxu0 %v589
    %2587 = vmatprep.subr.mxu0 %v594
    %2588 = vmatpush1.msra.mxu0 %v593
    %2589 = vmatprep.subr.mxu0 %v598
    %2590 = vmatpush1.msra.mxu0 %v597
    %2591 = vmatprep.subr.mxu0 %v602
    %2592 = vmatpush1.msra.mxu0 %v601
    %2593 = vmatprep.subr.mxu0 %v606
    %2594 = vmatpush1.msra.mxu0 %v605
    %2595 = vmatprep.subr.mxu0 %v610
    %2596 = vmatpush1.msra.mxu0 %v609
    %2597 = vmatprep.subr.mxu0 0.0
    %2598 = vmatpush1.msra.mxu0 0.0
    %2599 = vmatprep.subr.mxu0 0.0
    %2600 = vmatpush1.msra.mxu0 0.0
    %2601 = vmatprep.subr.mxu0 0.0
    %2602 = vmatpush1.msra.mxu0 0.0
    %2603 = vmatprep.subr.mxu0 0.0
    %2604 = vmatpush1.msra.mxu0 0.0
    %2605 = vmatprep.subr.mxu0 0.0
    %2606 = vmatpush1.msra.mxu0 0.0
    %2607 = vmatprep.subr.mxu0 0.0
    %2608 = vmatpush1.msra.mxu0 0.0
    %2609 = vmatprep.subr.mxu0 0.0
    %2610 = vmatpush1.msra.mxu0 0.0
    %2611 = vmatprep.subr.mxu0 0.0
    %2612 = vmatpush1.msra.mxu0 0.0
    %2613 = vmatprep.subr.mxu0 0.0
    %2614 = vmatpush1.msra.mxu0 0.0
    %2615 = vmatprep.subr.mxu0 0.0
    %2616 = vmatpush1.msra.mxu0 0.0
    %2617 = vmatprep.subr.mxu0 0.0
    %2618 = vmatpush1.msra.mxu0 0.0
    %2619 = vmatprep.subr.mxu0 0.0
    %2620 = vmatpush1.msra.mxu0 0.0
    %2621 = vmatprep.subr.mxu0 0.0
    %2622 = vmatpush1.msra.mxu0 0.0
    %2623 = vmatprep.subr.mxu0 0.0
    %2624 = vmatpush1.msra.mxu0 0.0
    %2625 = vmatprep.subr.mxu0 0.0
    %2626 = vmatpush1.msra.mxu0 0.0
    %2627 = vmatprep.subr.mxu0 0.0
    %2628 = vmatpush1.msra.mxu0 0.0
    %2629 = vmatprep.mubr.f32.mxu0 0.0
    %2630 = vmatmul.mubr.f32.gmra.mrb[0].mxu0 %v2557
    %v2631 = vpop.f32.mrb[0].mxu0
    %v2632 = vadd.f32 0.0, %v2631
    %v2633 = vpop.f32.mrb[0].mxu0
    %v2634 = vadd.f32 0.0, %v2633
    %2635 = vdwg.mxu0
    %2636 = vmatprep.subr.mxu0 %v552
    %2637 = vmatpush1.msra.mxu0 %v551
    %2638 = vmatprep.subr.mxu0 %v556
    %2639 = vmatpush1.msra.mxu0 %v555
    %2640 = vmatprep.subr.mxu0 %v560
    %2641 = vmatpush1.msra.mxu0 %v559
    %2642 = vmatprep.subr.mxu0 %v564
    %2643 = vmatpush1.msra.mxu0 %v563
    %2644 = vmatprep.subr.mxu0 %v568
    %2645 = vmatpush1.msra.mxu0 %v567
    %2646 = vmatprep.subr.mxu0 %v572
    %2647 = vmatpush1.msra.mxu0 %v571
    %2648 = vmatprep.subr.mxu0 %v576
    %2649 = vmatpush1.msra.mxu0 %v575
    %2650 = vmatprep.subr.mxu0 %v580
    %2651 = vmatpush1.msra.mxu0 %v579
    %2652 = vmatprep.subr.mxu0 %v584
    %2653 = vmatpush1.msra.mxu0 %v583
    %2654 = vmatprep.subr.mxu0 %v588
    %2655 = vmatpush1.msra.mxu0 %v587
    %2656 = vmatprep.subr.mxu0 %v592
    %2657 = vmatpush1.msra.mxu0 %v591
    %2658 = vmatprep.subr.mxu0 %v596
    %2659 = vmatpush1.msra.mxu0 %v595
    %2660 = vmatprep.subr.mxu0 %v600
    %2661 = vmatpush1.msra.mxu0 %v599
    %2662 = vmatprep.subr.mxu0 %v604
    %2663 = vmatpush1.msra.mxu0 %v603
    %2664 = vmatprep.subr.mxu0 %v608
    %2665 = vmatpush1.msra.mxu0 %v607
    %2666 = vmatprep.subr.mxu0 %v612
    %2667 = vmatpush1.msra.mxu0 %v611
    %2668 = vmatprep.subr.mxu0 0.0
    %2669 = vmatpush1.msra.mxu0 0.0
    %2670 = vmatprep.subr.mxu0 0.0
    %2671 = vmatpush1.msra.mxu0 0.0
    %2672 = vmatprep.subr.mxu0 0.0
    %2673 = vmatpush1.msra.mxu0 0.0
    %2674 = vmatprep.subr.mxu0 0.0
    %2675 = vmatpush1.msra.mxu0 0.0
    %2676 = vmatprep.subr.mxu0 0.0
    %2677 = vmatpush1.msra.mxu0 0.0
    %2678 = vmatprep.subr.mxu0 0.0
    %2679 = vmatpush1.msra.mxu0 0.0
    %2680 = vmatprep.subr.mxu0 0.0
    %2681 = vmatpush1.msra.mxu0 0.0
    %2682 = vmatprep.subr.mxu0 0.0
    %2683 = vmatpush1.msra.mxu0 0.0
    %2684 = vmatprep.subr.mxu0 0.0
    %2685 = vmatpush1.msra.mxu0 0.0
    %2686 = vmatprep.subr.mxu0 0.0
    %2687 = vmatpush1.msra.mxu0 0.0
    %2688 = vmatprep.subr.mxu0 0.0
    %2689 = vmatpush1.msra.mxu0 0.0
    %2690 = vmatprep.subr.mxu0 0.0
    %2691 = vmatpush1.msra.mxu0 0.0
    %2692 = vmatprep.subr.mxu0 0.0
    %2693 = vmatpush1.msra.mxu0 0.0
    %2694 = vmatprep.subr.mxu0 0.0
    %2695 = vmatpush1.msra.mxu0 0.0
    %2696 = vmatprep.subr.mxu0 0.0
    %2697 = vmatpush1.msra.mxu0 0.0
    %2698 = vmatprep.subr.mxu0 0.0
    %2699 = vmatpush1.msra.mxu0 0.0
    %2700 = vmatprep.mubr.f32.mxu0 0.0
    %2701 = vmatmul.mubr.f32.gmra.mrb[0].mxu0 %v2557
    %v2702 = vpop.f32.mrb[0].mxu0
    %v2703 = vadd.f32 0.0, %v2702
    %v2704 = vpop.f32.mrb[0].mxu0
    %v2705 = vadd.f32 0.0, %v2704
    %2706 = vdwg.mxu0
    %v2707 = vadd.f32 %v2561, %v2632
    %v2708 = vadd.f32 %v2562, %v2634
    %v2709 = vadd.f32 %v2563, %v2703
    %v2710 = vadd.f32 %v2564, %v2705
    %v2711 = vxor.u32 %v2707, 2147483648
    %v2712 = vmul.f32 %v2711, 1.442695
    %v2713 = vpow.pop %v2712
    %v2714 = vadd.f32 %v2713, 1.0
    %v2715 = vrcp.pop %v2714
    %v2716 = vmul.f32 1.0, %v2715
    %v2717 = vxor.u32 %v2708, 2147483648
    %v2718 = vmul.f32 %v2717, 1.442695
    %v2719 = vpow.pop %v2718
    %v2720 = vadd.f32 %v2719, 1.0
    %v2721 = vrcp.pop %v2720
    %v2722 = vmul.f32 1.0, %v2721
    %v2723 = vtanh.pop %v2709
    %v2724 = vxor.u32 %v2710, 2147483648
    %v2725 = vmul.f32 %v2724, 1.442695
    %v2726 = vpow.pop %v2725
    %v2727 = vadd.f32 %v2726, 1.0
    %v2728 = vrcp.pop %v2727
    %v2729 = vmul.f32 1.0, %v2728
    %v2730 = vmul.f32 %v2722, %v2555
    %v2731 = vmul.f32 %v2716, %v2723
    %v2732 = vadd.f32 %v2730, %v2731
    %v2733 = vtanh.pop %v2732
    %v2734 = vmul.f32 %v2729, %v2733
    %s2735 = scalar_lea.vmem [#allocation5], 88
    %2736 = vst [vmem:[%s2735] sm:$0xff] %v2734
    %s2737 = scalar_lea.vmem [#allocation4], 384
    %v2738 = vld [vmem:[%s2737] sm:$0xff]
    %v2739 = vld [vmem:[%s2737 + $0x8] sm:$0xff]
    %v2740 = vld [vmem:[%s2737 + $0x10] sm:$0xff]
    %v2741 = vld [vmem:[%s2737 + $0x18] sm:$0xff]
    %2742 = vmatprep.subr.mxu0 %v550
    %2743 = vmatpush1.msra.mxu0 %v549
    %2744 = vmatprep.subr.mxu0 %v554
    %2745 = vmatpush1.msra.mxu0 %v553
    %2746 = vmatprep.subr.mxu0 %v558
    %2747 = vmatpush1.msra.mxu0 %v557
    %2748 = vmatprep.subr.mxu0 %v562
    %2749 = vmatpush1.msra.mxu0 %v561
    %2750 = vmatprep.subr.mxu0 %v566
    %2751 = vmatpush1.msra.mxu0 %v565
    %2752 = vmatprep.subr.mxu0 %v570
    %2753 = vmatpush1.msra.mxu0 %v569
    %2754 = vmatprep.subr.mxu0 %v574
    %2755 = vmatpush1.msra.mxu0 %v573
    %2756 = vmatprep.subr.mxu0 %v578
    %2757 = vmatpush1.msra.mxu0 %v577
    %2758 = vmatprep.subr.mxu0 %v582
    %2759 = vmatpush1.msra.mxu0 %v581
    %2760 = vmatprep.subr.mxu0 %v586
    %2761 = vmatpush1.msra.mxu0 %v585
    %2762 = vmatprep.subr.mxu0 %v590
    %2763 = vmatpush1.msra.mxu0 %v589
    %2764 = vmatprep.subr.mxu0 %v594
    %2765 = vmatpush1.msra.mxu0 %v593
    %2766 = vmatprep.subr.mxu0 %v598
    %2767 = vmatpush1.msra.mxu0 %v597
    %2768 = vmatprep.subr.mxu0 %v602
    %2769 = vmatpush1.msra.mxu0 %v601
    %2770 = vmatprep.subr.mxu0 %v606
    %2771 = vmatpush1.msra.mxu0 %v605
    %2772 = vmatprep.subr.mxu0 %v610
    %2773 = vmatpush1.msra.mxu0 %v609
    %2774 = vmatprep.subr.mxu0 0.0
    %2775 = vmatpush1.msra.mxu0 0.0
    %2776 = vmatprep.subr.mxu0 0.0
    %2777 = vmatpush1.msra.mxu0 0.0
    %2778 = vmatprep.subr.mxu0 0.0
    %2779 = vmatpush1.msra.mxu0 0.0
    %2780 = vmatprep.subr.mxu0 0.0
    %2781 = vmatpush1.msra.mxu0 0.0
    %2782 = vmatprep.subr.mxu0 0.0
    %2783 = vmatpush1.msra.mxu0 0.0
    %2784 = vmatprep.subr.mxu0 0.0
    %2785 = vmatpush1.msra.mxu0 0.0
    %2786 = vmatprep.subr.mxu0 0.0
    %2787 = vmatpush1.msra.mxu0 0.0
    %2788 = vmatprep.subr.mxu0 0.0
    %2789 = vmatpush1.msra.mxu0 0.0
    %2790 = vmatprep.subr.mxu0 0.0
    %2791 = vmatpush1.msra.mxu0 0.0
    %2792 = vmatprep.subr.mxu0 0.0
    %2793 = vmatpush1.msra.mxu0 0.0
    %2794 = vmatprep.subr.mxu0 0.0
    %2795 = vmatpush1.msra.mxu0 0.0
    %2796 = vmatprep.subr.mxu0 0.0
    %2797 = vmatpush1.msra.mxu0 0.0
    %2798 = vmatprep.subr.mxu0 0.0
    %2799 = vmatpush1.msra.mxu0 0.0
    %2800 = vmatprep.subr.mxu0 0.0
    %2801 = vmatpush1.msra.mxu0 0.0
    %2802 = vmatprep.subr.mxu0 0.0
    %2803 = vmatpush1.msra.mxu0 0.0
    %2804 = vmatprep.subr.mxu0 0.0
    %2805 = vmatpush1.msra.mxu0 0.0
    %2806 = vmatprep.mubr.f32.mxu0 0.0
    %2807 = vmatmul.mubr.f32.gmra.mrb[0].mxu0 %v2734
    %v2808 = vpop.f32.mrb[0].mxu0
    %v2809 = vadd.f32 0.0, %v2808
    %v2810 = vpop.f32.mrb[0].mxu0
    %v2811 = vadd.f32 0.0, %v2810
    %2812 = vdwg.mxu0
    %2813 = vmatprep.subr.mxu0 %v552
    %2814 = vmatpush1.msra.mxu0 %v551
    %2815 = vmatprep.subr.mxu0 %v556
    %2816 = vmatpush1.msra.mxu0 %v555
    %2817 = vmatprep.subr.mxu0 %v560
    %2818 = vmatpush1.msra.mxu0 %v559
    %2819 = vmatprep.subr.mxu0 %v564
    %2820 = vmatpush1.msra.mxu0 %v563
    %2821 = vmatprep.subr.mxu0 %v568
    %2822 = vmatpush1.msra.mxu0 %v567
    %2823 = vmatprep.subr.mxu0 %v572
    %2824 = vmatpush1.msra.mxu0 %v571
    %2825 = vmatprep.subr.mxu0 %v576
    %2826 = vmatpush1.msra.mxu0 %v575
    %2827 = vmatprep.subr.mxu0 %v580
    %2828 = vmatpush1.msra.mxu0 %v579
    %2829 = vmatprep.subr.mxu0 %v584
    %2830 = vmatpush1.msra.mxu0 %v583
    %2831 = vmatprep.subr.mxu0 %v588
    %2832 = vmatpush1.msra.mxu0 %v587
    %2833 = vmatprep.subr.mxu0 %v592
    %2834 = vmatpush1.msra.mxu0 %v591
    %2835 = vmatprep.subr.mxu0 %v596
    %2836 = vmatpush1.msra.mxu0 %v595
    %2837 = vmatprep.subr.mxu0 %v600
    %2838 = vmatpush1.msra.mxu0 %v599
    %2839 = vmatprep.subr.mxu0 %v604
    %2840 = vmatpush1.msra.mxu0 %v603
    %2841 = vmatprep.subr.mxu0 %v608
    %2842 = vmatpush1.msra.mxu0 %v607
    %2843 = vmatprep.subr.mxu0 %v612
    %2844 = vmatpush1.msra.mxu0 %v611
    %2845 = vmatprep.subr.mxu0 0.0
    %2846 = vmatpush1.msra.mxu0 0.0
    %2847 = vmatprep.subr.mxu0 0.0
    %2848 = vmatpush1.msra.mxu0 0.0
    %2849 = vmatprep.subr.mxu0 0.0
    %2850 = vmatpush1.msra.mxu0 0.0
    %2851 = vmatprep.subr.mxu0 0.0
    %2852 = vmatpush1.msra.mxu0 0.0
    %2853 = vmatprep.subr.mxu0 0.0
    %2854 = vmatpush1.msra.mxu0 0.0
    %2855 = vmatprep.subr.mxu0 0.0
    %2856 = vmatpush1.msra.mxu0 0.0
    %2857 = vmatprep.subr.mxu0 0.0
    %2858 = vmatpush1.msra.mxu0 0.0
    %2859 = vmatprep.subr.mxu0 0.0
    %2860 = vmatpush1.msra.mxu0 0.0
    %2861 = vmatprep.subr.mxu0 0.0
    %2862 = vmatpush1.msra.mxu0 0.0
    %2863 = vmatprep.subr.mxu0 0.0
    %2864 = vmatpush1.msra.mxu0 0.0
    %2865 = vmatprep.subr.mxu0 0.0
    %2866 = vmatpush1.msra.mxu0 0.0
    %2867 = vmatprep.subr.mxu0 0.0
    %2868 = vmatpush1.msra.mxu0 0.0
    %2869 = vmatprep.subr.mxu0 0.0
    %2870 = vmatpush1.msra.mxu0 0.0
    %2871 = vmatprep.subr.mxu0 0.0
    %2872 = vmatpush1.msra.mxu0 0.0
    %2873 = vmatprep.subr.mxu0 0.0
    %2874 = vmatpush1.msra.mxu0 0.0
    %2875 = vmatprep.subr.mxu0 0.0
    %2876 = vmatpush1.msra.mxu0 0.0
    %2877 = vmatprep.mubr.f32.mxu0 0.0
    %2878 = vmatmul.mubr.f32.gmra.mrb[0].mxu0 %v2734
    %v2879 = vpop.f32.mrb[0].mxu0
    %v2880 = vadd.f32 0.0, %v2879
    %v2881 = vpop.f32.mrb[0].mxu0
    %v2882 = vadd.f32 0.0, %v2881
    %2883 = vdwg.mxu0
    %v2884 = vadd.f32 %v2738, %v2809
    %v2885 = vadd.f32 %v2739, %v2811
    %v2886 = vadd.f32 %v2740, %v2880
    %v2887 = vadd.f32 %v2741, %v2882
    %v2888 = vxor.u32 %v2884, 2147483648
    %v2889 = vmul.f32 %v2888, 1.442695
    %v2890 = vpow.pop %v2889
    %v2891 = vadd.f32 %v2890, 1.0
    %v2892 = vrcp.pop %v2891
    %v2893 = vmul.f32 1.0, %v2892
    %v2894 = vxor.u32 %v2885, 2147483648
    %v2895 = vmul.f32 %v2894, 1.442695
    %v2896 = vpow.pop %v2895
    %v2897 = vadd.f32 %v2896, 1.0
    %v2898 = vrcp.pop %v2897
    %v2899 = vmul.f32 1.0, %v2898
    %v2900 = vtanh.pop %v2886
    %v2901 = vxor.u32 %v2887, 2147483648
    %v2902 = vmul.f32 %v2901, 1.442695
    %v2903 = vpow.pop %v2902
    %v2904 = vadd.f32 %v2903, 1.0
    %v2905 = vrcp.pop %v2904
    %v2906 = vmul.f32 1.0, %v2905
    %v2907 = vmul.f32 %v2899, %v2732
    %v2908 = vmul.f32 %v2893, %v2900
    %v2909 = vadd.f32 %v2907, %v2908
    %v2910 = vtanh.pop %v2909
    %v2911 = vmul.f32 %v2906, %v2910
    %s2912 = scalar_lea.vmem [#allocation5], 96
    %2913 = vst [vmem:[%s2912] sm:$0xff] %v2911
    %s2914 = scalar_lea.vmem [#allocation4], 416
    %v2915 = vld [vmem:[%s2914] sm:$0xff]
    %v2916 = vld [vmem:[%s2914 + $0x8] sm:$0xff]
    %v2917 = vld [vmem:[%s2914 + $0x10] sm:$0xff]
    %v2918 = vld [vmem:[%s2914 + $0x18] sm:$0xff]
    %2919 = vmatprep.subr.mxu0 %v550
    %2920 = vmatpush1.msra.mxu0 %v549
    %2921 = vmatprep.subr.mxu0 %v554
    %2922 = vmatpush1.msra.mxu0 %v553
    %2923 = vmatprep.subr.mxu0 %v558
    %2924 = vmatpush1.msra.mxu0 %v557
    %2925 = vmatprep.subr.mxu0 %v562
    %2926 = vmatpush1.msra.mxu0 %v561
    %2927 = vmatprep.subr.mxu0 %v566
    %2928 = vmatpush1.msra.mxu0 %v565
    %2929 = vmatprep.subr.mxu0 %v570
    %2930 = vmatpush1.msra.mxu0 %v569
    %2931 = vmatprep.subr.mxu0 %v574
    %2932 = vmatpush1.msra.mxu0 %v573
    %2933 = vmatprep.subr.mxu0 %v578
    %2934 = vmatpush1.msra.mxu0 %v577
    %2935 = vmatprep.subr.mxu0 %v582
    %2936 = vmatpush1.msra.mxu0 %v581
    %2937 = vmatprep.subr.mxu0 %v586
    %2938 = vmatpush1.msra.mxu0 %v585
    %2939 = vmatprep.subr.mxu0 %v590
    %2940 = vmatpush1.msra.mxu0 %v589
    %2941 = vmatprep.subr.mxu0 %v594
    %2942 = vmatpush1.msra.mxu0 %v593
    %2943 = vmatprep.subr.mxu0 %v598
    %2944 = vmatpush1.msra.mxu0 %v597
    %2945 = vmatprep.subr.mxu0 %v602
    %2946 = vmatpush1.msra.mxu0 %v601
    %2947 = vmatprep.subr.mxu0 %v606
    %2948 = vmatpush1.msra.mxu0 %v605
    %2949 = vmatprep.subr.mxu0 %v610
    %2950 = vmatpush1.msra.mxu0 %v609
    %2951 = vmatprep.subr.mxu0 0.0
    %2952 = vmatpush1.msra.mxu0 0.0
    %2953 = vmatprep.subr.mxu0 0.0
    %2954 = vmatpush1.msra.mxu0 0.0
    %2955 = vmatprep.subr.mxu0 0.0
    %2956 = vmatpush1.msra.mxu0 0.0
    %2957 = vmatprep.subr.mxu0 0.0
    %2958 = vmatpush1.msra.mxu0 0.0
    %2959 = vmatprep.subr.mxu0 0.0
    %2960 = vmatpush1.msra.mxu0 0.0
    %2961 = vmatprep.subr.mxu0 0.0
    %2962 = vmatpush1.msra.mxu0 0.0
    %2963 = vmatprep.subr.mxu0 0.0
    %2964 = vmatpush1.msra.mxu0 0.0
    %2965 = vmatprep.subr.mxu0 0.0
    %2966 = vmatpush1.msra.mxu0 0.0
    %2967 = vmatprep.subr.mxu0 0.0
    %2968 = vmatpush1.msra.mxu0 0.0
    %2969 = vmatprep.subr.mxu0 0.0
    %2970 = vmatpush1.msra.mxu0 0.0
    %2971 = vmatprep.subr.mxu0 0.0
    %2972 = vmatpush1.msra.mxu0 0.0
    %2973 = vmatprep.subr.mxu0 0.0
    %2974 = vmatpush1.msra.mxu0 0.0
    %2975 = vmatprep.subr.mxu0 0.0
    %2976 = vmatpush1.msra.mxu0 0.0
    %2977 = vmatprep.subr.mxu0 0.0
    %2978 = vmatpush1.msra.mxu0 0.0
    %2979 = vmatprep.subr.mxu0 0.0
    %2980 = vmatpush1.msra.mxu0 0.0
    %2981 = vmatprep.subr.mxu0 0.0
    %2982 = vmatpush1.msra.mxu0 0.0
    %2983 = vmatprep.mubr.f32.mxu0 0.0
    %2984 = vmatmul.mubr.f32.gmra.mrb[0].mxu0 %v2911
    %v2985 = vpop.f32.mrb[0].mxu0
    %v2986 = vadd.f32 0.0, %v2985
    %v2987 = vpop.f32.mrb[0].mxu0
    %v2988 = vadd.f32 0.0, %v2987
    %2989 = vdwg.mxu0
    %2990 = vmatprep.subr.mxu0 %v552
    %2991 = vmatpush1.msra.mxu0 %v551
    %2992 = vmatprep.subr.mxu0 %v556
    %2993 = vmatpush1.msra.mxu0 %v555
    %2994 = vmatprep.subr.mxu0 %v560
    %2995 = vmatpush1.msra.mxu0 %v559
    %2996 = vmatprep.subr.mxu0 %v564
    %2997 = vmatpush1.msra.mxu0 %v563
    %2998 = vmatprep.subr.mxu0 %v568
    %2999 = vmatpush1.msra.mxu0 %v567
    %3000 = vmatprep.subr.mxu0 %v572
    %3001 = vmatpush1.msra.mxu0 %v571
    %3002 = vmatprep.subr.mxu0 %v576
    %3003 = vmatpush1.msra.mxu0 %v575
    %3004 = vmatprep.subr.mxu0 %v580
    %3005 = vmatpush1.msra.mxu0 %v579
    %3006 = vmatprep.subr.mxu0 %v584
    %3007 = vmatpush1.msra.mxu0 %v583
    %3008 = vmatprep.subr.mxu0 %v588
    %3009 = vmatpush1.msra.mxu0 %v587
    %3010 = vmatprep.subr.mxu0 %v592
    %3011 = vmatpush1.msra.mxu0 %v591
    %3012 = vmatprep.subr.mxu0 %v596
    %3013 = vmatpush1.msra.mxu0 %v595
    %3014 = vmatprep.subr.mxu0 %v600
    %3015 = vmatpush1.msra.mxu0 %v599
    %3016 = vmatprep.subr.mxu0 %v604
    %3017 = vmatpush1.msra.mxu0 %v603
    %3018 = vmatprep.subr.mxu0 %v608
    %3019 = vmatpush1.msra.mxu0 %v607
    %3020 = vmatprep.subr.mxu0 %v612
    %3021 = vmatpush1.msra.mxu0 %v611
    %3022 = vmatprep.subr.mxu0 0.0
    %3023 = vmatpush1.msra.mxu0 0.0
    %3024 = vmatprep.subr.mxu0 0.0
    %3025 = vmatpush1.msra.mxu0 0.0
    %3026 = vmatprep.subr.mxu0 0.0
    %3027 = vmatpush1.msra.mxu0 0.0
    %3028 = vmatprep.subr.mxu0 0.0
    %3029 = vmatpush1.msra.mxu0 0.0
    %3030 = vmatprep.subr.mxu0 0.0
    %3031 = vmatpush1.msra.mxu0 0.0
    %3032 = vmatprep.subr.mxu0 0.0
    %3033 = vmatpush1.msra.mxu0 0.0
    %3034 = vmatprep.subr.mxu0 0.0
    %3035 = vmatpush1.msra.mxu0 0.0
    %3036 = vmatprep.subr.mxu0 0.0
    %3037 = vmatpush1.msra.mxu0 0.0
    %3038 = vmatprep.subr.mxu0 0.0
    %3039 = vmatpush1.msra.mxu0 0.0
    %3040 = vmatprep.subr.mxu0 0.0
    %3041 = vmatpush1.msra.mxu0 0.0
    %3042 = vmatprep.subr.mxu0 0.0
    %3043 = vmatpush1.msra.mxu0 0.0
    %3044 = vmatprep.subr.mxu0 0.0
    %3045 = vmatpush1.msra.mxu0 0.0
    %3046 = vmatprep.subr.mxu0 0.0
    %3047 = vmatpush1.msra.mxu0 0.0
    %3048 = vmatprep.subr.mxu0 0.0
    %3049 = vmatpush1.msra.mxu0 0.0
    %3050 = vmatprep.subr.mxu0 0.0
    %3051 = vmatpush1.msra.mxu0 0.0
    %3052 = vmatprep.subr.mxu0 0.0
    %3053 = vmatpush1.msra.mxu0 0.0
    %3054 = vmatprep.mubr.f32.mxu0 0.0
    %3055 = vmatmul.mubr.f32.gmra.mrb[0].mxu0 %v2911
    %v3056 = vpop.f32.mrb[0].mxu0
    %v3057 = vadd.f32 0.0, %v3056
    %v3058 = vpop.f32.mrb[0].mxu0
    %v3059 = vadd.f32 0.0, %v3058
    %3060 = vdwg.mxu0
    %v3061 = vadd.f32 %v2915, %v2986
    %v3062 = vadd.f32 %v2916, %v2988
    %v3063 = vadd.f32 %v2917, %v3057
    %v3064 = vadd.f32 %v2918, %v3059
    %v3065 = vxor.u32 %v3061, 2147483648
    %v3066 = vmul.f32 %v3065, 1.442695
    %v3067 = vpow.pop %v3066
    %v3068 = vadd.f32 %v3067, 1.0
    %v3069 = vrcp.pop %v3068
    %v3070 = vmul.f32 1.0, %v3069
    %v3071 = vxor.u32 %v3062, 2147483648
    %v3072 = vmul.f32 %v3071, 1.442695
    %v3073 = vpow.pop %v3072
    %v3074 = vadd.f32 %v3073, 1.0
    %v3075 = vrcp.pop %v3074
    %v3076 = vmul.f32 1.0, %v3075
    %v3077 = vtanh.pop %v3063
    %v3078 = vxor.u32 %v3064, 2147483648
    %v3079 = vmul.f32 %v3078, 1.442695
    %v3080 = vpow.pop %v3079
    %v3081 = vadd.f32 %v3080, 1.0
    %v3082 = vrcp.pop %v3081
    %v3083 = vmul.f32 1.0, %v3082
    %v3084 = vmul.f32 %v3076, %v2909
    %v3085 = vmul.f32 %v3070, %v3077
    %v3086 = vadd.f32 %v3084, %v3085
    %v3087 = vtanh.pop %v3086
    %v3088 = vmul.f32 %v3083, %v3087
    %s3089 = scalar_lea.vmem [#allocation5], 104
    %3090 = vst [vmem:[%s3089] sm:$0xff] %v3088
    %s3091 = scalar_lea.vmem [#allocation4], 448
    %v3092 = vld [vmem:[%s3091] sm:$0xff]
    %v3093 = vld [vmem:[%s3091 + $0x8] sm:$0xff]
    %v3094 = vld [vmem:[%s3091 + $0x10] sm:$0xff]
    %v3095 = vld [vmem:[%s3091 + $0x18] sm:$0xff]
    %3096 = vmatprep.subr.mxu0 %v550
    %3097 = vmatpush1.msra.mxu0 %v549
    %3098 = vmatprep.subr.mxu0 %v554
    %3099 = vmatpush1.msra.mxu0 %v553
    %3100 = vmatprep.subr.mxu0 %v558
    %3101 = vmatpush1.msra.mxu0 %v557
    %3102 = vmatprep.subr.mxu0 %v562
    %3103 = vmatpush1.msra.mxu0 %v561
    %3104 = vmatprep.subr.mxu0 %v566
    %3105 = vmatpush1.msra.mxu0 %v565
    %3106 = vmatprep.subr.mxu0 %v570
    %3107 = vmatpush1.msra.mxu0 %v569
    %3108 = vmatprep.subr.mxu0 %v574
    %3109 = vmatpush1.msra.mxu0 %v573
    %3110 = vmatprep.subr.mxu0 %v578
    %3111 = vmatpush1.msra.mxu0 %v577
    %3112 = vmatprep.subr.mxu0 %v582
    %3113 = vmatpush1.msra.mxu0 %v581
    %3114 = vmatprep.subr.mxu0 %v586
    %3115 = vmatpush1.msra.mxu0 %v585
    %3116 = vmatprep.subr.mxu0 %v590
    %3117 = vmatpush1.msra.mxu0 %v589
    %3118 = vmatprep.subr.mxu0 %v594
    %3119 = vmatpush1.msra.mxu0 %v593
    %3120 = vmatprep.subr.mxu0 %v598
    %3121 = vmatpush1.msra.mxu0 %v597
    %3122 = vmatprep.subr.mxu0 %v602
    %3123 = vmatpush1.msra.mxu0 %v601
    %3124 = vmatprep.subr.mxu0 %v606
    %3125 = vmatpush1.msra.mxu0 %v605
    %3126 = vmatprep.subr.mxu0 %v610
    %3127 = vmatpush1.msra.mxu0 %v609
    %3128 = vmatprep.subr.mxu0 0.0
    %3129 = vmatpush1.msra.mxu0 0.0
    %3130 = vmatprep.subr.mxu0 0.0
    %3131 = vmatpush1.msra.mxu0 0.0
    %3132 = vmatprep.subr.mxu0 0.0
    %3133 = vmatpush1.msra.mxu0 0.0
    %3134 = vmatprep.subr.mxu0 0.0
    %3135 = vmatpush1.msra.mxu0 0.0
    %3136 = vmatprep.subr.mxu0 0.0
    %3137 = vmatpush1.msra.mxu0 0.0
    %3138 = vmatprep.subr.mxu0 0.0
    %3139 = vmatpush1.msra.mxu0 0.0
    %3140 = vmatprep.subr.mxu0 0.0
    %3141 = vmatpush1.msra.mxu0 0.0
    %3142 = vmatprep.subr.mxu0 0.0
    %3143 = vmatpush1.msra.mxu0 0.0
    %3144 = vmatprep.subr.mxu0 0.0
    %3145 = vmatpush1.msra.mxu0 0.0
    %3146 = vmatprep.subr.mxu0 0.0
    %3147 = vmatpush1.msra.mxu0 0.0
    %3148 = vmatprep.subr.mxu0 0.0
    %3149 = vmatpush1.msra.mxu0 0.0
    %3150 = vmatprep.subr.mxu0 0.0
    %3151 = vmatpush1.msra.mxu0 0.0
    %3152 = vmatprep.subr.mxu0 0.0
    %3153 = vmatpush1.msra.mxu0 0.0
    %3154 = vmatprep.subr.mxu0 0.0
    %3155 = vmatpush1.msra.mxu0 0.0
    %3156 = vmatprep.subr.mxu0 0.0
    %3157 = vmatpush1.msra.mxu0 0.0
    %3158 = vmatprep.subr.mxu0 0.0
    %3159 = vmatpush1.msra.mxu0 0.0
    %3160 = vmatprep.mubr.f32.mxu0 0.0
    %3161 = vmatmul.mubr.f32.gmra.mrb[0].mxu0 %v3088
    %v3162 = vpop.f32.mrb[0].mxu0
    %v3163 = vadd.f32 0.0, %v3162
    %v3164 = vpop.f32.mrb[0].mxu0
    %v3165 = vadd.f32 0.0, %v3164
    %3166 = vdwg.mxu0
    %3167 = vmatprep.subr.mxu0 %v552
    %3168 = vmatpush1.msra.mxu0 %v551
    %3169 = vmatprep.subr.mxu0 %v556
    %3170 = vmatpush1.msra.mxu0 %v555
    %3171 = vmatprep.subr.mxu0 %v560
    %3172 = vmatpush1.msra.mxu0 %v559
    %3173 = vmatprep.subr.mxu0 %v564
    %3174 = vmatpush1.msra.mxu0 %v563
    %3175 = vmatprep.subr.mxu0 %v568
    %3176 = vmatpush1.msra.mxu0 %v567
    %3177 = vmatprep.subr.mxu0 %v572
    %3178 = vmatpush1.msra.mxu0 %v571
    %3179 = vmatprep.subr.mxu0 %v576
    %3180 = vmatpush1.msra.mxu0 %v575
    %3181 = vmatprep.subr.mxu0 %v580
    %3182 = vmatpush1.msra.mxu0 %v579
    %3183 = vmatprep.subr.mxu0 %v584
    %3184 = vmatpush1.msra.mxu0 %v583
    %3185 = vmatprep.subr.mxu0 %v588
    %3186 = vmatpush1.msra.mxu0 %v587
    %3187 = vmatprep.subr.mxu0 %v592
    %3188 = vmatpush1.msra.mxu0 %v591
    %3189 = vmatprep.subr.mxu0 %v596
    %3190 = vmatpush1.msra.mxu0 %v595
    %3191 = vmatprep.subr.mxu0 %v600
    %3192 = vmatpush1.msra.mxu0 %v599
    %3193 = vmatprep.subr.mxu0 %v604
    %3194 = vmatpush1.msra.mxu0 %v603
    %3195 = vmatprep.subr.mxu0 %v608
    %3196 = vmatpush1.msra.mxu0 %v607
    %3197 = vmatprep.subr.mxu0 %v612
    %3198 = vmatpush1.msra.mxu0 %v611
    %3199 = vmatprep.subr.mxu0 0.0
    %3200 = vmatpush1.msra.mxu0 0.0
    %3201 = vmatprep.subr.mxu0 0.0
    %3202 = vmatpush1.msra.mxu0 0.0
    %3203 = vmatprep.subr.mxu0 0.0
    %3204 = vmatpush1.msra.mxu0 0.0
    %3205 = vmatprep.subr.mxu0 0.0
    %3206 = vmatpush1.msra.mxu0 0.0
    %3207 = vmatprep.subr.mxu0 0.0
    %3208 = vmatpush1.msra.mxu0 0.0
    %3209 = vmatprep.subr.mxu0 0.0
    %3210 = vmatpush1.msra.mxu0 0.0
    %3211 = vmatprep.subr.mxu0 0.0
    %3212 = vmatpush1.msra.mxu0 0.0
    %3213 = vmatprep.subr.mxu0 0.0
    %3214 = vmatpush1.msra.mxu0 0.0
    %3215 = vmatprep.subr.mxu0 0.0
    %3216 = vmatpush1.msra.mxu0 0.0
    %3217 = vmatprep.subr.mxu0 0.0
    %3218 = vmatpush1.msra.mxu0 0.0
    %3219 = vmatprep.subr.mxu0 0.0
    %3220 = vmatpush1.msra.mxu0 0.0
    %3221 = vmatprep.subr.mxu0 0.0
    %3222 = vmatpush1.msra.mxu0 0.0
    %3223 = vmatprep.subr.mxu0 0.0
    %3224 = vmatpush1.msra.mxu0 0.0
    %3225 = vmatprep.subr.mxu0 0.0
    %3226 = vmatpush1.msra.mxu0 0.0
    %3227 = vmatprep.subr.mxu0 0.0
    %3228 = vmatpush1.msra.mxu0 0.0
    %3229 = vmatprep.subr.mxu0 0.0
    %3230 = vmatpush1.msra.mxu0 0.0
    %3231 = vmatprep.mubr.f32.mxu0 0.0
    %3232 = vmatmul.mubr.f32.gmra.mrb[0].mxu0 %v3088
    %v3233 = vpop.f32.mrb[0].mxu0
    %v3234 = vadd.f32 0.0, %v3233
    %v3235 = vpop.f32.mrb[0].mxu0
    %v3236 = vadd.f32 0.0, %v3235
    %3237 = vdwg.mxu0
    %v3238 = vadd.f32 %v3092, %v3163
    %v3239 = vadd.f32 %v3093, %v3165
    %v3240 = vadd.f32 %v3094, %v3234
    %v3241 = vadd.f32 %v3095, %v3236
    %v3242 = vxor.u32 %v3238, 2147483648
    %v3243 = vmul.f32 %v3242, 1.442695
    %v3244 = vpow.pop %v3243
    %v3245 = vadd.f32 %v3244, 1.0
    %v3246 = vrcp.pop %v3245
    %v3247 = vmul.f32 1.0, %v3246
    %v3248 = vxor.u32 %v3239, 2147483648
    %v3249 = vmul.f32 %v3248, 1.442695
    %v3250 = vpow.pop %v3249
    %v3251 = vadd.f32 %v3250, 1.0
    %v3252 = vrcp.pop %v3251
    %v3253 = vmul.f32 1.0, %v3252
    %v3254 = vtanh.pop %v3240
    %v3255 = vxor.u32 %v3241, 2147483648
    %v3256 = vmul.f32 %v3255, 1.442695
    %v3257 = vpow.pop %v3256
    %v3258 = vadd.f32 %v3257, 1.0
    %v3259 = vrcp.pop %v3258
    %v3260 = vmul.f32 1.0, %v3259
    %v3261 = vmul.f32 %v3253, %v3086
    %v3262 = vmul.f32 %v3247, %v3254
    %v3263 = vadd.f32 %v3261, %v3262
    %v3264 = vtanh.pop %v3263
    %v3265 = vmul.f32 %v3260, %v3264
    %s3266 = scalar_lea.vmem [#allocation5], 112
    %3267 = vst [vmem:[%s3266] sm:$0xff] %v3265
    %s3268 = scalar_lea.vmem [#allocation4], 480
    %v3269 = vld [vmem:[%s3268] sm:$0xff]
    %v3270 = vld [vmem:[%s3268 + $0x8] sm:$0xff]
    %v3271 = vld [vmem:[%s3268 + $0x10] sm:$0xff]
    %v3272 = vld [vmem:[%s3268 + $0x18] sm:$0xff]
    %3273 = vmatprep.subr.mxu0 %v550
    %3274 = vmatpush1.msra.mxu0 %v549
    %3275 = vmatprep.subr.mxu0 %v554
    %3276 = vmatpush1.msra.mxu0 %v553
    %3277 = vmatprep.subr.mxu0 %v558
    %3278 = vmatpush1.msra.mxu0 %v557
    %3279 = vmatprep.subr.mxu0 %v562
    %3280 = vmatpush1.msra.mxu0 %v561
    %3281 = vmatprep.subr.mxu0 %v566
    %3282 = vmatpush1.msra.mxu0 %v565
    %3283 = vmatprep.subr.mxu0 %v570
    %3284 = vmatpush1.msra.mxu0 %v569
    %3285 = vmatprep.subr.mxu0 %v574
    %3286 = vmatpush1.msra.mxu0 %v573
    %3287 = vmatprep.subr.mxu0 %v578
    %3288 = vmatpush1.msra.mxu0 %v577
    %3289 = vmatprep.subr.mxu0 %v582
    %3290 = vmatpush1.msra.mxu0 %v581
    %3291 = vmatprep.subr.mxu0 %v586
    %3292 = vmatpush1.msra.mxu0 %v585
    %3293 = vmatprep.subr.mxu0 %v590
    %3294 = vmatpush1.msra.mxu0 %v589
    %3295 = vmatprep.subr.mxu0 %v594
    %3296 = vmatpush1.msra.mxu0 %v593
    %3297 = vmatprep.subr.mxu0 %v598
    %3298 = vmatpush1.msra.mxu0 %v597
    %3299 = vmatprep.subr.mxu0 %v602
    %3300 = vmatpush1.msra.mxu0 %v601
    %3301 = vmatprep.subr.mxu0 %v606
    %3302 = vmatpush1.msra.mxu0 %v605
    %3303 = vmatprep.subr.mxu0 %v610
    %3304 = vmatpush1.msra.mxu0 %v609
    %3305 = vmatprep.subr.mxu0 0.0
    %3306 = vmatpush1.msra.mxu0 0.0
    %3307 = vmatprep.subr.mxu0 0.0
    %3308 = vmatpush1.msra.mxu0 0.0
    %3309 = vmatprep.subr.mxu0 0.0
    %3310 = vmatpush1.msra.mxu0 0.0
    %3311 = vmatprep.subr.mxu0 0.0
    %3312 = vmatpush1.msra.mxu0 0.0
    %3313 = vmatprep.subr.mxu0 0.0
    %3314 = vmatpush1.msra.mxu0 0.0
    %3315 = vmatprep.subr.mxu0 0.0
    %3316 = vmatpush1.msra.mxu0 0.0
    %3317 = vmatprep.subr.mxu0 0.0
    %3318 = vmatpush1.msra.mxu0 0.0
    %3319 = vmatprep.subr.mxu0 0.0
    %3320 = vmatpush1.msra.mxu0 0.0
    %3321 = vmatprep.subr.mxu0 0.0
    %3322 = vmatpush1.msra.mxu0 0.0
    %3323 = vmatprep.subr.mxu0 0.0
    %3324 = vmatpush1.msra.mxu0 0.0
    %3325 = vmatprep.subr.mxu0 0.0
    %3326 = vmatpush1.msra.mxu0 0.0
    %3327 = vmatprep.subr.mxu0 0.0
    %3328 = vmatpush1.msra.mxu0 0.0
    %3329 = vmatprep.subr.mxu0 0.0
    %3330 = vmatpush1.msra.mxu0 0.0
    %3331 = vmatprep.subr.mxu0 0.0
    %3332 = vmatpush1.msra.mxu0 0.0
    %3333 = vmatprep.subr.mxu0 0.0
    %3334 = vmatpush1.msra.mxu0 0.0
    %3335 = vmatprep.subr.mxu0 0.0
    %3336 = vmatpush1.msra.mxu0 0.0
    %3337 = vmatprep.mubr.f32.mxu0 0.0
    %3338 = vmatmul.mubr.f32.gmra.mrb[0].mxu0 %v3265
    %v3339 = vpop.f32.mrb[0].mxu0
    %v3340 = vadd.f32 0.0, %v3339
    %v3341 = vpop.f32.mrb[0].mxu0
    %v3342 = vadd.f32 0.0, %v3341
    %3343 = vdwg.mxu0
    %3344 = vmatprep.subr.mxu0 %v552
    %3345 = vmatpush1.msra.mxu0 %v551
    %3346 = vmatprep.subr.mxu0 %v556
    %3347 = vmatpush1.msra.mxu0 %v555
    %3348 = vmatprep.subr.mxu0 %v560
    %3349 = vmatpush1.msra.mxu0 %v559
    %3350 = vmatprep.subr.mxu0 %v564
    %3351 = vmatpush1.msra.mxu0 %v563
    %3352 = vmatprep.subr.mxu0 %v568
    %3353 = vmatpush1.msra.mxu0 %v567
    %3354 = vmatprep.subr.mxu0 %v572
    %3355 = vmatpush1.msra.mxu0 %v571
    %3356 = vmatprep.subr.mxu0 %v576
    %3357 = vmatpush1.msra.mxu0 %v575
    %3358 = vmatprep.subr.mxu0 %v580
    %3359 = vmatpush1.msra.mxu0 %v579
    %3360 = vmatprep.subr.mxu0 %v584
    %3361 = vmatpush1.msra.mxu0 %v583
    %3362 = vmatprep.subr.mxu0 %v588
    %3363 = vmatpush1.msra.mxu0 %v587
    %3364 = vmatprep.subr.mxu0 %v592
    %3365 = vmatpush1.msra.mxu0 %v591
    %3366 = vmatprep.subr.mxu0 %v596
    %3367 = vmatpush1.msra.mxu0 %v595
    %3368 = vmatprep.subr.mxu0 %v600
    %3369 = vmatpush1.msra.mxu0 %v599
    %3370 = vmatprep.subr.mxu0 %v604
    %3371 = vmatpush1.msra.mxu0 %v603
    %3372 = vmatprep.subr.mxu0 %v608
    %3373 = vmatpush1.msra.mxu0 %v607
    %3374 = vmatprep.subr.mxu0 %v612
    %3375 = vmatpush1.msra.mxu0 %v611
    %3376 = vmatprep.subr.mxu0 0.0
    %3377 = vmatpush1.msra.mxu0 0.0
    %3378 = vmatprep.subr.mxu0 0.0
    %3379 = vmatpush1.msra.mxu0 0.0
    %3380 = vmatprep.subr.mxu0 0.0
    %3381 = vmatpush1.msra.mxu0 0.0
    %3382 = vmatprep.subr.mxu0 0.0
    %3383 = vmatpush1.msra.mxu0 0.0
    %3384 = vmatprep.subr.mxu0 0.0
    %3385 = vmatpush1.msra.mxu0 0.0
    %3386 = vmatprep.subr.mxu0 0.0
    %3387 = vmatpush1.msra.mxu0 0.0
    %3388 = vmatprep.subr.mxu0 0.0
    %3389 = vmatpush1.msra.mxu0 0.0
    %3390 = vmatprep.subr.mxu0 0.0
    %3391 = vmatpush1.msra.mxu0 0.0
    %3392 = vmatprep.subr.mxu0 0.0
    %3393 = vmatpush1.msra.mxu0 0.0
    %3394 = vmatprep.subr.mxu0 0.0
    %3395 = vmatpush1.msra.mxu0 0.0
    %3396 = vmatprep.subr.mxu0 0.0
    %3397 = vmatpush1.msra.mxu0 0.0
    %3398 = vmatprep.subr.mxu0 0.0
    %3399 = vmatpush1.msra.mxu0 0.0
    %3400 = vmatprep.subr.mxu0 0.0
    %3401 = vmatpush1.msra.mxu0 0.0
    %3402 = vmatprep.subr.mxu0 0.0
    %3403 = vmatpush1.msra.mxu0 0.0
    %3404 = vmatprep.subr.mxu0 0.0
    %3405 = vmatpush1.msra.mxu0 0.0
    %3406 = vmatprep.subr.mxu0 0.0
    %3407 = vmatpush1.msra.mxu0 0.0
    %3408 = vmatprep.mubr.f32.mxu0 0.0
    %3409 = vmatmul.mubr.f32.gmra.mrb[0].mxu0 %v3265
    %v3410 = vpop.f32.mrb[0].mxu0
    %v3411 = vadd.f32 0.0, %v3410
    %v3412 = vpop.f32.mrb[0].mxu0
    %v3413 = vadd.f32 0.0, %v3412
    %3414 = vdwg.mxu0
    %v3415 = vadd.f32 %v3269, %v3340
    %v3416 = vadd.f32 %v3270, %v3342
    %v3417 = vadd.f32 %v3271, %v3411
    %v3418 = vadd.f32 %v3272, %v3413
    %v3419 = vxor.u32 %v3415, 2147483648
    %v3420 = vmul.f32 %v3419, 1.442695
    %v3421 = vpow.pop %v3420
    %v3422 = vadd.f32 %v3421, 1.0
    %v3423 = vrcp.pop %v3422
    %v3424 = vmul.f32 1.0, %v3423
    %v3425 = vxor.u32 %v3416, 2147483648
    %v3426 = vmul.f32 %v3425, 1.442695
    %v3427 = vpow.pop %v3426
    %v3428 = vadd.f32 %v3427, 1.0
    %v3429 = vrcp.pop %v3428
    %v3430 = vmul.f32 1.0, %v3429
    %v3431 = vtanh.pop %v3417
    %v3432 = vxor.u32 %v3418, 2147483648
    %v3433 = vmul.f32 %v3432, 1.442695
    %v3434 = vpow.pop %v3433
    %v3435 = vadd.f32 %v3434, 1.0
    %v3436 = vrcp.pop %v3435
    %v3437 = vmul.f32 1.0, %v3436
    %v3438 = vmul.f32 %v3430, %v3263
    %v3439 = vmul.f32 %v3424, %v3431
    %v3440 = vadd.f32 %v3438, %v3439
    %v3441 = vtanh.pop %v3440
    %v3442 = vmul.f32 %v3437, %v3441
    %s3443 = scalar_lea.vmem [#allocation5], 120
    %3444 = vst [vmem:[%s3443] sm:$0xff] %v3442
    %3445 = vst [vmem:[#allocation2] sm:$0xff] %v3442
    %3446 = vst [vmem:[#allocation3] sm:$0xff] %v3440
    %v3447 = vld [vmem:[#allocation5] sm:$0xff]
    %v3449 = vcombine.high %v3447, %v3447
    %v3451 = vunpack.c.l.s4 1966171168
    %v3452 = vunpack.c.0.s8 %v3451
    %v3453 = vlaneseq
    %v3454 = vshrl.u32 %v3453, 7
    %v3455 = vsub.s32 %v3452, %v3454
    %v3456 = vrot.slane %v3447, %v3455
    %v3458 = vunpack.c.l.s4 1966171168
    %v3459 = vunpack.c.0.s8 %v3458
    %v3460 = vlaneseq
    %v3461 = vshrl.u32 %v3460, 7
    %v3462 = vsub.s32 %v3459, %v3461
    %v3463 = vrot.slane %v3449, %v3462
    %v3464 = vcombine.high %v3456, %v3456
    %v3465 = vcombine.high %v3463, %v3463
    %v3467 = vunpack.c.l.s4 1966171168
    %v3468 = vunpack.c.0.s8 %v3467
    %v3469 = vlaneseq
    %v3470 = vshrl.u32 %v3469, 7
    %v3471 = vsub.s32 %v3468, %v3470
    %v3472 = vrot.slane %v3456, %v3471
    %v3474 = vunpack.c.l.s4 1966171168
    %v3475 = vunpack.c.0.s8 %v3474
    %v3476 = vlaneseq
    %v3477 = vshrl.u32 %v3476, 7
    %v3478 = vsub.s32 %v3475, %v3477
    %v3479 = vrot.slane %v3463, %v3478
    %v3481 = vunpack.c.l.s4 1966171168
    %v3482 = vunpack.c.0.s8 %v3481
    %v3483 = vlaneseq
    %v3484 = vshrl.u32 %v3483, 7
    %v3485 = vsub.s32 %v3482, %v3484
    %v3486 = vrot.slane %v3464, %v3485
    %v3488 = vunpack.c.l.s4 1966171168
    %v3489 = vunpack.c.0.s8 %v3488
    %v3490 = vlaneseq
    %v3491 = vshrl.u32 %v3490, 7
    %v3492 = vsub.s32 %v3489, %v3491
    %v3493 = vrot.slane %v3465, %v3492
    %v3494 = vcombine.high %v3472, %v3472
    %v3495 = vcombine.high %v3479, %v3479
    %v3496 = vcombine.high %v3486, %v3486
    %v3497 = vcombine.high %v3493, %v3493
    %3506 = vst [vmem:[#allocation12] sm:$0x1] %v3472
    %3507 = vst [vmem:[#allocation12 + $0x10] sm:$0x1] %v3486
    %3508 = vst [vmem:[#allocation12 + $0x20] sm:$0x1] %v3494
    %3509 = vst [vmem:[#allocation12 + $0x30] sm:$0x1] %v3496
    %3510 = vst [vmem:[#allocation12 + $0x40] sm:$0x1] %v3479
    %3511 = vst [vmem:[#allocation12 + $0x50] sm:$0x1] %v3493
    %3512 = vst [vmem:[#allocation12 + $0x60] sm:$0x1] %v3495
    %3513 = vst [vmem:[#allocation12 + $0x70] sm:$0x1] %v3497
    %v3514 = vld [vmem:[%s965] sm:$0xff]
    %v3516 = vcombine.high %v3514, %v3514
    %v3518 = vunpack.c.l.s4 1966171168
    %v3519 = vunpack.c.0.s8 %v3518
    %v3520 = vlaneseq
    %v3521 = vshrl.u32 %v3520, 7
    %v3522 = vsub.s32 %v3519, %v3521
    %v3523 = vrot.slane %v3514, %v3522
    %v3525 = vunpack.c.l.s4 1966171168
    %v3526 = vunpack.c.0.s8 %v3525
    %v3527 = vlaneseq
    %v3528 = vshrl.u32 %v3527, 7
    %v3529 = vsub.s32 %v3526, %v3528
    %v3530 = vrot.slane %v3516, %v3529
    %v3531 = vcombine.high %v3523, %v3523
    %v3532 = vcombine.high %v3530, %v3530
    %v3534 = vunpack.c.l.s4 1966171168
    %v3535 = vunpack.c.0.s8 %v3534
    %v3536 = vlaneseq
    %v3537 = vshrl.u32 %v3536, 7
    %v3538 = vsub.s32 %v3535, %v3537
    %v3539 = vrot.slane %v3523, %v3538
    %v3541 = vunpack.c.l.s4 1966171168
    %v3542 = vunpack.c.0.s8 %v3541
    %v3543 = vlaneseq
    %v3544 = vshrl.u32 %v3543, 7
    %v3545 = vsub.s32 %v3542, %v3544
    %v3546 = vrot.slane %v3530, %v3545
    %v3548 = vunpack.c.l.s4 1966171168
    %v3549 = vunpack.c.0.s8 %v3548
    %v3550 = vlaneseq
    %v3551 = vshrl.u32 %v3550, 7
    %v3552 = vsub.s32 %v3549, %v3551
    %v3553 = vrot.slane %v3531, %v3552
    %v3555 = vunpack.c.l.s4 1966171168
    %v3556 = vunpack.c.0.s8 %v3555
    %v3557 = vlaneseq
    %v3558 = vshrl.u32 %v3557, 7
    %v3559 = vsub.s32 %v3556, %v3558
    %v3560 = vrot.slane %v3532, %v3559
    %v3561 = vcombine.high %v3539, %v3539
    %v3562 = vcombine.high %v3546, %v3546
    %v3563 = vcombine.high %v3553, %v3553
    %v3564 = vcombine.high %v3560, %v3560
    %3573 = vst [vmem:[#allocation12 + $0x1] sm:$0x1] %v3539
    %3574 = vst [vmem:[#allocation12 + $0x11] sm:$0x1] %v3553
    %3575 = vst [vmem:[#allocation12 + $0x21] sm:$0x1] %v3561
    %3576 = vst [vmem:[#allocation12 + $0x31] sm:$0x1] %v3563
    %3577 = vst [vmem:[#allocation12 + $0x41] sm:$0x1] %v3546
    %3578 = vst [vmem:[#allocation12 + $0x51] sm:$0x1] %v3560
    %3579 = vst [vmem:[#allocation12 + $0x61] sm:$0x1] %v3562
    %3580 = vst [vmem:[#allocation12 + $0x71] sm:$0x1] %v3564
    %v3581 = vld [vmem:[%s1142] sm:$0xff]
    %v3583 = vcombine.high %v3581, %v3581
    %v3585 = vunpack.c.l.s4 1966171168
    %v3586 = vunpack.c.0.s8 %v3585
    %v3587 = vlaneseq
    %v3588 = vshrl.u32 %v3587, 7
    %v3589 = vsub.s32 %v3586, %v3588
    %v3590 = vrot.slane %v3581, %v3589
    %v3592 = vunpack.c.l.s4 1966171168
    %v3593 = vunpack.c.0.s8 %v3592
    %v3594 = vlaneseq
    %v3595 = vshrl.u32 %v3594, 7
    %v3596 = vsub.s32 %v3593, %v3595
    %v3597 = vrot.slane %v3583, %v3596
    %v3598 = vcombine.high %v3590, %v3590
    %v3599 = vcombine.high %v3597, %v3597
    %v3601 = vunpack.c.l.s4 1966171168
    %v3602 = vunpack.c.0.s8 %v3601
    %v3603 = vlaneseq
    %v3604 = vshrl.u32 %v3603, 7
    %v3605 = vsub.s32 %v3602, %v3604
    %v3606 = vrot.slane %v3590, %v3605
    %v3608 = vunpack.c.l.s4 1966171168
    %v3609 = vunpack.c.0.s8 %v3608
    %v3610 = vlaneseq
    %v3611 = vshrl.u32 %v3610, 7
    %v3612 = vsub.s32 %v3609, %v3611
    %v3613 = vrot.slane %v3597, %v3612
    %v3615 = vunpack.c.l.s4 1966171168
    %v3616 = vunpack.c.0.s8 %v3615
    %v3617 = vlaneseq
    %v3618 = vshrl.u32 %v3617, 7
    %v3619 = vsub.s32 %v3616, %v3618
    %v3620 = vrot.slane %v3598, %v3619
    %v3622 = vunpack.c.l.s4 1966171168
    %v3623 = vunpack.c.0.s8 %v3622
    %v3624 = vlaneseq
    %v3625 = vshrl.u32 %v3624, 7
    %v3626 = vsub.s32 %v3623, %v3625
    %v3627 = vrot.slane %v3599, %v3626
    %v3628 = vcombine.high %v3606, %v3606
    %v3629 = vcombine.high %v3613, %v3613
    %v3630 = vcombine.high %v3620, %v3620
    %v3631 = vcombine.high %v3627, %v3627
    %3640 = vst [vmem:[#allocation12 + $0x2] sm:$0x1] %v3606
    %3641 = vst [vmem:[#allocation12 + $0x12] sm:$0x1] %v3620
    %3642 = vst [vmem:[#allocation12 + $0x22] sm:$0x1] %v3628
    %3643 = vst [vmem:[#allocation12 + $0x32] sm:$0x1] %v3630
    %3644 = vst [vmem:[#allocation12 + $0x42] sm:$0x1] %v3613
    %3645 = vst [vmem:[#allocation12 + $0x52] sm:$0x1] %v3627
    %3646 = vst [vmem:[#allocation12 + $0x62] sm:$0x1] %v3629
    %3647 = vst [vmem:[#allocation12 + $0x72] sm:$0x1] %v3631
    %v3648 = vld [vmem:[%s1319] sm:$0xff]
    %v3650 = vcombine.high %v3648, %v3648
    %v3652 = vunpack.c.l.s4 1966171168
    %v3653 = vunpack.c.0.s8 %v3652
    %v3654 = vlaneseq
    %v3655 = vshrl.u32 %v3654, 7
    %v3656 = vsub.s32 %v3653, %v3655
    %v3657 = vrot.slane %v3648, %v3656
    %v3659 = vunpack.c.l.s4 1966171168
    %v3660 = vunpack.c.0.s8 %v3659
    %v3661 = vlaneseq
    %v3662 = vshrl.u32 %v3661, 7
    %v3663 = vsub.s32 %v3660, %v3662
    %v3664 = vrot.slane %v3650, %v3663
    %v3665 = vcombine.high %v3657, %v3657
    %v3666 = vcombine.high %v3664, %v3664
    %v3668 = vunpack.c.l.s4 1966171168
    %v3669 = vunpack.c.0.s8 %v3668
    %v3670 = vlaneseq
    %v3671 = vshrl.u32 %v3670, 7
    %v3672 = vsub.s32 %v3669, %v3671
    %v3673 = vrot.slane %v3657, %v3672
    %v3675 = vunpack.c.l.s4 1966171168
    %v3676 = vunpack.c.0.s8 %v3675
    %v3677 = vlaneseq
    %v3678 = vshrl.u32 %v3677, 7
    %v3679 = vsub.s32 %v3676, %v3678
    %v3680 = vrot.slane %v3664, %v3679
    %v3682 = vunpack.c.l.s4 1966171168
    %v3683 = vunpack.c.0.s8 %v3682
    %v3684 = vlaneseq
    %v3685 = vshrl.u32 %v3684, 7
    %v3686 = vsub.s32 %v3683, %v3685
    %v3687 = vrot.slane %v3665, %v3686
    %v3689 = vunpack.c.l.s4 1966171168
    %v3690 = vunpack.c.0.s8 %v3689
    %v3691 = vlaneseq
    %v3692 = vshrl.u32 %v3691, 7
    %v3693 = vsub.s32 %v3690, %v3692
    %v3694 = vrot.slane %v3666, %v3693
    %v3695 = vcombine.high %v3673, %v3673
    %v3696 = vcombine.high %v3680, %v3680
    %v3697 = vcombine.high %v3687, %v3687
    %v3698 = vcombine.high %v3694, %v3694
    %3707 = vst [vmem:[#allocation12 + $0x3] sm:$0x1] %v3673
    %3708 = vst [vmem:[#allocation12 + $0x13] sm:$0x1] %v3687
    %3709 = vst [vmem:[#allocation12 + $0x23] sm:$0x1] %v3695
    %3710 = vst [vmem:[#allocation12 + $0x33] sm:$0x1] %v3697
    %3711 = vst [vmem:[#allocation12 + $0x43] sm:$0x1] %v3680
    %3712 = vst [vmem:[#allocation12 + $0x53] sm:$0x1] %v3694
    %3713 = vst [vmem:[#allocation12 + $0x63] sm:$0x1] %v3696
    %3714 = vst [vmem:[#allocation12 + $0x73] sm:$0x1] %v3698
    %v3715 = vld [vmem:[%s1496] sm:$0xff]
    %v3717 = vcombine.high %v3715, %v3715
    %v3719 = vunpack.c.l.s4 1966171168
    %v3720 = vunpack.c.0.s8 %v3719
    %v3721 = vlaneseq
    %v3722 = vshrl.u32 %v3721, 7
    %v3723 = vsub.s32 %v3720, %v3722
    %v3724 = vrot.slane %v3715, %v3723
    %v3726 = vunpack.c.l.s4 1966171168
    %v3727 = vunpack.c.0.s8 %v3726
    %v3728 = vlaneseq
    %v3729 = vshrl.u32 %v3728, 7
    %v3730 = vsub.s32 %v3727, %v3729
    %v3731 = vrot.slane %v3717, %v3730
    %v3732 = vcombine.high %v3724, %v3724
    %v3733 = vcombine.high %v3731, %v3731
    %v3735 = vunpack.c.l.s4 1966171168
    %v3736 = vunpack.c.0.s8 %v3735
    %v3737 = vlaneseq
    %v3738 = vshrl.u32 %v3737, 7
    %v3739 = vsub.s32 %v3736, %v3738
    %v3740 = vrot.slane %v3724, %v3739
    %v3742 = vunpack.c.l.s4 1966171168
    %v3743 = vunpack.c.0.s8 %v3742
    %v3744 = vlaneseq
    %v3745 = vshrl.u32 %v3744, 7
    %v3746 = vsub.s32 %v3743, %v3745
    %v3747 = vrot.slane %v3731, %v3746
    %v3749 = vunpack.c.l.s4 1966171168
    %v3750 = vunpack.c.0.s8 %v3749
    %v3751 = vlaneseq
    %v3752 = vshrl.u32 %v3751, 7
    %v3753 = vsub.s32 %v3750, %v3752
    %v3754 = vrot.slane %v3732, %v3753
    %v3756 = vunpack.c.l.s4 1966171168
    %v3757 = vunpack.c.0.s8 %v3756
    %v3758 = vlaneseq
    %v3759 = vshrl.u32 %v3758, 7
    %v3760 = vsub.s32 %v3757, %v3759
    %v3761 = vrot.slane %v3733, %v3760
    %v3762 = vcombine.high %v3740, %v3740
    %v3763 = vcombine.high %v3747, %v3747
    %v3764 = vcombine.high %v3754, %v3754
    %v3765 = vcombine.high %v3761, %v3761
    %3774 = vst [vmem:[#allocation12 + $0x4] sm:$0x1] %v3740
    %3775 = vst [vmem:[#allocation12 + $0x14] sm:$0x1] %v3754
    %3776 = vst [vmem:[#allocation12 + $0x24] sm:$0x1] %v3762
    %3777 = vst [vmem:[#allocation12 + $0x34] sm:$0x1] %v3764
    %3778 = vst [vmem:[#allocation12 + $0x44] sm:$0x1] %v3747
    %3779 = vst [vmem:[#allocation12 + $0x54] sm:$0x1] %v3761
    %3780 = vst [vmem:[#allocation12 + $0x64] sm:$0x1] %v3763
    %3781 = vst [vmem:[#allocation12 + $0x74] sm:$0x1] %v3765
    %v3782 = vld [vmem:[%s1673] sm:$0xff]
    %v3784 = vcombine.high %v3782, %v3782
    %v3786 = vunpack.c.l.s4 1966171168
    %v3787 = vunpack.c.0.s8 %v3786
    %v3788 = vlaneseq
    %v3789 = vshrl.u32 %v3788, 7
    %v3790 = vsub.s32 %v3787, %v3789
    %v3791 = vrot.slane %v3782, %v3790
    %v3793 = vunpack.c.l.s4 1966171168
    %v3794 = vunpack.c.0.s8 %v3793
    %v3795 = vlaneseq
    %v3796 = vshrl.u32 %v3795, 7
    %v3797 = vsub.s32 %v3794, %v3796
    %v3798 = vrot.slane %v3784, %v3797
    %v3799 = vcombine.high %v3791, %v3791
    %v3800 = vcombine.high %v3798, %v3798
    %v3802 = vunpack.c.l.s4 1966171168
    %v3803 = vunpack.c.0.s8 %v3802
    %v3804 = vlaneseq
    %v3805 = vshrl.u32 %v3804, 7
    %v3806 = vsub.s32 %v3803, %v3805
    %v3807 = vrot.slane %v3791, %v3806
    %v3809 = vunpack.c.l.s4 1966171168
    %v3810 = vunpack.c.0.s8 %v3809
    %v3811 = vlaneseq
    %v3812 = vshrl.u32 %v3811, 7
    %v3813 = vsub.s32 %v3810, %v3812
    %v3814 = vrot.slane %v3798, %v3813
    %v3816 = vunpack.c.l.s4 1966171168
    %v3817 = vunpack.c.0.s8 %v3816
    %v3818 = vlaneseq
    %v3819 = vshrl.u32 %v3818, 7
    %v3820 = vsub.s32 %v3817, %v3819
    %v3821 = vrot.slane %v3799, %v3820
    %v3823 = vunpack.c.l.s4 1966171168
    %v3824 = vunpack.c.0.s8 %v3823
    %v3825 = vlaneseq
    %v3826 = vshrl.u32 %v3825, 7
    %v3827 = vsub.s32 %v3824, %v3826
    %v3828 = vrot.slane %v3800, %v3827
    %v3829 = vcombine.high %v3807, %v3807
    %v3830 = vcombine.high %v3814, %v3814
    %v3831 = vcombine.high %v3821, %v3821
    %v3832 = vcombine.high %v3828, %v3828
    %3841 = vst [vmem:[#allocation12 + $0x5] sm:$0x1] %v3807
    %3842 = vst [vmem:[#allocation12 + $0x15] sm:$0x1] %v3821
    %3843 = vst [vmem:[#allocation12 + $0x25] sm:$0x1] %v3829
    %3844 = vst [vmem:[#allocation12 + $0x35] sm:$0x1] %v3831
    %3845 = vst [vmem:[#allocation12 + $0x45] sm:$0x1] %v3814
    %3846 = vst [vmem:[#allocation12 + $0x55] sm:$0x1] %v3828
    %3847 = vst [vmem:[#allocation12 + $0x65] sm:$0x1] %v3830
    %3848 = vst [vmem:[#allocation12 + $0x75] sm:$0x1] %v3832
    %v3849 = vld [vmem:[%s1850] sm:$0xff]
    %v3851 = vcombine.high %v3849, %v3849
    %v3853 = vunpack.c.l.s4 1966171168
    %v3854 = vunpack.c.0.s8 %v3853
    %v3855 = vlaneseq
    %v3856 = vshrl.u32 %v3855, 7
    %v3857 = vsub.s32 %v3854, %v3856
    %v3858 = vrot.slane %v3849, %v3857
    %v3860 = vunpack.c.l.s4 1966171168
    %v3861 = vunpack.c.0.s8 %v3860
    %v3862 = vlaneseq
    %v3863 = vshrl.u32 %v3862, 7
    %v3864 = vsub.s32 %v3861, %v3863
    %v3865 = vrot.slane %v3851, %v3864
    %v3866 = vcombine.high %v3858, %v3858
    %v3867 = vcombine.high %v3865, %v3865
    %v3869 = vunpack.c.l.s4 1966171168
    %v3870 = vunpack.c.0.s8 %v3869
    %v3871 = vlaneseq
    %v3872 = vshrl.u32 %v3871, 7
    %v3873 = vsub.s32 %v3870, %v3872
    %v3874 = vrot.slane %v3858, %v3873
    %v3876 = vunpack.c.l.s4 1966171168
    %v3877 = vunpack.c.0.s8 %v3876
    %v3878 = vlaneseq
    %v3879 = vshrl.u32 %v3878, 7
    %v3880 = vsub.s32 %v3877, %v3879
    %v3881 = vrot.slane %v3865, %v3880
    %v3883 = vunpack.c.l.s4 1966171168
    %v3884 = vunpack.c.0.s8 %v3883
    %v3885 = vlaneseq
    %v3886 = vshrl.u32 %v3885, 7
    %v3887 = vsub.s32 %v3884, %v3886
    %v3888 = vrot.slane %v3866, %v3887
    %v3890 = vunpack.c.l.s4 1966171168
    %v3891 = vunpack.c.0.s8 %v3890
    %v3892 = vlaneseq
    %v3893 = vshrl.u32 %v3892, 7
    %v3894 = vsub.s32 %v3891, %v3893
    %v3895 = vrot.slane %v3867, %v3894
    %v3896 = vcombine.high %v3874, %v3874
    %v3897 = vcombine.high %v3881, %v3881
    %v3898 = vcombine.high %v3888, %v3888
    %v3899 = vcombine.high %v3895, %v3895
    %3908 = vst [vmem:[#allocation12 + $0x6] sm:$0x1] %v3874
    %3909 = vst [vmem:[#allocation12 + $0x16] sm:$0x1] %v3888
    %3910 = vst [vmem:[#allocation12 + $0x26] sm:$0x1] %v3896
    %3911 = vst [vmem:[#allocation12 + $0x36] sm:$0x1] %v3898
    %3912 = vst [vmem:[#allocation12 + $0x46] sm:$0x1] %v3881
    %3913 = vst [vmem:[#allocation12 + $0x56] sm:$0x1] %v3895
    %3914 = vst [vmem:[#allocation12 + $0x66] sm:$0x1] %v3897
    %3915 = vst [vmem:[#allocation12 + $0x76] sm:$0x1] %v3899
    %v3916 = vld [vmem:[%s2027] sm:$0xff]
    %v3918 = vcombine.high %v3916, %v3916
    %v3920 = vunpack.c.l.s4 1966171168
    %v3921 = vunpack.c.0.s8 %v3920
    %v3922 = vlaneseq
    %v3923 = vshrl.u32 %v3922, 7
    %v3924 = vsub.s32 %v3921, %v3923
    %v3925 = vrot.slane %v3916, %v3924
    %v3927 = vunpack.c.l.s4 1966171168
    %v3928 = vunpack.c.0.s8 %v3927
    %v3929 = vlaneseq
    %v3930 = vshrl.u32 %v3929, 7
    %v3931 = vsub.s32 %v3928, %v3930
    %v3932 = vrot.slane %v3918, %v3931
    %v3933 = vcombine.high %v3925, %v3925
    %v3934 = vcombine.high %v3932, %v3932
    %v3936 = vunpack.c.l.s4 1966171168
    %v3937 = vunpack.c.0.s8 %v3936
    %v3938 = vlaneseq
    %v3939 = vshrl.u32 %v3938, 7
    %v3940 = vsub.s32 %v3937, %v3939
    %v3941 = vrot.slane %v3925, %v3940
    %v3943 = vunpack.c.l.s4 1966171168
    %v3944 = vunpack.c.0.s8 %v3943
    %v3945 = vlaneseq
    %v3946 = vshrl.u32 %v3945, 7
    %v3947 = vsub.s32 %v3944, %v3946
    %v3948 = vrot.slane %v3932, %v3947
    %v3950 = vunpack.c.l.s4 1966171168
    %v3951 = vunpack.c.0.s8 %v3950
    %v3952 = vlaneseq
    %v3953 = vshrl.u32 %v3952, 7
    %v3954 = vsub.s32 %v3951, %v3953
    %v3955 = vrot.slane %v3933, %v3954
    %v3957 = vunpack.c.l.s4 1966171168
    %v3958 = vunpack.c.0.s8 %v3957
    %v3959 = vlaneseq
    %v3960 = vshrl.u32 %v3959, 7
    %v3961 = vsub.s32 %v3958, %v3960
    %v3962 = vrot.slane %v3934, %v3961
    %v3963 = vcombine.high %v3941, %v3941
    %v3964 = vcombine.high %v3948, %v3948
    %v3965 = vcombine.high %v3955, %v3955
    %v3966 = vcombine.high %v3962, %v3962
    %3975 = vst [vmem:[#allocation12 + $0x7] sm:$0x1] %v3941
    %3976 = vst [vmem:[#allocation12 + $0x17] sm:$0x1] %v3955
    %3977 = vst [vmem:[#allocation12 + $0x27] sm:$0x1] %v3963
    %3978 = vst [vmem:[#allocation12 + $0x37] sm:$0x1] %v3965
    %3979 = vst [vmem:[#allocation12 + $0x47] sm:$0x1] %v3948
    %3980 = vst [vmem:[#allocation12 + $0x57] sm:$0x1] %v3962
    %3981 = vst [vmem:[#allocation12 + $0x67] sm:$0x1] %v3964
    %3982 = vst [vmem:[#allocation12 + $0x77] sm:$0x1] %v3966
    %v3983 = vld [vmem:[%s2204] sm:$0xff]
    %v3985 = vcombine.high %v3983, %v3983
    %v3987 = vunpack.c.l.s4 1966171168
    %v3988 = vunpack.c.0.s8 %v3987
    %v3989 = vlaneseq
    %v3990 = vshrl.u32 %v3989, 7
    %v3991 = vsub.s32 %v3988, %v3990
    %v3992 = vrot.slane %v3983, %v3991
    %v3994 = vunpack.c.l.s4 1966171168
    %v3995 = vunpack.c.0.s8 %v3994
    %v3996 = vlaneseq
    %v3997 = vshrl.u32 %v3996, 7
    %v3998 = vsub.s32 %v3995, %v3997
    %v3999 = vrot.slane %v3985, %v3998
    %v4000 = vcombine.high %v3992, %v3992
    %v4001 = vcombine.high %v3999, %v3999
    %v4003 = vunpack.c.l.s4 1966171168
    %v4004 = vunpack.c.0.s8 %v4003
    %v4005 = vlaneseq
    %v4006 = vshrl.u32 %v4005, 7
    %v4007 = vsub.s32 %v4004, %v4006
    %v4008 = vrot.slane %v3992, %v4007
    %v4010 = vunpack.c.l.s4 1966171168
    %v4011 = vunpack.c.0.s8 %v4010
    %v4012 = vlaneseq
    %v4013 = vshrl.u32 %v4012, 7
    %v4014 = vsub.s32 %v4011, %v4013
    %v4015 = vrot.slane %v3999, %v4014
    %v4017 = vunpack.c.l.s4 1966171168
    %v4018 = vunpack.c.0.s8 %v4017
    %v4019 = vlaneseq
    %v4020 = vshrl.u32 %v4019, 7
    %v4021 = vsub.s32 %v4018, %v4020
    %v4022 = vrot.slane %v4000, %v4021
    %v4024 = vunpack.c.l.s4 1966171168
    %v4025 = vunpack.c.0.s8 %v4024
    %v4026 = vlaneseq
    %v4027 = vshrl.u32 %v4026, 7
    %v4028 = vsub.s32 %v4025, %v4027
    %v4029 = vrot.slane %v4001, %v4028
    %v4030 = vcombine.high %v4008, %v4008
    %v4031 = vcombine.high %v4015, %v4015
    %v4032 = vcombine.high %v4022, %v4022
    %v4033 = vcombine.high %v4029, %v4029
    %4042 = vst [vmem:[#allocation12 + $0x8] sm:$0x1] %v4008
    %4043 = vst [vmem:[#allocation12 + $0x18] sm:$0x1] %v4022
    %4044 = vst [vmem:[#allocation12 + $0x28] sm:$0x1] %v4030
    %4045 = vst [vmem:[#allocation12 + $0x38] sm:$0x1] %v4032
    %4046 = vst [vmem:[#allocation12 + $0x48] sm:$0x1] %v4015
    %4047 = vst [vmem:[#allocation12 + $0x58] sm:$0x1] %v4029
    %4048 = vst [vmem:[#allocation12 + $0x68] sm:$0x1] %v4031
    %4049 = vst [vmem:[#allocation12 + $0x78] sm:$0x1] %v4033
    %v4050 = vld [vmem:[%s2381] sm:$0xff]
    %v4052 = vcombine.high %v4050, %v4050
    %v4054 = vunpack.c.l.s4 1966171168
    %v4055 = vunpack.c.0.s8 %v4054
    %v4056 = vlaneseq
    %v4057 = vshrl.u32 %v4056, 7
    %v4058 = vsub.s32 %v4055, %v4057
    %v4059 = vrot.slane %v4050, %v4058
    %v4061 = vunpack.c.l.s4 1966171168
    %v4062 = vunpack.c.0.s8 %v4061
    %v4063 = vlaneseq
    %v4064 = vshrl.u32 %v4063, 7
    %v4065 = vsub.s32 %v4062, %v4064
    %v4066 = vrot.slane %v4052, %v4065
    %v4067 = vcombine.high %v4059, %v4059
    %v4068 = vcombine.high %v4066, %v4066
    %v4070 = vunpack.c.l.s4 1966171168
    %v4071 = vunpack.c.0.s8 %v4070
    %v4072 = vlaneseq
    %v4073 = vshrl.u32 %v4072, 7
    %v4074 = vsub.s32 %v4071, %v4073
    %v4075 = vrot.slane %v4059, %v4074
    %v4077 = vunpack.c.l.s4 1966171168
    %v4078 = vunpack.c.0.s8 %v4077
    %v4079 = vlaneseq
    %v4080 = vshrl.u32 %v4079, 7
    %v4081 = vsub.s32 %v4078, %v4080
    %v4082 = vrot.slane %v4066, %v4081
    %v4084 = vunpack.c.l.s4 1966171168
    %v4085 = vunpack.c.0.s8 %v4084
    %v4086 = vlaneseq
    %v4087 = vshrl.u32 %v4086, 7
    %v4088 = vsub.s32 %v4085, %v4087
    %v4089 = vrot.slane %v4067, %v4088
    %v4091 = vunpack.c.l.s4 1966171168
    %v4092 = vunpack.c.0.s8 %v4091
    %v4093 = vlaneseq
    %v4094 = vshrl.u32 %v4093, 7
    %v4095 = vsub.s32 %v4092, %v4094
    %v4096 = vrot.slane %v4068, %v4095
    %v4097 = vcombine.high %v4075, %v4075
    %v4098 = vcombine.high %v4082, %v4082
    %v4099 = vcombine.high %v4089, %v4089
    %v4100 = vcombine.high %v4096, %v4096
    %4109 = vst [vmem:[#allocation12 + $0x9] sm:$0x1] %v4075
    %4110 = vst [vmem:[#allocation12 + $0x19] sm:$0x1] %v4089
    %4111 = vst [vmem:[#allocation12 + $0x29] sm:$0x1] %v4097
    %4112 = vst [vmem:[#allocation12 + $0x39] sm:$0x1] %v4099
    %4113 = vst [vmem:[#allocation12 + $0x49] sm:$0x1] %v4082
    %4114 = vst [vmem:[#allocation12 + $0x59] sm:$0x1] %v4096
    %4115 = vst [vmem:[#allocation12 + $0x69] sm:$0x1] %v4098
    %4116 = vst [vmem:[#allocation12 + $0x79] sm:$0x1] %v4100
    %v4117 = vld [vmem:[%s2558] sm:$0xff]
    %v4119 = vcombine.high %v4117, %v4117
    %v4121 = vunpack.c.l.s4 1966171168
    %v4122 = vunpack.c.0.s8 %v4121
    %v4123 = vlaneseq
    %v4124 = vshrl.u32 %v4123, 7
    %v4125 = vsub.s32 %v4122, %v4124
    %v4126 = vrot.slane %v4117, %v4125
    %v4128 = vunpack.c.l.s4 1966171168
    %v4129 = vunpack.c.0.s8 %v4128
    %v4130 = vlaneseq
    %v4131 = vshrl.u32 %v4130, 7
    %v4132 = vsub.s32 %v4129, %v4131
    %v4133 = vrot.slane %v4119, %v4132
    %v4134 = vcombine.high %v4126, %v4126
    %v4135 = vcombine.high %v4133, %v4133
    %v4137 = vunpack.c.l.s4 1966171168
    %v4138 = vunpack.c.0.s8 %v4137
    %v4139 = vlaneseq
    %v4140 = vshrl.u32 %v4139, 7
    %v4141 = vsub.s32 %v4138, %v4140
    %v4142 = vrot.slane %v4126, %v4141
    %v4144 = vunpack.c.l.s4 1966171168
    %v4145 = vunpack.c.0.s8 %v4144
    %v4146 = vlaneseq
    %v4147 = vshrl.u32 %v4146, 7
    %v4148 = vsub.s32 %v4145, %v4147
    %v4149 = vrot.slane %v4133, %v4148
    %v4151 = vunpack.c.l.s4 1966171168
    %v4152 = vunpack.c.0.s8 %v4151
    %v4153 = vlaneseq
    %v4154 = vshrl.u32 %v4153, 7
    %v4155 = vsub.s32 %v4152, %v4154
    %v4156 = vrot.slane %v4134, %v4155
    %v4158 = vunpack.c.l.s4 1966171168
    %v4159 = vunpack.c.0.s8 %v4158
    %v4160 = vlaneseq
    %v4161 = vshrl.u32 %v4160, 7
    %v4162 = vsub.s32 %v4159, %v4161
    %v4163 = vrot.slane %v4135, %v4162
    %v4164 = vcombine.high %v4142, %v4142
    %v4165 = vcombine.high %v4149, %v4149
    %v4166 = vcombine.high %v4156, %v4156
    %v4167 = vcombine.high %v4163, %v4163
    %4176 = vst [vmem:[#allocation12 + $0xa] sm:$0x1] %v4142
    %4177 = vst [vmem:[#allocation12 + $0x1a] sm:$0x1] %v4156
    %4178 = vst [vmem:[#allocation12 + $0x2a] sm:$0x1] %v4164
    %4179 = vst [vmem:[#allocation12 + $0x3a] sm:$0x1] %v4166
    %4180 = vst [vmem:[#allocation12 + $0x4a] sm:$0x1] %v4149
    %4181 = vst [vmem:[#allocation12 + $0x5a] sm:$0x1] %v4163
    %4182 = vst [vmem:[#allocation12 + $0x6a] sm:$0x1] %v4165
    %4183 = vst [vmem:[#allocation12 + $0x7a] sm:$0x1] %v4167
    %v4184 = vld [vmem:[%s2735] sm:$0xff]
    %v4186 = vcombine.high %v4184, %v4184
    %v4188 = vunpack.c.l.s4 1966171168
    %v4189 = vunpack.c.0.s8 %v4188
    %v4190 = vlaneseq
    %v4191 = vshrl.u32 %v4190, 7
    %v4192 = vsub.s32 %v4189, %v4191
    %v4193 = vrot.slane %v4184, %v4192
    %v4195 = vunpack.c.l.s4 1966171168
    %v4196 = vunpack.c.0.s8 %v4195
    %v4197 = vlaneseq
    %v4198 = vshrl.u32 %v4197, 7
    %v4199 = vsub.s32 %v4196, %v4198
    %v4200 = vrot.slane %v4186, %v4199
    %v4201 = vcombine.high %v4193, %v4193
    %v4202 = vcombine.high %v4200, %v4200
    %v4204 = vunpack.c.l.s4 1966171168
    %v4205 = vunpack.c.0.s8 %v4204
    %v4206 = vlaneseq
    %v4207 = vshrl.u32 %v4206, 7
    %v4208 = vsub.s32 %v4205, %v4207
    %v4209 = vrot.slane %v4193, %v4208
    %v4211 = vunpack.c.l.s4 1966171168
    %v4212 = vunpack.c.0.s8 %v4211
    %v4213 = vlaneseq
    %v4214 = vshrl.u32 %v4213, 7
    %v4215 = vsub.s32 %v4212, %v4214
    %v4216 = vrot.slane %v4200, %v4215
    %v4218 = vunpack.c.l.s4 1966171168
    %v4219 = vunpack.c.0.s8 %v4218
    %v4220 = vlaneseq
    %v4221 = vshrl.u32 %v4220, 7
    %v4222 = vsub.s32 %v4219, %v4221
    %v4223 = vrot.slane %v4201, %v4222
    %v4225 = vunpack.c.l.s4 1966171168
    %v4226 = vunpack.c.0.s8 %v4225
    %v4227 = vlaneseq
    %v4228 = vshrl.u32 %v4227, 7
    %v4229 = vsub.s32 %v4226, %v4228
    %v4230 = vrot.slane %v4202, %v4229
    %v4231 = vcombine.high %v4209, %v4209
    %v4232 = vcombine.high %v4216, %v4216
    %v4233 = vcombine.high %v4223, %v4223
    %v4234 = vcombine.high %v4230, %v4230
    %4243 = vst [vmem:[#allocation12 + $0xb] sm:$0x1] %v4209
    %4244 = vst [vmem:[#allocation12 + $0x1b] sm:$0x1] %v4223
    %4245 = vst [vmem:[#allocation12 + $0x2b] sm:$0x1] %v4231
    %4246 = vst [vmem:[#allocation12 + $0x3b] sm:$0x1] %v4233
    %4247 = vst [vmem:[#allocation12 + $0x4b] sm:$0x1] %v4216
    %4248 = vst [vmem:[#allocation12 + $0x5b] sm:$0x1] %v4230
    %4249 = vst [vmem:[#allocation12 + $0x6b] sm:$0x1] %v4232
    %4250 = vst [vmem:[#allocation12 + $0x7b] sm:$0x1] %v4234
    %v4251 = vld [vmem:[%s2912] sm:$0xff]
    %v4253 = vcombine.high %v4251, %v4251
    %v4255 = vunpack.c.l.s4 1966171168
    %v4256 = vunpack.c.0.s8 %v4255
    %v4257 = vlaneseq
    %v4258 = vshrl.u32 %v4257, 7
    %v4259 = vsub.s32 %v4256, %v4258
    %v4260 = vrot.slane %v4251, %v4259
    %v4262 = vunpack.c.l.s4 1966171168
    %v4263 = vunpack.c.0.s8 %v4262
    %v4264 = vlaneseq
    %v4265 = vshrl.u32 %v4264, 7
    %v4266 = vsub.s32 %v4263, %v4265
    %v4267 = vrot.slane %v4253, %v4266
    %v4268 = vcombine.high %v4260, %v4260
    %v4269 = vcombine.high %v4267, %v4267
    %v4271 = vunpack.c.l.s4 1966171168
    %v4272 = vunpack.c.0.s8 %v4271
    %v4273 = vlaneseq
    %v4274 = vshrl.u32 %v4273, 7
    %v4275 = vsub.s32 %v4272, %v4274
    %v4276 = vrot.slane %v4260, %v4275
    %v4278 = vunpack.c.l.s4 1966171168
    %v4279 = vunpack.c.0.s8 %v4278
    %v4280 = vlaneseq
    %v4281 = vshrl.u32 %v4280, 7
    %v4282 = vsub.s32 %v4279, %v4281
    %v4283 = vrot.slane %v4267, %v4282
    %v4285 = vunpack.c.l.s4 1966171168
    %v4286 = vunpack.c.0.s8 %v4285
    %v4287 = vlaneseq
    %v4288 = vshrl.u32 %v4287, 7
    %v4289 = vsub.s32 %v4286, %v4288
    %v4290 = vrot.slane %v4268, %v4289
    %v4292 = vunpack.c.l.s4 1966171168
    %v4293 = vunpack.c.0.s8 %v4292
    %v4294 = vlaneseq
    %v4295 = vshrl.u32 %v4294, 7
    %v4296 = vsub.s32 %v4293, %v4295
    %v4297 = vrot.slane %v4269, %v4296
    %v4298 = vcombine.high %v4276, %v4276
    %v4299 = vcombine.high %v4283, %v4283
    %v4300 = vcombine.high %v4290, %v4290
    %v4301 = vcombine.high %v4297, %v4297
    %4310 = vst [vmem:[#allocation12 + $0xc] sm:$0x1] %v4276
    %4311 = vst [vmem:[#allocation12 + $0x1c] sm:$0x1] %v4290
    %4312 = vst [vmem:[#allocation12 + $0x2c] sm:$0x1] %v4298
    %4313 = vst [vmem:[#allocation12 + $0x3c] sm:$0x1] %v4300
    %4314 = vst [vmem:[#allocation12 + $0x4c] sm:$0x1] %v4283
    %4315 = vst [vmem:[#allocation12 + $0x5c] sm:$0x1] %v4297
    %4316 = vst [vmem:[#allocation12 + $0x6c] sm:$0x1] %v4299
    %4317 = vst [vmem:[#allocation12 + $0x7c] sm:$0x1] %v4301
    %v4318 = vld [vmem:[%s3089] sm:$0xff]
    %v4320 = vcombine.high %v4318, %v4318
    %v4322 = vunpack.c.l.s4 1966171168
    %v4323 = vunpack.c.0.s8 %v4322
    %v4324 = vlaneseq
    %v4325 = vshrl.u32 %v4324, 7
    %v4326 = vsub.s32 %v4323, %v4325
    %v4327 = vrot.slane %v4318, %v4326
    %v4329 = vunpack.c.l.s4 1966171168
    %v4330 = vunpack.c.0.s8 %v4329
    %v4331 = vlaneseq
    %v4332 = vshrl.u32 %v4331, 7
    %v4333 = vsub.s32 %v4330, %v4332
    %v4334 = vrot.slane %v4320, %v4333
    %v4335 = vcombine.high %v4327, %v4327
    %v4336 = vcombine.high %v4334, %v4334
    %v4338 = vunpack.c.l.s4 1966171168
    %v4339 = vunpack.c.0.s8 %v4338
    %v4340 = vlaneseq
    %v4341 = vshrl.u32 %v4340, 7
    %v4342 = vsub.s32 %v4339, %v4341
    %v4343 = vrot.slane %v4327, %v4342
    %v4345 = vunpack.c.l.s4 1966171168
    %v4346 = vunpack.c.0.s8 %v4345
    %v4347 = vlaneseq
    %v4348 = vshrl.u32 %v4347, 7
    %v4349 = vsub.s32 %v4346, %v4348
    %v4350 = vrot.slane %v4334, %v4349
    %v4352 = vunpack.c.l.s4 1966171168
    %v4353 = vunpack.c.0.s8 %v4352
    %v4354 = vlaneseq
    %v4355 = vshrl.u32 %v4354, 7
    %v4356 = vsub.s32 %v4353, %v4355
    %v4357 = vrot.slane %v4335, %v4356
    %v4359 = vunpack.c.l.s4 1966171168
    %v4360 = vunpack.c.0.s8 %v4359
    %v4361 = vlaneseq
    %v4362 = vshrl.u32 %v4361, 7
    %v4363 = vsub.s32 %v4360, %v4362
    %v4364 = vrot.slane %v4336, %v4363
    %v4365 = vcombine.high %v4343, %v4343
    %v4366 = vcombine.high %v4350, %v4350
    %v4367 = vcombine.high %v4357, %v4357
    %v4368 = vcombine.high %v4364, %v4364
    %4377 = vst [vmem:[#allocation12 + $0xd] sm:$0x1] %v4343
    %4378 = vst [vmem:[#allocation12 + $0x1d] sm:$0x1] %v4357
    %4379 = vst [vmem:[#allocation12 + $0x2d] sm:$0x1] %v4365
    %4380 = vst [vmem:[#allocation12 + $0x3d] sm:$0x1] %v4367
    %4381 = vst [vmem:[#allocation12 + $0x4d] sm:$0x1] %v4350
    %4382 = vst [vmem:[#allocation12 + $0x5d] sm:$0x1] %v4364
    %4383 = vst [vmem:[#allocation12 + $0x6d] sm:$0x1] %v4366
    %4384 = vst [vmem:[#allocation12 + $0x7d] sm:$0x1] %v4368
    %v4385 = vld [vmem:[%s3266] sm:$0xff]
    %v4387 = vcombine.high %v4385, %v4385
    %v4389 = vunpack.c.l.s4 1966171168
    %v4390 = vunpack.c.0.s8 %v4389
    %v4391 = vlaneseq
    %v4392 = vshrl.u32 %v4391, 7
    %v4393 = vsub.s32 %v4390, %v4392
    %v4394 = vrot.slane %v4385, %v4393
    %v4396 = vunpack.c.l.s4 1966171168
    %v4397 = vunpack.c.0.s8 %v4396
    %v4398 = vlaneseq
    %v4399 = vshrl.u32 %v4398, 7
    %v4400 = vsub.s32 %v4397, %v4399
    %v4401 = vrot.slane %v4387, %v4400
    %v4402 = vcombine.high %v4394, %v4394
    %v4403 = vcombine.high %v4401, %v4401
    %v4405 = vunpack.c.l.s4 1966171168
    %v4406 = vunpack.c.0.s8 %v4405
    %v4407 = vlaneseq
    %v4408 = vshrl.u32 %v4407, 7
    %v4409 = vsub.s32 %v4406, %v4408
    %v4410 = vrot.slane %v4394, %v4409
    %v4412 = vunpack.c.l.s4 1966171168
    %v4413 = vunpack.c.0.s8 %v4412
    %v4414 = vlaneseq
    %v4415 = vshrl.u32 %v4414, 7
    %v4416 = vsub.s32 %v4413, %v4415
    %v4417 = vrot.slane %v4401, %v4416
    %v4419 = vunpack.c.l.s4 1966171168
    %v4420 = vunpack.c.0.s8 %v4419
    %v4421 = vlaneseq
    %v4422 = vshrl.u32 %v4421, 7
    %v4423 = vsub.s32 %v4420, %v4422
    %v4424 = vrot.slane %v4402, %v4423
    %v4426 = vunpack.c.l.s4 1966171168
    %v4427 = vunpack.c.0.s8 %v4426
    %v4428 = vlaneseq
    %v4429 = vshrl.u32 %v4428, 7
    %v4430 = vsub.s32 %v4427, %v4429
    %v4431 = vrot.slane %v4403, %v4430
    %v4432 = vcombine.high %v4410, %v4410
    %v4433 = vcombine.high %v4417, %v4417
    %v4434 = vcombine.high %v4424, %v4424
    %v4435 = vcombine.high %v4431, %v4431
    %4444 = vst [vmem:[#allocation12 + $0xe] sm:$0x1] %v4410
    %4445 = vst [vmem:[#allocation12 + $0x1e] sm:$0x1] %v4424
    %4446 = vst [vmem:[#allocation12 + $0x2e] sm:$0x1] %v4432
    %4447 = vst [vmem:[#allocation12 + $0x3e] sm:$0x1] %v4434
    %4448 = vst [vmem:[#allocation12 + $0x4e] sm:$0x1] %v4417
    %4449 = vst [vmem:[#allocation12 + $0x5e] sm:$0x1] %v4431
    %4450 = vst [vmem:[#allocation12 + $0x6e] sm:$0x1] %v4433
    %4451 = vst [vmem:[#allocation12 + $0x7e] sm:$0x1] %v4435
    %v4452 = vld [vmem:[%s3443] sm:$0xff]
    %v4454 = vcombine.high %v4452, %v4452
    %v4456 = vunpack.c.l.s4 1966171168
    %v4457 = vunpack.c.0.s8 %v4456
    %v4458 = vlaneseq
    %v4459 = vshrl.u32 %v4458, 7
    %v4460 = vsub.s32 %v4457, %v4459
    %v4461 = vrot.slane %v4452, %v4460
    %v4463 = vunpack.c.l.s4 1966171168
    %v4464 = vunpack.c.0.s8 %v4463
    %v4465 = vlaneseq
    %v4466 = vshrl.u32 %v4465, 7
    %v4467 = vsub.s32 %v4464, %v4466
    %v4468 = vrot.slane %v4454, %v4467
    %v4469 = vcombine.high %v4461, %v4461
    %v4470 = vcombine.high %v4468, %v4468
    %v4472 = vunpack.c.l.s4 1966171168
    %v4473 = vunpack.c.0.s8 %v4472
    %v4474 = vlaneseq
    %v4475 = vshrl.u32 %v4474, 7
    %v4476 = vsub.s32 %v4473, %v4475
    %v4477 = vrot.slane %v4461, %v4476
    %v4479 = vunpack.c.l.s4 1966171168
    %v4480 = vunpack.c.0.s8 %v4479
    %v4481 = vlaneseq
    %v4482 = vshrl.u32 %v4481, 7
    %v4483 = vsub.s32 %v4480, %v4482
    %v4484 = vrot.slane %v4468, %v4483
    %v4486 = vunpack.c.l.s4 1966171168
    %v4487 = vunpack.c.0.s8 %v4486
    %v4488 = vlaneseq
    %v4489 = vshrl.u32 %v4488, 7
    %v4490 = vsub.s32 %v4487, %v4489
    %v4491 = vrot.slane %v4469, %v4490
    %v4493 = vunpack.c.l.s4 1966171168
    %v4494 = vunpack.c.0.s8 %v4493
    %v4495 = vlaneseq
    %v4496 = vshrl.u32 %v4495, 7
    %v4497 = vsub.s32 %v4494, %v4496
    %v4498 = vrot.slane %v4470, %v4497
    %v4499 = vcombine.high %v4477, %v4477
    %v4500 = vcombine.high %v4484, %v4484
    %v4501 = vcombine.high %v4491, %v4491
    %v4502 = vcombine.high %v4498, %v4498
    %4511 = vst [vmem:[#allocation12 + $0xf] sm:$0x1] %v4477
    %4512 = vst [vmem:[#allocation12 + $0x1f] sm:$0x1] %v4491
    %4513 = vst [vmem:[#allocation12 + $0x2f] sm:$0x1] %v4499
    %4514 = vst [vmem:[#allocation12 + $0x3f] sm:$0x1] %v4501
    %4515 = vst [vmem:[#allocation12 + $0x4f] sm:$0x1] %v4484
    %4516 = vst [vmem:[#allocation12 + $0x5f] sm:$0x1] %v4498
    %4517 = vst [vmem:[#allocation12 + $0x6f] sm:$0x1] %v4500
    %4518 = vst [vmem:[#allocation12 + $0x7f] sm:$0x1] %v4502
    // Predicated region
    $region34: #{tpu_custom_call.1} parent=1 // pred_check
      %p4519 = pneg %p62
    $region35: #{tpu_custom_call.1} parent=1 // pred_check_branch
      %4521 = sbr.rel (%p4519) target = $region37
    $region36: #{tpu_custom_call.1} parent=1 // pred_region
      %4522 = vst [vmem:[#allocation13] sm:$0xff] %v3440
    $region37: #{tpu_custom_call.1} parent=1 // pred_fallthru
      _
    // Predicated region
    $region38: #{tpu_custom_call.1} parent=1 // pred_check
      _
    $region39: #{tpu_custom_call.1} parent=1 // pred_check_branch
      %4524 = sbr.rel (0) target = $region41
    $region40: #{tpu_custom_call.1} parent=1 // pred_region
      %s4526 = ssub.s32 2048, 2048
      %4527 = vsyncadd [#allocation8], %s4526
      %s4528 = sshll.u32 [#allocation12], 4
      %s4529 = int_to_ptr.vmem [resolvable:$true] %s4528
      %4534 = dma.vmem_to_hbm [thread:$0]  %s4529, 2048, %s4, [#allocation8], 128, 128, 8
    $region41: #{tpu_custom_call.1} parent=1 // pred_fallthru
      _
    // Predicated region
    $region42: #{tpu_custom_call.1} parent=1 // pred_check
      _
    $region43: #{tpu_custom_call.1} parent=1 // pred_check_branch
      %4536 = sbr.rel (0) target = $region45
    $region44: #{tpu_custom_call.1} parent=1 // pred_region
      %s4538 = ssub.s32 128, 128
      %4539 = vsyncadd [#allocation14], %s4538
      %s4541 = sshll.u32 [#allocation13], 4
      %s4542 = int_to_ptr.vmem [resolvable:$true] %s4541
      %4544 = dma.vmem_to_hbm [thread:$0]  %s4542, 128, %s5, [#allocation14]
    $region45: #{tpu_custom_call.1} parent=1 // pred_fallthru
      _
    // Predicated region
    $region46: #{tpu_custom_call.1} parent=1 // pred_check
      _
    $region47: #{tpu_custom_call.1} parent=1 // pred_check_branch
      %4546 = sbr.rel (0) target = $region49
    $region48: #{tpu_custom_call.1} parent=1 // pred_region
      %4547 = dma.done [#allocation8], 2048
    $region49: #{tpu_custom_call.1} parent=1 // pred_fallthru
      _
    // Predicated region
    $region50: #{tpu_custom_call.1} parent=1 // pred_check
      _
    $region51: #{tpu_custom_call.1} parent=1 // pred_check_branch
      %4549 = sbr.rel (0) target = $region53
    $region52: #{tpu_custom_call.1} parent=1 // pred_region
      %4550 = dma.done [#allocation14], 128
    $region53: #{tpu_custom_call.1} parent=1 // pred_fallthru
      _
    %4551 = vsyncpa [#allocation7], 1
    %4552 = vsyncpa [#allocation10], 1
    %4553 = vsyncpa [#allocation8], 1
    %4554 = vsyncpa [#allocation14], 1

</llo_original>
